<compile_context>
chip_gen: v7x
topology: tpu7x:2x2x1
jax: 0.10.0
libtpu: 0.0.40
codegen_flags: <defaults>
</compile_context>

<pallas_src>
import functools

import jax
import jax.numpy as jnp
from jax.experimental import pallas as pl
from jax.experimental.pallas import tpu as pltpu

LANE = 128
TILE_H = 8  # target output rows per grid step (reduced to a divisor of H)


def _round_up(x, m):
    return (x + m - 1) // m * m


def _pick_tile_h(H, target=TILE_H):
    th = min(target, H)
    while H % th:
        th -= 1
    return th


# ---------------------------------------------------------------------------
# Kernel 1: 3x3 conv (shifted-slab accumulate, no im2col) + bias + PReLU
#           + fused BatchNorm statistics (sum / sum-of-squares per channel)
# ---------------------------------------------------------------------------
def _make_conv_kernel(W, Wp, rows_out, cpad):
    def kernel(alpha_ref, x_ref, w_ref, b_ref, o_ref, st_ref):
        # x_ref:  (1, 1, rows_in, Cin)  flattened reflection-padded H-tile (+2 zero rows)
        # w_ref:  (9, Cin, cpad)        tap-major weights, output channels lane-padded
        # b_ref:  (1, cpad)
        # o_ref:  (1, 1, rows_out, cpad) with rows_out = TH * (W+2); cols >= W are garbage
        # st_ref: (1, 1, 8, cpad)       sublane 0 = sum, sublane 1 = sum of squares
        x = x_ref[0, 0]                                       # (rows_in, Cin)
        acc = jnp.zeros((rows_out, cpad), jnp.float32)
        for kh in range(3):
            for kw in range(3):
                start = kh * Wp + kw                          # static slab offset
                patch = x[start:start + rows_out, :]          # (rows_out, Cin)
                acc = acc + jnp.dot(patch, w_ref[kh * 3 + kw],
                                    preferred_element_type=jnp.float32)
        y = acc + b_ref[...]                                  # (rows_out, cpad)
        a = alpha_ref[0]
        y = jnp.where(y > 0, y, a * y)                        # PReLU (shared alpha)
        o_ref[0, 0] = y

        # fused BN statistics: mask the garbage columns (j >= W inside each padded row)
        rid = jax.lax.broadcasted_iota(jnp.int32, (rows_out, 1), 0)
        valid = (rid % Wp) < W
        ym = jnp.where(valid, y, 0.0)
        s = jnp.sum(ym, axis=0, keepdims=True)                # (1, cpad)
        q = jnp.sum(ym * ym, axis=0, keepdims=True)           # (1, cpad)
        sid = jax.lax.broadcasted_iota(jnp.int32, (8, 1), 0)
        st_ref[0, 0] = jnp.where(sid == 0, s, 0.0) + jnp.where(sid == 1, q, 0.0)

    return kernel


def conv3x3_prelu_bnstats(x_nhwc, w_hwio, bias, alpha):
    """reflection-pad(1) -> 3x3 conv ('VALID', stride 1) -> PReLU, plus fused
    per-channel sum / sum-of-squares of the result (for BatchNorm).

    Returns (y_raw, sum, sumsq, meta) where y_raw is the lane-padded tiled
    layout (N, nT, TH*(W+2), cpad) consumed by `_raw_to_image`.
    """
    N, H, W, Cin = x_nhwc.shape
    Cout = w_hwio.shape[-1]
    cpad = _round_up(max(Cout, LANE), LANE)
    th = _pick_tile_h(H)
    nT = H // th
    Wp = W + 2
    rows_out = th * Wp
    rows_in = _round_up((th + 2) * Wp + 2, 8)

    # JAX glue: reflection pad + halo H-tiling + flatten (pure data movement).
    xp = jnp.pad(x_nhwc.astype(jnp.float32),
                 ((0, 0), (1, 1), (1, 1), (0, 0)), mode="reflect")   # (N, H+2, Wp, Cin)
    tiles = jnp.stack([xp[:, t * th: t * th + th + 2] for t in range(nT)],
                      axis=1)                                        # (N, nT, th+2, Wp, Cin)
    flat = tiles.reshape(N, nT, (th + 2) * Wp, Cin)
    flat = jnp.pad(flat, ((0, 0), (0, 0), (0, rows_in - (th + 2) * Wp), (0, 0)))

    w = jnp.pad(w_hwio.astype(jnp.float32).reshape(9, Cin, Cout),
                ((0, 0), (0, 0), (0, cpad - Cout)))                  # (9, Cin, cpad)
    b = jnp.pad(bias.astype(jnp.float32).reshape(1, Cout),
                ((0, 0), (0, cpad - Cout)))                          # (1, cpad)
    alpha_arr = jnp.asarray(alpha, jnp.float32).reshape(1)

    y_raw, st = pl.pallas_call(
        _make_conv_kernel(W, Wp, rows_out, cpad),
        out_shape=(jax.ShapeDtypeStruct((N, nT, rows_out, cpad), jnp.float32),
                   jax.ShapeDtypeStruct((N, nT, 8, cpad), jnp.float32)),
        grid=(N, nT),
        in_specs=[
            pl.BlockSpec(memory_space=pltpu.MemorySpace.SMEM),          # alpha scalar
            pl.BlockSpec((1, 1, rows_in, Cin), lambda n, t: (n, t, 0, 0)),
            pl.BlockSpec((9, Cin, cpad), lambda n, t: (0, 0, 0)),       # weights resident
            pl.BlockSpec((1, cpad), lambda n, t: (0, 0)),               # bias resident
        ],
        out_specs=(pl.BlockSpec((1, 1, rows_out, cpad), lambda n, t: (n, t, 0, 0)),
                   pl.BlockSpec((1, 1, 8, cpad), lambda n, t: (n, t, 0, 0))),
        compiler_params=pltpu.CompilerParams(
            dimension_semantics=("parallel", "parallel")),
    )(alpha_arr, flat, w, b)

    # Tiny (N, nT, Cout) partial-stat reduction in JAX keeps both grid axes parallel.
    ssum = jnp.sum(st[:, :, 0, :Cout], axis=(0, 1))
    ssq = jnp.sum(st[:, :, 1, :Cout], axis=(0, 1))
    meta = (N, nT, th, W, Cout)
    return y_raw, ssum, ssq, meta


# ---------------------------------------------------------------------------
# Kernel 2: elementwise affine y = x * scale + shift  (BatchNorm apply)
# ---------------------------------------------------------------------------
def _affine_kernel(x_ref, sc_ref, sh_ref, o_ref):
    o_ref[0, 0] = x_ref[0, 0] * sc_ref[...] + sh_ref[...]


def bn_affine_apply(y_raw, scale_pad, shift_pad):
    N, nT, rows, cpad = y_raw.shape
    return pl.pallas_call(
        _affine_kernel,
        out_shape=jax.ShapeDtypeStruct(y_raw.shape, jnp.float32),
        grid=(N, nT),
        in_specs=[pl.BlockSpec((1, 1, rows, cpad), lambda n, t: (n, t, 0, 0)),
                  pl.BlockSpec((1, cpad), lambda n, t: (0, 0)),
                  pl.BlockSpec((1, cpad), lambda n, t: (0, 0))],
        out_specs=pl.BlockSpec((1, 1, rows, cpad), lambda n, t: (n, t, 0, 0)),
        compiler_params=pltpu.CompilerParams(
            dimension_semantics=("parallel", "parallel")),
    )(y_raw, scale_pad, shift_pad)


# ---------------------------------------------------------------------------
# JAX glue helpers
# ---------------------------------------------------------------------------
def _bn_scale_shift(ssum, ssq, count, gamma, beta, eps=1e-5):
    mean = ssum / count
    var = jnp.maximum(ssq / count - mean * mean, 0.0)   # guard tiny negative cancellation
    # TODO(synk): for very large activation magnitudes a two-pass / Welford reduction
    # would be numerically safer than E[x^2]-E[x]^2.
    inv = jax.lax.rsqrt(var + eps)
    scale = gamma.astype(jnp.float32) * inv
    shift = beta.astype(jnp.float32) - mean * scale
    return scale, shift


def _raw_to_image(y_raw, N, nT, th, W, Cout):
    """(N, nT, TH*(W+2), cpad) -> (N, H, W, Cout): drop garbage cols & lane padding."""
    Wp = W + 2
    img = y_raw.reshape(N, nT, th, Wp, y_raw.shape[-1])[:, :, :, :W, :Cout]
    return img.reshape(N, nT * th, W, Cout)


# ---------------------------------------------------------------------------
# Full encoding_block forward (batch_norm=True branch, no dropout)
# ---------------------------------------------------------------------------
@jax.jit
def encoding_block_forward(x_nchw, params):
    N, Cin, H, W = x_nchw.shape
    Cout = params["w1"].shape[-1]
    cnt = float(N * H * W)

    x = jnp.transpose(x_nchw, (0, 2, 3, 1)).astype(jnp.float32)   # NCHW -> NHWC

    # --- block 1: conv1 + PReLU1 (+ fused BN1 statistics) ---
    y1_raw, s1, q1, meta1 = conv3x3_prelu_bnstats(
        x, params["w1"], params["b1"], params["alpha1"])
    scale1, shift1 = _bn_scale_shift(s1, q1, cnt, params["gamma1"], params["beta1"])

    # Fold BN1's affine into conv2 (conv is linear): w2' = w2 * scale1[ci],
    # b2' = b2 + sum_{kh,kw,ci} w2[kh,kw,ci,:] * shift1[ci].
    w2f = params["w2"].astype(jnp.float32) * scale1.reshape(1, 1, Cout, 1)
    b2f = params["b2"].astype(jnp.float32) + jnp.einsum(
        "hwio,i->o", params["w2"].astype(jnp.float32), shift1)

    # --- block 2: conv2(+folded BN1) + PReLU2 (+ fused BN2 statistics) ---
    y1_img = _raw_to_image(y1_raw, *meta1)                        # pre-BN1 activations
    y2_raw, s2, q2, meta2 = conv3x3_prelu_bnstats(
        y1_img, w2f, b2f, params["alpha2"])
    scale2, shift2 = _bn_scale_shift(s2, q2, cnt, params["gamma2"], params["beta2"])

    cpad = y2_raw.shape[-1]
    sc2 = jnp.pad(scale2.reshape(1, Cout), ((0, 0), (0, cpad - Cout)))
    sh2 = jnp.pad(shift2.reshape(1, Cout), ((0, 0), (0, cpad - Cout)))
    y2n_raw = bn_affine_apply(y2_raw, sc2, sh2)                   # BN2 apply (lane dense)

    out = _raw_to_image(y2n_raw, *meta2)                          # (N, H, W, Cout)
    return jnp.transpose(out, (0, 3, 1, 2))                       # NHWC -> NCHW


# ---------------------------------------------------------------------------
# Pure-JAX reference (for correctness check only)
# ---------------------------------------------------------------------------
def reference_forward(x_nchw, p):
    def conv_prelu(x, w_hwio, b, a):
        xp = jnp.pad(x, ((0, 0), (1, 1), (1, 1), (0, 0)), mode="reflect")
        y = jax.lax.conv_general_dilated(
            xp, w_hwio, (1, 1), "VALID",
            dimension_numbers=("NHWC", "HWIO", "NHWC"))
        y = y + b.reshape(1, 1, 1, -1)
        return jnp.where(y > 0, y, a.reshape(()) * y)

    def bn(x, g, bt, eps=1e-5):
        mean = x.mean((0, 1, 2), keepdims=True)
        var = x.var((0, 1, 2), keepdims=True)
        return (x - mean) / jnp.sqrt(var + eps) * g.reshape(1, 1, 1, -1) \
               + bt.reshape(1, 1, 1, -1)

    x = jnp.transpose(x_nchw, (0, 2, 3, 1)).astype(jnp.float32)
    y = conv_prelu(x, p["w1"], p["b1"], p["alpha1"])
    y = bn(y, p["gamma1"], p["beta1"])
    y = conv_prelu(y, p["w2"], p["b2"], p["alpha2"])
    y = bn(y, p["gamma2"], p["beta2"])
    return jnp.transpose(y, (0, 3, 1, 2))


if __name__ == "__main__":
    # Small shapes consistent with the module: NCHW input, in_size=4, out_size=8.
    N, Cin, Cout, H, W = 2, 4, 8, 16, 16

    root = jax.random.PRNGKey(0)
    kx, kw1, kb1, kg1, kbt1, kw2, kb2, kg2, kbt2 = jax.random.split(root, 9)

    x = jax.random.normal(kx, (N, Cin, H, W), jnp.float32)

    params = {
        # Conv weights in HWIO layout (3, 3, Cin, Cout); deterministic synthetic init.
        "w1": 0.2 * jax.random.normal(kw1, (3, 3, Cin, Cout), jnp.float32),
        "b1": 0.1 * jax.random.normal(kb1, (Cout,), jnp.float32),
        "alpha1": jnp.full((1,), 0.25, jnp.float32),      # PReLU default init
        "gamma1": 1.0 + 0.1 * jax.random.normal(kg1, (Cout,), jnp.float32),
        "beta1": 0.1 * jax.random.normal(kbt1, (Cout,), jnp.float32),
        "w2": 0.2 * jax.random.normal(kw2, (3, 3, Cout, Cout), jnp.float32),
        "b2": 0.1 * jax.random.normal(kb2, (Cout,), jnp.float32),
        "alpha2": jnp.full((1,), 0.25, jnp.float32),
        "gamma2": 1.0 + 0.1 * jax.random.normal(kg2, (Cout,), jnp.float32),
        "beta2": 0.1 * jax.random.normal(kbt2, (Cout,), jnp.float32),
    }

    out = jax.block_until_ready(encoding_block_forward(x, params))
    ref = jax.block_until_ready(reference_forward(x, params))

    assert out.shape == (N, Cout, H, W), out.shape
    assert jnp.allclose(out, ref, atol=5e-3, rtol=5e-3), \
        float(jnp.max(jnp.abs(out - ref)))

    print("KERNEL_OK")
</pallas_src>

<mosaic_0001>
module attributes {stable_mosaic.version = 11 : i64} {
  func.func @kernel(%arg0: i32, %arg1: i32, %arg2: memref<1xf32, #tpu.memory_space<smem>>, %arg3: memref<1x1x184x4xf32, #tpu.memory_space<vmem>>, %arg4: memref<9x4x128xf32, #tpu.memory_space<vmem>>, %arg5: memref<1x128xf32, #tpu.memory_space<vmem>>, %arg6: memref<1x1x144x128xf32, #tpu.memory_space<vmem>>, %arg7: memref<1x1x8x128xf32, #tpu.memory_space<vmem>>) attributes {dimension_semantics = [#tpu.dimension_semantics<parallel>, #tpu.dimension_semantics<parallel>], iteration_bounds = array<i64: 2, 2>, scalar_prefetch = 0 : i64, scratch_operands = 0 : i64, tpu.core_type = #tpu.core_type<tc>, window_params = [{transform_indices = @transform_0, window_bounds = array<i64: 1>}, {transform_indices = @transform_1, window_bounds = array<i64: 1, 1, 184, 4>}, {pipeline_mode = #tpu.pipeline_mode<synchronous>, transform_indices = @transform_2, window_bounds = array<i64: 9, 4, 128>}, {pipeline_mode = #tpu.pipeline_mode<synchronous>, transform_indices = @transform_3, window_bounds = array<i64: 1, 128>}, {transform_indices = @transform_4, window_bounds = array<i64: 1, 1, 144, 128>}, {transform_indices = @transform_5, window_bounds = array<i64: 1, 1, 8, 128>}]} {
    %c0 = arith.constant 0 : index
    %c0_0 = arith.constant 0 : index
    %c0_1 = arith.constant 0 : index
    %c0_2 = arith.constant 0 : index
    %0 = vector.load %arg3[%c0, %c0_0, %c0_1, %c0_2] : memref<1x1x184x4xf32, #tpu.memory_space<vmem>>, vector<1x1x184x4xf32>
    %1 = vector.shape_cast %0 : vector<1x1x184x4xf32> to vector<184x4xf32>
    %cst = arith.constant 0.000000e+00 : f32
    %2 = vector.broadcast %cst : f32 to vector<144x128xf32>
    %3 = vector.extract_strided_slice %1 {offsets = [0, 0], sizes = [144, 4], strides = [1, 1]} : vector<184x4xf32> to vector<144x4xf32>
    %c0_3 = arith.constant 0 : index
    %c0_4 = arith.constant 0 : index
    %c0_5 = arith.constant 0 : index
    %4 = vector.load %arg4[%c0_3, %c0_4, %c0_5] : memref<9x4x128xf32, #tpu.memory_space<vmem>>, vector<1x4x128xf32>
    %5 = vector.shape_cast %4 : vector<1x4x128xf32> to vector<4x128xf32>
    %cst_6 = arith.constant dense<0.000000e+00> : vector<144x128xf32>
    %6 = tpu.matmul %3, %5, %cst_6 {dimension_numbers = #tpu.dot_dimension_numbers<[1], [0], [0], [1], [0, 0, 1, 1], [], []>} : vector<144x4xf32>, vector<4x128xf32>, vector<144x128xf32> -> vector<144x128xf32>
    %7 = arith.addf %2, %6 : vector<144x128xf32>
    %8 = vector.extract_strided_slice %1 {offsets = [1, 0], sizes = [144, 4], strides = [1, 1]} : vector<184x4xf32> to vector<144x4xf32>
    %c1 = arith.constant 1 : index
    %c0_7 = arith.constant 0 : index
    %c0_8 = arith.constant 0 : index
    %9 = vector.load %arg4[%c1, %c0_7, %c0_8] : memref<9x4x128xf32, #tpu.memory_space<vmem>>, vector<1x4x128xf32>
    %10 = vector.shape_cast %9 : vector<1x4x128xf32> to vector<4x128xf32>
    %cst_9 = arith.constant dense<0.000000e+00> : vector<144x128xf32>
    %11 = tpu.matmul %8, %10, %cst_9 {dimension_numbers = #tpu.dot_dimension_numbers<[1], [0], [0], [1], [0, 0, 1, 1], [], []>} : vector<144x4xf32>, vector<4x128xf32>, vector<144x128xf32> -> vector<144x128xf32>
    %12 = arith.addf %7, %11 : vector<144x128xf32>
    %13 = vector.extract_strided_slice %1 {offsets = [2, 0], sizes = [144, 4], strides = [1, 1]} : vector<184x4xf32> to vector<144x4xf32>
    %c2 = arith.constant 2 : index
    %c0_10 = arith.constant 0 : index
    %c0_11 = arith.constant 0 : index
    %14 = vector.load %arg4[%c2, %c0_10, %c0_11] : memref<9x4x128xf32, #tpu.memory_space<vmem>>, vector<1x4x128xf32>
    %15 = vector.shape_cast %14 : vector<1x4x128xf32> to vector<4x128xf32>
    %cst_12 = arith.constant dense<0.000000e+00> : vector<144x128xf32>
    %16 = tpu.matmul %13, %15, %cst_12 {dimension_numbers = #tpu.dot_dimension_numbers<[1], [0], [0], [1], [0, 0, 1, 1], [], []>} : vector<144x4xf32>, vector<4x128xf32>, vector<144x128xf32> -> vector<144x128xf32>
    %17 = arith.addf %12, %16 : vector<144x128xf32>
    %18 = vector.extract_strided_slice %1 {offsets = [18, 0], sizes = [144, 4], strides = [1, 1]} : vector<184x4xf32> to vector<144x4xf32>
    %c3 = arith.constant 3 : index
    %c0_13 = arith.constant 0 : index
    %c0_14 = arith.constant 0 : index
    %19 = vector.load %arg4[%c3, %c0_13, %c0_14] : memref<9x4x128xf32, #tpu.memory_space<vmem>>, vector<1x4x128xf32>
    %20 = vector.shape_cast %19 : vector<1x4x128xf32> to vector<4x128xf32>
    %cst_15 = arith.constant dense<0.000000e+00> : vector<144x128xf32>
    %21 = tpu.matmul %18, %20, %cst_15 {dimension_numbers = #tpu.dot_dimension_numbers<[1], [0], [0], [1], [0, 0, 1, 1], [], []>} : vector<144x4xf32>, vector<4x128xf32>, vector<144x128xf32> -> vector<144x128xf32>
    %22 = arith.addf %17, %21 : vector<144x128xf32>
    %23 = vector.extract_strided_slice %1 {offsets = [19, 0], sizes = [144, 4], strides = [1, 1]} : vector<184x4xf32> to vector<144x4xf32>
    %c4 = arith.constant 4 : index
    %c0_16 = arith.constant 0 : index
    %c0_17 = arith.constant 0 : index
    %24 = vector.load %arg4[%c4, %c0_16, %c0_17] : memref<9x4x128xf32, #tpu.memory_space<vmem>>, vector<1x4x128xf32>
    %25 = vector.shape_cast %24 : vector<1x4x128xf32> to vector<4x128xf32>
    %cst_18 = arith.constant dense<0.000000e+00> : vector<144x128xf32>
    %26 = tpu.matmul %23, %25, %cst_18 {dimension_numbers = #tpu.dot_dimension_numbers<[1], [0], [0], [1], [0, 0, 1, 1], [], []>} : vector<144x4xf32>, vector<4x128xf32>, vector<144x128xf32> -> vector<144x128xf32>
    %27 = arith.addf %22, %26 : vector<144x128xf32>
    %28 = vector.extract_strided_slice %1 {offsets = [20, 0], sizes = [144, 4], strides = [1, 1]} : vector<184x4xf32> to vector<144x4xf32>
    %c5 = arith.constant 5 : index
    %c0_19 = arith.constant 0 : index
    %c0_20 = arith.constant 0 : index
    %29 = vector.load %arg4[%c5, %c0_19, %c0_20] : memref<9x4x128xf32, #tpu.memory_space<vmem>>, vector<1x4x128xf32>
    %30 = vector.shape_cast %29 : vector<1x4x128xf32> to vector<4x128xf32>
    %cst_21 = arith.constant dense<0.000000e+00> : vector<144x128xf32>
    %31 = tpu.matmul %28, %30, %cst_21 {dimension_numbers = #tpu.dot_dimension_numbers<[1], [0], [0], [1], [0, 0, 1, 1], [], []>} : vector<144x4xf32>, vector<4x128xf32>, vector<144x128xf32> -> vector<144x128xf32>
    %32 = arith.addf %27, %31 : vector<144x128xf32>
    %33 = vector.extract_strided_slice %1 {offsets = [36, 0], sizes = [144, 4], strides = [1, 1]} : vector<184x4xf32> to vector<144x4xf32>
    %c6 = arith.constant 6 : index
    %c0_22 = arith.constant 0 : index
    %c0_23 = arith.constant 0 : index
    %34 = vector.load %arg4[%c6, %c0_22, %c0_23] : memref<9x4x128xf32, #tpu.memory_space<vmem>>, vector<1x4x128xf32>
    %35 = vector.shape_cast %34 : vector<1x4x128xf32> to vector<4x128xf32>
    %cst_24 = arith.constant dense<0.000000e+00> : vector<144x128xf32>
    %36 = tpu.matmul %33, %35, %cst_24 {dimension_numbers = #tpu.dot_dimension_numbers<[1], [0], [0], [1], [0, 0, 1, 1], [], []>} : vector<144x4xf32>, vector<4x128xf32>, vector<144x128xf32> -> vector<144x128xf32>
    %37 = arith.addf %32, %36 : vector<144x128xf32>
    %38 = vector.extract_strided_slice %1 {offsets = [37, 0], sizes = [144, 4], strides = [1, 1]} : vector<184x4xf32> to vector<144x4xf32>
    %c7 = arith.constant 7 : index
    %c0_25 = arith.constant 0 : index
    %c0_26 = arith.constant 0 : index
    %39 = vector.load %arg4[%c7, %c0_25, %c0_26] : memref<9x4x128xf32, #tpu.memory_space<vmem>>, vector<1x4x128xf32>
    %40 = vector.shape_cast %39 : vector<1x4x128xf32> to vector<4x128xf32>
    %cst_27 = arith.constant dense<0.000000e+00> : vector<144x128xf32>
    %41 = tpu.matmul %38, %40, %cst_27 {dimension_numbers = #tpu.dot_dimension_numbers<[1], [0], [0], [1], [0, 0, 1, 1], [], []>} : vector<144x4xf32>, vector<4x128xf32>, vector<144x128xf32> -> vector<144x128xf32>
    %42 = arith.addf %37, %41 : vector<144x128xf32>
    %43 = vector.extract_strided_slice %1 {offsets = [38, 0], sizes = [144, 4], strides = [1, 1]} : vector<184x4xf32> to vector<144x4xf32>
    %c8 = arith.constant 8 : index
    %c0_28 = arith.constant 0 : index
    %c0_29 = arith.constant 0 : index
    %44 = vector.load %arg4[%c8, %c0_28, %c0_29] : memref<9x4x128xf32, #tpu.memory_space<vmem>>, vector<1x4x128xf32>
    %45 = vector.shape_cast %44 : vector<1x4x128xf32> to vector<4x128xf32>
    %cst_30 = arith.constant dense<0.000000e+00> : vector<144x128xf32>
    %46 = tpu.matmul %43, %45, %cst_30 {dimension_numbers = #tpu.dot_dimension_numbers<[1], [0], [0], [1], [0, 0, 1, 1], [], []>} : vector<144x4xf32>, vector<4x128xf32>, vector<144x128xf32> -> vector<144x128xf32>
    %47 = arith.addf %42, %46 : vector<144x128xf32>
    %c0_31 = arith.constant 0 : index
    %c0_32 = arith.constant 0 : index
    %48 = vector.load %arg5[%c0_31, %c0_32] : memref<1x128xf32, #tpu.memory_space<vmem>>, vector<1x128xf32>
    %49 = vector.broadcast %48 : vector<1x128xf32> to vector<144x128xf32>
    %50 = arith.addf %47, %49 : vector<144x128xf32>
    %c0_33 = arith.constant 0 : index
    %51 = memref.load %arg2[%c0_33] : memref<1xf32, #tpu.memory_space<smem>>
    %cst_34 = arith.constant 0.000000e+00 : f32
    %52 = vector.broadcast %cst_34 : f32 to vector<144x128xf32>
    %53 = arith.cmpf ogt, %50, %52 : vector<144x128xf32>
    %54 = vector.broadcast %51 : f32 to vector<144x128xf32>
    %55 = arith.mulf %54, %50 : vector<144x128xf32>
    %56 = arith.select %53, %50, %55 : vector<144x128xi1>, vector<144x128xf32>
    %c0_35 = arith.constant 0 : index
    %c0_36 = arith.constant 0 : index
    %c0_37 = arith.constant 0 : index
    %c0_38 = arith.constant 0 : index
    %57 = vector.load %arg6[%c0_35, %c0_36, %c0_37, %c0_38] : memref<1x1x144x128xf32, #tpu.memory_space<vmem>>, vector<1x1x144x128xf32>
    %58 = vector.shape_cast %57 : vector<1x1x144x128xf32> to vector<144x128xf32>
    %59 = vector.shape_cast %56 : vector<144x128xf32> to vector<1x1x144x128xf32>
    tpu.vector_store %arg6[%c0_35, %c0_36, %c0_37, %c0_38], %59 {strides = array<i32>} : memref<1x1x144x128xf32, #tpu.memory_space<vmem>>, vector<1x1x144x128xf32>,
    %60 = tpu.iota {dimensions = array<i32: 0>} : vector<144x1xi32>
    %c18_i32 = arith.constant 18 : i32
    %c0_i32 = arith.constant 0 : i32
    %61 = arith.cmpi eq, %c18_i32, %c0_i32 : i32
    %c1_i32 = arith.constant 1 : i32
    %62 = arith.select %61, %c1_i32, %c18_i32 : i32
    %63 = vector.broadcast %62 : i32 to vector<144x1xi32>
    %64 = arith.remsi %60, %63 : vector<144x1xi32>
    %c0_i32_39 = arith.constant 0 : i32
    %65 = vector.broadcast %c0_i32_39 : i32 to vector<144x1xi32>
    %66 = arith.cmpi ne, %64, %65 : vector<144x1xi32>
    %c0_i32_40 = arith.constant 0 : i32
    %67 = vector.broadcast %c0_i32_40 : i32 to vector<144x1xi32>
    %68 = arith.cmpi slt, %64, %67 : vector<144x1xi32>
    %c0_i32_41 = arith.constant 0 : i32
    %69 = arith.cmpi slt, %62, %c0_i32_41 : i32
    %70 = vector.broadcast %69 : i1 to vector<144x1xi1>
    %71 = vector.broadcast %70 : vector<144x1xi1> to vector<144x1xi1>
    %72 = arith.xori %68, %71 : vector<144x1xi1>
    %73 = arith.andi %72, %66 : vector<144x1xi1>
    %74 = vector.broadcast %62 : i32 to vector<144x1xi32>
    %75 = arith.addi %64, %74 : vector<144x1xi32>
    %76 = arith.select %73, %75, %64 : vector<144x1xi1>, vector<144x1xi32>
    %c16_i32 = arith.constant 16 : i32
    %77 = vector.broadcast %c16_i32 : i32 to vector<144x1xi32>
    %78 = arith.cmpi slt, %76, %77 : vector<144x1xi32>
    %cst_42 = arith.constant 0.000000e+00 : f32
    %79 = vector.shape_cast %78 : vector<144x1xi1> to vector<144x1xi1>
    %80 = vector.broadcast %79 : vector<144x1xi1> to vector<144x128xi1>
    %81 = vector.broadcast %cst_42 : f32 to vector<144x128xf32>
    %82 = arith.select %80, %56, %81 : vector<144x128xi1>, vector<144x128xf32>
    %cst_43 = arith.constant dense<0.000000e+00> : vector<128xf32>
    %83 = vector.multi_reduction <add>, %82, %cst_43 [0] : vector<144x128xf32> to vector<128xf32>
    %84 = vector.shape_cast %83 : vector<128xf32> to vector<1x128xf32>
    %85 = arith.mulf %82, %82 : vector<144x128xf32>
    %cst_44 = arith.constant dense<0.000000e+00> : vector<128xf32>
    %86 = vector.multi_reduction <add>, %85, %cst_44 [0] : vector<144x128xf32> to vector<128xf32>
    %87 = vector.shape_cast %86 : vector<128xf32> to vector<1x128xf32>
    %88 = tpu.iota {dimensions = array<i32: 0>} : vector<8x1xi32>
    %c0_i32_45 = arith.constant 0 : i32
    %89 = vector.broadcast %c0_i32_45 : i32 to vector<8x1xi32>
    %90 = arith.cmpi eq, %88, %89 : vector<8x1xi32>
    %cst_46 = arith.constant 0.000000e+00 : f32
    %91 = vector.shape_cast %90 : vector<8x1xi1> to vector<8x1xi1>
    %92 = vector.broadcast %91 : vector<8x1xi1> to vector<8x128xi1>
    %93 = vector.shape_cast %84 : vector<1x128xf32> to vector<1x128xf32>
    %94 = vector.broadcast %93 : vector<1x128xf32> to vector<8x128xf32>
    %95 = vector.broadcast %cst_46 : f32 to vector<8x128xf32>
    %96 = arith.select %92, %94, %95 : vector<8x128xi1>, vector<8x128xf32>
    %c1_i32_47 = arith.constant 1 : i32
    %97 = vector.broadcast %c1_i32_47 : i32 to vector<8x1xi32>
    %98 = arith.cmpi eq, %88, %97 : vector<8x1xi32>
    %cst_48 = arith.constant 0.000000e+00 : f32
    %99 = vector.shape_cast %98 : vector<8x1xi1> to vector<8x1xi1>
    %100 = vector.broadcast %99 : vector<8x1xi1> to vector<8x128xi1>
    %101 = vector.shape_cast %87 : vector<1x128xf32> to vector<1x128xf32>
    %102 = vector.broadcast %101 : vector<1x128xf32> to vector<8x128xf32>
    %103 = vector.broadcast %cst_48 : f32 to vector<8x128xf32>
    %104 = arith.select %100, %102, %103 : vector<8x128xi1>, vector<8x128xf32>
    %105 = arith.addf %96, %104 : vector<8x128xf32>
    %c0_49 = arith.constant 0 : index
    %c0_50 = arith.constant 0 : index
    %c0_51 = arith.constant 0 : index
    %c0_52 = arith.constant 0 : index
    %106 = vector.load %arg7[%c0_49, %c0_50, %c0_51, %c0_52] : memref<1x1x8x128xf32, #tpu.memory_space<vmem>>, vector<1x1x8x128xf32>
    %107 = vector.shape_cast %106 : vector<1x1x8x128xf32> to vector<8x128xf32>
    %108 = vector.shape_cast %105 : vector<8x128xf32> to vector<1x1x8x128xf32>
    tpu.vector_store %arg7[%c0_49, %c0_50, %c0_51, %c0_52], %108 {strides = array<i32>} : memref<1x1x8x128xf32, #tpu.memory_space<vmem>>, vector<1x1x8x128xf32>,
    return
  }
  func.func @transform_0(%arg0: i32, %arg1: i32) -> i32 {
    %c0_i32 = arith.constant 0 : i32
    %c0_i32_0 = arith.constant 0 : i32
    return %c0_i32 : i32
  }
  func.func @transform_1(%arg0: i32, %arg1: i32) -> (i32, i32, i32, i32) {
    %c0_i32 = arith.constant 0 : i32
    %c0_i32_0 = arith.constant 0 : i32
    %c0_i32_1 = arith.constant 0 : i32
    return %arg0, %arg1, %c0_i32, %c0_i32_0 : i32, i32, i32, i32
  }
  func.func @transform_2(%arg0: i32, %arg1: i32) -> (i32, i32, i32) {
    %c0_i32 = arith.constant 0 : i32
    %c0_i32_0 = arith.constant 0 : i32
    %c0_i32_1 = arith.constant 0 : i32
    %c0_i32_2 = arith.constant 0 : i32
    return %c0_i32, %c0_i32_0, %c0_i32_1 : i32, i32, i32
  }
  func.func @transform_3(%arg0: i32, %arg1: i32) -> (i32, i32) {
    %c0_i32 = arith.constant 0 : i32
    %c0_i32_0 = arith.constant 0 : i32
    %c0_i32_1 = arith.constant 0 : i32
    return %c0_i32, %c0_i32_0 : i32, i32
  }
  func.func @transform_4(%arg0: i32, %arg1: i32) -> (i32, i32, i32, i32) {
    %c0_i32 = arith.constant 0 : i32
    %c0_i32_0 = arith.constant 0 : i32
    %c0_i32_1 = arith.constant 0 : i32
    return %arg0, %arg1, %c0_i32, %c0_i32_0 : i32, i32, i32, i32
  }
  func.func @transform_5(%arg0: i32, %arg1: i32) -> (i32, i32, i32, i32) {
    %c0_i32 = arith.constant 0 : i32
    %c0_i32_0 = arith.constant 0 : i32
    %c0_i32_1 = arith.constant 0 : i32
    return %arg0, %arg1, %c0_i32, %c0_i32_0 : i32, i32, i32, i32
  }
}

module attributes {stable_mosaic.version = 11 : i64} {
  func.func @_affine_kernel(%arg0: i32, %arg1: i32, %arg2: memref<1x1x144x128xf32, #tpu.memory_space<vmem>>, %arg3: memref<1x128xf32, #tpu.memory_space<vmem>>, %arg4: memref<1x128xf32, #tpu.memory_space<vmem>>, %arg5: memref<1x1x144x128xf32, #tpu.memory_space<vmem>>) attributes {dimension_semantics = [#tpu.dimension_semantics<parallel>, #tpu.dimension_semantics<parallel>], iteration_bounds = array<i64: 2, 2>, scalar_prefetch = 0 : i64, scratch_operands = 0 : i64, tpu.core_type = #tpu.core_type<tc>, window_params = [{transform_indices = @transform_0, window_bounds = array<i64: 1, 1, 144, 128>}, {pipeline_mode = #tpu.pipeline_mode<synchronous>, transform_indices = @transform_1, window_bounds = array<i64: 1, 128>}, {pipeline_mode = #tpu.pipeline_mode<synchronous>, transform_indices = @transform_2, window_bounds = array<i64: 1, 128>}, {transform_indices = @transform_3, window_bounds = array<i64: 1, 1, 144, 128>}]} {
    %c0 = arith.constant 0 : index
    %c0_0 = arith.constant 0 : index
    %c0_1 = arith.constant 0 : index
    %c0_2 = arith.constant 0 : index
    %0 = vector.load %arg2[%c0, %c0_0, %c0_1, %c0_2] : memref<1x1x144x128xf32, #tpu.memory_space<vmem>>, vector<1x1x144x128xf32>
    %1 = vector.shape_cast %0 : vector<1x1x144x128xf32> to vector<144x128xf32>
    %c0_3 = arith.constant 0 : index
    %c0_4 = arith.constant 0 : index
    %2 = vector.load %arg3[%c0_3, %c0_4] : memref<1x128xf32, #tpu.memory_space<vmem>>, vector<1x128xf32>
    %3 = vector.broadcast %2 : vector<1x128xf32> to vector<144x128xf32>
    %4 = arith.mulf %1, %3 : vector<144x128xf32>
    %c0_5 = arith.constant 0 : index
    %c0_6 = arith.constant 0 : index
    %5 = vector.load %arg4[%c0_5, %c0_6] : memref<1x128xf32, #tpu.memory_space<vmem>>, vector<1x128xf32>
    %6 = vector.broadcast %5 : vector<1x128xf32> to vector<144x128xf32>
    %7 = arith.addf %4, %6 : vector<144x128xf32>
    %c0_7 = arith.constant 0 : index
    %c0_8 = arith.constant 0 : index
    %c0_9 = arith.constant 0 : index
    %c0_10 = arith.constant 0 : index
    %8 = vector.load %arg5[%c0_7, %c0_8, %c0_9, %c0_10] : memref<1x1x144x128xf32, #tpu.memory_space<vmem>>, vector<1x1x144x128xf32>
    %9 = vector.shape_cast %8 : vector<1x1x144x128xf32> to vector<144x128xf32>
    %10 = vector.shape_cast %7 : vector<144x128xf32> to vector<1x1x144x128xf32>
    tpu.vector_store %arg5[%c0_7, %c0_8, %c0_9, %c0_10], %10 {strides = array<i32>} : memref<1x1x144x128xf32, #tpu.memory_space<vmem>>, vector<1x1x144x128xf32>,
    return
  }
  func.func @transform_0(%arg0: i32, %arg1: i32) -> (i32, i32, i32, i32) {
    %c0_i32 = arith.constant 0 : i32
    %c0_i32_0 = arith.constant 0 : i32
    %c0_i32_1 = arith.constant 0 : i32
    return %arg0, %arg1, %c0_i32, %c0_i32_0 : i32, i32, i32, i32
  }
  func.func @transform_1(%arg0: i32, %arg1: i32) -> (i32, i32) {
    %c0_i32 = arith.constant 0 : i32
    %c0_i32_0 = arith.constant 0 : i32
    %c0_i32_1 = arith.constant 0 : i32
    return %c0_i32, %c0_i32_0 : i32, i32
  }
  func.func @transform_2(%arg0: i32, %arg1: i32) -> (i32, i32) {
    %c0_i32 = arith.constant 0 : i32
    %c0_i32_0 = arith.constant 0 : i32
    %c0_i32_1 = arith.constant 0 : i32
    return %c0_i32, %c0_i32_0 : i32, i32
  }
  func.func @transform_3(%arg0: i32, %arg1: i32) -> (i32, i32, i32, i32) {
    %c0_i32 = arith.constant 0 : i32
    %c0_i32_0 = arith.constant 0 : i32
    %c0_i32_1 = arith.constant 0 : i32
    return %arg0, %arg1, %c0_i32, %c0_i32_0 : i32, i32, i32, i32
  }
}

module attributes {stable_mosaic.version = 11 : i64} {
  func.func @kernel(%arg0: i32, %arg1: i32, %arg2: memref<1xf32, #tpu.memory_space<smem>>, %arg3: memref<1x1x184x8xf32, #tpu.memory_space<vmem>>, %arg4: memref<9x8x128xf32, #tpu.memory_space<vmem>>, %arg5: memref<1x128xf32, #tpu.memory_space<vmem>>, %arg6: memref<1x1x144x128xf32, #tpu.memory_space<vmem>>, %arg7: memref<1x1x8x128xf32, #tpu.memory_space<vmem>>) attributes {dimension_semantics = [#tpu.dimension_semantics<parallel>, #tpu.dimension_semantics<parallel>], iteration_bounds = array<i64: 2, 2>, scalar_prefetch = 0 : i64, scratch_operands = 0 : i64, tpu.core_type = #tpu.core_type<tc>, window_params = [{transform_indices = @transform_0, window_bounds = array<i64: 1>}, {transform_indices = @transform_1, window_bounds = array<i64: 1, 1, 184, 8>}, {pipeline_mode = #tpu.pipeline_mode<synchronous>, transform_indices = @transform_2, window_bounds = array<i64: 9, 8, 128>}, {pipeline_mode = #tpu.pipeline_mode<synchronous>, transform_indices = @transform_3, window_bounds = array<i64: 1, 128>}, {transform_indices = @transform_4, window_bounds = array<i64: 1, 1, 144, 128>}, {transform_indices = @transform_5, window_bounds = array<i64: 1, 1, 8, 128>}]} {
    %c0 = arith.constant 0 : index
    %c0_0 = arith.constant 0 : index
    %c0_1 = arith.constant 0 : index
    %c0_2 = arith.constant 0 : index
    %0 = vector.load %arg3[%c0, %c0_0, %c0_1, %c0_2] : memref<1x1x184x8xf32, #tpu.memory_space<vmem>>, vector<1x1x184x8xf32>
    %1 = vector.shape_cast %0 : vector<1x1x184x8xf32> to vector<184x8xf32>
    %cst = arith.constant 0.000000e+00 : f32
    %2 = vector.broadcast %cst : f32 to vector<144x128xf32>
    %3 = vector.extract_strided_slice %1 {offsets = [0, 0], sizes = [144, 8], strides = [1, 1]} : vector<184x8xf32> to vector<144x8xf32>
    %c0_3 = arith.constant 0 : index
    %c0_4 = arith.constant 0 : index
    %c0_5 = arith.constant 0 : index
    %4 = vector.load %arg4[%c0_3, %c0_4, %c0_5] : memref<9x8x128xf32, #tpu.memory_space<vmem>>, vector<1x8x128xf32>
    %5 = vector.shape_cast %4 : vector<1x8x128xf32> to vector<8x128xf32>
    %cst_6 = arith.constant dense<0.000000e+00> : vector<144x128xf32>
    %6 = tpu.matmul %3, %5, %cst_6 {dimension_numbers = #tpu.dot_dimension_numbers<[1], [0], [0], [1], [0, 0, 1, 1], [], []>} : vector<144x8xf32>, vector<8x128xf32>, vector<144x128xf32> -> vector<144x128xf32>
    %7 = arith.addf %2, %6 : vector<144x128xf32>
    %8 = vector.extract_strided_slice %1 {offsets = [1, 0], sizes = [144, 8], strides = [1, 1]} : vector<184x8xf32> to vector<144x8xf32>
    %c1 = arith.constant 1 : index
    %c0_7 = arith.constant 0 : index
    %c0_8 = arith.constant 0 : index
    %9 = vector.load %arg4[%c1, %c0_7, %c0_8] : memref<9x8x128xf32, #tpu.memory_space<vmem>>, vector<1x8x128xf32>
    %10 = vector.shape_cast %9 : vector<1x8x128xf32> to vector<8x128xf32>
    %cst_9 = arith.constant dense<0.000000e+00> : vector<144x128xf32>
    %11 = tpu.matmul %8, %10, %cst_9 {dimension_numbers = #tpu.dot_dimension_numbers<[1], [0], [0], [1], [0, 0, 1, 1], [], []>} : vector<144x8xf32>, vector<8x128xf32>, vector<144x128xf32> -> vector<144x128xf32>
    %12 = arith.addf %7, %11 : vector<144x128xf32>
    %13 = vector.extract_strided_slice %1 {offsets = [2, 0], sizes = [144, 8], strides = [1, 1]} : vector<184x8xf32> to vector<144x8xf32>
    %c2 = arith.constant 2 : index
    %c0_10 = arith.constant 0 : index
    %c0_11 = arith.constant 0 : index
    %14 = vector.load %arg4[%c2, %c0_10, %c0_11] : memref<9x8x128xf32, #tpu.memory_space<vmem>>, vector<1x8x128xf32>
    %15 = vector.shape_cast %14 : vector<1x8x128xf32> to vector<8x128xf32>
    %cst_12 = arith.constant dense<0.000000e+00> : vector<144x128xf32>
    %16 = tpu.matmul %13, %15, %cst_12 {dimension_numbers = #tpu.dot_dimension_numbers<[1], [0], [0], [1], [0, 0, 1, 1], [], []>} : vector<144x8xf32>, vector<8x128xf32>, vector<144x128xf32> -> vector<144x128xf32>
    %17 = arith.addf %12, %16 : vector<144x128xf32>
    %18 = vector.extract_strided_slice %1 {offsets = [18, 0], sizes = [144, 8], strides = [1, 1]} : vector<184x8xf32> to vector<144x8xf32>
    %c3 = arith.constant 3 : index
    %c0_13 = arith.constant 0 : index
    %c0_14 = arith.constant 0 : index
    %19 = vector.load %arg4[%c3, %c0_13, %c0_14] : memref<9x8x128xf32, #tpu.memory_space<vmem>>, vector<1x8x128xf32>
    %20 = vector.shape_cast %19 : vector<1x8x128xf32> to vector<8x128xf32>
    %cst_15 = arith.constant dense<0.000000e+00> : vector<144x128xf32>
    %21 = tpu.matmul %18, %20, %cst_15 {dimension_numbers = #tpu.dot_dimension_numbers<[1], [0], [0], [1], [0, 0, 1, 1], [], []>} : vector<144x8xf32>, vector<8x128xf32>, vector<144x128xf32> -> vector<144x128xf32>
    %22 = arith.addf %17, %21 : vector<144x128xf32>
    %23 = vector.extract_strided_slice %1 {offsets = [19, 0], sizes = [144, 8], strides = [1, 1]} : vector<184x8xf32> to vector<144x8xf32>
    %c4 = arith.constant 4 : index
    %c0_16 = arith.constant 0 : index
    %c0_17 = arith.constant 0 : index
    %24 = vector.load %arg4[%c4, %c0_16, %c0_17] : memref<9x8x128xf32, #tpu.memory_space<vmem>>, vector<1x8x128xf32>
    %25 = vector.shape_cast %24 : vector<1x8x128xf32> to vector<8x128xf32>
    %cst_18 = arith.constant dense<0.000000e+00> : vector<144x128xf32>
    %26 = tpu.matmul %23, %25, %cst_18 {dimension_numbers = #tpu.dot_dimension_numbers<[1], [0], [0], [1], [0, 0, 1, 1], [], []>} : vector<144x8xf32>, vector<8x128xf32>, vector<144x128xf32> -> vector<144x128xf32>
    %27 = arith.addf %22, %26 : vector<144x128xf32>
    %28 = vector.extract_strided_slice %1 {offsets = [20, 0], sizes = [144, 8], strides = [1, 1]} : vector<184x8xf32> to vector<144x8xf32>
    %c5 = arith.constant 5 : index
    %c0_19 = arith.constant 0 : index
    %c0_20 = arith.constant 0 : index
    %29 = vector.load %arg4[%c5, %c0_19, %c0_20] : memref<9x8x128xf32, #tpu.memory_space<vmem>>, vector<1x8x128xf32>
    %30 = vector.shape_cast %29 : vector<1x8x128xf32> to vector<8x128xf32>
    %cst_21 = arith.constant dense<0.000000e+00> : vector<144x128xf32>
    %31 = tpu.matmul %28, %30, %cst_21 {dimension_numbers = #tpu.dot_dimension_numbers<[1], [0], [0], [1], [0, 0, 1, 1], [], []>} : vector<144x8xf32>, vector<8x128xf32>, vector<144x128xf32> -> vector<144x128xf32>
    %32 = arith.addf %27, %31 : vector<144x128xf32>
    %33 = vector.extract_strided_slice %1 {offsets = [36, 0], sizes = [144, 8], strides = [1, 1]} : vector<184x8xf32> to vector<144x8xf32>
    %c6 = arith.constant 6 : index
    %c0_22 = arith.constant 0 : index
    %c0_23 = arith.constant 0 : index
    %34 = vector.load %arg4[%c6, %c0_22, %c0_23] : memref<9x8x128xf32, #tpu.memory_space<vmem>>, vector<1x8x128xf32>
    %35 = vector.shape_cast %34 : vector<1x8x128xf32> to vector<8x128xf32>
    %cst_24 = arith.constant dense<0.000000e+00> : vector<144x128xf32>
    %36 = tpu.matmul %33, %35, %cst_24 {dimension_numbers = #tpu.dot_dimension_numbers<[1], [0], [0], [1], [0, 0, 1, 1], [], []>} : vector<144x8xf32>, vector<8x128xf32>, vector<144x128xf32> -> vector<144x128xf32>
    %37 = arith.addf %32, %36 : vector<144x128xf32>
    %38 = vector.extract_strided_slice %1 {offsets = [37, 0], sizes = [144, 8], strides = [1, 1]} : vector<184x8xf32> to vector<144x8xf32>
    %c7 = arith.constant 7 : index
    %c0_25 = arith.constant 0 : index
    %c0_26 = arith.constant 0 : index
    %39 = vector.load %arg4[%c7, %c0_25, %c0_26] : memref<9x8x128xf32, #tpu.memory_space<vmem>>, vector<1x8x128xf32>
    %40 = vector.shape_cast %39 : vector<1x8x128xf32> to vector<8x128xf32>
    %cst_27 = arith.constant dense<0.000000e+00> : vector<144x128xf32>
    %41 = tpu.matmul %38, %40, %cst_27 {dimension_numbers = #tpu.dot_dimension_numbers<[1], [0], [0], [1], [0, 0, 1, 1], [], []>} : vector<144x8xf32>, vector<8x128xf32>, vector<144x128xf32> -> vector<144x128xf32>
    %42 = arith.addf %37, %41 : vector<144x128xf32>
    %43 = vector.extract_strided_slice %1 {offsets = [38, 0], sizes = [144, 8], strides = [1, 1]} : vector<184x8xf32> to vector<144x8xf32>
    %c8 = arith.constant 8 : index
    %c0_28 = arith.constant 0 : index
    %c0_29 = arith.constant 0 : index
    %44 = vector.load %arg4[%c8, %c0_28, %c0_29] : memref<9x8x128xf32, #tpu.memory_space<vmem>>, vector<1x8x128xf32>
    %45 = vector.shape_cast %44 : vector<1x8x128xf32> to vector<8x128xf32>
    %cst_30 = arith.constant dense<0.000000e+00> : vector<144x128xf32>
    %46 = tpu.matmul %43, %45, %cst_30 {dimension_numbers = #tpu.dot_dimension_numbers<[1], [0], [0], [1], [0, 0, 1, 1], [], []>} : vector<144x8xf32>, vector<8x128xf32>, vector<144x128xf32> -> vector<144x128xf32>
    %47 = arith.addf %42, %46 : vector<144x128xf32>
    %c0_31 = arith.constant 0 : index
    %c0_32 = arith.constant 0 : index
    %48 = vector.load %arg5[%c0_31, %c0_32] : memref<1x128xf32, #tpu.memory_space<vmem>>, vector<1x128xf32>
    %49 = vector.broadcast %48 : vector<1x128xf32> to vector<144x128xf32>
    %50 = arith.addf %47, %49 : vector<144x128xf32>
    %c0_33 = arith.constant 0 : index
    %51 = memref.load %arg2[%c0_33] : memref<1xf32, #tpu.memory_space<smem>>
    %cst_34 = arith.constant 0.000000e+00 : f32
    %52 = vector.broadcast %cst_34 : f32 to vector<144x128xf32>
    %53 = arith.cmpf ogt, %50, %52 : vector<144x128xf32>
    %54 = vector.broadcast %51 : f32 to vector<144x128xf32>
    %55 = arith.mulf %54, %50 : vector<144x128xf32>
    %56 = arith.select %53, %50, %55 : vector<144x128xi1>, vector<144x128xf32>
    %c0_35 = arith.constant 0 : index
    %c0_36 = arith.constant 0 : index
    %c0_37 = arith.constant 0 : index
    %c0_38 = arith.constant 0 : index
    %57 = vector.load %arg6[%c0_35, %c0_36, %c0_37, %c0_38] : memref<1x1x144x128xf32, #tpu.memory_space<vmem>>, vector<1x1x144x128xf32>
    %58 = vector.shape_cast %57 : vector<1x1x144x128xf32> to vector<144x128xf32>
    %59 = vector.shape_cast %56 : vector<144x128xf32> to vector<1x1x144x128xf32>
    tpu.vector_store %arg6[%c0_35, %c0_36, %c0_37, %c0_38], %59 {strides = array<i32>} : memref<1x1x144x128xf32, #tpu.memory_space<vmem>>, vector<1x1x144x128xf32>,
    %60 = tpu.iota {dimensions = array<i32: 0>} : vector<144x1xi32>
    %c18_i32 = arith.constant 18 : i32
    %c0_i32 = arith.constant 0 : i32
    %61 = arith.cmpi eq, %c18_i32, %c0_i32 : i32
    %c1_i32 = arith.constant 1 : i32
    %62 = arith.select %61, %c1_i32, %c18_i32 : i32
    %63 = vector.broadcast %62 : i32 to vector<144x1xi32>
    %64 = arith.remsi %60, %63 : vector<144x1xi32>
    %c0_i32_39 = arith.constant 0 : i32
    %65 = vector.broadcast %c0_i32_39 : i32 to vector<144x1xi32>
    %66 = arith.cmpi ne, %64, %65 : vector<144x1xi32>
    %c0_i32_40 = arith.constant 0 : i32
    %67 = vector.broadcast %c0_i32_40 : i32 to vector<144x1xi32>
    %68 = arith.cmpi slt, %64, %67 : vector<144x1xi32>
    %c0_i32_41 = arith.constant 0 : i32
    %69 = arith.cmpi slt, %62, %c0_i32_41 : i32
    %70 = vector.broadcast %69 : i1 to vector<144x1xi1>
    %71 = vector.broadcast %70 : vector<144x1xi1> to vector<144x1xi1>
    %72 = arith.xori %68, %71 : vector<144x1xi1>
    %73 = arith.andi %72, %66 : vector<144x1xi1>
    %74 = vector.broadcast %62 : i32 to vector<144x1xi32>
    %75 = arith.addi %64, %74 : vector<144x1xi32>
    %76 = arith.select %73, %75, %64 : vector<144x1xi1>, vector<144x1xi32>
    %c16_i32 = arith.constant 16 : i32
    %77 = vector.broadcast %c16_i32 : i32 to vector<144x1xi32>
    %78 = arith.cmpi slt, %76, %77 : vector<144x1xi32>
    %cst_42 = arith.constant 0.000000e+00 : f32
    %79 = vector.shape_cast %78 : vector<144x1xi1> to vector<144x1xi1>
    %80 = vector.broadcast %79 : vector<144x1xi1> to vector<144x128xi1>
    %81 = vector.broadcast %cst_42 : f32 to vector<144x128xf32>
    %82 = arith.select %80, %56, %81 : vector<144x128xi1>, vector<144x128xf32>
    %cst_43 = arith.constant dense<0.000000e+00> : vector<128xf32>
    %83 = vector.multi_reduction <add>, %82, %cst_43 [0] : vector<144x128xf32> to vector<128xf32>
    %84 = vector.shape_cast %83 : vector<128xf32> to vector<1x128xf32>
    %85 = arith.mulf %82, %82 : vector<144x128xf32>
    %cst_44 = arith.constant dense<0.000000e+00> : vector<128xf32>
    %86 = vector.multi_reduction <add>, %85, %cst_44 [0] : vector<144x128xf32> to vector<128xf32>
    %87 = vector.shape_cast %86 : vector<128xf32> to vector<1x128xf32>
    %88 = tpu.iota {dimensions = array<i32: 0>} : vector<8x1xi32>
    %c0_i32_45 = arith.constant 0 : i32
    %89 = vector.broadcast %c0_i32_45 : i32 to vector<8x1xi32>
    %90 = arith.cmpi eq, %88, %89 : vector<8x1xi32>
    %cst_46 = arith.constant 0.000000e+00 : f32
    %91 = vector.shape_cast %90 : vector<8x1xi1> to vector<8x1xi1>
    %92 = vector.broadcast %91 : vector<8x1xi1> to vector<8x128xi1>
    %93 = vector.shape_cast %84 : vector<1x128xf32> to vector<1x128xf32>
    %94 = vector.broadcast %93 : vector<1x128xf32> to vector<8x128xf32>
    %95 = vector.broadcast %cst_46 : f32 to vector<8x128xf32>
    %96 = arith.select %92, %94, %95 : vector<8x128xi1>, vector<8x128xf32>
    %c1_i32_47 = arith.constant 1 : i32
    %97 = vector.broadcast %c1_i32_47 : i32 to vector<8x1xi32>
    %98 = arith.cmpi eq, %88, %97 : vector<8x1xi32>
    %cst_48 = arith.constant 0.000000e+00 : f32
    %99 = vector.shape_cast %98 : vector<8x1xi1> to vector<8x1xi1>
    %100 = vector.broadcast %99 : vector<8x1xi1> to vector<8x128xi1>
    %101 = vector.shape_cast %87 : vector<1x128xf32> to vector<1x128xf32>
    %102 = vector.broadcast %101 : vector<1x128xf32> to vector<8x128xf32>
    %103 = vector.broadcast %cst_48 : f32 to vector<8x128xf32>
    %104 = arith.select %100, %102, %103 : vector<8x128xi1>, vector<8x128xf32>
    %105 = arith.addf %96, %104 : vector<8x128xf32>
    %c0_49 = arith.constant 0 : index
    %c0_50 = arith.constant 0 : index
    %c0_51 = arith.constant 0 : index
    %c0_52 = arith.constant 0 : index
    %106 = vector.load %arg7[%c0_49, %c0_50, %c0_51, %c0_52] : memref<1x1x8x128xf32, #tpu.memory_space<vmem>>, vector<1x1x8x128xf32>
    %107 = vector.shape_cast %106 : vector<1x1x8x128xf32> to vector<8x128xf32>
    %108 = vector.shape_cast %105 : vector<8x128xf32> to vector<1x1x8x128xf32>
    tpu.vector_store %arg7[%c0_49, %c0_50, %c0_51, %c0_52], %108 {strides = array<i32>} : memref<1x1x8x128xf32, #tpu.memory_space<vmem>>, vector<1x1x8x128xf32>,
    return
  }
  func.func @transform_0(%arg0: i32, %arg1: i32) -> i32 {
    %c0_i32 = arith.constant 0 : i32
    %c0_i32_0 = arith.constant 0 : i32
    return %c0_i32 : i32
  }
  func.func @transform_1(%arg0: i32, %arg1: i32) -> (i32, i32, i32, i32) {
    %c0_i32 = arith.constant 0 : i32
    %c0_i32_0 = arith.constant 0 : i32
    %c0_i32_1 = arith.constant 0 : i32
    return %arg0, %arg1, %c0_i32, %c0_i32_0 : i32, i32, i32, i32
  }
  func.func @transform_2(%arg0: i32, %arg1: i32) -> (i32, i32, i32) {
    %c0_i32 = arith.constant 0 : i32
    %c0_i32_0 = arith.constant 0 : i32
    %c0_i32_1 = arith.constant 0 : i32
    %c0_i32_2 = arith.constant 0 : i32
    return %c0_i32, %c0_i32_0, %c0_i32_1 : i32, i32, i32
  }
  func.func @transform_3(%arg0: i32, %arg1: i32) -> (i32, i32) {
    %c0_i32 = arith.constant 0 : i32
    %c0_i32_0 = arith.constant 0 : i32
    %c0_i32_1 = arith.constant 0 : i32
    return %c0_i32, %c0_i32_0 : i32, i32
  }
  func.func @transform_4(%arg0: i32, %arg1: i32) -> (i32, i32, i32, i32) {
    %c0_i32 = arith.constant 0 : i32
    %c0_i32_0 = arith.constant 0 : i32
    %c0_i32_1 = arith.constant 0 : i32
    return %arg0, %arg1, %c0_i32, %c0_i32_0 : i32, i32, i32, i32
  }
  func.func @transform_5(%arg0: i32, %arg1: i32) -> (i32, i32, i32, i32) {
    %c0_i32 = arith.constant 0 : i32
    %c0_i32_0 = arith.constant 0 : i32
    %c0_i32_1 = arith.constant 0 : i32
    return %arg0, %arg1, %c0_i32, %c0_i32_0 : i32, i32, i32, i32
  }
}

</mosaic_0001>

<llo_original>
// kernel: encoding_block_forward.3
$region0: #{encoding_block_forward.3}
  #allocation0 [shape = 'u32[]', space=smem, size = 0x4, offset = 0x4, fixed_abs, tag = 'smem constant byte address 0x4 - core index']
  #allocation1 [shape = 'u32[144,128]{1,0:T(1,128)}', space=vmem, size = 0x12000, scoped, tag = 'internal scratch']
  #allocation2 [shape = 'f32[1]{0:T(128)S(6)}', space=smem, size = 0x200, scoped, tag = 'scoped memory for encoding_block_forward.3']
  %s0 = inlined_call_operand.<no memory space> [shape: f32[1], index: 0, kind: input, shape index: {}]
  %s1 = inlined_call_operand.vmem [shape: f32[2,2,184,4], index: 1, kind: input, shape index: {}]
  %s2 = inlined_call_operand.vmem [shape: f32[9,4,128], index: 2, kind: input, shape index: {}]
  %s3 = inlined_call_operand.vmem [shape: f32[1,128], index: 3, kind: input, shape index: {}]
  %s4 = inlined_call_operand.vmem [shape: f32[2,2,144,128], index: 4, kind: output, shape index: {0}]
  %s5 = inlined_call_operand.vmem [shape: f32[2,2,8,128], index: 5, kind: output, shape index: {1}]
  %6 = xla_tuple %s4, %s5
  %s7 = sld [smem:[#allocation0]]
  $region57: #{encoding_block_forward.3} parent=0
    _
  %s9 = ssub.s32 1, %s7
  %s10 = scalar_select 0, %s9, %s7
  %11 = sst [smem:[#allocation2]] %s0
  loop: start=0, step=1, limit=6
  $region2: #{encoding_block_forward.3} parent=0 // loop_pre_header
    _
  $region3: #{encoding_block_forward.3} parent=0 // loop_header
    %s13 = sphi 0, %s17
    %p14 = scmp.ge.s32.totalorder %s13, 6
    %s20 = sphi 0, %s32
    %s21 = sphi 0, %s28
    %s22 = sphi 0, %s20
    %s23 = sphi 0, %s21
    %s24 = sphi 0, %s22
    %s25 = sphi 0, %s23
    %s33 = sphi 0, %s33
    %s35 = sphi 0, %s33
    %s36 = sphi 0, %s35
    %s50 = sphi 0, %s36
    %s58 = sphi 0, %s60
    %s61 = sphi 0, %s58
    %s62 = sphi 0, %s61
    %s78 = sphi 0, %s62
    %s82 = sphi 0, %s82
    %s84 = sphi 0, %s82
    %s85 = sphi 0, %s84
    %s99 = sphi 0, %s85
    %s103 = sphi 0, %s103
    %s105 = sphi 0, %s103
    %s106 = sphi 0, %s105
    %s120 = sphi 0, %s106
    %s128 = sphi 0, %s130
    %s131 = sphi 0, %s128
    %s132 = sphi 0, %s131
    %s148 = sphi 0, %s132
    %s156 = sphi 0, %s158
    %s159 = sphi 0, %s156
    %s160 = sphi 0, %s159
    %s176 = sphi 0, %s160
  $region4: #{encoding_block_forward.3} parent=0 // loop_header_branch
    %16 = sbr.rel (%p14) target = $region8
  $region5: #{encoding_block_forward.3} parent=0 // loop_body
    %s18 = ssub.s32 %s13, 1
    %s19 = ssub.s32 %s13, 2
    %s26 = sadd.s32 1, %s21
    %p27 = scmp.ge.s32.totalorder %s26, 2
    %s28 = scalar_select %p27, 0, %s26
    %s29 = sadd.s32 1, %s20
    %s30 = scalar_select %p27, %s29, %s20
    %p31 = scmp.ge.s32.totalorder %s30, 2
    %s32 = scalar_select %p31, 0, %s30
    %s34 = sadd.s32 %s33, 1
    %p37 = scmp.eq.s32.totalorder %s13, 3
    %p38 = scmp.ne.s32.totalorder %s33, %s35
    %p39 = scmp.eq.s32.totalorder %s13, 0
    %p40 = por %p38, %p39
    %p41 = scmp.ne.s32.totalorder %s33, %s35
    %p42 = scmp.eq.s32.totalorder %s18, 3
    %p43 = por %p41, %p42
    %p44 = scmp.ne.s32.totalorder %s35, %s36
    %p45 = scmp.eq.s32.totalorder %s18, 0
    %p46 = por %p44, %p45
    %p47 = scmp.ne.s32.totalorder %s35, %s36
    %p48 = scmp.eq.s32.totalorder %s19, 3
    %p49 = por %p47, %p48
    %p51 = scmp.ne.s32.totalorder %s36, %s50
    %p52 = scmp.eq.s32.totalorder %s19, 0
    %p53 = por %p51, %p52
    %s54 = ssub.s32 %s20, %s32
    %s55 = ssub.s32 %s21, %s28
    %s56 = sor.u32 %s54, %s55
    %p57 = scmp.eq.s32.totalorder %s56, 0
    %s59 = sadd.s32 %s58, 1
    %s60 = scalar_select %p57, %s58, %s59
    %p63 = pneg %p57
    %p64 = scmp.eq.s32.totalorder %s13, 3
    %p65 = por %p63, %p64
    %p66 = scmp.ne.s32.totalorder %s58, %s61
    %p67 = scmp.eq.s32.totalorder %s13, 0
    %p68 = por %p66, %p67
    %p69 = scmp.ne.s32.totalorder %s58, %s61
    %p70 = scmp.eq.s32.totalorder %s18, 3
    %p71 = por %p69, %p70
    %p72 = scmp.ne.s32.totalorder %s61, %s62
    %p73 = scmp.eq.s32.totalorder %s18, 0
    %p74 = por %p72, %p73
    %p75 = scmp.ne.s32.totalorder %s61, %s62
    %p76 = scmp.eq.s32.totalorder %s19, 3
    %p77 = por %p75, %p76
    %p79 = scmp.ne.s32.totalorder %s62, %s78
    %p80 = scmp.eq.s32.totalorder %s19, 0
    %p81 = por %p79, %p80
    %s83 = sadd.s32 %s82, 1
    %p86 = scmp.eq.s32.totalorder %s13, 3
    %p87 = scmp.ne.s32.totalorder %s82, %s84
    %p88 = scmp.eq.s32.totalorder %s13, 0
    %p89 = por %p87, %p88
    %p90 = scmp.ne.s32.totalorder %s82, %s84
    %p91 = scmp.eq.s32.totalorder %s18, 3
    %p92 = por %p90, %p91
    %p93 = scmp.ne.s32.totalorder %s84, %s85
    %p94 = scmp.eq.s32.totalorder %s18, 0
    %p95 = por %p93, %p94
    %p96 = scmp.ne.s32.totalorder %s84, %s85
    %p97 = scmp.eq.s32.totalorder %s19, 3
    %p98 = por %p96, %p97
    %p100 = scmp.ne.s32.totalorder %s85, %s99
    %p101 = scmp.eq.s32.totalorder %s19, 0
    %p102 = por %p100, %p101
    %s104 = sadd.s32 %s103, 1
    %p107 = scmp.eq.s32.totalorder %s13, 3
    %p108 = scmp.ne.s32.totalorder %s103, %s105
    %p109 = scmp.eq.s32.totalorder %s13, 0
    %p110 = por %p108, %p109
    %p111 = scmp.ne.s32.totalorder %s103, %s105
    %p112 = scmp.eq.s32.totalorder %s18, 3
    %p113 = por %p111, %p112
    %p114 = scmp.ne.s32.totalorder %s105, %s106
    %p115 = scmp.eq.s32.totalorder %s18, 0
    %p116 = por %p114, %p115
    %p117 = scmp.ne.s32.totalorder %s105, %s106
    %p118 = scmp.eq.s32.totalorder %s19, 3
    %p119 = por %p117, %p118
    %p121 = scmp.ne.s32.totalorder %s106, %s120
    %p122 = scmp.eq.s32.totalorder %s19, 0
    %p123 = por %p121, %p122
    %s124 = ssub.s32 %s20, %s32
    %s125 = ssub.s32 %s21, %s28
    %s126 = sor.u32 %s124, %s125
    %p127 = scmp.eq.s32.totalorder %s126, 0
    %s129 = sadd.s32 %s128, 1
    %s130 = scalar_select %p127, %s128, %s129
    %p133 = pneg %p127
    %p134 = scmp.eq.s32.totalorder %s13, 3
    %p135 = por %p133, %p134
    %p136 = scmp.ne.s32.totalorder %s128, %s131
    %p137 = scmp.eq.s32.totalorder %s13, 0
    %p138 = por %p136, %p137
    %p139 = scmp.ne.s32.totalorder %s128, %s131
    %p140 = scmp.eq.s32.totalorder %s18, 3
    %p141 = por %p139, %p140
    %p142 = scmp.ne.s32.totalorder %s131, %s132
    %p143 = scmp.eq.s32.totalorder %s18, 0
    %p144 = por %p142, %p143
    %p145 = scmp.ne.s32.totalorder %s131, %s132
    %p146 = scmp.eq.s32.totalorder %s19, 3
    %p147 = por %p145, %p146
    %p149 = scmp.ne.s32.totalorder %s132, %s148
    %p150 = scmp.eq.s32.totalorder %s19, 0
    %p151 = por %p149, %p150
    %s152 = ssub.s32 %s20, %s32
    %s153 = ssub.s32 %s21, %s28
    %s154 = sor.u32 %s152, %s153
    %p155 = scmp.eq.s32.totalorder %s154, 0
    %s157 = sadd.s32 %s156, 1
    %s158 = scalar_select %p155, %s156, %s157
    %p161 = pneg %p155
    %p162 = scmp.eq.s32.totalorder %s13, 3
    %p163 = por %p161, %p162
    %p164 = scmp.ne.s32.totalorder %s156, %s159
    %p165 = scmp.eq.s32.totalorder %s13, 0
    %p166 = por %p164, %p165
    %p167 = scmp.ne.s32.totalorder %s156, %s159
    %p168 = scmp.eq.s32.totalorder %s18, 3
    %p169 = por %p167, %p168
    %p170 = scmp.ne.s32.totalorder %s159, %s160
    %p171 = scmp.eq.s32.totalorder %s18, 0
    %p172 = por %p170, %p171
    %p173 = scmp.ne.s32.totalorder %s159, %s160
    %p174 = scmp.eq.s32.totalorder %s19, 3
    %p175 = por %p173, %p174
    %p177 = scmp.ne.s32.totalorder %s160, %s176
    %p178 = scmp.eq.s32.totalorder %s19, 0
    %p179 = por %p177, %p178
    %p180 = scmp.le.s32.totalorder 1, %s13
    %p181 = scmp.lt.s32.totalorder %s13, 5
    %p182 = pnand %p180, %p181
    %p183 = pneg %p182
    // Predicated region
    $region9: #{encoding_block_forward.3} parent=5 // pred_check
      _
    $region10: #{encoding_block_forward.3} parent=5 // pred_check_branch
      %185 = sbr.rel (%p182) target = $region12
    $region11: #{encoding_block_forward.3} parent=5 // pred_region
      %s186 = ssub.s32 %s13, 1
      // Predicated region
      $region13: #{encoding_block_forward.3} parent=11 // pred_check
        %p187 = pneg %p46
      $region14: #{encoding_block_forward.3} parent=11 // pred_check_branch
        %189 = sbr.rel (%p187) target = $region16
      $region15: #{encoding_block_forward.3} parent=11 // pred_region
        _
      $region16: #{encoding_block_forward.3} parent=11 // pred_fallthru
        _
      // Predicated region
      $region17: #{encoding_block_forward.3} parent=11 // pred_check
        %p190 = pneg %p95
      $region18: #{encoding_block_forward.3} parent=11 // pred_check_branch
        %192 = sbr.rel (%p190) target = $region20
      $region19: #{encoding_block_forward.3} parent=11 // pred_region
        _
      $region20: #{encoding_block_forward.3} parent=11 // pred_fallthru
        _
      // Predicated region
      $region21: #{encoding_block_forward.3} parent=11 // pred_check
        %p193 = pneg %p116
      $region22: #{encoding_block_forward.3} parent=11 // pred_check_branch
        %195 = sbr.rel (%p193) target = $region24
      $region23: #{encoding_block_forward.3} parent=11 // pred_region
        _
      $region24: #{encoding_block_forward.3} parent=11 // pred_fallthru
        _
    $region12: #{encoding_block_forward.3} parent=5 // pred_fallthru
      _
    %p196 = scmp.lt.s32.totalorder %s13, 4
    // Predicated region
    $region25: #{encoding_block_forward.3} parent=5 // pred_check
      %p197 = pneg %p196
    $region26: #{encoding_block_forward.3} parent=5 // pred_check_branch
      %199 = sbr.rel (%p197) target = $region28
    $region27: #{encoding_block_forward.3} parent=5 // pred_region
      // Predicated region
      $region29: #{encoding_block_forward.3} parent=27 // pred_check
        %p200 = pneg %p68
      $region30: #{encoding_block_forward.3} parent=27 // pred_check_branch
        %202 = sbr.rel (%p200) target = $region32
      $region31: #{encoding_block_forward.3} parent=27 // pred_region
        %p203 = scmp.lt.s32.totalorder %s20, 1
        %s204 = scalar_select %p203, %s20, 1
        %p205 = scmp.lt.s32.totalorder %s21, 1
        %s206 = scalar_select %p205, %s21, 1
        %s207 = smul.addr %s206, 23
        %s208 = smul.addr %s204, 46
        %s209 = sadd.s32 %s207, %s208
        %s210 = smul.addr %s209, 8
        %s211 = scalar_lea.vmem %s1, %s210
      $region32: #{encoding_block_forward.3} parent=27 // pred_fallthru
        _
    $region28: #{encoding_block_forward.3} parent=5 // pred_fallthru
      _
    %p212 = scmp.le.s32.totalorder 1, %s13
    %p213 = scmp.lt.s32.totalorder %s13, 5
    %p214 = pnand %p212, %p213
    %p215 = pneg %p214
    // Predicated region
    $region33: #{encoding_block_forward.3} parent=5 // pred_check
      _
    $region34: #{encoding_block_forward.3} parent=5 // pred_check_branch
      %217 = sbr.rel (%p214) target = $region36
    $region35: #{encoding_block_forward.3} parent=5 // pred_region
      %s218 = ssub.s32 %s13, 1
      %p219 = pneg %p46
      %p220 = pneg %p43
      %p221 = scmp.lt.s32.totalorder %s22, 1
      %s222 = scalar_select %p221, %s22, 1
      %p223 = scmp.lt.s32.totalorder %s23, 1
      %s224 = scalar_select %p223, %s23, 1
      %s225 = smul.addr %s224, 23
      %s226 = smul.addr %s222, 46
      %s227 = sadd.s32 %s225, %s226
      %s228 = smul.addr %s227, 8
      %s229 = scalar_lea.vmem %s1, %s228
      %p230 = pneg %p74
      %p231 = pneg %p71
      %p232 = pneg %p95
      %p233 = pneg %p92
      %p234 = pneg %p116
      %p235 = pneg %p113
      %p236 = pneg %p144
      %p237 = pneg %p141
      %p238 = scmp.lt.s32.totalorder %s22, 1
      %s239 = scalar_select %p238, %s22, 1
      %p240 = scmp.lt.s32.totalorder %s23, 1
      %s241 = scalar_select %p240, %s23, 1
      %s242 = smul.addr %s241, 18
      %s243 = smul.addr %s239, 36
      %s244 = sadd.s32 %s242, %s243
      %s245 = smul.addr %s244, 8
      %s246 = scalar_lea.vmem %s4, %s245
      %p247 = pneg %p172
      %p248 = pneg %p169
      %p249 = scmp.lt.s32.totalorder %s22, 1
      %s250 = scalar_select %p249, %s22, 1
      %p251 = scmp.lt.s32.totalorder %s23, 1
      %s252 = scalar_select %p251, %s23, 1
      %s253 = smul.addr %s250, 2
      %s254 = sadd.s32 %s252, %s253
      %s255 = smul.addr %s254, 8
      %s256 = scalar_lea.vmem %s5, %s255
      %p257 = scmp.lt.s32.totalorder %s22, 1
      %s258 = scalar_select %p257, %s22, 1
      %p259 = scmp.lt.s32.totalorder %s23, 1
      %s260 = scalar_select %p259, %s23, 1
      %s261 = smul.addr %s260, 23
      %s262 = smul.addr %s258, 46
      %s263 = sadd.s32 %s261, %s262
      %s264 = smul.addr %s263, 8
      %s265 = scalar_lea.vmem %s1, %s264
      %p266 = scmp.lt.s32.totalorder %s22, 1
      %s267 = scalar_select %p266, %s22, 1
      %p268 = scmp.lt.s32.totalorder %s23, 1
      %s269 = scalar_select %p268, %s23, 1
      %s270 = smul.addr %s269, 18
      %s271 = smul.addr %s267, 36
      %s272 = sadd.s32 %s270, %s271
      %s273 = smul.addr %s272, 8
      %s274 = scalar_lea.vmem %s4, %s273
      %p275 = scmp.lt.s32.totalorder %s22, 1
      %s276 = scalar_select %p275, %s22, 1
      %p277 = scmp.lt.s32.totalorder %s23, 1
      %s278 = scalar_select %p277, %s23, 1
      %s279 = smul.addr %s276, 2
      %s280 = sadd.s32 %s278, %s279
      %s281 = smul.addr %s280, 8
      %s282 = scalar_lea.vmem %s5, %s281
      %v283 = vld [vmem:[%s265] sm:$0xff]
      %v284 = vld [vmem:[%s265 + $0x8] sm:$0xff]
      %v285 = vld [vmem:[%s265 + $0x10] sm:$0xff]
      %v286 = vld [vmem:[%s265 + $0x18] sm:$0xff]
      %v287 = vld [vmem:[%s265 + $0x20] sm:$0xff]
      %v288 = vld [vmem:[%s265 + $0x28] sm:$0xff]
      %v289 = vld [vmem:[%s265 + $0x30] sm:$0xff]
      %v290 = vld [vmem:[%s265 + $0x38] sm:$0xff]
      %v291 = vld [vmem:[%s265 + $0x40] sm:$0xff]
      %v292 = vld [vmem:[%s265 + $0x48] sm:$0xff]
      %v293 = vld [vmem:[%s265 + $0x50] sm:$0xff]
      %v294 = vld [vmem:[%s265 + $0x58] sm:$0xff]
      %v295 = vld [vmem:[%s265 + $0x60] sm:$0xff]
      %v296 = vld [vmem:[%s265 + $0x68] sm:$0xff]
      %v297 = vld [vmem:[%s265 + $0x70] sm:$0xff]
      %v298 = vld [vmem:[%s265 + $0x78] sm:$0xff]
      %v299 = vld [vmem:[%s265 + $0x80] sm:$0xff]
      %v300 = vld [vmem:[%s265 + $0x88] sm:$0xff]
      %v301 = vld [vmem:[%s265 + $0x90] sm:$0xff]
      %v302 = vld [vmem:[%s265 + $0x98] sm:$0xff]
      %v303 = vld [vmem:[%s265 + $0xa0] sm:$0xff]
      %v304 = vld [vmem:[%s265 + $0xa8] sm:$0xff]
      %v305 = vld [vmem:[%s265 + $0xb0] sm:$0xff]
      %v306 = vld [vmem:[%s2] sm:$0xf]
      %s307 = scalar_lea.vmem %s2, 4
      %v308 = vld [vmem:[%s307] sm:$0xf]
      %vm328 = vcmask 1046528
      %v329 = vrot.slane %v283, 1
      %v330 = vrot.slane %v284, 1
      %v331 = vsel %vm328, %v329, %v330
      %v332 = vrot.slane %v285, 1
      %v333 = vsel %vm328, %v330, %v332
      %v334 = vrot.slane %v286, 1
      %v335 = vsel %vm328, %v332, %v334
      %v336 = vrot.slane %v287, 1
      %v337 = vsel %vm328, %v334, %v336
      %v338 = vrot.slane %v288, 1
      %v339 = vsel %vm328, %v336, %v338
      %v340 = vrot.slane %v289, 1
      %v341 = vsel %vm328, %v338, %v340
      %v342 = vrot.slane %v290, 1
      %v343 = vsel %vm328, %v340, %v342
      %v344 = vrot.slane %v291, 1
      %v345 = vsel %vm328, %v342, %v344
      %v346 = vrot.slane %v292, 1
      %v347 = vsel %vm328, %v344, %v346
      %v348 = vrot.slane %v293, 1
      %v349 = vsel %vm328, %v346, %v348
      %v350 = vrot.slane %v294, 1
      %v351 = vsel %vm328, %v348, %v350
      %v352 = vrot.slane %v295, 1
      %v353 = vsel %vm328, %v350, %v352
      %v354 = vrot.slane %v296, 1
      %v355 = vsel %vm328, %v352, %v354
      %v356 = vrot.slane %v297, 1
      %v357 = vsel %vm328, %v354, %v356
      %v358 = vrot.slane %v298, 1
      %v359 = vsel %vm328, %v356, %v358
      %v360 = vrot.slane %v299, 1
      %v361 = vsel %vm328, %v358, %v360
      %v362 = vrot.slane %v300, 1
      %v363 = vsel %vm328, %v360, %v362
      %v364 = vrot.slane %v301, 1
      %v365 = vsel %vm328, %v362, %v364
      %vm366 = vcmask 31744
      %v367 = vsel %vm366, %v331, 0
      %v369 = vsel %vm366, %v333, 0
      %v371 = vsel %vm366, %v335, 0
      %v373 = vsel %vm366, %v337, 0
      %v375 = vsel %vm366, %v339, 0
      %v377 = vsel %vm366, %v341, 0
      %v379 = vsel %vm366, %v343, 0
      %v381 = vsel %vm366, %v345, 0
      %v383 = vsel %vm366, %v347, 0
      %v385 = vsel %vm366, %v349, 0
      %v387 = vsel %vm366, %v351, 0
      %v389 = vsel %vm366, %v353, 0
      %v391 = vsel %vm366, %v355, 0
      %v393 = vsel %vm366, %v357, 0
      %v395 = vsel %vm366, %v359, 0
      %v397 = vsel %vm366, %v361, 0
      %v399 = vsel %vm366, %v363, 0
      %v401 = vsel %vm366, %v365, 0
      %vm403 = vcmask 1043456
      %v405 = vsel %vm403, %v308, 0
      %407 = vmatprep.subr.mxu0 0.0
      %408 = vmatpush1.msra.mxu0 %v405
      %409 = vmatprep.subr.mxu0 0.0
      %410 = vmatpush1.msra.mxu0 0.0
      %411 = vmatprep.subr.mxu0 0.0
      %412 = vmatpush1.msra.mxu0 0.0
      %413 = vmatprep.subr.mxu0 0.0
      %414 = vmatpush1.msra.mxu0 0.0
      %415 = vmatprep.subr.mxu0 0.0
      %416 = vmatpush1.msra.mxu0 0.0
      %417 = vmatprep.subr.mxu0 0.0
      %418 = vmatpush1.msra.mxu0 0.0
      %419 = vmatprep.subr.mxu0 0.0
      %420 = vmatpush1.msra.mxu0 0.0
      %421 = vmatprep.subr.mxu0 0.0
      %422 = vmatpush1.msra.mxu0 0.0
      %423 = vmatprep.subr.mxu0 0.0
      %424 = vmatpush1.msra.mxu0 0.0
      %425 = vmatprep.subr.mxu0 0.0
      %426 = vmatpush1.msra.mxu0 0.0
      %427 = vmatprep.subr.mxu0 0.0
      %428 = vmatpush1.msra.mxu0 0.0
      %429 = vmatprep.subr.mxu0 0.0
      %430 = vmatpush1.msra.mxu0 0.0
      %431 = vmatprep.subr.mxu0 0.0
      %432 = vmatpush1.msra.mxu0 0.0
      %433 = vmatprep.subr.mxu0 0.0
      %434 = vmatpush1.msra.mxu0 0.0
      %435 = vmatprep.subr.mxu0 0.0
      %436 = vmatpush1.msra.mxu0 0.0
      %437 = vmatprep.subr.mxu0 0.0
      %438 = vmatpush1.msra.mxu0 0.0
      %439 = vmatprep.subr.mxu0 0.0
      %440 = vmatpush1.msra.mxu0 0.0
      %441 = vmatprep.subr.mxu0 0.0
      %442 = vmatpush1.msra.mxu0 0.0
      %443 = vmatprep.subr.mxu0 0.0
      %444 = vmatpush1.msra.mxu0 0.0
      %445 = vmatprep.subr.mxu0 0.0
      %446 = vmatpush1.msra.mxu0 0.0
      %447 = vmatprep.subr.mxu0 0.0
      %448 = vmatpush1.msra.mxu0 0.0
      %449 = vmatprep.subr.mxu0 0.0
      %450 = vmatpush1.msra.mxu0 0.0
      %451 = vmatprep.subr.mxu0 0.0
      %452 = vmatpush1.msra.mxu0 0.0
      %453 = vmatprep.subr.mxu0 0.0
      %454 = vmatpush1.msra.mxu0 0.0
      %455 = vmatprep.subr.mxu0 0.0
      %456 = vmatpush1.msra.mxu0 0.0
      %457 = vmatprep.subr.mxu0 0.0
      %458 = vmatpush1.msra.mxu0 0.0
      %459 = vmatprep.subr.mxu0 0.0
      %460 = vmatpush1.msra.mxu0 0.0
      %461 = vmatprep.subr.mxu0 0.0
      %462 = vmatpush1.msra.mxu0 0.0
      %463 = vmatprep.subr.mxu0 0.0
      %464 = vmatpush1.msra.mxu0 0.0
      %465 = vmatprep.subr.mxu0 0.0
      %466 = vmatpush1.msra.mxu0 0.0
      %467 = vmatprep.subr.mxu0 0.0
      %468 = vmatpush1.msra.mxu0 0.0
      %469 = vmatprep.subr.mxu0 0.0
      %470 = vmatpush1.msra.mxu0 0.0
      %471 = vmatprep.mubr.f32.mxu0 0.0
      %472 = vmatmul.mubr.f32.gmra.mrb[0].mxu0 %v367
      %v473 = vpop.f32.mrb[0].mxu0
      %v474 = vadd.f32 0.0, %v473
      %v475 = vpop.f32.mrb[0].mxu0
      %476 = vmatprep.mubr.f32.mxu0 0.0
      %477 = vmatmul.mubr.f32.gmra.mrb[0].mxu0 %v369
      %v478 = vpop.f32.mrb[0].mxu0
      %v479 = vadd.f32 0.0, %v478
      %v480 = vpop.f32.mrb[0].mxu0
      %481 = vmatprep.mubr.f32.mxu0 0.0
      %482 = vmatmul.mubr.f32.gmra.mrb[0].mxu0 %v371
      %v483 = vpop.f32.mrb[0].mxu0
      %v484 = vadd.f32 0.0, %v483
      %v485 = vpop.f32.mrb[0].mxu0
      %486 = vmatprep.mubr.f32.mxu0 0.0
      %487 = vmatmul.mubr.f32.gmra.mrb[0].mxu0 %v373
      %v488 = vpop.f32.mrb[0].mxu0
      %v489 = vadd.f32 0.0, %v488
      %v490 = vpop.f32.mrb[0].mxu0
      %491 = vmatprep.mubr.f32.mxu0 0.0
      %492 = vmatmul.mubr.f32.gmra.mrb[0].mxu0 %v375
      %v493 = vpop.f32.mrb[0].mxu0
      %v494 = vadd.f32 0.0, %v493
      %v495 = vpop.f32.mrb[0].mxu0
      %496 = vmatprep.mubr.f32.mxu0 0.0
      %497 = vmatmul.mubr.f32.gmra.mrb[0].mxu0 %v377
      %v498 = vpop.f32.mrb[0].mxu0
      %v499 = vadd.f32 0.0, %v498
      %v500 = vpop.f32.mrb[0].mxu0
      %501 = vmatprep.mubr.f32.mxu0 0.0
      %502 = vmatmul.mubr.f32.gmra.mrb[0].mxu0 %v379
      %v503 = vpop.f32.mrb[0].mxu0
      %v504 = vadd.f32 0.0, %v503
      %v505 = vpop.f32.mrb[0].mxu0
      %506 = vmatprep.mubr.f32.mxu0 0.0
      %507 = vmatmul.mubr.f32.gmra.mrb[0].mxu0 %v381
      %v508 = vpop.f32.mrb[0].mxu0
      %v509 = vadd.f32 0.0, %v508
      %v510 = vpop.f32.mrb[0].mxu0
      %511 = vmatprep.mubr.f32.mxu0 0.0
      %512 = vmatmul.mubr.f32.gmra.mrb[0].mxu0 %v383
      %v513 = vpop.f32.mrb[0].mxu0
      %v514 = vadd.f32 0.0, %v513
      %v515 = vpop.f32.mrb[0].mxu0
      %516 = vmatprep.mubr.f32.mxu0 0.0
      %517 = vmatmul.mubr.f32.gmra.mrb[0].mxu0 %v385
      %v518 = vpop.f32.mrb[0].mxu0
      %v519 = vadd.f32 0.0, %v518
      %v520 = vpop.f32.mrb[0].mxu0
      %521 = vmatprep.mubr.f32.mxu0 0.0
      %522 = vmatmul.mubr.f32.gmra.mrb[0].mxu0 %v387
      %v523 = vpop.f32.mrb[0].mxu0
      %v524 = vadd.f32 0.0, %v523
      %v525 = vpop.f32.mrb[0].mxu0
      %526 = vmatprep.mubr.f32.mxu0 0.0
      %527 = vmatmul.mubr.f32.gmra.mrb[0].mxu0 %v389
      %v528 = vpop.f32.mrb[0].mxu0
      %v529 = vadd.f32 0.0, %v528
      %v530 = vpop.f32.mrb[0].mxu0
      %531 = vmatprep.mubr.f32.mxu0 0.0
      %532 = vmatmul.mubr.f32.gmra.mrb[0].mxu0 %v391
      %v533 = vpop.f32.mrb[0].mxu0
      %v534 = vadd.f32 0.0, %v533
      %v535 = vpop.f32.mrb[0].mxu0
      %536 = vmatprep.mubr.f32.mxu0 0.0
      %537 = vmatmul.mubr.f32.gmra.mrb[0].mxu0 %v393
      %v538 = vpop.f32.mrb[0].mxu0
      %v539 = vadd.f32 0.0, %v538
      %v540 = vpop.f32.mrb[0].mxu0
      %541 = vmatprep.mubr.f32.mxu0 0.0
      %542 = vmatmul.mubr.f32.gmra.mrb[0].mxu0 %v395
      %v543 = vpop.f32.mrb[0].mxu0
      %v544 = vadd.f32 0.0, %v543
      %v545 = vpop.f32.mrb[0].mxu0
      %546 = vmatprep.mubr.f32.mxu0 0.0
      %547 = vmatmul.mubr.f32.gmra.mrb[0].mxu0 %v397
      %v548 = vpop.f32.mrb[0].mxu0
      %v549 = vadd.f32 0.0, %v548
      %v550 = vpop.f32.mrb[0].mxu0
      %551 = vmatprep.mubr.f32.mxu0 0.0
      %552 = vmatmul.mubr.f32.gmra.mrb[0].mxu0 %v399
      %v553 = vpop.f32.mrb[0].mxu0
      %v554 = vadd.f32 0.0, %v553
      %v555 = vpop.f32.mrb[0].mxu0
      %556 = vmatprep.mubr.f32.mxu0 0.0
      %557 = vmatmul.mubr.f32.gmra.mrb[0].mxu0 %v401
      %v558 = vpop.f32.mrb[0].mxu0
      %v559 = vadd.f32 0.0, %v558
      %v560 = vpop.f32.mrb[0].mxu0
      %561 = vdwg.mxu0
      %v562 = vsel %vm366, %v283, 0
      %v564 = vsel %vm366, %v284, 0
      %v566 = vsel %vm366, %v285, 0
      %v568 = vsel %vm366, %v286, 0
      %v570 = vsel %vm366, %v287, 0
      %v572 = vsel %vm366, %v288, 0
      %v574 = vsel %vm366, %v289, 0
      %v576 = vsel %vm366, %v290, 0
      %v578 = vsel %vm366, %v291, 0
      %v580 = vsel %vm366, %v292, 0
      %v582 = vsel %vm366, %v293, 0
      %v584 = vsel %vm366, %v294, 0
      %v586 = vsel %vm366, %v295, 0
      %v588 = vsel %vm366, %v296, 0
      %v590 = vsel %vm366, %v297, 0
      %v592 = vsel %vm366, %v298, 0
      %v594 = vsel %vm366, %v299, 0
      %v596 = vsel %vm366, %v300, 0
      %v599 = vsel %vm403, %v306, 0
      %601 = vmatprep.subr.mxu0 0.0
      %602 = vmatpush1.msra.mxu0 %v599
      %603 = vmatprep.subr.mxu0 0.0
      %604 = vmatpush1.msra.mxu0 0.0
      %605 = vmatprep.subr.mxu0 0.0
      %606 = vmatpush1.msra.mxu0 0.0
      %607 = vmatprep.subr.mxu0 0.0
      %608 = vmatpush1.msra.mxu0 0.0
      %609 = vmatprep.subr.mxu0 0.0
      %610 = vmatpush1.msra.mxu0 0.0
      %611 = vmatprep.subr.mxu0 0.0
      %612 = vmatpush1.msra.mxu0 0.0
      %613 = vmatprep.subr.mxu0 0.0
      %614 = vmatpush1.msra.mxu0 0.0
      %615 = vmatprep.subr.mxu0 0.0
      %616 = vmatpush1.msra.mxu0 0.0
      %617 = vmatprep.subr.mxu0 0.0
      %618 = vmatpush1.msra.mxu0 0.0
      %619 = vmatprep.subr.mxu0 0.0
      %620 = vmatpush1.msra.mxu0 0.0
      %621 = vmatprep.subr.mxu0 0.0
      %622 = vmatpush1.msra.mxu0 0.0
      %623 = vmatprep.subr.mxu0 0.0
      %624 = vmatpush1.msra.mxu0 0.0
      %625 = vmatprep.subr.mxu0 0.0
      %626 = vmatpush1.msra.mxu0 0.0
      %627 = vmatprep.subr.mxu0 0.0
      %628 = vmatpush1.msra.mxu0 0.0
      %629 = vmatprep.subr.mxu0 0.0
      %630 = vmatpush1.msra.mxu0 0.0
      %631 = vmatprep.subr.mxu0 0.0
      %632 = vmatpush1.msra.mxu0 0.0
      %633 = vmatprep.subr.mxu0 0.0
      %634 = vmatpush1.msra.mxu0 0.0
      %635 = vmatprep.subr.mxu0 0.0
      %636 = vmatpush1.msra.mxu0 0.0
      %637 = vmatprep.subr.mxu0 0.0
      %638 = vmatpush1.msra.mxu0 0.0
      %639 = vmatprep.subr.mxu0 0.0
      %640 = vmatpush1.msra.mxu0 0.0
      %641 = vmatprep.subr.mxu0 0.0
      %642 = vmatpush1.msra.mxu0 0.0
      %643 = vmatprep.subr.mxu0 0.0
      %644 = vmatpush1.msra.mxu0 0.0
      %645 = vmatprep.subr.mxu0 0.0
      %646 = vmatpush1.msra.mxu0 0.0
      %647 = vmatprep.subr.mxu0 0.0
      %648 = vmatpush1.msra.mxu0 0.0
      %649 = vmatprep.subr.mxu0 0.0
      %650 = vmatpush1.msra.mxu0 0.0
      %651 = vmatprep.subr.mxu0 0.0
      %652 = vmatpush1.msra.mxu0 0.0
      %653 = vmatprep.subr.mxu0 0.0
      %654 = vmatpush1.msra.mxu0 0.0
      %655 = vmatprep.subr.mxu0 0.0
      %656 = vmatpush1.msra.mxu0 0.0
      %657 = vmatprep.subr.mxu0 0.0
      %658 = vmatpush1.msra.mxu0 0.0
      %659 = vmatprep.subr.mxu0 0.0
      %660 = vmatpush1.msra.mxu0 0.0
      %661 = vmatprep.subr.mxu0 0.0
      %662 = vmatpush1.msra.mxu0 0.0
      %663 = vmatprep.subr.mxu0 0.0
      %664 = vmatpush1.msra.mxu0 0.0
      %665 = vmatprep.mubr.f32.mxu0 0.0
      %666 = vmatmul.mubr.f32.gmra.mrb[0].mxu0 %v562
      %v667 = vpop.f32.mrb[0].mxu0
      %v668 = vadd.f32 %v474, %v667
      %v669 = vpop.f32.mrb[0].mxu0
      %670 = vmatprep.mubr.f32.mxu0 0.0
      %671 = vmatmul.mubr.f32.gmra.mrb[0].mxu0 %v564
      %v672 = vpop.f32.mrb[0].mxu0
      %v673 = vadd.f32 %v479, %v672
      %v674 = vpop.f32.mrb[0].mxu0
      %675 = vmatprep.mubr.f32.mxu0 0.0
      %676 = vmatmul.mubr.f32.gmra.mrb[0].mxu0 %v566
      %v677 = vpop.f32.mrb[0].mxu0
      %v678 = vadd.f32 %v484, %v677
      %v679 = vpop.f32.mrb[0].mxu0
      %680 = vmatprep.mubr.f32.mxu0 0.0
      %681 = vmatmul.mubr.f32.gmra.mrb[0].mxu0 %v568
      %v682 = vpop.f32.mrb[0].mxu0
      %v683 = vadd.f32 %v489, %v682
      %v684 = vpop.f32.mrb[0].mxu0
      %685 = vmatprep.mubr.f32.mxu0 0.0
      %686 = vmatmul.mubr.f32.gmra.mrb[0].mxu0 %v570
      %v687 = vpop.f32.mrb[0].mxu0
      %v688 = vadd.f32 %v494, %v687
      %v689 = vpop.f32.mrb[0].mxu0
      %690 = vmatprep.mubr.f32.mxu0 0.0
      %691 = vmatmul.mubr.f32.gmra.mrb[0].mxu0 %v572
      %v692 = vpop.f32.mrb[0].mxu0
      %v693 = vadd.f32 %v499, %v692
      %v694 = vpop.f32.mrb[0].mxu0
      %695 = vmatprep.mubr.f32.mxu0 0.0
      %696 = vmatmul.mubr.f32.gmra.mrb[0].mxu0 %v574
      %v697 = vpop.f32.mrb[0].mxu0
      %v698 = vadd.f32 %v504, %v697
      %v699 = vpop.f32.mrb[0].mxu0
      %700 = vmatprep.mubr.f32.mxu0 0.0
      %701 = vmatmul.mubr.f32.gmra.mrb[0].mxu0 %v576
      %v702 = vpop.f32.mrb[0].mxu0
      %v703 = vadd.f32 %v509, %v702
      %v704 = vpop.f32.mrb[0].mxu0
      %705 = vmatprep.mubr.f32.mxu0 0.0
      %706 = vmatmul.mubr.f32.gmra.mrb[0].mxu0 %v578
      %v707 = vpop.f32.mrb[0].mxu0
      %v708 = vadd.f32 %v514, %v707
      %v709 = vpop.f32.mrb[0].mxu0
      %710 = vmatprep.mubr.f32.mxu0 0.0
      %711 = vmatmul.mubr.f32.gmra.mrb[0].mxu0 %v580
      %v712 = vpop.f32.mrb[0].mxu0
      %v713 = vadd.f32 %v519, %v712
      %v714 = vpop.f32.mrb[0].mxu0
      %715 = vmatprep.mubr.f32.mxu0 0.0
      %716 = vmatmul.mubr.f32.gmra.mrb[0].mxu0 %v582
      %v717 = vpop.f32.mrb[0].mxu0
      %v718 = vadd.f32 %v524, %v717
      %v719 = vpop.f32.mrb[0].mxu0
      %720 = vmatprep.mubr.f32.mxu0 0.0
      %721 = vmatmul.mubr.f32.gmra.mrb[0].mxu0 %v584
      %v722 = vpop.f32.mrb[0].mxu0
      %v723 = vadd.f32 %v529, %v722
      %v724 = vpop.f32.mrb[0].mxu0
      %725 = vmatprep.mubr.f32.mxu0 0.0
      %726 = vmatmul.mubr.f32.gmra.mrb[0].mxu0 %v586
      %v727 = vpop.f32.mrb[0].mxu0
      %v728 = vadd.f32 %v534, %v727
      %v729 = vpop.f32.mrb[0].mxu0
      %730 = vmatprep.mubr.f32.mxu0 0.0
      %731 = vmatmul.mubr.f32.gmra.mrb[0].mxu0 %v588
      %v732 = vpop.f32.mrb[0].mxu0
      %v733 = vadd.f32 %v539, %v732
      %v734 = vpop.f32.mrb[0].mxu0
      %735 = vmatprep.mubr.f32.mxu0 0.0
      %736 = vmatmul.mubr.f32.gmra.mrb[0].mxu0 %v590
      %v737 = vpop.f32.mrb[0].mxu0
      %v738 = vadd.f32 %v544, %v737
      %v739 = vpop.f32.mrb[0].mxu0
      %740 = vmatprep.mubr.f32.mxu0 0.0
      %741 = vmatmul.mubr.f32.gmra.mrb[0].mxu0 %v592
      %v742 = vpop.f32.mrb[0].mxu0
      %v743 = vadd.f32 %v549, %v742
      %v744 = vpop.f32.mrb[0].mxu0
      %745 = vmatprep.mubr.f32.mxu0 0.0
      %746 = vmatmul.mubr.f32.gmra.mrb[0].mxu0 %v594
      %v747 = vpop.f32.mrb[0].mxu0
      %v748 = vadd.f32 %v554, %v747
      %v749 = vpop.f32.mrb[0].mxu0
      %750 = vmatprep.mubr.f32.mxu0 0.0
      %751 = vmatmul.mubr.f32.gmra.mrb[0].mxu0 %v596
      %v752 = vpop.f32.mrb[0].mxu0
      %v753 = vadd.f32 %v559, %v752
      %v754 = vpop.f32.mrb[0].mxu0
      %755 = vdwg.mxu0
      %s756 = scalar_lea.vmem %s2, 8
      %v757 = vld [vmem:[%s756] sm:$0xf]
      %vm758 = vcmask 1045504
      %v759 = vrot.slane %v283, 2
      %v760 = vrot.slane %v284, 2
      %v761 = vsel %vm758, %v759, %v760
      %v762 = vrot.slane %v285, 2
      %v763 = vsel %vm758, %v760, %v762
      %v764 = vrot.slane %v286, 2
      %v765 = vsel %vm758, %v762, %v764
      %v766 = vrot.slane %v287, 2
      %v767 = vsel %vm758, %v764, %v766
      %v768 = vrot.slane %v288, 2
      %v769 = vsel %vm758, %v766, %v768
      %v770 = vrot.slane %v289, 2
      %v771 = vsel %vm758, %v768, %v770
      %v772 = vrot.slane %v290, 2
      %v773 = vsel %vm758, %v770, %v772
      %v774 = vrot.slane %v291, 2
      %v775 = vsel %vm758, %v772, %v774
      %v776 = vrot.slane %v292, 2
      %v777 = vsel %vm758, %v774, %v776
      %v778 = vrot.slane %v293, 2
      %v779 = vsel %vm758, %v776, %v778
      %v780 = vrot.slane %v294, 2
      %v781 = vsel %vm758, %v778, %v780
      %v782 = vrot.slane %v295, 2
      %v783 = vsel %vm758, %v780, %v782
      %v784 = vrot.slane %v296, 2
      %v785 = vsel %vm758, %v782, %v784
      %v786 = vrot.slane %v297, 2
      %v787 = vsel %vm758, %v784, %v786
      %v788 = vrot.slane %v298, 2
      %v789 = vsel %vm758, %v786, %v788
      %v790 = vrot.slane %v299, 2
      %v791 = vsel %vm758, %v788, %v790
      %v792 = vrot.slane %v300, 2
      %v793 = vsel %vm758, %v790, %v792
      %v794 = vrot.slane %v301, 2
      %v795 = vsel %vm758, %v792, %v794
      %v796 = vsel %vm366, %v761, 0
      %v798 = vsel %vm366, %v763, 0
      %v800 = vsel %vm366, %v765, 0
      %v802 = vsel %vm366, %v767, 0
      %v804 = vsel %vm366, %v769, 0
      %v806 = vsel %vm366, %v771, 0
      %v808 = vsel %vm366, %v773, 0
      %v810 = vsel %vm366, %v775, 0
      %v812 = vsel %vm366, %v777, 0
      %v814 = vsel %vm366, %v779, 0
      %v816 = vsel %vm366, %v781, 0
      %v818 = vsel %vm366, %v783, 0
      %v820 = vsel %vm366, %v785, 0
      %v822 = vsel %vm366, %v787, 0
      %v824 = vsel %vm366, %v789, 0
      %v826 = vsel %vm366, %v791, 0
      %v828 = vsel %vm366, %v793, 0
      %v830 = vsel %vm366, %v795, 0
      %v833 = vsel %vm403, %v757, 0
      %835 = vmatprep.subr.mxu0 0.0
      %836 = vmatpush1.msra.mxu0 %v833
      %837 = vmatprep.subr.mxu0 0.0
      %838 = vmatpush1.msra.mxu0 0.0
      %839 = vmatprep.subr.mxu0 0.0
      %840 = vmatpush1.msra.mxu0 0.0
      %841 = vmatprep.subr.mxu0 0.0
      %842 = vmatpush1.msra.mxu0 0.0
      %843 = vmatprep.subr.mxu0 0.0
      %844 = vmatpush1.msra.mxu0 0.0
      %845 = vmatprep.subr.mxu0 0.0
      %846 = vmatpush1.msra.mxu0 0.0
      %847 = vmatprep.subr.mxu0 0.0
      %848 = vmatpush1.msra.mxu0 0.0
      %849 = vmatprep.subr.mxu0 0.0
      %850 = vmatpush1.msra.mxu0 0.0
      %851 = vmatprep.subr.mxu0 0.0
      %852 = vmatpush1.msra.mxu0 0.0
      %853 = vmatprep.subr.mxu0 0.0
      %854 = vmatpush1.msra.mxu0 0.0
      %855 = vmatprep.subr.mxu0 0.0
      %856 = vmatpush1.msra.mxu0 0.0
      %857 = vmatprep.subr.mxu0 0.0
      %858 = vmatpush1.msra.mxu0 0.0
      %859 = vmatprep.subr.mxu0 0.0
      %860 = vmatpush1.msra.mxu0 0.0
      %861 = vmatprep.subr.mxu0 0.0
      %862 = vmatpush1.msra.mxu0 0.0
      %863 = vmatprep.subr.mxu0 0.0
      %864 = vmatpush1.msra.mxu0 0.0
      %865 = vmatprep.subr.mxu0 0.0
      %866 = vmatpush1.msra.mxu0 0.0
      %867 = vmatprep.subr.mxu0 0.0
      %868 = vmatpush1.msra.mxu0 0.0
      %869 = vmatprep.subr.mxu0 0.0
      %870 = vmatpush1.msra.mxu0 0.0
      %871 = vmatprep.subr.mxu0 0.0
      %872 = vmatpush1.msra.mxu0 0.0
      %873 = vmatprep.subr.mxu0 0.0
      %874 = vmatpush1.msra.mxu0 0.0
      %875 = vmatprep.subr.mxu0 0.0
      %876 = vmatpush1.msra.mxu0 0.0
      %877 = vmatprep.subr.mxu0 0.0
      %878 = vmatpush1.msra.mxu0 0.0
      %879 = vmatprep.subr.mxu0 0.0
      %880 = vmatpush1.msra.mxu0 0.0
      %881 = vmatprep.subr.mxu0 0.0
      %882 = vmatpush1.msra.mxu0 0.0
      %883 = vmatprep.subr.mxu0 0.0
      %884 = vmatpush1.msra.mxu0 0.0
      %885 = vmatprep.subr.mxu0 0.0
      %886 = vmatpush1.msra.mxu0 0.0
      %887 = vmatprep.subr.mxu0 0.0
      %888 = vmatpush1.msra.mxu0 0.0
      %889 = vmatprep.subr.mxu0 0.0
      %890 = vmatpush1.msra.mxu0 0.0
      %891 = vmatprep.subr.mxu0 0.0
      %892 = vmatpush1.msra.mxu0 0.0
      %893 = vmatprep.subr.mxu0 0.0
      %894 = vmatpush1.msra.mxu0 0.0
      %895 = vmatprep.subr.mxu0 0.0
      %896 = vmatpush1.msra.mxu0 0.0
      %897 = vmatprep.subr.mxu0 0.0
      %898 = vmatpush1.msra.mxu0 0.0
      %899 = vmatprep.mubr.f32.mxu0 0.0
      %900 = vmatmul.mubr.f32.gmra.mrb[0].mxu0 %v796
      %v901 = vpop.f32.mrb[0].mxu0
      %v902 = vadd.f32 0.0, %v901
      %v903 = vpop.f32.mrb[0].mxu0
      %904 = vmatprep.mubr.f32.mxu0 0.0
      %905 = vmatmul.mubr.f32.gmra.mrb[0].mxu0 %v798
      %v906 = vpop.f32.mrb[0].mxu0
      %v907 = vadd.f32 0.0, %v906
      %v908 = vpop.f32.mrb[0].mxu0
      %909 = vmatprep.mubr.f32.mxu0 0.0
      %910 = vmatmul.mubr.f32.gmra.mrb[0].mxu0 %v800
      %v911 = vpop.f32.mrb[0].mxu0
      %v912 = vadd.f32 0.0, %v911
      %v913 = vpop.f32.mrb[0].mxu0
      %914 = vmatprep.mubr.f32.mxu0 0.0
      %915 = vmatmul.mubr.f32.gmra.mrb[0].mxu0 %v802
      %v916 = vpop.f32.mrb[0].mxu0
      %v917 = vadd.f32 0.0, %v916
      %v918 = vpop.f32.mrb[0].mxu0
      %919 = vmatprep.mubr.f32.mxu0 0.0
      %920 = vmatmul.mubr.f32.gmra.mrb[0].mxu0 %v804
      %v921 = vpop.f32.mrb[0].mxu0
      %v922 = vadd.f32 0.0, %v921
      %v923 = vpop.f32.mrb[0].mxu0
      %924 = vmatprep.mubr.f32.mxu0 0.0
      %925 = vmatmul.mubr.f32.gmra.mrb[0].mxu0 %v806
      %v926 = vpop.f32.mrb[0].mxu0
      %v927 = vadd.f32 0.0, %v926
      %v928 = vpop.f32.mrb[0].mxu0
      %929 = vmatprep.mubr.f32.mxu0 0.0
      %930 = vmatmul.mubr.f32.gmra.mrb[0].mxu0 %v808
      %v931 = vpop.f32.mrb[0].mxu0
      %v932 = vadd.f32 0.0, %v931
      %v933 = vpop.f32.mrb[0].mxu0
      %934 = vmatprep.mubr.f32.mxu0 0.0
      %935 = vmatmul.mubr.f32.gmra.mrb[0].mxu0 %v810
      %v936 = vpop.f32.mrb[0].mxu0
      %v937 = vadd.f32 0.0, %v936
      %v938 = vpop.f32.mrb[0].mxu0
      %939 = vmatprep.mubr.f32.mxu0 0.0
      %940 = vmatmul.mubr.f32.gmra.mrb[0].mxu0 %v812
      %v941 = vpop.f32.mrb[0].mxu0
      %v942 = vadd.f32 0.0, %v941
      %v943 = vpop.f32.mrb[0].mxu0
      %944 = vmatprep.mubr.f32.mxu0 0.0
      %945 = vmatmul.mubr.f32.gmra.mrb[0].mxu0 %v814
      %v946 = vpop.f32.mrb[0].mxu0
      %v947 = vadd.f32 0.0, %v946
      %v948 = vpop.f32.mrb[0].mxu0
      %949 = vmatprep.mubr.f32.mxu0 0.0
      %950 = vmatmul.mubr.f32.gmra.mrb[0].mxu0 %v816
      %v951 = vpop.f32.mrb[0].mxu0
      %v952 = vadd.f32 0.0, %v951
      %v953 = vpop.f32.mrb[0].mxu0
      %954 = vmatprep.mubr.f32.mxu0 0.0
      %955 = vmatmul.mubr.f32.gmra.mrb[0].mxu0 %v818
      %v956 = vpop.f32.mrb[0].mxu0
      %v957 = vadd.f32 0.0, %v956
      %v958 = vpop.f32.mrb[0].mxu0
      %959 = vmatprep.mubr.f32.mxu0 0.0
      %960 = vmatmul.mubr.f32.gmra.mrb[0].mxu0 %v820
      %v961 = vpop.f32.mrb[0].mxu0
      %v962 = vadd.f32 0.0, %v961
      %v963 = vpop.f32.mrb[0].mxu0
      %964 = vmatprep.mubr.f32.mxu0 0.0
      %965 = vmatmul.mubr.f32.gmra.mrb[0].mxu0 %v822
      %v966 = vpop.f32.mrb[0].mxu0
      %v967 = vadd.f32 0.0, %v966
      %v968 = vpop.f32.mrb[0].mxu0
      %969 = vmatprep.mubr.f32.mxu0 0.0
      %970 = vmatmul.mubr.f32.gmra.mrb[0].mxu0 %v824
      %v971 = vpop.f32.mrb[0].mxu0
      %v972 = vadd.f32 0.0, %v971
      %v973 = vpop.f32.mrb[0].mxu0
      %974 = vmatprep.mubr.f32.mxu0 0.0
      %975 = vmatmul.mubr.f32.gmra.mrb[0].mxu0 %v826
      %v976 = vpop.f32.mrb[0].mxu0
      %v977 = vadd.f32 0.0, %v976
      %v978 = vpop.f32.mrb[0].mxu0
      %979 = vmatprep.mubr.f32.mxu0 0.0
      %980 = vmatmul.mubr.f32.gmra.mrb[0].mxu0 %v828
      %v981 = vpop.f32.mrb[0].mxu0
      %v982 = vadd.f32 0.0, %v981
      %v983 = vpop.f32.mrb[0].mxu0
      %984 = vmatprep.mubr.f32.mxu0 0.0
      %985 = vmatmul.mubr.f32.gmra.mrb[0].mxu0 %v830
      %v986 = vpop.f32.mrb[0].mxu0
      %v987 = vadd.f32 0.0, %v986
      %v988 = vpop.f32.mrb[0].mxu0
      %989 = vdwg.mxu0
      %v990 = vadd.f32 %v668, %v902
      %v991 = vadd.f32 %v673, %v907
      %v992 = vadd.f32 %v678, %v912
      %v993 = vadd.f32 %v683, %v917
      %v994 = vadd.f32 %v688, %v922
      %v995 = vadd.f32 %v693, %v927
      %v996 = vadd.f32 %v698, %v932
      %v997 = vadd.f32 %v703, %v937
      %v998 = vadd.f32 %v708, %v942
      %v999 = vadd.f32 %v713, %v947
      %v1000 = vadd.f32 %v718, %v952
      %v1001 = vadd.f32 %v723, %v957
      %v1002 = vadd.f32 %v728, %v962
      %v1003 = vadd.f32 %v733, %v967
      %v1004 = vadd.f32 %v738, %v972
      %v1005 = vadd.f32 %v743, %v977
      %v1006 = vadd.f32 %v748, %v982
      %v1007 = vadd.f32 %v753, %v987
      %s1008 = scalar_lea.vmem %s2, 12
      %v1009 = vld [vmem:[%s1008] sm:$0xf]
      %v1012 = vrot.slane %v302, 2
      %v1013 = vsel %vm758, %v794, %v1012
      %v1014 = vrot.slane %v303, 2
      %v1015 = vsel %vm758, %v1012, %v1014
      %v1016 = vsel %vm366, %v1013, 0
      %v1018 = vsel %vm366, %v1015, 0
      %v1021 = vsel %vm403, %v1009, 0
      %1023 = vmatprep.subr.mxu0 0.0
      %1024 = vmatpush1.msra.mxu0 %v1021
      %1025 = vmatprep.subr.mxu0 0.0
      %1026 = vmatpush1.msra.mxu0 0.0
      %1027 = vmatprep.subr.mxu0 0.0
      %1028 = vmatpush1.msra.mxu0 0.0
      %1029 = vmatprep.subr.mxu0 0.0
      %1030 = vmatpush1.msra.mxu0 0.0
      %1031 = vmatprep.subr.mxu0 0.0
      %1032 = vmatpush1.msra.mxu0 0.0
      %1033 = vmatprep.subr.mxu0 0.0
      %1034 = vmatpush1.msra.mxu0 0.0
      %1035 = vmatprep.subr.mxu0 0.0
      %1036 = vmatpush1.msra.mxu0 0.0
      %1037 = vmatprep.subr.mxu0 0.0
      %1038 = vmatpush1.msra.mxu0 0.0
      %1039 = vmatprep.subr.mxu0 0.0
      %1040 = vmatpush1.msra.mxu0 0.0
      %1041 = vmatprep.subr.mxu0 0.0
      %1042 = vmatpush1.msra.mxu0 0.0
      %1043 = vmatprep.subr.mxu0 0.0
      %1044 = vmatpush1.msra.mxu0 0.0
      %1045 = vmatprep.subr.mxu0 0.0
      %1046 = vmatpush1.msra.mxu0 0.0
      %1047 = vmatprep.subr.mxu0 0.0
      %1048 = vmatpush1.msra.mxu0 0.0
      %1049 = vmatprep.subr.mxu0 0.0
      %1050 = vmatpush1.msra.mxu0 0.0
      %1051 = vmatprep.subr.mxu0 0.0
      %1052 = vmatpush1.msra.mxu0 0.0
      %1053 = vmatprep.subr.mxu0 0.0
      %1054 = vmatpush1.msra.mxu0 0.0
      %1055 = vmatprep.subr.mxu0 0.0
      %1056 = vmatpush1.msra.mxu0 0.0
      %1057 = vmatprep.subr.mxu0 0.0
      %1058 = vmatpush1.msra.mxu0 0.0
      %1059 = vmatprep.subr.mxu0 0.0
      %1060 = vmatpush1.msra.mxu0 0.0
      %1061 = vmatprep.subr.mxu0 0.0
      %1062 = vmatpush1.msra.mxu0 0.0
      %1063 = vmatprep.subr.mxu0 0.0
      %1064 = vmatpush1.msra.mxu0 0.0
      %1065 = vmatprep.subr.mxu0 0.0
      %1066 = vmatpush1.msra.mxu0 0.0
      %1067 = vmatprep.subr.mxu0 0.0
      %1068 = vmatpush1.msra.mxu0 0.0
      %1069 = vmatprep.subr.mxu0 0.0
      %1070 = vmatpush1.msra.mxu0 0.0
      %1071 = vmatprep.subr.mxu0 0.0
      %1072 = vmatpush1.msra.mxu0 0.0
      %1073 = vmatprep.subr.mxu0 0.0
      %1074 = vmatpush1.msra.mxu0 0.0
      %1075 = vmatprep.subr.mxu0 0.0
      %1076 = vmatpush1.msra.mxu0 0.0
      %1077 = vmatprep.subr.mxu0 0.0
      %1078 = vmatpush1.msra.mxu0 0.0
      %1079 = vmatprep.subr.mxu0 0.0
      %1080 = vmatpush1.msra.mxu0 0.0
      %1081 = vmatprep.subr.mxu0 0.0
      %1082 = vmatpush1.msra.mxu0 0.0
      %1083 = vmatprep.subr.mxu0 0.0
      %1084 = vmatpush1.msra.mxu0 0.0
      %1085 = vmatprep.subr.mxu0 0.0
      %1086 = vmatpush1.msra.mxu0 0.0
      %1087 = vmatprep.mubr.f32.mxu0 0.0
      %1088 = vmatmul.mubr.f32.gmra.mrb[0].mxu0 %v800
      %v1089 = vpop.f32.mrb[0].mxu0
      %v1090 = vadd.f32 0.0, %v1089
      %v1091 = vpop.f32.mrb[0].mxu0
      %1092 = vmatprep.mubr.f32.mxu0 0.0
      %1093 = vmatmul.mubr.f32.gmra.mrb[0].mxu0 %v802
      %v1094 = vpop.f32.mrb[0].mxu0
      %v1095 = vadd.f32 0.0, %v1094
      %v1096 = vpop.f32.mrb[0].mxu0
      %1097 = vmatprep.mubr.f32.mxu0 0.0
      %1098 = vmatmul.mubr.f32.gmra.mrb[0].mxu0 %v804
      %v1099 = vpop.f32.mrb[0].mxu0
      %v1100 = vadd.f32 0.0, %v1099
      %v1101 = vpop.f32.mrb[0].mxu0
      %1102 = vmatprep.mubr.f32.mxu0 0.0
      %1103 = vmatmul.mubr.f32.gmra.mrb[0].mxu0 %v806
      %v1104 = vpop.f32.mrb[0].mxu0
      %v1105 = vadd.f32 0.0, %v1104
      %v1106 = vpop.f32.mrb[0].mxu0
      %1107 = vmatprep.mubr.f32.mxu0 0.0
      %1108 = vmatmul.mubr.f32.gmra.mrb[0].mxu0 %v808
      %v1109 = vpop.f32.mrb[0].mxu0
      %v1110 = vadd.f32 0.0, %v1109
      %v1111 = vpop.f32.mrb[0].mxu0
      %1112 = vmatprep.mubr.f32.mxu0 0.0
      %1113 = vmatmul.mubr.f32.gmra.mrb[0].mxu0 %v810
      %v1114 = vpop.f32.mrb[0].mxu0
      %v1115 = vadd.f32 0.0, %v1114
      %v1116 = vpop.f32.mrb[0].mxu0
      %1117 = vmatprep.mubr.f32.mxu0 0.0
      %1118 = vmatmul.mubr.f32.gmra.mrb[0].mxu0 %v812
      %v1119 = vpop.f32.mrb[0].mxu0
      %v1120 = vadd.f32 0.0, %v1119
      %v1121 = vpop.f32.mrb[0].mxu0
      %1122 = vmatprep.mubr.f32.mxu0 0.0
      %1123 = vmatmul.mubr.f32.gmra.mrb[0].mxu0 %v814
      %v1124 = vpop.f32.mrb[0].mxu0
      %v1125 = vadd.f32 0.0, %v1124
      %v1126 = vpop.f32.mrb[0].mxu0
      %1127 = vmatprep.mubr.f32.mxu0 0.0
      %1128 = vmatmul.mubr.f32.gmra.mrb[0].mxu0 %v816
      %v1129 = vpop.f32.mrb[0].mxu0
      %v1130 = vadd.f32 0.0, %v1129
      %v1131 = vpop.f32.mrb[0].mxu0
      %1132 = vmatprep.mubr.f32.mxu0 0.0
      %1133 = vmatmul.mubr.f32.gmra.mrb[0].mxu0 %v818
      %v1134 = vpop.f32.mrb[0].mxu0
      %v1135 = vadd.f32 0.0, %v1134
      %v1136 = vpop.f32.mrb[0].mxu0
      %1137 = vmatprep.mubr.f32.mxu0 0.0
      %1138 = vmatmul.mubr.f32.gmra.mrb[0].mxu0 %v820
      %v1139 = vpop.f32.mrb[0].mxu0
      %v1140 = vadd.f32 0.0, %v1139
      %v1141 = vpop.f32.mrb[0].mxu0
      %1142 = vmatprep.mubr.f32.mxu0 0.0
      %1143 = vmatmul.mubr.f32.gmra.mrb[0].mxu0 %v822
      %v1144 = vpop.f32.mrb[0].mxu0
      %v1145 = vadd.f32 0.0, %v1144
      %v1146 = vpop.f32.mrb[0].mxu0
      %1147 = vmatprep.mubr.f32.mxu0 0.0
      %1148 = vmatmul.mubr.f32.gmra.mrb[0].mxu0 %v824
      %v1149 = vpop.f32.mrb[0].mxu0
      %v1150 = vadd.f32 0.0, %v1149
      %v1151 = vpop.f32.mrb[0].mxu0
      %1152 = vmatprep.mubr.f32.mxu0 0.0
      %1153 = vmatmul.mubr.f32.gmra.mrb[0].mxu0 %v826
      %v1154 = vpop.f32.mrb[0].mxu0
      %v1155 = vadd.f32 0.0, %v1154
      %v1156 = vpop.f32.mrb[0].mxu0
      %1157 = vmatprep.mubr.f32.mxu0 0.0
      %1158 = vmatmul.mubr.f32.gmra.mrb[0].mxu0 %v828
      %v1159 = vpop.f32.mrb[0].mxu0
      %v1160 = vadd.f32 0.0, %v1159
      %v1161 = vpop.f32.mrb[0].mxu0
      %1162 = vmatprep.mubr.f32.mxu0 0.0
      %1163 = vmatmul.mubr.f32.gmra.mrb[0].mxu0 %v830
      %v1164 = vpop.f32.mrb[0].mxu0
      %v1165 = vadd.f32 0.0, %v1164
      %v1166 = vpop.f32.mrb[0].mxu0
      %1167 = vmatprep.mubr.f32.mxu0 0.0
      %1168 = vmatmul.mubr.f32.gmra.mrb[0].mxu0 %v1016
      %v1169 = vpop.f32.mrb[0].mxu0
      %v1170 = vadd.f32 0.0, %v1169
      %v1171 = vpop.f32.mrb[0].mxu0
      %1172 = vmatprep.mubr.f32.mxu0 0.0
      %1173 = vmatmul.mubr.f32.gmra.mrb[0].mxu0 %v1018
      %v1174 = vpop.f32.mrb[0].mxu0
      %v1175 = vadd.f32 0.0, %v1174
      %v1176 = vpop.f32.mrb[0].mxu0
      %1177 = vdwg.mxu0
      %v1178 = vadd.f32 %v990, %v1090
      %v1179 = vadd.f32 %v991, %v1095
      %v1180 = vadd.f32 %v992, %v1100
      %v1181 = vadd.f32 %v993, %v1105
      %v1182 = vadd.f32 %v994, %v1110
      %v1183 = vadd.f32 %v995, %v1115
      %v1184 = vadd.f32 %v996, %v1120
      %v1185 = vadd.f32 %v997, %v1125
      %v1186 = vadd.f32 %v998, %v1130
      %v1187 = vadd.f32 %v999, %v1135
      %v1188 = vadd.f32 %v1000, %v1140
      %v1189 = vadd.f32 %v1001, %v1145
      %v1190 = vadd.f32 %v1002, %v1150
      %v1191 = vadd.f32 %v1003, %v1155
      %v1192 = vadd.f32 %v1004, %v1160
      %v1193 = vadd.f32 %v1005, %v1165
      %v1194 = vadd.f32 %v1006, %v1170
      %v1195 = vadd.f32 %v1007, %v1175
      %s1196 = scalar_lea.vmem %s2, 16
      %v1197 = vld [vmem:[%s1196] sm:$0xf]
      %vm1198 = vcmask 1044480
      %v1199 = vrot.slane %v285, 3
      %v1200 = vrot.slane %v286, 3
      %v1201 = vsel %vm1198, %v1199, %v1200
      %v1202 = vrot.slane %v287, 3
      %v1203 = vsel %vm1198, %v1200, %v1202
      %v1204 = vrot.slane %v288, 3
      %v1205 = vsel %vm1198, %v1202, %v1204
      %v1206 = vrot.slane %v289, 3
      %v1207 = vsel %vm1198, %v1204, %v1206
      %v1208 = vrot.slane %v290, 3
      %v1209 = vsel %vm1198, %v1206, %v1208
      %v1210 = vrot.slane %v291, 3
      %v1211 = vsel %vm1198, %v1208, %v1210
      %v1212 = vrot.slane %v292, 3
      %v1213 = vsel %vm1198, %v1210, %v1212
      %v1214 = vrot.slane %v293, 3
      %v1215 = vsel %vm1198, %v1212, %v1214
      %v1216 = vrot.slane %v294, 3
      %v1217 = vsel %vm1198, %v1214, %v1216
      %v1218 = vrot.slane %v295, 3
      %v1219 = vsel %vm1198, %v1216, %v1218
      %v1220 = vrot.slane %v296, 3
      %v1221 = vsel %vm1198, %v1218, %v1220
      %v1222 = vrot.slane %v297, 3
      %v1223 = vsel %vm1198, %v1220, %v1222
      %v1224 = vrot.slane %v298, 3
      %v1225 = vsel %vm1198, %v1222, %v1224
      %v1226 = vrot.slane %v299, 3
      %v1227 = vsel %vm1198, %v1224, %v1226
      %v1228 = vrot.slane %v300, 3
      %v1229 = vsel %vm1198, %v1226, %v1228
      %v1230 = vrot.slane %v301, 3
      %v1231 = vsel %vm1198, %v1228, %v1230
      %v1232 = vrot.slane %v302, 3
      %v1233 = vsel %vm1198, %v1230, %v1232
      %v1234 = vrot.slane %v303, 3
      %v1235 = vsel %vm1198, %v1232, %v1234
      %v1236 = vsel %vm366, %v1201, 0
      %v1238 = vsel %vm366, %v1203, 0
      %v1240 = vsel %vm366, %v1205, 0
      %v1242 = vsel %vm366, %v1207, 0
      %v1244 = vsel %vm366, %v1209, 0
      %v1246 = vsel %vm366, %v1211, 0
      %v1248 = vsel %vm366, %v1213, 0
      %v1250 = vsel %vm366, %v1215, 0
      %v1252 = vsel %vm366, %v1217, 0
      %v1254 = vsel %vm366, %v1219, 0
      %v1256 = vsel %vm366, %v1221, 0
      %v1258 = vsel %vm366, %v1223, 0
      %v1260 = vsel %vm366, %v1225, 0
      %v1262 = vsel %vm366, %v1227, 0
      %v1264 = vsel %vm366, %v1229, 0
      %v1266 = vsel %vm366, %v1231, 0
      %v1268 = vsel %vm366, %v1233, 0
      %v1270 = vsel %vm366, %v1235, 0
      %v1273 = vsel %vm403, %v1197, 0
      %1275 = vmatprep.subr.mxu0 0.0
      %1276 = vmatpush1.msra.mxu0 %v1273
      %1277 = vmatprep.subr.mxu0 0.0
      %1278 = vmatpush1.msra.mxu0 0.0
      %1279 = vmatprep.subr.mxu0 0.0
      %1280 = vmatpush1.msra.mxu0 0.0
      %1281 = vmatprep.subr.mxu0 0.0
      %1282 = vmatpush1.msra.mxu0 0.0
      %1283 = vmatprep.subr.mxu0 0.0
      %1284 = vmatpush1.msra.mxu0 0.0
      %1285 = vmatprep.subr.mxu0 0.0
      %1286 = vmatpush1.msra.mxu0 0.0
      %1287 = vmatprep.subr.mxu0 0.0
      %1288 = vmatpush1.msra.mxu0 0.0
      %1289 = vmatprep.subr.mxu0 0.0
      %1290 = vmatpush1.msra.mxu0 0.0
      %1291 = vmatprep.subr.mxu0 0.0
      %1292 = vmatpush1.msra.mxu0 0.0
      %1293 = vmatprep.subr.mxu0 0.0
      %1294 = vmatpush1.msra.mxu0 0.0
      %1295 = vmatprep.subr.mxu0 0.0
      %1296 = vmatpush1.msra.mxu0 0.0
      %1297 = vmatprep.subr.mxu0 0.0
      %1298 = vmatpush1.msra.mxu0 0.0
      %1299 = vmatprep.subr.mxu0 0.0
      %1300 = vmatpush1.msra.mxu0 0.0
      %1301 = vmatprep.subr.mxu0 0.0
      %1302 = vmatpush1.msra.mxu0 0.0
      %1303 = vmatprep.subr.mxu0 0.0
      %1304 = vmatpush1.msra.mxu0 0.0
      %1305 = vmatprep.subr.mxu0 0.0
      %1306 = vmatpush1.msra.mxu0 0.0
      %1307 = vmatprep.subr.mxu0 0.0
      %1308 = vmatpush1.msra.mxu0 0.0
      %1309 = vmatprep.subr.mxu0 0.0
      %1310 = vmatpush1.msra.mxu0 0.0
      %1311 = vmatprep.subr.mxu0 0.0
      %1312 = vmatpush1.msra.mxu0 0.0
      %1313 = vmatprep.subr.mxu0 0.0
      %1314 = vmatpush1.msra.mxu0 0.0
      %1315 = vmatprep.subr.mxu0 0.0
      %1316 = vmatpush1.msra.mxu0 0.0
      %1317 = vmatprep.subr.mxu0 0.0
      %1318 = vmatpush1.msra.mxu0 0.0
      %1319 = vmatprep.subr.mxu0 0.0
      %1320 = vmatpush1.msra.mxu0 0.0
      %1321 = vmatprep.subr.mxu0 0.0
      %1322 = vmatpush1.msra.mxu0 0.0
      %1323 = vmatprep.subr.mxu0 0.0
      %1324 = vmatpush1.msra.mxu0 0.0
      %1325 = vmatprep.subr.mxu0 0.0
      %1326 = vmatpush1.msra.mxu0 0.0
      %1327 = vmatprep.subr.mxu0 0.0
      %1328 = vmatpush1.msra.mxu0 0.0
      %1329 = vmatprep.subr.mxu0 0.0
      %1330 = vmatpush1.msra.mxu0 0.0
      %1331 = vmatprep.subr.mxu0 0.0
      %1332 = vmatpush1.msra.mxu0 0.0
      %1333 = vmatprep.subr.mxu0 0.0
      %1334 = vmatpush1.msra.mxu0 0.0
      %1335 = vmatprep.subr.mxu0 0.0
      %1336 = vmatpush1.msra.mxu0 0.0
      %1337 = vmatprep.subr.mxu0 0.0
      %1338 = vmatpush1.msra.mxu0 0.0
      %1339 = vmatprep.mubr.f32.mxu0 0.0
      %1340 = vmatmul.mubr.f32.gmra.mrb[0].mxu0 %v1236
      %v1341 = vpop.f32.mrb[0].mxu0
      %v1342 = vadd.f32 0.0, %v1341
      %v1343 = vpop.f32.mrb[0].mxu0
      %1344 = vmatprep.mubr.f32.mxu0 0.0
      %1345 = vmatmul.mubr.f32.gmra.mrb[0].mxu0 %v1238
      %v1346 = vpop.f32.mrb[0].mxu0
      %v1347 = vadd.f32 0.0, %v1346
      %v1348 = vpop.f32.mrb[0].mxu0
      %1349 = vmatprep.mubr.f32.mxu0 0.0
      %1350 = vmatmul.mubr.f32.gmra.mrb[0].mxu0 %v1240
      %v1351 = vpop.f32.mrb[0].mxu0
      %v1352 = vadd.f32 0.0, %v1351
      %v1353 = vpop.f32.mrb[0].mxu0
      %1354 = vmatprep.mubr.f32.mxu0 0.0
      %1355 = vmatmul.mubr.f32.gmra.mrb[0].mxu0 %v1242
      %v1356 = vpop.f32.mrb[0].mxu0
      %v1357 = vadd.f32 0.0, %v1356
      %v1358 = vpop.f32.mrb[0].mxu0
      %1359 = vmatprep.mubr.f32.mxu0 0.0
      %1360 = vmatmul.mubr.f32.gmra.mrb[0].mxu0 %v1244
      %v1361 = vpop.f32.mrb[0].mxu0
      %v1362 = vadd.f32 0.0, %v1361
      %v1363 = vpop.f32.mrb[0].mxu0
      %1364 = vmatprep.mubr.f32.mxu0 0.0
      %1365 = vmatmul.mubr.f32.gmra.mrb[0].mxu0 %v1246
      %v1366 = vpop.f32.mrb[0].mxu0
      %v1367 = vadd.f32 0.0, %v1366
      %v1368 = vpop.f32.mrb[0].mxu0
      %1369 = vmatprep.mubr.f32.mxu0 0.0
      %1370 = vmatmul.mubr.f32.gmra.mrb[0].mxu0 %v1248
      %v1371 = vpop.f32.mrb[0].mxu0
      %v1372 = vadd.f32 0.0, %v1371
      %v1373 = vpop.f32.mrb[0].mxu0
      %1374 = vmatprep.mubr.f32.mxu0 0.0
      %1375 = vmatmul.mubr.f32.gmra.mrb[0].mxu0 %v1250
      %v1376 = vpop.f32.mrb[0].mxu0
      %v1377 = vadd.f32 0.0, %v1376
      %v1378 = vpop.f32.mrb[0].mxu0
      %1379 = vmatprep.mubr.f32.mxu0 0.0
      %1380 = vmatmul.mubr.f32.gmra.mrb[0].mxu0 %v1252
      %v1381 = vpop.f32.mrb[0].mxu0
      %v1382 = vadd.f32 0.0, %v1381
      %v1383 = vpop.f32.mrb[0].mxu0
      %1384 = vmatprep.mubr.f32.mxu0 0.0
      %1385 = vmatmul.mubr.f32.gmra.mrb[0].mxu0 %v1254
      %v1386 = vpop.f32.mrb[0].mxu0
      %v1387 = vadd.f32 0.0, %v1386
      %v1388 = vpop.f32.mrb[0].mxu0
      %1389 = vmatprep.mubr.f32.mxu0 0.0
      %1390 = vmatmul.mubr.f32.gmra.mrb[0].mxu0 %v1256
      %v1391 = vpop.f32.mrb[0].mxu0
      %v1392 = vadd.f32 0.0, %v1391
      %v1393 = vpop.f32.mrb[0].mxu0
      %1394 = vmatprep.mubr.f32.mxu0 0.0
      %1395 = vmatmul.mubr.f32.gmra.mrb[0].mxu0 %v1258
      %v1396 = vpop.f32.mrb[0].mxu0
      %v1397 = vadd.f32 0.0, %v1396
      %v1398 = vpop.f32.mrb[0].mxu0
      %1399 = vmatprep.mubr.f32.mxu0 0.0
      %1400 = vmatmul.mubr.f32.gmra.mrb[0].mxu0 %v1260
      %v1401 = vpop.f32.mrb[0].mxu0
      %v1402 = vadd.f32 0.0, %v1401
      %v1403 = vpop.f32.mrb[0].mxu0
      %1404 = vmatprep.mubr.f32.mxu0 0.0
      %1405 = vmatmul.mubr.f32.gmra.mrb[0].mxu0 %v1262
      %v1406 = vpop.f32.mrb[0].mxu0
      %v1407 = vadd.f32 0.0, %v1406
      %v1408 = vpop.f32.mrb[0].mxu0
      %1409 = vmatprep.mubr.f32.mxu0 0.0
      %1410 = vmatmul.mubr.f32.gmra.mrb[0].mxu0 %v1264
      %v1411 = vpop.f32.mrb[0].mxu0
      %v1412 = vadd.f32 0.0, %v1411
      %v1413 = vpop.f32.mrb[0].mxu0
      %1414 = vmatprep.mubr.f32.mxu0 0.0
      %1415 = vmatmul.mubr.f32.gmra.mrb[0].mxu0 %v1266
      %v1416 = vpop.f32.mrb[0].mxu0
      %v1417 = vadd.f32 0.0, %v1416
      %v1418 = vpop.f32.mrb[0].mxu0
      %1419 = vmatprep.mubr.f32.mxu0 0.0
      %1420 = vmatmul.mubr.f32.gmra.mrb[0].mxu0 %v1268
      %v1421 = vpop.f32.mrb[0].mxu0
      %v1422 = vadd.f32 0.0, %v1421
      %v1423 = vpop.f32.mrb[0].mxu0
      %1424 = vmatprep.mubr.f32.mxu0 0.0
      %1425 = vmatmul.mubr.f32.gmra.mrb[0].mxu0 %v1270
      %v1426 = vpop.f32.mrb[0].mxu0
      %v1427 = vadd.f32 0.0, %v1426
      %v1428 = vpop.f32.mrb[0].mxu0
      %1429 = vdwg.mxu0
      %v1430 = vadd.f32 %v1178, %v1342
      %v1431 = vadd.f32 %v1179, %v1347
      %v1432 = vadd.f32 %v1180, %v1352
      %v1433 = vadd.f32 %v1181, %v1357
      %v1434 = vadd.f32 %v1182, %v1362
      %v1435 = vadd.f32 %v1183, %v1367
      %v1436 = vadd.f32 %v1184, %v1372
      %v1437 = vadd.f32 %v1185, %v1377
      %v1438 = vadd.f32 %v1186, %v1382
      %v1439 = vadd.f32 %v1187, %v1387
      %v1440 = vadd.f32 %v1188, %v1392
      %v1441 = vadd.f32 %v1189, %v1397
      %v1442 = vadd.f32 %v1190, %v1402
      %v1443 = vadd.f32 %v1191, %v1407
      %v1444 = vadd.f32 %v1192, %v1412
      %v1445 = vadd.f32 %v1193, %v1417
      %v1446 = vadd.f32 %v1194, %v1422
      %v1447 = vadd.f32 %v1195, %v1427
      %s1448 = scalar_lea.vmem %s2, 20
      %v1449 = vld [vmem:[%s1448] sm:$0xf]
      %v1450 = vrot.slane %v285, 4
      %v1451 = vrot.slane %v286, 4
      %v1452 = vsel %vm403, %v1450, %v1451
      %v1453 = vrot.slane %v287, 4
      %v1454 = vsel %vm403, %v1451, %v1453
      %v1455 = vrot.slane %v288, 4
      %v1456 = vsel %vm403, %v1453, %v1455
      %v1457 = vrot.slane %v289, 4
      %v1458 = vsel %vm403, %v1455, %v1457
      %v1459 = vrot.slane %v290, 4
      %v1460 = vsel %vm403, %v1457, %v1459
      %v1461 = vrot.slane %v291, 4
      %v1462 = vsel %vm403, %v1459, %v1461
      %v1463 = vrot.slane %v292, 4
      %v1464 = vsel %vm403, %v1461, %v1463
      %v1465 = vrot.slane %v293, 4
      %v1466 = vsel %vm403, %v1463, %v1465
      %v1467 = vrot.slane %v294, 4
      %v1468 = vsel %vm403, %v1465, %v1467
      %v1469 = vrot.slane %v295, 4
      %v1470 = vsel %vm403, %v1467, %v1469
      %v1471 = vrot.slane %v296, 4
      %v1472 = vsel %vm403, %v1469, %v1471
      %v1473 = vrot.slane %v297, 4
      %v1474 = vsel %vm403, %v1471, %v1473
      %v1475 = vrot.slane %v298, 4
      %v1476 = vsel %vm403, %v1473, %v1475
      %v1477 = vrot.slane %v299, 4
      %v1478 = vsel %vm403, %v1475, %v1477
      %v1479 = vrot.slane %v300, 4
      %v1480 = vsel %vm403, %v1477, %v1479
      %v1481 = vrot.slane %v301, 4
      %v1482 = vsel %vm403, %v1479, %v1481
      %v1483 = vrot.slane %v302, 4
      %v1484 = vsel %vm403, %v1481, %v1483
      %v1485 = vrot.slane %v303, 4
      %v1486 = vsel %vm403, %v1483, %v1485
      %v1487 = vsel %vm366, %v1452, 0
      %v1489 = vsel %vm366, %v1454, 0
      %v1491 = vsel %vm366, %v1456, 0
      %v1493 = vsel %vm366, %v1458, 0
      %v1495 = vsel %vm366, %v1460, 0
      %v1497 = vsel %vm366, %v1462, 0
      %v1499 = vsel %vm366, %v1464, 0
      %v1501 = vsel %vm366, %v1466, 0
      %v1503 = vsel %vm366, %v1468, 0
      %v1505 = vsel %vm366, %v1470, 0
      %v1507 = vsel %vm366, %v1472, 0
      %v1509 = vsel %vm366, %v1474, 0
      %v1511 = vsel %vm366, %v1476, 0
      %v1513 = vsel %vm366, %v1478, 0
      %v1515 = vsel %vm366, %v1480, 0
      %v1517 = vsel %vm366, %v1482, 0
      %v1519 = vsel %vm366, %v1484, 0
      %v1521 = vsel %vm366, %v1486, 0
      %v1524 = vsel %vm403, %v1449, 0
      %1526 = vmatprep.subr.mxu0 0.0
      %1527 = vmatpush1.msra.mxu0 %v1524
      %1528 = vmatprep.subr.mxu0 0.0
      %1529 = vmatpush1.msra.mxu0 0.0
      %1530 = vmatprep.subr.mxu0 0.0
      %1531 = vmatpush1.msra.mxu0 0.0
      %1532 = vmatprep.subr.mxu0 0.0
      %1533 = vmatpush1.msra.mxu0 0.0
      %1534 = vmatprep.subr.mxu0 0.0
      %1535 = vmatpush1.msra.mxu0 0.0
      %1536 = vmatprep.subr.mxu0 0.0
      %1537 = vmatpush1.msra.mxu0 0.0
      %1538 = vmatprep.subr.mxu0 0.0
      %1539 = vmatpush1.msra.mxu0 0.0
      %1540 = vmatprep.subr.mxu0 0.0
      %1541 = vmatpush1.msra.mxu0 0.0
      %1542 = vmatprep.subr.mxu0 0.0
      %1543 = vmatpush1.msra.mxu0 0.0
      %1544 = vmatprep.subr.mxu0 0.0
      %1545 = vmatpush1.msra.mxu0 0.0
      %1546 = vmatprep.subr.mxu0 0.0
      %1547 = vmatpush1.msra.mxu0 0.0
      %1548 = vmatprep.subr.mxu0 0.0
      %1549 = vmatpush1.msra.mxu0 0.0
      %1550 = vmatprep.subr.mxu0 0.0
      %1551 = vmatpush1.msra.mxu0 0.0
      %1552 = vmatprep.subr.mxu0 0.0
      %1553 = vmatpush1.msra.mxu0 0.0
      %1554 = vmatprep.subr.mxu0 0.0
      %1555 = vmatpush1.msra.mxu0 0.0
      %1556 = vmatprep.subr.mxu0 0.0
      %1557 = vmatpush1.msra.mxu0 0.0
      %1558 = vmatprep.subr.mxu0 0.0
      %1559 = vmatpush1.msra.mxu0 0.0
      %1560 = vmatprep.subr.mxu0 0.0
      %1561 = vmatpush1.msra.mxu0 0.0
      %1562 = vmatprep.subr.mxu0 0.0
      %1563 = vmatpush1.msra.mxu0 0.0
      %1564 = vmatprep.subr.mxu0 0.0
      %1565 = vmatpush1.msra.mxu0 0.0
      %1566 = vmatprep.subr.mxu0 0.0
      %1567 = vmatpush1.msra.mxu0 0.0
      %1568 = vmatprep.subr.mxu0 0.0
      %1569 = vmatpush1.msra.mxu0 0.0
      %1570 = vmatprep.subr.mxu0 0.0
      %1571 = vmatpush1.msra.mxu0 0.0
      %1572 = vmatprep.subr.mxu0 0.0
      %1573 = vmatpush1.msra.mxu0 0.0
      %1574 = vmatprep.subr.mxu0 0.0
      %1575 = vmatpush1.msra.mxu0 0.0
      %1576 = vmatprep.subr.mxu0 0.0
      %1577 = vmatpush1.msra.mxu0 0.0
      %1578 = vmatprep.subr.mxu0 0.0
      %1579 = vmatpush1.msra.mxu0 0.0
      %1580 = vmatprep.subr.mxu0 0.0
      %1581 = vmatpush1.msra.mxu0 0.0
      %1582 = vmatprep.subr.mxu0 0.0
      %1583 = vmatpush1.msra.mxu0 0.0
      %1584 = vmatprep.subr.mxu0 0.0
      %1585 = vmatpush1.msra.mxu0 0.0
      %1586 = vmatprep.subr.mxu0 0.0
      %1587 = vmatpush1.msra.mxu0 0.0
      %1588 = vmatprep.subr.mxu0 0.0
      %1589 = vmatpush1.msra.mxu0 0.0
      %1590 = vmatprep.mubr.f32.mxu0 0.0
      %1591 = vmatmul.mubr.f32.gmra.mrb[0].mxu0 %v1487
      %v1592 = vpop.f32.mrb[0].mxu0
      %v1593 = vadd.f32 0.0, %v1592
      %v1594 = vpop.f32.mrb[0].mxu0
      %1595 = vmatprep.mubr.f32.mxu0 0.0
      %1596 = vmatmul.mubr.f32.gmra.mrb[0].mxu0 %v1489
      %v1597 = vpop.f32.mrb[0].mxu0
      %v1598 = vadd.f32 0.0, %v1597
      %v1599 = vpop.f32.mrb[0].mxu0
      %1600 = vmatprep.mubr.f32.mxu0 0.0
      %1601 = vmatmul.mubr.f32.gmra.mrb[0].mxu0 %v1491
      %v1602 = vpop.f32.mrb[0].mxu0
      %v1603 = vadd.f32 0.0, %v1602
      %v1604 = vpop.f32.mrb[0].mxu0
      %1605 = vmatprep.mubr.f32.mxu0 0.0
      %1606 = vmatmul.mubr.f32.gmra.mrb[0].mxu0 %v1493
      %v1607 = vpop.f32.mrb[0].mxu0
      %v1608 = vadd.f32 0.0, %v1607
      %v1609 = vpop.f32.mrb[0].mxu0
      %1610 = vmatprep.mubr.f32.mxu0 0.0
      %1611 = vmatmul.mubr.f32.gmra.mrb[0].mxu0 %v1495
      %v1612 = vpop.f32.mrb[0].mxu0
      %v1613 = vadd.f32 0.0, %v1612
      %v1614 = vpop.f32.mrb[0].mxu0
      %1615 = vmatprep.mubr.f32.mxu0 0.0
      %1616 = vmatmul.mubr.f32.gmra.mrb[0].mxu0 %v1497
      %v1617 = vpop.f32.mrb[0].mxu0
      %v1618 = vadd.f32 0.0, %v1617
      %v1619 = vpop.f32.mrb[0].mxu0
      %1620 = vmatprep.mubr.f32.mxu0 0.0
      %1621 = vmatmul.mubr.f32.gmra.mrb[0].mxu0 %v1499
      %v1622 = vpop.f32.mrb[0].mxu0
      %v1623 = vadd.f32 0.0, %v1622
      %v1624 = vpop.f32.mrb[0].mxu0
      %1625 = vmatprep.mubr.f32.mxu0 0.0
      %1626 = vmatmul.mubr.f32.gmra.mrb[0].mxu0 %v1501
      %v1627 = vpop.f32.mrb[0].mxu0
      %v1628 = vadd.f32 0.0, %v1627
      %v1629 = vpop.f32.mrb[0].mxu0
      %1630 = vmatprep.mubr.f32.mxu0 0.0
      %1631 = vmatmul.mubr.f32.gmra.mrb[0].mxu0 %v1503
      %v1632 = vpop.f32.mrb[0].mxu0
      %v1633 = vadd.f32 0.0, %v1632
      %v1634 = vpop.f32.mrb[0].mxu0
      %1635 = vmatprep.mubr.f32.mxu0 0.0
      %1636 = vmatmul.mubr.f32.gmra.mrb[0].mxu0 %v1505
      %v1637 = vpop.f32.mrb[0].mxu0
      %v1638 = vadd.f32 0.0, %v1637
      %v1639 = vpop.f32.mrb[0].mxu0
      %1640 = vmatprep.mubr.f32.mxu0 0.0
      %1641 = vmatmul.mubr.f32.gmra.mrb[0].mxu0 %v1507
      %v1642 = vpop.f32.mrb[0].mxu0
      %v1643 = vadd.f32 0.0, %v1642
      %v1644 = vpop.f32.mrb[0].mxu0
      %1645 = vmatprep.mubr.f32.mxu0 0.0
      %1646 = vmatmul.mubr.f32.gmra.mrb[0].mxu0 %v1509
      %v1647 = vpop.f32.mrb[0].mxu0
      %v1648 = vadd.f32 0.0, %v1647
      %v1649 = vpop.f32.mrb[0].mxu0
      %1650 = vmatprep.mubr.f32.mxu0 0.0
      %1651 = vmatmul.mubr.f32.gmra.mrb[0].mxu0 %v1511
      %v1652 = vpop.f32.mrb[0].mxu0
      %v1653 = vadd.f32 0.0, %v1652
      %v1654 = vpop.f32.mrb[0].mxu0
      %1655 = vmatprep.mubr.f32.mxu0 0.0
      %1656 = vmatmul.mubr.f32.gmra.mrb[0].mxu0 %v1513
      %v1657 = vpop.f32.mrb[0].mxu0
      %v1658 = vadd.f32 0.0, %v1657
      %v1659 = vpop.f32.mrb[0].mxu0
      %1660 = vmatprep.mubr.f32.mxu0 0.0
      %1661 = vmatmul.mubr.f32.gmra.mrb[0].mxu0 %v1515
      %v1662 = vpop.f32.mrb[0].mxu0
      %v1663 = vadd.f32 0.0, %v1662
      %v1664 = vpop.f32.mrb[0].mxu0
      %1665 = vmatprep.mubr.f32.mxu0 0.0
      %1666 = vmatmul.mubr.f32.gmra.mrb[0].mxu0 %v1517
      %v1667 = vpop.f32.mrb[0].mxu0
      %v1668 = vadd.f32 0.0, %v1667
      %v1669 = vpop.f32.mrb[0].mxu0
      %1670 = vmatprep.mubr.f32.mxu0 0.0
      %1671 = vmatmul.mubr.f32.gmra.mrb[0].mxu0 %v1519
      %v1672 = vpop.f32.mrb[0].mxu0
      %v1673 = vadd.f32 0.0, %v1672
      %v1674 = vpop.f32.mrb[0].mxu0
      %1675 = vmatprep.mubr.f32.mxu0 0.0
      %1676 = vmatmul.mubr.f32.gmra.mrb[0].mxu0 %v1521
      %v1677 = vpop.f32.mrb[0].mxu0
      %v1678 = vadd.f32 0.0, %v1677
      %v1679 = vpop.f32.mrb[0].mxu0
      %1680 = vdwg.mxu0
      %v1681 = vadd.f32 %v1430, %v1593
      %v1682 = vadd.f32 %v1431, %v1598
      %v1683 = vadd.f32 %v1432, %v1603
      %v1684 = vadd.f32 %v1433, %v1608
      %v1685 = vadd.f32 %v1434, %v1613
      %v1686 = vadd.f32 %v1435, %v1618
      %v1687 = vadd.f32 %v1436, %v1623
      %v1688 = vadd.f32 %v1437, %v1628
      %v1689 = vadd.f32 %v1438, %v1633
      %v1690 = vadd.f32 %v1439, %v1638
      %v1691 = vadd.f32 %v1440, %v1643
      %v1692 = vadd.f32 %v1441, %v1648
      %v1693 = vadd.f32 %v1442, %v1653
      %v1694 = vadd.f32 %v1443, %v1658
      %v1695 = vadd.f32 %v1444, %v1663
      %v1696 = vadd.f32 %v1445, %v1668
      %v1697 = vadd.f32 %v1446, %v1673
      %v1698 = vadd.f32 %v1447, %v1678
      %s1699 = scalar_lea.vmem %s2, 24
      %v1700 = vld [vmem:[%s1699] sm:$0xf]
      %v1703 = vrot.slane %v304, 4
      %v1704 = vsel %vm403, %v1485, %v1703
      %v1705 = vrot.slane %v305, 4
      %v1706 = vsel %vm403, %v1703, %v1705
      %v1707 = vsel %vm366, %v1704, 0
      %v1709 = vsel %vm366, %v1706, 0
      %v1712 = vsel %vm403, %v1700, 0
      %1714 = vmatprep.subr.mxu0 0.0
      %1715 = vmatpush1.msra.mxu0 %v1712
      %1716 = vmatprep.subr.mxu0 0.0
      %1717 = vmatpush1.msra.mxu0 0.0
      %1718 = vmatprep.subr.mxu0 0.0
      %1719 = vmatpush1.msra.mxu0 0.0
      %1720 = vmatprep.subr.mxu0 0.0
      %1721 = vmatpush1.msra.mxu0 0.0
      %1722 = vmatprep.subr.mxu0 0.0
      %1723 = vmatpush1.msra.mxu0 0.0
      %1724 = vmatprep.subr.mxu0 0.0
      %1725 = vmatpush1.msra.mxu0 0.0
      %1726 = vmatprep.subr.mxu0 0.0
      %1727 = vmatpush1.msra.mxu0 0.0
      %1728 = vmatprep.subr.mxu0 0.0
      %1729 = vmatpush1.msra.mxu0 0.0
      %1730 = vmatprep.subr.mxu0 0.0
      %1731 = vmatpush1.msra.mxu0 0.0
      %1732 = vmatprep.subr.mxu0 0.0
      %1733 = vmatpush1.msra.mxu0 0.0
      %1734 = vmatprep.subr.mxu0 0.0
      %1735 = vmatpush1.msra.mxu0 0.0
      %1736 = vmatprep.subr.mxu0 0.0
      %1737 = vmatpush1.msra.mxu0 0.0
      %1738 = vmatprep.subr.mxu0 0.0
      %1739 = vmatpush1.msra.mxu0 0.0
      %1740 = vmatprep.subr.mxu0 0.0
      %1741 = vmatpush1.msra.mxu0 0.0
      %1742 = vmatprep.subr.mxu0 0.0
      %1743 = vmatpush1.msra.mxu0 0.0
      %1744 = vmatprep.subr.mxu0 0.0
      %1745 = vmatpush1.msra.mxu0 0.0
      %1746 = vmatprep.subr.mxu0 0.0
      %1747 = vmatpush1.msra.mxu0 0.0
      %1748 = vmatprep.subr.mxu0 0.0
      %1749 = vmatpush1.msra.mxu0 0.0
      %1750 = vmatprep.subr.mxu0 0.0
      %1751 = vmatpush1.msra.mxu0 0.0
      %1752 = vmatprep.subr.mxu0 0.0
      %1753 = vmatpush1.msra.mxu0 0.0
      %1754 = vmatprep.subr.mxu0 0.0
      %1755 = vmatpush1.msra.mxu0 0.0
      %1756 = vmatprep.subr.mxu0 0.0
      %1757 = vmatpush1.msra.mxu0 0.0
      %1758 = vmatprep.subr.mxu0 0.0
      %1759 = vmatpush1.msra.mxu0 0.0
      %1760 = vmatprep.subr.mxu0 0.0
      %1761 = vmatpush1.msra.mxu0 0.0
      %1762 = vmatprep.subr.mxu0 0.0
      %1763 = vmatpush1.msra.mxu0 0.0
      %1764 = vmatprep.subr.mxu0 0.0
      %1765 = vmatpush1.msra.mxu0 0.0
      %1766 = vmatprep.subr.mxu0 0.0
      %1767 = vmatpush1.msra.mxu0 0.0
      %1768 = vmatprep.subr.mxu0 0.0
      %1769 = vmatpush1.msra.mxu0 0.0
      %1770 = vmatprep.subr.mxu0 0.0
      %1771 = vmatpush1.msra.mxu0 0.0
      %1772 = vmatprep.subr.mxu0 0.0
      %1773 = vmatpush1.msra.mxu0 0.0
      %1774 = vmatprep.subr.mxu0 0.0
      %1775 = vmatpush1.msra.mxu0 0.0
      %1776 = vmatprep.subr.mxu0 0.0
      %1777 = vmatpush1.msra.mxu0 0.0
      %1778 = vmatprep.mubr.f32.mxu0 0.0
      %1779 = vmatmul.mubr.f32.gmra.mrb[0].mxu0 %v1491
      %v1780 = vpop.f32.mrb[0].mxu0
      %v1781 = vadd.f32 0.0, %v1780
      %v1782 = vpop.f32.mrb[0].mxu0
      %1783 = vmatprep.mubr.f32.mxu0 0.0
      %1784 = vmatmul.mubr.f32.gmra.mrb[0].mxu0 %v1493
      %v1785 = vpop.f32.mrb[0].mxu0
      %v1786 = vadd.f32 0.0, %v1785
      %v1787 = vpop.f32.mrb[0].mxu0
      %1788 = vmatprep.mubr.f32.mxu0 0.0
      %1789 = vmatmul.mubr.f32.gmra.mrb[0].mxu0 %v1495
      %v1790 = vpop.f32.mrb[0].mxu0
      %v1791 = vadd.f32 0.0, %v1790
      %v1792 = vpop.f32.mrb[0].mxu0
      %1793 = vmatprep.mubr.f32.mxu0 0.0
      %1794 = vmatmul.mubr.f32.gmra.mrb[0].mxu0 %v1497
      %v1795 = vpop.f32.mrb[0].mxu0
      %v1796 = vadd.f32 0.0, %v1795
      %v1797 = vpop.f32.mrb[0].mxu0
      %1798 = vmatprep.mubr.f32.mxu0 0.0
      %1799 = vmatmul.mubr.f32.gmra.mrb[0].mxu0 %v1499
      %v1800 = vpop.f32.mrb[0].mxu0
      %v1801 = vadd.f32 0.0, %v1800
      %v1802 = vpop.f32.mrb[0].mxu0
      %1803 = vmatprep.mubr.f32.mxu0 0.0
      %1804 = vmatmul.mubr.f32.gmra.mrb[0].mxu0 %v1501
      %v1805 = vpop.f32.mrb[0].mxu0
      %v1806 = vadd.f32 0.0, %v1805
      %v1807 = vpop.f32.mrb[0].mxu0
      %1808 = vmatprep.mubr.f32.mxu0 0.0
      %1809 = vmatmul.mubr.f32.gmra.mrb[0].mxu0 %v1503
      %v1810 = vpop.f32.mrb[0].mxu0
      %v1811 = vadd.f32 0.0, %v1810
      %v1812 = vpop.f32.mrb[0].mxu0
      %1813 = vmatprep.mubr.f32.mxu0 0.0
      %1814 = vmatmul.mubr.f32.gmra.mrb[0].mxu0 %v1505
      %v1815 = vpop.f32.mrb[0].mxu0
      %v1816 = vadd.f32 0.0, %v1815
      %v1817 = vpop.f32.mrb[0].mxu0
      %1818 = vmatprep.mubr.f32.mxu0 0.0
      %1819 = vmatmul.mubr.f32.gmra.mrb[0].mxu0 %v1507
      %v1820 = vpop.f32.mrb[0].mxu0
      %v1821 = vadd.f32 0.0, %v1820
      %v1822 = vpop.f32.mrb[0].mxu0
      %1823 = vmatprep.mubr.f32.mxu0 0.0
      %1824 = vmatmul.mubr.f32.gmra.mrb[0].mxu0 %v1509
      %v1825 = vpop.f32.mrb[0].mxu0
      %v1826 = vadd.f32 0.0, %v1825
      %v1827 = vpop.f32.mrb[0].mxu0
      %1828 = vmatprep.mubr.f32.mxu0 0.0
      %1829 = vmatmul.mubr.f32.gmra.mrb[0].mxu0 %v1511
      %v1830 = vpop.f32.mrb[0].mxu0
      %v1831 = vadd.f32 0.0, %v1830
      %v1832 = vpop.f32.mrb[0].mxu0
      %1833 = vmatprep.mubr.f32.mxu0 0.0
      %1834 = vmatmul.mubr.f32.gmra.mrb[0].mxu0 %v1513
      %v1835 = vpop.f32.mrb[0].mxu0
      %v1836 = vadd.f32 0.0, %v1835
      %v1837 = vpop.f32.mrb[0].mxu0
      %1838 = vmatprep.mubr.f32.mxu0 0.0
      %1839 = vmatmul.mubr.f32.gmra.mrb[0].mxu0 %v1515
      %v1840 = vpop.f32.mrb[0].mxu0
      %v1841 = vadd.f32 0.0, %v1840
      %v1842 = vpop.f32.mrb[0].mxu0
      %1843 = vmatprep.mubr.f32.mxu0 0.0
      %1844 = vmatmul.mubr.f32.gmra.mrb[0].mxu0 %v1517
      %v1845 = vpop.f32.mrb[0].mxu0
      %v1846 = vadd.f32 0.0, %v1845
      %v1847 = vpop.f32.mrb[0].mxu0
      %1848 = vmatprep.mubr.f32.mxu0 0.0
      %1849 = vmatmul.mubr.f32.gmra.mrb[0].mxu0 %v1519
      %v1850 = vpop.f32.mrb[0].mxu0
      %v1851 = vadd.f32 0.0, %v1850
      %v1852 = vpop.f32.mrb[0].mxu0
      %1853 = vmatprep.mubr.f32.mxu0 0.0
      %1854 = vmatmul.mubr.f32.gmra.mrb[0].mxu0 %v1521
      %v1855 = vpop.f32.mrb[0].mxu0
      %v1856 = vadd.f32 0.0, %v1855
      %v1857 = vpop.f32.mrb[0].mxu0
      %1858 = vmatprep.mubr.f32.mxu0 0.0
      %1859 = vmatmul.mubr.f32.gmra.mrb[0].mxu0 %v1707
      %v1860 = vpop.f32.mrb[0].mxu0
      %v1861 = vadd.f32 0.0, %v1860
      %v1862 = vpop.f32.mrb[0].mxu0
      %1863 = vmatprep.mubr.f32.mxu0 0.0
      %1864 = vmatmul.mubr.f32.gmra.mrb[0].mxu0 %v1709
      %v1865 = vpop.f32.mrb[0].mxu0
      %v1866 = vadd.f32 0.0, %v1865
      %v1867 = vpop.f32.mrb[0].mxu0
      %1868 = vdwg.mxu0
      %v1869 = vadd.f32 %v1681, %v1781
      %v1870 = vadd.f32 %v1682, %v1786
      %v1871 = vadd.f32 %v1683, %v1791
      %v1872 = vadd.f32 %v1684, %v1796
      %v1873 = vadd.f32 %v1685, %v1801
      %v1874 = vadd.f32 %v1686, %v1806
      %v1875 = vadd.f32 %v1687, %v1811
      %v1876 = vadd.f32 %v1688, %v1816
      %v1877 = vadd.f32 %v1689, %v1821
      %v1878 = vadd.f32 %v1690, %v1826
      %v1879 = vadd.f32 %v1691, %v1831
      %v1880 = vadd.f32 %v1692, %v1836
      %v1881 = vadd.f32 %v1693, %v1841
      %v1882 = vadd.f32 %v1694, %v1846
      %v1883 = vadd.f32 %v1695, %v1851
      %v1884 = vadd.f32 %v1696, %v1856
      %v1885 = vadd.f32 %v1697, %v1861
      %v1886 = vadd.f32 %v1698, %v1866
      %s1887 = scalar_lea.vmem %s2, 28
      %v1888 = vld [vmem:[%s1887] sm:$0xf]
      %vm1889 = vcmask 1042432
      %v1890 = vrot.slane %v287, 5
      %v1891 = vrot.slane %v288, 5
      %v1892 = vsel %vm1889, %v1890, %v1891
      %v1893 = vrot.slane %v289, 5
      %v1894 = vsel %vm1889, %v1891, %v1893
      %v1895 = vrot.slane %v290, 5
      %v1896 = vsel %vm1889, %v1893, %v1895
      %v1897 = vrot.slane %v291, 5
      %v1898 = vsel %vm1889, %v1895, %v1897
      %v1899 = vrot.slane %v292, 5
      %v1900 = vsel %vm1889, %v1897, %v1899
      %v1901 = vrot.slane %v293, 5
      %v1902 = vsel %vm1889, %v1899, %v1901
      %v1903 = vrot.slane %v294, 5
      %v1904 = vsel %vm1889, %v1901, %v1903
      %v1905 = vrot.slane %v295, 5
      %v1906 = vsel %vm1889, %v1903, %v1905
      %v1907 = vrot.slane %v296, 5
      %v1908 = vsel %vm1889, %v1905, %v1907
      %v1909 = vrot.slane %v297, 5
      %v1910 = vsel %vm1889, %v1907, %v1909
      %v1911 = vrot.slane %v298, 5
      %v1912 = vsel %vm1889, %v1909, %v1911
      %v1913 = vrot.slane %v299, 5
      %v1914 = vsel %vm1889, %v1911, %v1913
      %v1915 = vrot.slane %v300, 5
      %v1916 = vsel %vm1889, %v1913, %v1915
      %v1917 = vrot.slane %v301, 5
      %v1918 = vsel %vm1889, %v1915, %v1917
      %v1919 = vrot.slane %v302, 5
      %v1920 = vsel %vm1889, %v1917, %v1919
      %v1921 = vrot.slane %v303, 5
      %v1922 = vsel %vm1889, %v1919, %v1921
      %v1923 = vrot.slane %v304, 5
      %v1924 = vsel %vm1889, %v1921, %v1923
      %v1925 = vrot.slane %v305, 5
      %v1926 = vsel %vm1889, %v1923, %v1925
      %v1927 = vsel %vm366, %v1892, 0
      %v1929 = vsel %vm366, %v1894, 0
      %v1931 = vsel %vm366, %v1896, 0
      %v1933 = vsel %vm366, %v1898, 0
      %v1935 = vsel %vm366, %v1900, 0
      %v1937 = vsel %vm366, %v1902, 0
      %v1939 = vsel %vm366, %v1904, 0
      %v1941 = vsel %vm366, %v1906, 0
      %v1943 = vsel %vm366, %v1908, 0
      %v1945 = vsel %vm366, %v1910, 0
      %v1947 = vsel %vm366, %v1912, 0
      %v1949 = vsel %vm366, %v1914, 0
      %v1951 = vsel %vm366, %v1916, 0
      %v1953 = vsel %vm366, %v1918, 0
      %v1955 = vsel %vm366, %v1920, 0
      %v1957 = vsel %vm366, %v1922, 0
      %v1959 = vsel %vm366, %v1924, 0
      %v1961 = vsel %vm366, %v1926, 0
      %v1964 = vsel %vm403, %v1888, 0
      %1966 = vmatprep.subr.mxu0 0.0
      %1967 = vmatpush1.msra.mxu0 %v1964
      %1968 = vmatprep.subr.mxu0 0.0
      %1969 = vmatpush1.msra.mxu0 0.0
      %1970 = vmatprep.subr.mxu0 0.0
      %1971 = vmatpush1.msra.mxu0 0.0
      %1972 = vmatprep.subr.mxu0 0.0
      %1973 = vmatpush1.msra.mxu0 0.0
      %1974 = vmatprep.subr.mxu0 0.0
      %1975 = vmatpush1.msra.mxu0 0.0
      %1976 = vmatprep.subr.mxu0 0.0
      %1977 = vmatpush1.msra.mxu0 0.0
      %1978 = vmatprep.subr.mxu0 0.0
      %1979 = vmatpush1.msra.mxu0 0.0
      %1980 = vmatprep.subr.mxu0 0.0
      %1981 = vmatpush1.msra.mxu0 0.0
      %1982 = vmatprep.subr.mxu0 0.0
      %1983 = vmatpush1.msra.mxu0 0.0
      %1984 = vmatprep.subr.mxu0 0.0
      %1985 = vmatpush1.msra.mxu0 0.0
      %1986 = vmatprep.subr.mxu0 0.0
      %1987 = vmatpush1.msra.mxu0 0.0
      %1988 = vmatprep.subr.mxu0 0.0
      %1989 = vmatpush1.msra.mxu0 0.0
      %1990 = vmatprep.subr.mxu0 0.0
      %1991 = vmatpush1.msra.mxu0 0.0
      %1992 = vmatprep.subr.mxu0 0.0
      %1993 = vmatpush1.msra.mxu0 0.0
      %1994 = vmatprep.subr.mxu0 0.0
      %1995 = vmatpush1.msra.mxu0 0.0
      %1996 = vmatprep.subr.mxu0 0.0
      %1997 = vmatpush1.msra.mxu0 0.0
      %1998 = vmatprep.subr.mxu0 0.0
      %1999 = vmatpush1.msra.mxu0 0.0
      %2000 = vmatprep.subr.mxu0 0.0
      %2001 = vmatpush1.msra.mxu0 0.0
      %2002 = vmatprep.subr.mxu0 0.0
      %2003 = vmatpush1.msra.mxu0 0.0
      %2004 = vmatprep.subr.mxu0 0.0
      %2005 = vmatpush1.msra.mxu0 0.0
      %2006 = vmatprep.subr.mxu0 0.0
      %2007 = vmatpush1.msra.mxu0 0.0
      %2008 = vmatprep.subr.mxu0 0.0
      %2009 = vmatpush1.msra.mxu0 0.0
      %2010 = vmatprep.subr.mxu0 0.0
      %2011 = vmatpush1.msra.mxu0 0.0
      %2012 = vmatprep.subr.mxu0 0.0
      %2013 = vmatpush1.msra.mxu0 0.0
      %2014 = vmatprep.subr.mxu0 0.0
      %2015 = vmatpush1.msra.mxu0 0.0
      %2016 = vmatprep.subr.mxu0 0.0
      %2017 = vmatpush1.msra.mxu0 0.0
      %2018 = vmatprep.subr.mxu0 0.0
      %2019 = vmatpush1.msra.mxu0 0.0
      %2020 = vmatprep.subr.mxu0 0.0
      %2021 = vmatpush1.msra.mxu0 0.0
      %2022 = vmatprep.subr.mxu0 0.0
      %2023 = vmatpush1.msra.mxu0 0.0
      %2024 = vmatprep.subr.mxu0 0.0
      %2025 = vmatpush1.msra.mxu0 0.0
      %2026 = vmatprep.subr.mxu0 0.0
      %2027 = vmatpush1.msra.mxu0 0.0
      %2028 = vmatprep.subr.mxu0 0.0
      %2029 = vmatpush1.msra.mxu0 0.0
      %2030 = vmatprep.mubr.f32.mxu0 0.0
      %2031 = vmatmul.mubr.f32.gmra.mrb[0].mxu0 %v1927
      %v2032 = vpop.f32.mrb[0].mxu0
      %v2033 = vadd.f32 0.0, %v2032
      %v2034 = vpop.f32.mrb[0].mxu0
      %2035 = vmatprep.mubr.f32.mxu0 0.0
      %2036 = vmatmul.mubr.f32.gmra.mrb[0].mxu0 %v1929
      %v2037 = vpop.f32.mrb[0].mxu0
      %v2038 = vadd.f32 0.0, %v2037
      %v2039 = vpop.f32.mrb[0].mxu0
      %2040 = vmatprep.mubr.f32.mxu0 0.0
      %2041 = vmatmul.mubr.f32.gmra.mrb[0].mxu0 %v1931
      %v2042 = vpop.f32.mrb[0].mxu0
      %v2043 = vadd.f32 0.0, %v2042
      %v2044 = vpop.f32.mrb[0].mxu0
      %2045 = vmatprep.mubr.f32.mxu0 0.0
      %2046 = vmatmul.mubr.f32.gmra.mrb[0].mxu0 %v1933
      %v2047 = vpop.f32.mrb[0].mxu0
      %v2048 = vadd.f32 0.0, %v2047
      %v2049 = vpop.f32.mrb[0].mxu0
      %2050 = vmatprep.mubr.f32.mxu0 0.0
      %2051 = vmatmul.mubr.f32.gmra.mrb[0].mxu0 %v1935
      %v2052 = vpop.f32.mrb[0].mxu0
      %v2053 = vadd.f32 0.0, %v2052
      %v2054 = vpop.f32.mrb[0].mxu0
      %2055 = vmatprep.mubr.f32.mxu0 0.0
      %2056 = vmatmul.mubr.f32.gmra.mrb[0].mxu0 %v1937
      %v2057 = vpop.f32.mrb[0].mxu0
      %v2058 = vadd.f32 0.0, %v2057
      %v2059 = vpop.f32.mrb[0].mxu0
      %2060 = vmatprep.mubr.f32.mxu0 0.0
      %2061 = vmatmul.mubr.f32.gmra.mrb[0].mxu0 %v1939
      %v2062 = vpop.f32.mrb[0].mxu0
      %v2063 = vadd.f32 0.0, %v2062
      %v2064 = vpop.f32.mrb[0].mxu0
      %2065 = vmatprep.mubr.f32.mxu0 0.0
      %2066 = vmatmul.mubr.f32.gmra.mrb[0].mxu0 %v1941
      %v2067 = vpop.f32.mrb[0].mxu0
      %v2068 = vadd.f32 0.0, %v2067
      %v2069 = vpop.f32.mrb[0].mxu0
      %2070 = vmatprep.mubr.f32.mxu0 0.0
      %2071 = vmatmul.mubr.f32.gmra.mrb[0].mxu0 %v1943
      %v2072 = vpop.f32.mrb[0].mxu0
      %v2073 = vadd.f32 0.0, %v2072
      %v2074 = vpop.f32.mrb[0].mxu0
      %2075 = vmatprep.mubr.f32.mxu0 0.0
      %2076 = vmatmul.mubr.f32.gmra.mrb[0].mxu0 %v1945
      %v2077 = vpop.f32.mrb[0].mxu0
      %v2078 = vadd.f32 0.0, %v2077
      %v2079 = vpop.f32.mrb[0].mxu0
      %2080 = vmatprep.mubr.f32.mxu0 0.0
      %2081 = vmatmul.mubr.f32.gmra.mrb[0].mxu0 %v1947
      %v2082 = vpop.f32.mrb[0].mxu0
      %v2083 = vadd.f32 0.0, %v2082
      %v2084 = vpop.f32.mrb[0].mxu0
      %2085 = vmatprep.mubr.f32.mxu0 0.0
      %2086 = vmatmul.mubr.f32.gmra.mrb[0].mxu0 %v1949
      %v2087 = vpop.f32.mrb[0].mxu0
      %v2088 = vadd.f32 0.0, %v2087
      %v2089 = vpop.f32.mrb[0].mxu0
      %2090 = vmatprep.mubr.f32.mxu0 0.0
      %2091 = vmatmul.mubr.f32.gmra.mrb[0].mxu0 %v1951
      %v2092 = vpop.f32.mrb[0].mxu0
      %v2093 = vadd.f32 0.0, %v2092
      %v2094 = vpop.f32.mrb[0].mxu0
      %2095 = vmatprep.mubr.f32.mxu0 0.0
      %2096 = vmatmul.mubr.f32.gmra.mrb[0].mxu0 %v1953
      %v2097 = vpop.f32.mrb[0].mxu0
      %v2098 = vadd.f32 0.0, %v2097
      %v2099 = vpop.f32.mrb[0].mxu0
      %2100 = vmatprep.mubr.f32.mxu0 0.0
      %2101 = vmatmul.mubr.f32.gmra.mrb[0].mxu0 %v1955
      %v2102 = vpop.f32.mrb[0].mxu0
      %v2103 = vadd.f32 0.0, %v2102
      %v2104 = vpop.f32.mrb[0].mxu0
      %2105 = vmatprep.mubr.f32.mxu0 0.0
      %2106 = vmatmul.mubr.f32.gmra.mrb[0].mxu0 %v1957
      %v2107 = vpop.f32.mrb[0].mxu0
      %v2108 = vadd.f32 0.0, %v2107
      %v2109 = vpop.f32.mrb[0].mxu0
      %2110 = vmatprep.mubr.f32.mxu0 0.0
      %2111 = vmatmul.mubr.f32.gmra.mrb[0].mxu0 %v1959
      %v2112 = vpop.f32.mrb[0].mxu0
      %v2113 = vadd.f32 0.0, %v2112
      %v2114 = vpop.f32.mrb[0].mxu0
      %2115 = vmatprep.mubr.f32.mxu0 0.0
      %2116 = vmatmul.mubr.f32.gmra.mrb[0].mxu0 %v1961
      %v2117 = vpop.f32.mrb[0].mxu0
      %v2118 = vadd.f32 0.0, %v2117
      %v2119 = vpop.f32.mrb[0].mxu0
      %2120 = vdwg.mxu0
      %v2121 = vadd.f32 %v1869, %v2033
      %v2122 = vadd.f32 %v1870, %v2038
      %v2123 = vadd.f32 %v1871, %v2043
      %v2124 = vadd.f32 %v1872, %v2048
      %v2125 = vadd.f32 %v1873, %v2053
      %v2126 = vadd.f32 %v1874, %v2058
      %v2127 = vadd.f32 %v1875, %v2063
      %v2128 = vadd.f32 %v1876, %v2068
      %v2129 = vadd.f32 %v1877, %v2073
      %v2130 = vadd.f32 %v1878, %v2078
      %v2131 = vadd.f32 %v1879, %v2083
      %v2132 = vadd.f32 %v1880, %v2088
      %v2133 = vadd.f32 %v1881, %v2093
      %v2134 = vadd.f32 %v1882, %v2098
      %v2135 = vadd.f32 %v1883, %v2103
      %v2136 = vadd.f32 %v1884, %v2108
      %v2137 = vadd.f32 %v1885, %v2113
      %v2138 = vadd.f32 %v1886, %v2118
      %s2139 = scalar_lea.vmem %s2, 32
      %v2140 = vld [vmem:[%s2139] sm:$0xf]
      %vm2141 = vcmask 1041408
      %v2142 = vrot.slane %v287, 6
      %v2143 = vrot.slane %v288, 6
      %v2144 = vsel %vm2141, %v2142, %v2143
      %v2145 = vrot.slane %v289, 6
      %v2146 = vsel %vm2141, %v2143, %v2145
      %v2147 = vrot.slane %v290, 6
      %v2148 = vsel %vm2141, %v2145, %v2147
      %v2149 = vrot.slane %v291, 6
      %v2150 = vsel %vm2141, %v2147, %v2149
      %v2151 = vrot.slane %v292, 6
      %v2152 = vsel %vm2141, %v2149, %v2151
      %v2153 = vrot.slane %v293, 6
      %v2154 = vsel %vm2141, %v2151, %v2153
      %v2155 = vrot.slane %v294, 6
      %v2156 = vsel %vm2141, %v2153, %v2155
      %v2157 = vrot.slane %v295, 6
      %v2158 = vsel %vm2141, %v2155, %v2157
      %v2159 = vrot.slane %v296, 6
      %v2160 = vsel %vm2141, %v2157, %v2159
      %v2161 = vrot.slane %v297, 6
      %v2162 = vsel %vm2141, %v2159, %v2161
      %v2163 = vrot.slane %v298, 6
      %v2164 = vsel %vm2141, %v2161, %v2163
      %v2165 = vrot.slane %v299, 6
      %v2166 = vsel %vm2141, %v2163, %v2165
      %v2167 = vrot.slane %v300, 6
      %v2168 = vsel %vm2141, %v2165, %v2167
      %v2169 = vrot.slane %v301, 6
      %v2170 = vsel %vm2141, %v2167, %v2169
      %v2171 = vrot.slane %v302, 6
      %v2172 = vsel %vm2141, %v2169, %v2171
      %v2173 = vrot.slane %v303, 6
      %v2174 = vsel %vm2141, %v2171, %v2173
      %v2175 = vrot.slane %v304, 6
      %v2176 = vsel %vm2141, %v2173, %v2175
      %v2177 = vrot.slane %v305, 6
      %v2178 = vsel %vm2141, %v2175, %v2177
      %v2179 = vsel %vm366, %v2144, 0
      %v2181 = vsel %vm366, %v2146, 0
      %v2183 = vsel %vm366, %v2148, 0
      %v2185 = vsel %vm366, %v2150, 0
      %v2187 = vsel %vm366, %v2152, 0
      %v2189 = vsel %vm366, %v2154, 0
      %v2191 = vsel %vm366, %v2156, 0
      %v2193 = vsel %vm366, %v2158, 0
      %v2195 = vsel %vm366, %v2160, 0
      %v2197 = vsel %vm366, %v2162, 0
      %v2199 = vsel %vm366, %v2164, 0
      %v2201 = vsel %vm366, %v2166, 0
      %v2203 = vsel %vm366, %v2168, 0
      %v2205 = vsel %vm366, %v2170, 0
      %v2207 = vsel %vm366, %v2172, 0
      %v2209 = vsel %vm366, %v2174, 0
      %v2211 = vsel %vm366, %v2176, 0
      %v2213 = vsel %vm366, %v2178, 0
      %v2216 = vsel %vm403, %v2140, 0
      %2218 = vmatprep.subr.mxu0 0.0
      %2219 = vmatpush1.msra.mxu0 %v2216
      %2220 = vmatprep.subr.mxu0 0.0
      %2221 = vmatpush1.msra.mxu0 0.0
      %2222 = vmatprep.subr.mxu0 0.0
      %2223 = vmatpush1.msra.mxu0 0.0
      %2224 = vmatprep.subr.mxu0 0.0
      %2225 = vmatpush1.msra.mxu0 0.0
      %2226 = vmatprep.subr.mxu0 0.0
      %2227 = vmatpush1.msra.mxu0 0.0
      %2228 = vmatprep.subr.mxu0 0.0
      %2229 = vmatpush1.msra.mxu0 0.0
      %2230 = vmatprep.subr.mxu0 0.0
      %2231 = vmatpush1.msra.mxu0 0.0
      %2232 = vmatprep.subr.mxu0 0.0
      %2233 = vmatpush1.msra.mxu0 0.0
      %2234 = vmatprep.subr.mxu0 0.0
      %2235 = vmatpush1.msra.mxu0 0.0
      %2236 = vmatprep.subr.mxu0 0.0
      %2237 = vmatpush1.msra.mxu0 0.0
      %2238 = vmatprep.subr.mxu0 0.0
      %2239 = vmatpush1.msra.mxu0 0.0
      %2240 = vmatprep.subr.mxu0 0.0
      %2241 = vmatpush1.msra.mxu0 0.0
      %2242 = vmatprep.subr.mxu0 0.0
      %2243 = vmatpush1.msra.mxu0 0.0
      %2244 = vmatprep.subr.mxu0 0.0
      %2245 = vmatpush1.msra.mxu0 0.0
      %2246 = vmatprep.subr.mxu0 0.0
      %2247 = vmatpush1.msra.mxu0 0.0
      %2248 = vmatprep.subr.mxu0 0.0
      %2249 = vmatpush1.msra.mxu0 0.0
      %2250 = vmatprep.subr.mxu0 0.0
      %2251 = vmatpush1.msra.mxu0 0.0
      %2252 = vmatprep.subr.mxu0 0.0
      %2253 = vmatpush1.msra.mxu0 0.0
      %2254 = vmatprep.subr.mxu0 0.0
      %2255 = vmatpush1.msra.mxu0 0.0
      %2256 = vmatprep.subr.mxu0 0.0
      %2257 = vmatpush1.msra.mxu0 0.0
      %2258 = vmatprep.subr.mxu0 0.0
      %2259 = vmatpush1.msra.mxu0 0.0
      %2260 = vmatprep.subr.mxu0 0.0
      %2261 = vmatpush1.msra.mxu0 0.0
      %2262 = vmatprep.subr.mxu0 0.0
      %2263 = vmatpush1.msra.mxu0 0.0
      %2264 = vmatprep.subr.mxu0 0.0
      %2265 = vmatpush1.msra.mxu0 0.0
      %2266 = vmatprep.subr.mxu0 0.0
      %2267 = vmatpush1.msra.mxu0 0.0
      %2268 = vmatprep.subr.mxu0 0.0
      %2269 = vmatpush1.msra.mxu0 0.0
      %2270 = vmatprep.subr.mxu0 0.0
      %2271 = vmatpush1.msra.mxu0 0.0
      %2272 = vmatprep.subr.mxu0 0.0
      %2273 = vmatpush1.msra.mxu0 0.0
      %2274 = vmatprep.subr.mxu0 0.0
      %2275 = vmatpush1.msra.mxu0 0.0
      %2276 = vmatprep.subr.mxu0 0.0
      %2277 = vmatpush1.msra.mxu0 0.0
      %2278 = vmatprep.subr.mxu0 0.0
      %2279 = vmatpush1.msra.mxu0 0.0
      %2280 = vmatprep.subr.mxu0 0.0
      %2281 = vmatpush1.msra.mxu0 0.0
      %2282 = vmatprep.mubr.f32.mxu0 0.0
      %2283 = vmatmul.mubr.f32.gmra.mrb[0].mxu0 %v2179
      %v2284 = vpop.f32.mrb[0].mxu0
      %v2285 = vadd.f32 0.0, %v2284
      %v2286 = vpop.f32.mrb[0].mxu0
      %2287 = vmatprep.mubr.f32.mxu0 0.0
      %2288 = vmatmul.mubr.f32.gmra.mrb[0].mxu0 %v2181
      %v2289 = vpop.f32.mrb[0].mxu0
      %v2290 = vadd.f32 0.0, %v2289
      %v2291 = vpop.f32.mrb[0].mxu0
      %2292 = vmatprep.mubr.f32.mxu0 0.0
      %2293 = vmatmul.mubr.f32.gmra.mrb[0].mxu0 %v2183
      %v2294 = vpop.f32.mrb[0].mxu0
      %v2295 = vadd.f32 0.0, %v2294
      %v2296 = vpop.f32.mrb[0].mxu0
      %2297 = vmatprep.mubr.f32.mxu0 0.0
      %2298 = vmatmul.mubr.f32.gmra.mrb[0].mxu0 %v2185
      %v2299 = vpop.f32.mrb[0].mxu0
      %v2300 = vadd.f32 0.0, %v2299
      %v2301 = vpop.f32.mrb[0].mxu0
      %2302 = vmatprep.mubr.f32.mxu0 0.0
      %2303 = vmatmul.mubr.f32.gmra.mrb[0].mxu0 %v2187
      %v2304 = vpop.f32.mrb[0].mxu0
      %v2305 = vadd.f32 0.0, %v2304
      %v2306 = vpop.f32.mrb[0].mxu0
      %2307 = vmatprep.mubr.f32.mxu0 0.0
      %2308 = vmatmul.mubr.f32.gmra.mrb[0].mxu0 %v2189
      %v2309 = vpop.f32.mrb[0].mxu0
      %v2310 = vadd.f32 0.0, %v2309
      %v2311 = vpop.f32.mrb[0].mxu0
      %2312 = vmatprep.mubr.f32.mxu0 0.0
      %2313 = vmatmul.mubr.f32.gmra.mrb[0].mxu0 %v2191
      %v2314 = vpop.f32.mrb[0].mxu0
      %v2315 = vadd.f32 0.0, %v2314
      %v2316 = vpop.f32.mrb[0].mxu0
      %2317 = vmatprep.mubr.f32.mxu0 0.0
      %2318 = vmatmul.mubr.f32.gmra.mrb[0].mxu0 %v2193
      %v2319 = vpop.f32.mrb[0].mxu0
      %v2320 = vadd.f32 0.0, %v2319
      %v2321 = vpop.f32.mrb[0].mxu0
      %2322 = vmatprep.mubr.f32.mxu0 0.0
      %2323 = vmatmul.mubr.f32.gmra.mrb[0].mxu0 %v2195
      %v2324 = vpop.f32.mrb[0].mxu0
      %v2325 = vadd.f32 0.0, %v2324
      %v2326 = vpop.f32.mrb[0].mxu0
      %2327 = vmatprep.mubr.f32.mxu0 0.0
      %2328 = vmatmul.mubr.f32.gmra.mrb[0].mxu0 %v2197
      %v2329 = vpop.f32.mrb[0].mxu0
      %v2330 = vadd.f32 0.0, %v2329
      %v2331 = vpop.f32.mrb[0].mxu0
      %2332 = vmatprep.mubr.f32.mxu0 0.0
      %2333 = vmatmul.mubr.f32.gmra.mrb[0].mxu0 %v2199
      %v2334 = vpop.f32.mrb[0].mxu0
      %v2335 = vadd.f32 0.0, %v2334
      %v2336 = vpop.f32.mrb[0].mxu0
      %2337 = vmatprep.mubr.f32.mxu0 0.0
      %2338 = vmatmul.mubr.f32.gmra.mrb[0].mxu0 %v2201
      %v2339 = vpop.f32.mrb[0].mxu0
      %v2340 = vadd.f32 0.0, %v2339
      %v2341 = vpop.f32.mrb[0].mxu0
      %2342 = vmatprep.mubr.f32.mxu0 0.0
      %2343 = vmatmul.mubr.f32.gmra.mrb[0].mxu0 %v2203
      %v2344 = vpop.f32.mrb[0].mxu0
      %v2345 = vadd.f32 0.0, %v2344
      %v2346 = vpop.f32.mrb[0].mxu0
      %2347 = vmatprep.mubr.f32.mxu0 0.0
      %2348 = vmatmul.mubr.f32.gmra.mrb[0].mxu0 %v2205
      %v2349 = vpop.f32.mrb[0].mxu0
      %v2350 = vadd.f32 0.0, %v2349
      %v2351 = vpop.f32.mrb[0].mxu0
      %2352 = vmatprep.mubr.f32.mxu0 0.0
      %2353 = vmatmul.mubr.f32.gmra.mrb[0].mxu0 %v2207
      %v2354 = vpop.f32.mrb[0].mxu0
      %v2355 = vadd.f32 0.0, %v2354
      %v2356 = vpop.f32.mrb[0].mxu0
      %2357 = vmatprep.mubr.f32.mxu0 0.0
      %2358 = vmatmul.mubr.f32.gmra.mrb[0].mxu0 %v2209
      %v2359 = vpop.f32.mrb[0].mxu0
      %v2360 = vadd.f32 0.0, %v2359
      %v2361 = vpop.f32.mrb[0].mxu0
      %2362 = vmatprep.mubr.f32.mxu0 0.0
      %2363 = vmatmul.mubr.f32.gmra.mrb[0].mxu0 %v2211
      %v2364 = vpop.f32.mrb[0].mxu0
      %v2365 = vadd.f32 0.0, %v2364
      %v2366 = vpop.f32.mrb[0].mxu0
      %2367 = vmatprep.mubr.f32.mxu0 0.0
      %2368 = vmatmul.mubr.f32.gmra.mrb[0].mxu0 %v2213
      %v2369 = vpop.f32.mrb[0].mxu0
      %v2370 = vadd.f32 0.0, %v2369
      %v2371 = vpop.f32.mrb[0].mxu0
      %2372 = vdwg.mxu0
      %v2373 = vadd.f32 %v2121, %v2285
      %v2374 = vadd.f32 %v2122, %v2290
      %v2375 = vadd.f32 %v2123, %v2295
      %v2376 = vadd.f32 %v2124, %v2300
      %v2377 = vadd.f32 %v2125, %v2305
      %v2378 = vadd.f32 %v2126, %v2310
      %v2379 = vadd.f32 %v2127, %v2315
      %v2380 = vadd.f32 %v2128, %v2320
      %v2381 = vadd.f32 %v2129, %v2325
      %v2382 = vadd.f32 %v2130, %v2330
      %v2383 = vadd.f32 %v2131, %v2335
      %v2384 = vadd.f32 %v2132, %v2340
      %v2385 = vadd.f32 %v2133, %v2345
      %v2386 = vadd.f32 %v2134, %v2350
      %v2387 = vadd.f32 %v2135, %v2355
      %v2388 = vadd.f32 %v2136, %v2360
      %v2389 = vadd.f32 %v2137, %v2365
      %v2390 = vadd.f32 %v2138, %v2370
      %v2391 = vld [vmem:[%s3] sm:$0x1]
      %v2393 = vlaneseq
      %v2394 = vshrl.u32 %v2393, 7
      %v2395 = vsub.s32 0, %v2394
      %v2396 = vrot.slane %v2391, %v2395
      %v2398 = vadd.f32 %v2373, %v2396
      %v2399 = vadd.f32 %v2374, %v2396
      %v2400 = vadd.f32 %v2375, %v2396
      %v2401 = vadd.f32 %v2376, %v2396
      %v2402 = vadd.f32 %v2377, %v2396
      %v2403 = vadd.f32 %v2378, %v2396
      %v2404 = vadd.f32 %v2379, %v2396
      %v2405 = vadd.f32 %v2380, %v2396
      %v2406 = vadd.f32 %v2381, %v2396
      %v2407 = vadd.f32 %v2382, %v2396
      %v2408 = vadd.f32 %v2383, %v2396
      %v2409 = vadd.f32 %v2384, %v2396
      %v2410 = vadd.f32 %v2385, %v2396
      %v2411 = vadd.f32 %v2386, %v2396
      %v2412 = vadd.f32 %v2387, %v2396
      %v2413 = vadd.f32 %v2388, %v2396
      %v2414 = vadd.f32 %v2389, %v2396
      %v2415 = vadd.f32 %v2390, %v2396
      %s2416 = sld [smem:[#allocation2]]
      %vm2417 = vcmp.gt.f32.partialorder %v2398, 0.0
      %vm2418 = vcmp.gt.f32.partialorder %v2399, 0.0
      %vm2419 = vcmp.gt.f32.partialorder %v2400, 0.0
      %vm2420 = vcmp.gt.f32.partialorder %v2401, 0.0
      %vm2421 = vcmp.gt.f32.partialorder %v2402, 0.0
      %vm2422 = vcmp.gt.f32.partialorder %v2403, 0.0
      %vm2423 = vcmp.gt.f32.partialorder %v2404, 0.0
      %vm2424 = vcmp.gt.f32.partialorder %v2405, 0.0
      %vm2425 = vcmp.gt.f32.partialorder %v2406, 0.0
      %vm2426 = vcmp.gt.f32.partialorder %v2407, 0.0
      %vm2427 = vcmp.gt.f32.partialorder %v2408, 0.0
      %vm2428 = vcmp.gt.f32.partialorder %v2409, 0.0
      %vm2429 = vcmp.gt.f32.partialorder %v2410, 0.0
      %vm2430 = vcmp.gt.f32.partialorder %v2411, 0.0
      %vm2431 = vcmp.gt.f32.partialorder %v2412, 0.0
      %vm2432 = vcmp.gt.f32.partialorder %v2413, 0.0
      %vm2433 = vcmp.gt.f32.partialorder %v2414, 0.0
      %vm2434 = vcmp.gt.f32.partialorder %v2415, 0.0
      %v2435 = vstv %s2416
      %v2436 = vmul.f32 %v2435, %v2398
      %v2437 = vmul.f32 %v2435, %v2399
      %v2438 = vmul.f32 %v2435, %v2400
      %v2439 = vmul.f32 %v2435, %v2401
      %v2440 = vmul.f32 %v2435, %v2402
      %v2441 = vmul.f32 %v2435, %v2403
      %v2442 = vmul.f32 %v2435, %v2404
      %v2443 = vmul.f32 %v2435, %v2405
      %v2444 = vmul.f32 %v2435, %v2406
      %v2445 = vmul.f32 %v2435, %v2407
      %v2446 = vmul.f32 %v2435, %v2408
      %v2447 = vmul.f32 %v2435, %v2409
      %v2448 = vmul.f32 %v2435, %v2410
      %v2449 = vmul.f32 %v2435, %v2411
      %v2450 = vmul.f32 %v2435, %v2412
      %v2451 = vmul.f32 %v2435, %v2413
      %v2452 = vmul.f32 %v2435, %v2414
      %v2453 = vmul.f32 %v2435, %v2415
      %v2454 = vsel %vm2417, %v2398, %v2436
      %v2455 = vsel %vm2418, %v2399, %v2437
      %v2456 = vsel %vm2419, %v2400, %v2438
      %v2457 = vsel %vm2420, %v2401, %v2439
      %v2458 = vsel %vm2421, %v2402, %v2440
      %v2459 = vsel %vm2422, %v2403, %v2441
      %v2460 = vsel %vm2423, %v2404, %v2442
      %v2461 = vsel %vm2424, %v2405, %v2443
      %v2462 = vsel %vm2425, %v2406, %v2444
      %v2463 = vsel %vm2426, %v2407, %v2445
      %v2464 = vsel %vm2427, %v2408, %v2446
      %v2465 = vsel %vm2428, %v2409, %v2447
      %v2466 = vsel %vm2429, %v2410, %v2448
      %v2467 = vsel %vm2430, %v2411, %v2449
      %v2468 = vsel %vm2431, %v2412, %v2450
      %v2469 = vsel %vm2432, %v2413, %v2451
      %v2470 = vsel %vm2433, %v2414, %v2452
      %v2471 = vsel %vm2434, %v2415, %v2453
      %2472 = vst [vmem:[%s274] sm:$0xff] %v2454
      %2473 = vst [vmem:[%s274 + $0x8] sm:$0xff] %v2455
      %2474 = vst [vmem:[%s274 + $0x10] sm:$0xff] %v2456
      %2475 = vst [vmem:[%s274 + $0x18] sm:$0xff] %v2457
      %2476 = vst [vmem:[%s274 + $0x20] sm:$0xff] %v2458
      %2477 = vst [vmem:[%s274 + $0x28] sm:$0xff] %v2459
      %2478 = vst [vmem:[%s274 + $0x30] sm:$0xff] %v2460
      %2479 = vst [vmem:[%s274 + $0x38] sm:$0xff] %v2461
      %2480 = vst [vmem:[%s274 + $0x40] sm:$0xff] %v2462
      %2481 = vst [vmem:[%s274 + $0x48] sm:$0xff] %v2463
      %2482 = vst [vmem:[%s274 + $0x50] sm:$0xff] %v2464
      %2483 = vst [vmem:[%s274 + $0x58] sm:$0xff] %v2465
      %2484 = vst [vmem:[%s274 + $0x60] sm:$0xff] %v2466
      %2485 = vst [vmem:[%s274 + $0x68] sm:$0xff] %v2467
      %2486 = vst [vmem:[%s274 + $0x70] sm:$0xff] %v2468
      %2487 = vst [vmem:[%s274 + $0x78] sm:$0xff] %v2469
      %2488 = vst [vmem:[%s274 + $0x80] sm:$0xff] %v2470
      %2489 = vst [vmem:[%s274 + $0x88] sm:$0xff] %v2471
      %v2490 = vlaneseq
      %v2491 = vshrl.u32 %v2490, 7
      %v2492 = vadd.s32 %v2491, 8
      %v2493 = vadd.s32 %v2491, 16
      %v2494 = vadd.s32 %v2491, 24
      %v2495 = vadd.s32 %v2491, 32
      %v2496 = vadd.s32 %v2491, 40
      %v2497 = vadd.s32 %v2491, 48
      %v2498 = vadd.s32 %v2491, 56
      %v2499 = vadd.s32 %v2491, 64
      %v2500 = vadd.s32 %v2491, 72
      %v2501 = vadd.s32 %v2491, 80
      %v2502 = vadd.s32 %v2491, 88
      %v2503 = vadd.s32 %v2491, 96
      %v2504 = vadd.s32 %v2491, 104
      %v2505 = vadd.s32 %v2491, 112
      %v2506 = vadd.s32 %v2491, 120
      %v2507 = vadd.s32 %v2491, 128
      %v2508 = vadd.s32 %v2491, 136
      %vm2509 = vcmp.lt.s32.totalorder %v2491, 0
      %v2510 = vsub.s32 0, %v2491
      %v2511 = vsel %vm2509, %v2510, %v2491
      %v2512 = vmul.u32.u64.compose %v2511, 3817748708
      %v2513 = vextract.low.u32 %v2512
      %v2514 = vextract.high.u32 %v2512
      %v2515 = vshrl.u32 %v2514, 4
      %v2516 = vmul.u32 %v2515, 18
      %v2517 = vsub.s32 %v2511, %v2516
      %v2518 = vsub.s32 0, %v2517
      %v2519 = vsel %vm2509, %v2518, %v2517
      %vm2520 = vcmp.lt.s32.totalorder %v2492, 0
      %v2521 = vsub.s32 0, %v2492
      %v2522 = vsel %vm2520, %v2521, %v2492
      %v2523 = vmul.u32.u64.compose %v2522, 3817748708
      %v2524 = vextract.low.u32 %v2523
      %v2525 = vextract.high.u32 %v2523
      %v2526 = vshrl.u32 %v2525, 4
      %v2527 = vmul.u32 %v2526, 18
      %v2528 = vsub.s32 %v2522, %v2527
      %v2529 = vsub.s32 0, %v2528
      %v2530 = vsel %vm2520, %v2529, %v2528
      %vm2531 = vcmp.lt.s32.totalorder %v2493, 0
      %v2532 = vsub.s32 0, %v2493
      %v2533 = vsel %vm2531, %v2532, %v2493
      %v2534 = vmul.u32.u64.compose %v2533, 3817748708
      %v2535 = vextract.low.u32 %v2534
      %v2536 = vextract.high.u32 %v2534
      %v2537 = vshrl.u32 %v2536, 4
      %v2538 = vmul.u32 %v2537, 18
      %v2539 = vsub.s32 %v2533, %v2538
      %v2540 = vsub.s32 0, %v2539
      %v2541 = vsel %vm2531, %v2540, %v2539
      %vm2542 = vcmp.lt.s32.totalorder %v2494, 0
      %v2543 = vsub.s32 0, %v2494
      %v2544 = vsel %vm2542, %v2543, %v2494
      %v2545 = vmul.u32.u64.compose %v2544, 3817748708
      %v2546 = vextract.low.u32 %v2545
      %v2547 = vextract.high.u32 %v2545
      %v2548 = vshrl.u32 %v2547, 4
      %v2549 = vmul.u32 %v2548, 18
      %v2550 = vsub.s32 %v2544, %v2549
      %v2551 = vsub.s32 0, %v2550
      %v2552 = vsel %vm2542, %v2551, %v2550
      %vm2553 = vcmp.lt.s32.totalorder %v2495, 0
      %v2554 = vsub.s32 0, %v2495
      %v2555 = vsel %vm2553, %v2554, %v2495
      %v2556 = vmul.u32.u64.compose %v2555, 3817748708
      %v2557 = vextract.low.u32 %v2556
      %v2558 = vextract.high.u32 %v2556
      %v2559 = vshrl.u32 %v2558, 4
      %v2560 = vmul.u32 %v2559, 18
      %v2561 = vsub.s32 %v2555, %v2560
      %v2562 = vsub.s32 0, %v2561
      %v2563 = vsel %vm2553, %v2562, %v2561
      %vm2564 = vcmp.lt.s32.totalorder %v2496, 0
      %v2565 = vsub.s32 0, %v2496
      %v2566 = vsel %vm2564, %v2565, %v2496
      %v2567 = vmul.u32.u64.compose %v2566, 3817748708
      %v2568 = vextract.low.u32 %v2567
      %v2569 = vextract.high.u32 %v2567
      %v2570 = vshrl.u32 %v2569, 4
      %v2571 = vmul.u32 %v2570, 18
      %v2572 = vsub.s32 %v2566, %v2571
      %v2573 = vsub.s32 0, %v2572
      %v2574 = vsel %vm2564, %v2573, %v2572
      %vm2575 = vcmp.lt.s32.totalorder %v2497, 0
      %v2576 = vsub.s32 0, %v2497
      %v2577 = vsel %vm2575, %v2576, %v2497
      %v2578 = vmul.u32.u64.compose %v2577, 3817748708
      %v2579 = vextract.low.u32 %v2578
      %v2580 = vextract.high.u32 %v2578
      %v2581 = vshrl.u32 %v2580, 4
      %v2582 = vmul.u32 %v2581, 18
      %v2583 = vsub.s32 %v2577, %v2582
      %v2584 = vsub.s32 0, %v2583
      %v2585 = vsel %vm2575, %v2584, %v2583
      %vm2586 = vcmp.lt.s32.totalorder %v2498, 0
      %v2587 = vsub.s32 0, %v2498
      %v2588 = vsel %vm2586, %v2587, %v2498
      %v2589 = vmul.u32.u64.compose %v2588, 3817748708
      %v2590 = vextract.low.u32 %v2589
      %v2591 = vextract.high.u32 %v2589
      %v2592 = vshrl.u32 %v2591, 4
      %v2593 = vmul.u32 %v2592, 18
      %v2594 = vsub.s32 %v2588, %v2593
      %v2595 = vsub.s32 0, %v2594
      %v2596 = vsel %vm2586, %v2595, %v2594
      %vm2597 = vcmp.lt.s32.totalorder %v2499, 0
      %v2598 = vsub.s32 0, %v2499
      %v2599 = vsel %vm2597, %v2598, %v2499
      %v2600 = vmul.u32.u64.compose %v2599, 3817748708
      %v2601 = vextract.low.u32 %v2600
      %v2602 = vextract.high.u32 %v2600
      %v2603 = vshrl.u32 %v2602, 4
      %v2604 = vmul.u32 %v2603, 18
      %v2605 = vsub.s32 %v2599, %v2604
      %v2606 = vsub.s32 0, %v2605
      %v2607 = vsel %vm2597, %v2606, %v2605
      %vm2608 = vcmp.lt.s32.totalorder %v2500, 0
      %v2609 = vsub.s32 0, %v2500
      %v2610 = vsel %vm2608, %v2609, %v2500
      %v2611 = vmul.u32.u64.compose %v2610, 3817748708
      %v2612 = vextract.low.u32 %v2611
      %v2613 = vextract.high.u32 %v2611
      %v2614 = vshrl.u32 %v2613, 4
      %v2615 = vmul.u32 %v2614, 18
      %v2616 = vsub.s32 %v2610, %v2615
      %v2617 = vsub.s32 0, %v2616
      %v2618 = vsel %vm2608, %v2617, %v2616
      %vm2619 = vcmp.lt.s32.totalorder %v2501, 0
      %v2620 = vsub.s32 0, %v2501
      %v2621 = vsel %vm2619, %v2620, %v2501
      %v2622 = vmul.u32.u64.compose %v2621, 3817748708
      %v2623 = vextract.low.u32 %v2622
      %v2624 = vextract.high.u32 %v2622
      %v2625 = vshrl.u32 %v2624, 4
      %v2626 = vmul.u32 %v2625, 18
      %v2627 = vsub.s32 %v2621, %v2626
      %v2628 = vsub.s32 0, %v2627
      %v2629 = vsel %vm2619, %v2628, %v2627
      %vm2630 = vcmp.lt.s32.totalorder %v2502, 0
      %v2631 = vsub.s32 0, %v2502
      %v2632 = vsel %vm2630, %v2631, %v2502
      %v2633 = vmul.u32.u64.compose %v2632, 3817748708
      %v2634 = vextract.low.u32 %v2633
      %v2635 = vextract.high.u32 %v2633
      %v2636 = vshrl.u32 %v2635, 4
      %v2637 = vmul.u32 %v2636, 18
      %v2638 = vsub.s32 %v2632, %v2637
      %v2639 = vsub.s32 0, %v2638
      %v2640 = vsel %vm2630, %v2639, %v2638
      %vm2641 = vcmp.lt.s32.totalorder %v2503, 0
      %v2642 = vsub.s32 0, %v2503
      %v2643 = vsel %vm2641, %v2642, %v2503
      %v2644 = vmul.u32.u64.compose %v2643, 3817748708
      %v2645 = vextract.low.u32 %v2644
      %v2646 = vextract.high.u32 %v2644
      %v2647 = vshrl.u32 %v2646, 4
      %v2648 = vmul.u32 %v2647, 18
      %v2649 = vsub.s32 %v2643, %v2648
      %v2650 = vsub.s32 0, %v2649
      %v2651 = vsel %vm2641, %v2650, %v2649
      %vm2652 = vcmp.lt.s32.totalorder %v2504, 0
      %v2653 = vsub.s32 0, %v2504
      %v2654 = vsel %vm2652, %v2653, %v2504
      %v2655 = vmul.u32.u64.compose %v2654, 3817748708
      %v2656 = vextract.low.u32 %v2655
      %v2657 = vextract.high.u32 %v2655
      %v2658 = vshrl.u32 %v2657, 4
      %v2659 = vmul.u32 %v2658, 18
      %v2660 = vsub.s32 %v2654, %v2659
      %v2661 = vsub.s32 0, %v2660
      %v2662 = vsel %vm2652, %v2661, %v2660
      %vm2663 = vcmp.lt.s32.totalorder %v2505, 0
      %v2664 = vsub.s32 0, %v2505
      %v2665 = vsel %vm2663, %v2664, %v2505
      %v2666 = vmul.u32.u64.compose %v2665, 3817748708
      %v2667 = vextract.low.u32 %v2666
      %v2668 = vextract.high.u32 %v2666
      %v2669 = vshrl.u32 %v2668, 4
      %v2670 = vmul.u32 %v2669, 18
      %v2671 = vsub.s32 %v2665, %v2670
      %v2672 = vsub.s32 0, %v2671
      %v2673 = vsel %vm2663, %v2672, %v2671
      %vm2674 = vcmp.lt.s32.totalorder %v2506, 0
      %v2675 = vsub.s32 0, %v2506
      %v2676 = vsel %vm2674, %v2675, %v2506
      %v2677 = vmul.u32.u64.compose %v2676, 3817748708
      %v2678 = vextract.low.u32 %v2677
      %v2679 = vextract.high.u32 %v2677
      %v2680 = vshrl.u32 %v2679, 4
      %v2681 = vmul.u32 %v2680, 18
      %v2682 = vsub.s32 %v2676, %v2681
      %v2683 = vsub.s32 0, %v2682
      %v2684 = vsel %vm2674, %v2683, %v2682
      %vm2685 = vcmp.lt.s32.totalorder %v2507, 0
      %v2686 = vsub.s32 0, %v2507
      %v2687 = vsel %vm2685, %v2686, %v2507
      %v2688 = vmul.u32.u64.compose %v2687, 3817748708
      %v2689 = vextract.low.u32 %v2688
      %v2690 = vextract.high.u32 %v2688
      %v2691 = vshrl.u32 %v2690, 4
      %v2692 = vmul.u32 %v2691, 18
      %v2693 = vsub.s32 %v2687, %v2692
      %v2694 = vsub.s32 0, %v2693
      %v2695 = vsel %vm2685, %v2694, %v2693
      %vm2696 = vcmp.lt.s32.totalorder %v2508, 0
      %v2697 = vsub.s32 0, %v2508
      %v2698 = vsel %vm2696, %v2697, %v2508
      %v2699 = vmul.u32.u64.compose %v2698, 3817748708
      %v2700 = vextract.low.u32 %v2699
      %v2701 = vextract.high.u32 %v2699
      %v2702 = vshrl.u32 %v2701, 4
      %v2703 = vmul.u32 %v2702, 18
      %v2704 = vsub.s32 %v2698, %v2703
      %v2705 = vsub.s32 0, %v2704
      %v2706 = vsel %vm2696, %v2705, %v2704
      %vm2707 = vcmp.ne.s32.totalorder %v2519, 0
      %vm2708 = vcmp.ne.s32.totalorder %v2530, 0
      %vm2709 = vcmp.ne.s32.totalorder %v2541, 0
      %vm2710 = vcmp.ne.s32.totalorder %v2552, 0
      %vm2711 = vcmp.ne.s32.totalorder %v2563, 0
      %vm2712 = vcmp.ne.s32.totalorder %v2574, 0
      %vm2713 = vcmp.ne.s32.totalorder %v2585, 0
      %vm2714 = vcmp.ne.s32.totalorder %v2596, 0
      %vm2715 = vcmp.ne.s32.totalorder %v2607, 0
      %vm2716 = vcmp.ne.s32.totalorder %v2618, 0
      %vm2717 = vcmp.ne.s32.totalorder %v2629, 0
      %vm2718 = vcmp.ne.s32.totalorder %v2640, 0
      %vm2719 = vcmp.ne.s32.totalorder %v2651, 0
      %vm2720 = vcmp.ne.s32.totalorder %v2662, 0
      %vm2721 = vcmp.ne.s32.totalorder %v2673, 0
      %vm2722 = vcmp.ne.s32.totalorder %v2684, 0
      %vm2723 = vcmp.ne.s32.totalorder %v2695, 0
      %vm2724 = vcmp.ne.s32.totalorder %v2706, 0
      %vm2725 = vcmp.lt.s32.totalorder %v2519, 0
      %vm2726 = vcmp.lt.s32.totalorder %v2530, 0
      %vm2727 = vcmp.lt.s32.totalorder %v2541, 0
      %vm2728 = vcmp.lt.s32.totalorder %v2552, 0
      %vm2729 = vcmp.lt.s32.totalorder %v2563, 0
      %vm2730 = vcmp.lt.s32.totalorder %v2574, 0
      %vm2731 = vcmp.lt.s32.totalorder %v2585, 0
      %vm2732 = vcmp.lt.s32.totalorder %v2596, 0
      %vm2733 = vcmp.lt.s32.totalorder %v2607, 0
      %vm2734 = vcmp.lt.s32.totalorder %v2618, 0
      %vm2735 = vcmp.lt.s32.totalorder %v2629, 0
      %vm2736 = vcmp.lt.s32.totalorder %v2640, 0
      %vm2737 = vcmp.lt.s32.totalorder %v2651, 0
      %vm2738 = vcmp.lt.s32.totalorder %v2662, 0
      %vm2739 = vcmp.lt.s32.totalorder %v2673, 0
      %vm2740 = vcmp.lt.s32.totalorder %v2684, 0
      %vm2741 = vcmp.lt.s32.totalorder %v2695, 0
      %vm2742 = vcmp.lt.s32.totalorder %v2706, 0
      %vm2743 = vmand %vm2725, %vm2707
      %vm2744 = vmand %vm2726, %vm2708
      %vm2745 = vmand %vm2727, %vm2709
      %vm2746 = vmand %vm2728, %vm2710
      %vm2747 = vmand %vm2729, %vm2711
      %vm2748 = vmand %vm2730, %vm2712
      %vm2749 = vmand %vm2731, %vm2713
      %vm2750 = vmand %vm2732, %vm2714
      %vm2751 = vmand %vm2733, %vm2715
      %vm2752 = vmand %vm2734, %vm2716
      %vm2753 = vmand %vm2735, %vm2717
      %vm2754 = vmand %vm2736, %vm2718
      %vm2755 = vmand %vm2737, %vm2719
      %vm2756 = vmand %vm2738, %vm2720
      %vm2757 = vmand %vm2739, %vm2721
      %vm2758 = vmand %vm2740, %vm2722
      %vm2759 = vmand %vm2741, %vm2723
      %vm2760 = vmand %vm2742, %vm2724
      %v2761 = vadd.s32 %v2519, 18
      %v2762 = vadd.s32 %v2530, 18
      %v2763 = vadd.s32 %v2541, 18
      %v2764 = vadd.s32 %v2552, 18
      %v2765 = vadd.s32 %v2563, 18
      %v2766 = vadd.s32 %v2574, 18
      %v2767 = vadd.s32 %v2585, 18
      %v2768 = vadd.s32 %v2596, 18
      %v2769 = vadd.s32 %v2607, 18
      %v2770 = vadd.s32 %v2618, 18
      %v2771 = vadd.s32 %v2629, 18
      %v2772 = vadd.s32 %v2640, 18
      %v2773 = vadd.s32 %v2651, 18
      %v2774 = vadd.s32 %v2662, 18
      %v2775 = vadd.s32 %v2673, 18
      %v2776 = vadd.s32 %v2684, 18
      %v2777 = vadd.s32 %v2695, 18
      %v2778 = vadd.s32 %v2706, 18
      %v2779 = vsel %vm2743, %v2761, %v2519
      %v2780 = vsel %vm2744, %v2762, %v2530
      %v2781 = vsel %vm2745, %v2763, %v2541
      %v2782 = vsel %vm2746, %v2764, %v2552
      %v2783 = vsel %vm2747, %v2765, %v2563
      %v2784 = vsel %vm2748, %v2766, %v2574
      %v2785 = vsel %vm2749, %v2767, %v2585
      %v2786 = vsel %vm2750, %v2768, %v2596
      %v2787 = vsel %vm2751, %v2769, %v2607
      %v2788 = vsel %vm2752, %v2770, %v2618
      %v2789 = vsel %vm2753, %v2771, %v2629
      %v2790 = vsel %vm2754, %v2772, %v2640
      %v2791 = vsel %vm2755, %v2773, %v2651
      %v2792 = vsel %vm2756, %v2774, %v2662
      %v2793 = vsel %vm2757, %v2775, %v2673
      %v2794 = vsel %vm2758, %v2776, %v2684
      %v2795 = vsel %vm2759, %v2777, %v2695
      %v2796 = vsel %vm2760, %v2778, %v2706
      %vm2797 = vcmp.lt.s32.totalorder %v2779, 16
      %vm2798 = vcmp.lt.s32.totalorder %v2780, 16
      %vm2799 = vcmp.lt.s32.totalorder %v2781, 16
      %vm2800 = vcmp.lt.s32.totalorder %v2782, 16
      %vm2801 = vcmp.lt.s32.totalorder %v2783, 16
      %vm2802 = vcmp.lt.s32.totalorder %v2784, 16
      %vm2803 = vcmp.lt.s32.totalorder %v2785, 16
      %vm2804 = vcmp.lt.s32.totalorder %v2786, 16
      %vm2805 = vcmp.lt.s32.totalorder %v2787, 16
      %vm2806 = vcmp.lt.s32.totalorder %v2788, 16
      %vm2807 = vcmp.lt.s32.totalorder %v2789, 16
      %vm2808 = vcmp.lt.s32.totalorder %v2790, 16
      %vm2809 = vcmp.lt.s32.totalorder %v2791, 16
      %vm2810 = vcmp.lt.s32.totalorder %v2792, 16
      %vm2811 = vcmp.lt.s32.totalorder %v2793, 16
      %vm2812 = vcmp.lt.s32.totalorder %v2794, 16
      %vm2813 = vcmp.lt.s32.totalorder %v2795, 16
      %vm2814 = vcmp.lt.s32.totalorder %v2796, 16
      %v2815 = vsel %vm2797, 1, 0
      %v2816 = vsel %vm2798, 1, 0
      %v2817 = vsel %vm2799, 1, 0
      %v2818 = vsel %vm2800, 1, 0
      %v2819 = vsel %vm2801, 1, 0
      %v2820 = vsel %vm2802, 1, 0
      %v2821 = vsel %vm2803, 1, 0
      %v2822 = vsel %vm2804, 1, 0
      %v2823 = vsel %vm2805, 1, 0
      %v2824 = vsel %vm2806, 1, 0
      %v2825 = vsel %vm2807, 1, 0
      %v2826 = vsel %vm2808, 1, 0
      %v2827 = vsel %vm2809, 1, 0
      %v2828 = vsel %vm2810, 1, 0
      %v2829 = vsel %vm2811, 1, 0
      %v2830 = vsel %vm2812, 1, 0
      %v2831 = vsel %vm2813, 1, 0
      %v2832 = vsel %vm2814, 1, 0
      %vm2833 = vcmp.eq.s32.totalorder %v2815, 1
      %vm2834 = vcmp.eq.s32.totalorder %v2816, 1
      %vm2835 = vcmp.eq.s32.totalorder %v2817, 1
      %vm2836 = vcmp.eq.s32.totalorder %v2818, 1
      %vm2837 = vcmp.eq.s32.totalorder %v2819, 1
      %vm2838 = vcmp.eq.s32.totalorder %v2820, 1
      %vm2839 = vcmp.eq.s32.totalorder %v2821, 1
      %vm2840 = vcmp.eq.s32.totalorder %v2822, 1
      %vm2841 = vcmp.eq.s32.totalorder %v2823, 1
      %vm2842 = vcmp.eq.s32.totalorder %v2824, 1
      %vm2843 = vcmp.eq.s32.totalorder %v2825, 1
      %vm2844 = vcmp.eq.s32.totalorder %v2826, 1
      %vm2845 = vcmp.eq.s32.totalorder %v2827, 1
      %vm2846 = vcmp.eq.s32.totalorder %v2828, 1
      %vm2847 = vcmp.eq.s32.totalorder %v2829, 1
      %vm2848 = vcmp.eq.s32.totalorder %v2830, 1
      %vm2849 = vcmp.eq.s32.totalorder %v2831, 1
      %vm2850 = vcmp.eq.s32.totalorder %v2832, 1
      %v2851 = vsel %vm2833, %v2454, 0.0
      %v2852 = vsel %vm2834, %v2455, 0.0
      %v2853 = vsel %vm2835, %v2456, 0.0
      %v2854 = vsel %vm2836, %v2457, 0.0
      %v2855 = vsel %vm2837, %v2458, 0.0
      %v2856 = vsel %vm2838, %v2459, 0.0
      %v2857 = vsel %vm2839, %v2460, 0.0
      %v2858 = vsel %vm2840, %v2461, 0.0
      %v2859 = vsel %vm2841, %v2462, 0.0
      %v2860 = vsel %vm2842, %v2463, 0.0
      %v2861 = vsel %vm2843, %v2464, 0.0
      %v2862 = vsel %vm2844, %v2465, 0.0
      %v2863 = vsel %vm2845, %v2466, 0.0
      %v2864 = vsel %vm2846, %v2467, 0.0
      %v2865 = vsel %vm2847, %v2468, 0.0
      %v2866 = vsel %vm2848, %v2469, 0.0
      %v2867 = vsel %vm2849, %v2470, 0.0
      %v2868 = vsel %vm2850, %v2471, 0.0
      %v2869 = vadd.f32 %v2851, %v2852
      %v2870 = vadd.f32 %v2869, %v2853
      %v2871 = vadd.f32 %v2870, %v2854
      %v2872 = vadd.f32 %v2871, %v2855
      %v2873 = vadd.f32 %v2872, %v2856
      %v2874 = vadd.f32 %v2873, %v2857
      %v2875 = vadd.f32 %v2874, %v2858
      %v2876 = vadd.f32 %v2875, %v2859
      %v2877 = vadd.f32 %v2876, %v2860
      %v2878 = vadd.f32 %v2877, %v2861
      %v2879 = vadd.f32 %v2878, %v2862
      %v2880 = vadd.f32 %v2879, %v2863
      %v2881 = vadd.f32 %v2880, %v2864
      %v2882 = vadd.f32 %v2881, %v2865
      %v2883 = vadd.f32 %v2882, %v2866
      %v2884 = vadd.f32 %v2883, %v2867
      %v2885 = vadd.f32 %v2884, %v2868
      %v2886 = vrot.slane %v2885, 4
      %v2887 = vadd.f32 %v2885, %v2886
      %v2888 = vrot.slane %v2887, 2
      %v2889 = vadd.f32 %v2887, %v2888
      %v2890 = vrot.slane %v2889, 1
      %v2891 = vadd.f32 %v2889, %v2890
      %v2892 = vmul.f32 %v2851, %v2851
      %v2893 = vmul.f32 %v2852, %v2852
      %v2894 = vmul.f32 %v2853, %v2853
      %v2895 = vmul.f32 %v2854, %v2854
      %v2896 = vmul.f32 %v2855, %v2855
      %v2897 = vmul.f32 %v2856, %v2856
      %v2898 = vmul.f32 %v2857, %v2857
      %v2899 = vmul.f32 %v2858, %v2858
      %v2900 = vmul.f32 %v2859, %v2859
      %v2901 = vmul.f32 %v2860, %v2860
      %v2902 = vmul.f32 %v2861, %v2861
      %v2903 = vmul.f32 %v2862, %v2862
      %v2904 = vmul.f32 %v2863, %v2863
      %v2905 = vmul.f32 %v2864, %v2864
      %v2906 = vmul.f32 %v2865, %v2865
      %v2907 = vmul.f32 %v2866, %v2866
      %v2908 = vmul.f32 %v2867, %v2867
      %v2909 = vmul.f32 %v2868, %v2868
      %v2910 = vadd.f32 %v2892, %v2893
      %v2911 = vadd.f32 %v2910, %v2894
      %v2912 = vadd.f32 %v2911, %v2895
      %v2913 = vadd.f32 %v2912, %v2896
      %v2914 = vadd.f32 %v2913, %v2897
      %v2915 = vadd.f32 %v2914, %v2898
      %v2916 = vadd.f32 %v2915, %v2899
      %v2917 = vadd.f32 %v2916, %v2900
      %v2918 = vadd.f32 %v2917, %v2901
      %v2919 = vadd.f32 %v2918, %v2902
      %v2920 = vadd.f32 %v2919, %v2903
      %v2921 = vadd.f32 %v2920, %v2904
      %v2922 = vadd.f32 %v2921, %v2905
      %v2923 = vadd.f32 %v2922, %v2906
      %v2924 = vadd.f32 %v2923, %v2907
      %v2925 = vadd.f32 %v2924, %v2908
      %v2926 = vadd.f32 %v2925, %v2909
      %v2927 = vrot.slane %v2926, 4
      %v2928 = vadd.f32 %v2926, %v2927
      %v2929 = vrot.slane %v2928, 2
      %v2930 = vadd.f32 %v2928, %v2929
      %v2931 = vrot.slane %v2930, 1
      %v2932 = vadd.f32 %v2930, %v2931
      %vm2933 = vcmp.eq.s32.totalorder %v2491, 0
      %v2934 = vsel %vm2933, 1, 0
      %vm2935 = vcmp.eq.s32.totalorder %v2934, 1
      %v2936 = vsel %vm2935, %v2891, 0.0
      %vm2937 = vcmp.eq.s32.totalorder %v2491, 1
      %v2938 = vsel %vm2937, 1, 0
      %vm2939 = vcmp.eq.s32.totalorder %v2938, 1
      %v2940 = vsel %vm2939, %v2932, 0.0
      %v2941 = vadd.f32 %v2936, %v2940
      %2942 = vst [vmem:[%s282] sm:$0xff] %v2941
      %p2943 = scmp.lt.s32.totalorder %s22, 1
      %s2944 = scalar_select %p2943, %s22, 1
      %p2945 = scmp.lt.s32.totalorder %s23, 1
      %s2946 = scalar_select %p2945, %s23, 1
      %s2947 = smul.addr %s2946, 18
      %s2948 = smul.addr %s2944, 36
      %s2949 = sadd.s32 %s2947, %s2948
      %s2950 = smul.addr %s2949, 8
      %s2951 = scalar_lea.vmem %s4, %s2950
      %p2952 = scmp.lt.s32.totalorder %s22, 1
      %s2953 = scalar_select %p2952, %s22, 1
      %p2954 = scmp.lt.s32.totalorder %s23, 1
      %s2955 = scalar_select %p2954, %s23, 1
      %s2956 = smul.addr %s2953, 2
      %s2957 = sadd.s32 %s2955, %s2956
      %s2958 = smul.addr %s2957, 8
      %s2959 = scalar_lea.vmem %s5, %s2958
      // Predicated region
      $region37: #{encoding_block_forward.3} parent=35 // pred_check
        %p2960 = pneg %p141
      $region38: #{encoding_block_forward.3} parent=35 // pred_check_branch
        %2962 = sbr.rel (%p2960) target = $region40
      $region39: #{encoding_block_forward.3} parent=35 // pred_region
        _
      $region40: #{encoding_block_forward.3} parent=35 // pred_fallthru
        _
      // Predicated region
      $region41: #{encoding_block_forward.3} parent=35 // pred_check
        %p2963 = pneg %p169
      $region42: #{encoding_block_forward.3} parent=35 // pred_check_branch
        %2965 = sbr.rel (%p2963) target = $region44
      $region43: #{encoding_block_forward.3} parent=35 // pred_region
        _
      $region44: #{encoding_block_forward.3} parent=35 // pred_fallthru
        _
    $region36: #{encoding_block_forward.3} parent=5 // pred_fallthru
      _
    %p2966 = scmp.le.s32.totalorder 2, %s13
    // Predicated region
    $region45: #{encoding_block_forward.3} parent=5 // pred_check
      %p2967 = pneg %p2966
    $region46: #{encoding_block_forward.3} parent=5 // pred_check_branch
      %2969 = sbr.rel (%p2967) target = $region48
    $region47: #{encoding_block_forward.3} parent=5 // pred_region
      %s2970 = ssub.s32 %s13, 2
      // Predicated region
      $region49: #{encoding_block_forward.3} parent=47 // pred_check
        %p2971 = pneg %p147
      $region50: #{encoding_block_forward.3} parent=47 // pred_check_branch
        %2973 = sbr.rel (%p2971) target = $region52
      $region51: #{encoding_block_forward.3} parent=47 // pred_region
        %p2974 = scmp.lt.s32.totalorder %s24, 1
        %s2975 = scalar_select %p2974, %s24, 1
        %p2976 = scmp.lt.s32.totalorder %s25, 1
        %s2977 = scalar_select %p2976, %s25, 1
        %s2978 = smul.addr %s2977, 18
        %s2979 = smul.addr %s2975, 36
        %s2980 = sadd.s32 %s2978, %s2979
        %s2981 = smul.addr %s2980, 8
        %s2982 = scalar_lea.vmem %s4, %s2981
      $region52: #{encoding_block_forward.3} parent=47 // pred_fallthru
        _
      // Predicated region
      $region53: #{encoding_block_forward.3} parent=47 // pred_check
        %p2983 = pneg %p175
      $region54: #{encoding_block_forward.3} parent=47 // pred_check_branch
        %2985 = sbr.rel (%p2983) target = $region56
      $region55: #{encoding_block_forward.3} parent=47 // pred_region
        %p2986 = scmp.lt.s32.totalorder %s24, 1
        %s2987 = scalar_select %p2986, %s24, 1
        %p2988 = scmp.lt.s32.totalorder %s25, 1
        %s2989 = scalar_select %p2988, %s25, 1
        %s2990 = smul.addr %s2987, 2
        %s2991 = sadd.s32 %s2989, %s2990
        %s2992 = smul.addr %s2991, 8
        %s2993 = scalar_lea.vmem %s5, %s2992
      $region56: #{encoding_block_forward.3} parent=47 // pred_fallthru
        _
    $region48: #{encoding_block_forward.3} parent=5 // pred_fallthru
      _
  $region6: #{encoding_block_forward.3} parent=0 // loop_footer
    %s17 = sadd.s32 1, %s13
  $region7: #{encoding_block_forward.3} parent=0 // loop_footer_branch
    %12 = sbr.rel target = $region3
  $region8: #{encoding_block_forward.3} parent=0 // loop_exit
    _

// kernel: encoding_block_forward.5
$region0: #{encoding_block_forward.5}
  #allocation0 [shape = 'u32[]', space=smem, size = 0x4, offset = 0x4, fixed_abs, tag = 'smem constant byte address 0x4 - core index']
  #allocation1 [shape = 'u32[144,128]{1,0:T(1,128)}', space=vmem, size = 0x12000, scoped, tag = 'internal scratch']
  %s0 = inlined_call_operand.vmem [shape: f32[2,2,144,128], index: 0, kind: input, shape index: {}]
  %s1 = inlined_call_operand.vmem [shape: f32[1,128], index: 1, kind: input, shape index: {}]
  %s2 = inlined_call_operand.vmem [shape: f32[1,128], index: 2, kind: input, shape index: {}]
  %s3 = inlined_call_operand.vmem [shape: f32[2,2,144,128], index: 3, kind: output, shape index: {}]
  %s4 = sld [smem:[#allocation0]]
  $region45: #{encoding_block_forward.5} parent=0
    _
  %s6 = ssub.s32 1, %s4
  %s7 = scalar_select 0, %s6, %s4
  loop: start=0, step=1, limit=6
  $region2: #{encoding_block_forward.5} parent=0 // loop_pre_header
    _
  $region3: #{encoding_block_forward.5} parent=0 // loop_header
    %s9 = sphi 0, %s13
    %p10 = scmp.ge.s32.totalorder %s9, 6
    %s16 = sphi 0, %s28
    %s17 = sphi 0, %s24
    %s18 = sphi 0, %s16
    %s19 = sphi 0, %s17
    %s20 = sphi 0, %s18
    %s21 = sphi 0, %s19
    %s33 = sphi 0, %s35
    %s36 = sphi 0, %s33
    %s37 = sphi 0, %s36
    %s53 = sphi 0, %s37
    %s57 = sphi 0, %s57
    %s59 = sphi 0, %s57
    %s60 = sphi 0, %s59
    %s74 = sphi 0, %s60
    %s78 = sphi 0, %s78
    %s80 = sphi 0, %s78
    %s81 = sphi 0, %s80
    %s95 = sphi 0, %s81
    %s103 = sphi 0, %s105
    %s106 = sphi 0, %s103
    %s107 = sphi 0, %s106
    %s123 = sphi 0, %s107
  $region4: #{encoding_block_forward.5} parent=0 // loop_header_branch
    %12 = sbr.rel (%p10) target = $region8
  $region5: #{encoding_block_forward.5} parent=0 // loop_body
    %s14 = ssub.s32 %s9, 1
    %s15 = ssub.s32 %s9, 2
    %s22 = sadd.s32 1, %s17
    %p23 = scmp.ge.s32.totalorder %s22, 2
    %s24 = scalar_select %p23, 0, %s22
    %s25 = sadd.s32 1, %s16
    %s26 = scalar_select %p23, %s25, %s16
    %p27 = scmp.ge.s32.totalorder %s26, 2
    %s28 = scalar_select %p27, 0, %s26
    %s29 = ssub.s32 %s16, %s28
    %s30 = ssub.s32 %s17, %s24
    %s31 = sor.u32 %s29, %s30
    %p32 = scmp.eq.s32.totalorder %s31, 0
    %s34 = sadd.s32 %s33, 1
    %s35 = scalar_select %p32, %s33, %s34
    %p38 = pneg %p32
    %p39 = scmp.eq.s32.totalorder %s9, 3
    %p40 = por %p38, %p39
    %p41 = scmp.ne.s32.totalorder %s33, %s36
    %p42 = scmp.eq.s32.totalorder %s9, 0
    %p43 = por %p41, %p42
    %p44 = scmp.ne.s32.totalorder %s33, %s36
    %p45 = scmp.eq.s32.totalorder %s14, 3
    %p46 = por %p44, %p45
    %p47 = scmp.ne.s32.totalorder %s36, %s37
    %p48 = scmp.eq.s32.totalorder %s14, 0
    %p49 = por %p47, %p48
    %p50 = scmp.ne.s32.totalorder %s36, %s37
    %p51 = scmp.eq.s32.totalorder %s15, 3
    %p52 = por %p50, %p51
    %p54 = scmp.ne.s32.totalorder %s37, %s53
    %p55 = scmp.eq.s32.totalorder %s15, 0
    %p56 = por %p54, %p55
    %s58 = sadd.s32 %s57, 1
    %p61 = scmp.eq.s32.totalorder %s9, 3
    %p62 = scmp.ne.s32.totalorder %s57, %s59
    %p63 = scmp.eq.s32.totalorder %s9, 0
    %p64 = por %p62, %p63
    %p65 = scmp.ne.s32.totalorder %s57, %s59
    %p66 = scmp.eq.s32.totalorder %s14, 3
    %p67 = por %p65, %p66
    %p68 = scmp.ne.s32.totalorder %s59, %s60
    %p69 = scmp.eq.s32.totalorder %s14, 0
    %p70 = por %p68, %p69
    %p71 = scmp.ne.s32.totalorder %s59, %s60
    %p72 = scmp.eq.s32.totalorder %s15, 3
    %p73 = por %p71, %p72
    %p75 = scmp.ne.s32.totalorder %s60, %s74
    %p76 = scmp.eq.s32.totalorder %s15, 0
    %p77 = por %p75, %p76
    %s79 = sadd.s32 %s78, 1
    %p82 = scmp.eq.s32.totalorder %s9, 3
    %p83 = scmp.ne.s32.totalorder %s78, %s80
    %p84 = scmp.eq.s32.totalorder %s9, 0
    %p85 = por %p83, %p84
    %p86 = scmp.ne.s32.totalorder %s78, %s80
    %p87 = scmp.eq.s32.totalorder %s14, 3
    %p88 = por %p86, %p87
    %p89 = scmp.ne.s32.totalorder %s80, %s81
    %p90 = scmp.eq.s32.totalorder %s14, 0
    %p91 = por %p89, %p90
    %p92 = scmp.ne.s32.totalorder %s80, %s81
    %p93 = scmp.eq.s32.totalorder %s15, 3
    %p94 = por %p92, %p93
    %p96 = scmp.ne.s32.totalorder %s81, %s95
    %p97 = scmp.eq.s32.totalorder %s15, 0
    %p98 = por %p96, %p97
    %s99 = ssub.s32 %s16, %s28
    %s100 = ssub.s32 %s17, %s24
    %s101 = sor.u32 %s99, %s100
    %p102 = scmp.eq.s32.totalorder %s101, 0
    %s104 = sadd.s32 %s103, 1
    %s105 = scalar_select %p102, %s103, %s104
    %p108 = pneg %p102
    %p109 = scmp.eq.s32.totalorder %s9, 3
    %p110 = por %p108, %p109
    %p111 = scmp.ne.s32.totalorder %s103, %s106
    %p112 = scmp.eq.s32.totalorder %s9, 0
    %p113 = por %p111, %p112
    %p114 = scmp.ne.s32.totalorder %s103, %s106
    %p115 = scmp.eq.s32.totalorder %s14, 3
    %p116 = por %p114, %p115
    %p117 = scmp.ne.s32.totalorder %s106, %s107
    %p118 = scmp.eq.s32.totalorder %s14, 0
    %p119 = por %p117, %p118
    %p120 = scmp.ne.s32.totalorder %s106, %s107
    %p121 = scmp.eq.s32.totalorder %s15, 3
    %p122 = por %p120, %p121
    %p124 = scmp.ne.s32.totalorder %s107, %s123
    %p125 = scmp.eq.s32.totalorder %s15, 0
    %p126 = por %p124, %p125
    %p127 = scmp.le.s32.totalorder 1, %s9
    %p128 = scmp.lt.s32.totalorder %s9, 5
    %p129 = pnand %p127, %p128
    %p130 = pneg %p129
    // Predicated region
    $region9: #{encoding_block_forward.5} parent=5 // pred_check
      _
    $region10: #{encoding_block_forward.5} parent=5 // pred_check_branch
      %132 = sbr.rel (%p129) target = $region12
    $region11: #{encoding_block_forward.5} parent=5 // pred_region
      %s133 = ssub.s32 %s9, 1
      // Predicated region
      $region13: #{encoding_block_forward.5} parent=11 // pred_check
        %p134 = pneg %p70
      $region14: #{encoding_block_forward.5} parent=11 // pred_check_branch
        %136 = sbr.rel (%p134) target = $region16
      $region15: #{encoding_block_forward.5} parent=11 // pred_region
        _
      $region16: #{encoding_block_forward.5} parent=11 // pred_fallthru
        _
      // Predicated region
      $region17: #{encoding_block_forward.5} parent=11 // pred_check
        %p137 = pneg %p91
      $region18: #{encoding_block_forward.5} parent=11 // pred_check_branch
        %139 = sbr.rel (%p137) target = $region20
      $region19: #{encoding_block_forward.5} parent=11 // pred_region
        _
      $region20: #{encoding_block_forward.5} parent=11 // pred_fallthru
        _
    $region12: #{encoding_block_forward.5} parent=5 // pred_fallthru
      _
    %p140 = scmp.lt.s32.totalorder %s9, 4
    // Predicated region
    $region21: #{encoding_block_forward.5} parent=5 // pred_check
      %p141 = pneg %p140
    $region22: #{encoding_block_forward.5} parent=5 // pred_check_branch
      %143 = sbr.rel (%p141) target = $region24
    $region23: #{encoding_block_forward.5} parent=5 // pred_region
      // Predicated region
      $region25: #{encoding_block_forward.5} parent=23 // pred_check
        %p144 = pneg %p43
      $region26: #{encoding_block_forward.5} parent=23 // pred_check_branch
        %146 = sbr.rel (%p144) target = $region28
      $region27: #{encoding_block_forward.5} parent=23 // pred_region
        %p147 = scmp.lt.s32.totalorder %s16, 1
        %s148 = scalar_select %p147, %s16, 1
        %p149 = scmp.lt.s32.totalorder %s17, 1
        %s150 = scalar_select %p149, %s17, 1
        %s151 = smul.addr %s150, 18
        %s152 = smul.addr %s148, 36
        %s153 = sadd.s32 %s151, %s152
        %s154 = smul.addr %s153, 8
        %s155 = scalar_lea.vmem %s0, %s154
      $region28: #{encoding_block_forward.5} parent=23 // pred_fallthru
        _
    $region24: #{encoding_block_forward.5} parent=5 // pred_fallthru
      _
    %p156 = scmp.le.s32.totalorder 1, %s9
    %p157 = scmp.lt.s32.totalorder %s9, 5
    %p158 = pnand %p156, %p157
    %p159 = pneg %p158
    // Predicated region
    $region29: #{encoding_block_forward.5} parent=5 // pred_check
      _
    $region30: #{encoding_block_forward.5} parent=5 // pred_check_branch
      %161 = sbr.rel (%p158) target = $region32
    $region31: #{encoding_block_forward.5} parent=5 // pred_region
      %s162 = ssub.s32 %s9, 1
      %p163 = scmp.lt.s32.totalorder %s18, 1
      %s164 = scalar_select %p163, %s18, 1
      %p165 = scmp.lt.s32.totalorder %s19, 1
      %s166 = scalar_select %p165, %s19, 1
      %s167 = smul.addr %s166, 18
      %s168 = smul.addr %s164, 36
      %s169 = sadd.s32 %s167, %s168
      %s170 = smul.addr %s169, 8
      %s171 = scalar_lea.vmem %s0, %s170
      %p172 = pneg %p49
      %p173 = pneg %p46
      %p174 = pneg %p70
      %p175 = pneg %p67
      %p176 = pneg %p91
      %p177 = pneg %p88
      %p178 = pneg %p119
      %p179 = pneg %p116
      %p180 = scmp.lt.s32.totalorder %s18, 1
      %s181 = scalar_select %p180, %s18, 1
      %p182 = scmp.lt.s32.totalorder %s19, 1
      %s183 = scalar_select %p182, %s19, 1
      %s184 = smul.addr %s183, 18
      %s185 = smul.addr %s181, 36
      %s186 = sadd.s32 %s184, %s185
      %s187 = smul.addr %s186, 8
      %s188 = scalar_lea.vmem %s3, %s187
      %p189 = scmp.lt.s32.totalorder %s18, 1
      %s190 = scalar_select %p189, %s18, 1
      %p191 = scmp.lt.s32.totalorder %s19, 1
      %s192 = scalar_select %p191, %s19, 1
      %s193 = smul.addr %s192, 18
      %s194 = smul.addr %s190, 36
      %s195 = sadd.s32 %s193, %s194
      %s196 = smul.addr %s195, 8
      %s197 = scalar_lea.vmem %s0, %s196
      %p198 = scmp.lt.s32.totalorder %s18, 1
      %s199 = scalar_select %p198, %s18, 1
      %p200 = scmp.lt.s32.totalorder %s19, 1
      %s201 = scalar_select %p200, %s19, 1
      %s202 = smul.addr %s201, 18
      %s203 = smul.addr %s199, 36
      %s204 = sadd.s32 %s202, %s203
      %s205 = smul.addr %s204, 8
      %s206 = scalar_lea.vmem %s3, %s205
      %v207 = vld [vmem:[%s197] sm:$0xff]
      %v208 = vld [vmem:[%s197 + $0x8] sm:$0xff]
      %v209 = vld [vmem:[%s197 + $0x10] sm:$0xff]
      %v210 = vld [vmem:[%s197 + $0x18] sm:$0xff]
      %v211 = vld [vmem:[%s197 + $0x20] sm:$0xff]
      %v212 = vld [vmem:[%s197 + $0x28] sm:$0xff]
      %v213 = vld [vmem:[%s197 + $0x30] sm:$0xff]
      %v214 = vld [vmem:[%s197 + $0x38] sm:$0xff]
      %v215 = vld [vmem:[%s197 + $0x40] sm:$0xff]
      %v216 = vld [vmem:[%s197 + $0x48] sm:$0xff]
      %v217 = vld [vmem:[%s197 + $0x50] sm:$0xff]
      %v218 = vld [vmem:[%s197 + $0x58] sm:$0xff]
      %v219 = vld [vmem:[%s197 + $0x60] sm:$0xff]
      %v220 = vld [vmem:[%s197 + $0x68] sm:$0xff]
      %v221 = vld [vmem:[%s197 + $0x70] sm:$0xff]
      %v222 = vld [vmem:[%s197 + $0x78] sm:$0xff]
      %v223 = vld [vmem:[%s197 + $0x80] sm:$0xff]
      %v224 = vld [vmem:[%s197 + $0x88] sm:$0xff]
      %v225 = vld [vmem:[%s1] sm:$0x1]
      %v227 = vlaneseq
      %v228 = vshrl.u32 %v227, 7
      %v229 = vsub.s32 0, %v228
      %v230 = vrot.slane %v225, %v229
      %v232 = vmul.f32 %v207, %v230
      %v233 = vmul.f32 %v208, %v230
      %v234 = vmul.f32 %v209, %v230
      %v235 = vmul.f32 %v210, %v230
      %v236 = vmul.f32 %v211, %v230
      %v237 = vmul.f32 %v212, %v230
      %v238 = vmul.f32 %v213, %v230
      %v239 = vmul.f32 %v214, %v230
      %v240 = vmul.f32 %v215, %v230
      %v241 = vmul.f32 %v216, %v230
      %v242 = vmul.f32 %v217, %v230
      %v243 = vmul.f32 %v218, %v230
      %v244 = vmul.f32 %v219, %v230
      %v245 = vmul.f32 %v220, %v230
      %v246 = vmul.f32 %v221, %v230
      %v247 = vmul.f32 %v222, %v230
      %v248 = vmul.f32 %v223, %v230
      %v249 = vmul.f32 %v224, %v230
      %v250 = vld [vmem:[%s2] sm:$0x1]
      %v252 = vlaneseq
      %v253 = vshrl.u32 %v252, 7
      %v254 = vsub.s32 0, %v253
      %v255 = vrot.slane %v250, %v254
      %v257 = vadd.f32 %v232, %v255
      %v258 = vadd.f32 %v233, %v255
      %v259 = vadd.f32 %v234, %v255
      %v260 = vadd.f32 %v235, %v255
      %v261 = vadd.f32 %v236, %v255
      %v262 = vadd.f32 %v237, %v255
      %v263 = vadd.f32 %v238, %v255
      %v264 = vadd.f32 %v239, %v255
      %v265 = vadd.f32 %v240, %v255
      %v266 = vadd.f32 %v241, %v255
      %v267 = vadd.f32 %v242, %v255
      %v268 = vadd.f32 %v243, %v255
      %v269 = vadd.f32 %v244, %v255
      %v270 = vadd.f32 %v245, %v255
      %v271 = vadd.f32 %v246, %v255
      %v272 = vadd.f32 %v247, %v255
      %v273 = vadd.f32 %v248, %v255
      %v274 = vadd.f32 %v249, %v255
      %275 = vst [vmem:[%s206] sm:$0xff] %v257
      %276 = vst [vmem:[%s206 + $0x8] sm:$0xff] %v258
      %277 = vst [vmem:[%s206 + $0x10] sm:$0xff] %v259
      %278 = vst [vmem:[%s206 + $0x18] sm:$0xff] %v260
      %279 = vst [vmem:[%s206 + $0x20] sm:$0xff] %v261
      %280 = vst [vmem:[%s206 + $0x28] sm:$0xff] %v262
      %281 = vst [vmem:[%s206 + $0x30] sm:$0xff] %v263
      %282 = vst [vmem:[%s206 + $0x38] sm:$0xff] %v264
      %283 = vst [vmem:[%s206 + $0x40] sm:$0xff] %v265
      %284 = vst [vmem:[%s206 + $0x48] sm:$0xff] %v266
      %285 = vst [vmem:[%s206 + $0x50] sm:$0xff] %v267
      %286 = vst [vmem:[%s206 + $0x58] sm:$0xff] %v268
      %287 = vst [vmem:[%s206 + $0x60] sm:$0xff] %v269
      %288 = vst [vmem:[%s206 + $0x68] sm:$0xff] %v270
      %289 = vst [vmem:[%s206 + $0x70] sm:$0xff] %v271
      %290 = vst [vmem:[%s206 + $0x78] sm:$0xff] %v272
      %291 = vst [vmem:[%s206 + $0x80] sm:$0xff] %v273
      %292 = vst [vmem:[%s206 + $0x88] sm:$0xff] %v274
      %p293 = scmp.lt.s32.totalorder %s18, 1
      %s294 = scalar_select %p293, %s18, 1
      %p295 = scmp.lt.s32.totalorder %s19, 1
      %s296 = scalar_select %p295, %s19, 1
      %s297 = smul.addr %s296, 18
      %s298 = smul.addr %s294, 36
      %s299 = sadd.s32 %s297, %s298
      %s300 = smul.addr %s299, 8
      %s301 = scalar_lea.vmem %s3, %s300
      // Predicated region
      $region33: #{encoding_block_forward.5} parent=31 // pred_check
        %p302 = pneg %p116
      $region34: #{encoding_block_forward.5} parent=31 // pred_check_branch
        %304 = sbr.rel (%p302) target = $region36
      $region35: #{encoding_block_forward.5} parent=31 // pred_region
        _
      $region36: #{encoding_block_forward.5} parent=31 // pred_fallthru
        _
    $region32: #{encoding_block_forward.5} parent=5 // pred_fallthru
      _
    %p305 = scmp.le.s32.totalorder 2, %s9
    // Predicated region
    $region37: #{encoding_block_forward.5} parent=5 // pred_check
      %p306 = pneg %p305
    $region38: #{encoding_block_forward.5} parent=5 // pred_check_branch
      %308 = sbr.rel (%p306) target = $region40
    $region39: #{encoding_block_forward.5} parent=5 // pred_region
      %s309 = ssub.s32 %s9, 2
      // Predicated region
      $region41: #{encoding_block_forward.5} parent=39 // pred_check
        %p310 = pneg %p122
      $region42: #{encoding_block_forward.5} parent=39 // pred_check_branch
        %312 = sbr.rel (%p310) target = $region44
      $region43: #{encoding_block_forward.5} parent=39 // pred_region
        %p313 = scmp.lt.s32.totalorder %s20, 1
        %s314 = scalar_select %p313, %s20, 1
        %p315 = scmp.lt.s32.totalorder %s21, 1
        %s316 = scalar_select %p315, %s21, 1
        %s317 = smul.addr %s316, 18
        %s318 = smul.addr %s314, 36
        %s319 = sadd.s32 %s317, %s318
        %s320 = smul.addr %s319, 8
        %s321 = scalar_lea.vmem %s3, %s320
      $region44: #{encoding_block_forward.5} parent=39 // pred_fallthru
        _
    $region40: #{encoding_block_forward.5} parent=5 // pred_fallthru
      _
  $region6: #{encoding_block_forward.5} parent=0 // loop_footer
    %s13 = sadd.s32 1, %s9
  $region7: #{encoding_block_forward.5} parent=0 // loop_footer_branch
    %8 = sbr.rel target = $region3
  $region8: #{encoding_block_forward.5} parent=0 // loop_exit
    _

// kernel: encoding_block_forward.4
$region0: #{encoding_block_forward.4}
  #allocation0 [shape = 'u32[]', space=smem, size = 0x4, offset = 0x4, fixed_abs, tag = 'smem constant byte address 0x4 - core index']
  #allocation1 [shape = 'u32[144,128]{1,0:T(1,128)}', space=vmem, size = 0x12000, scoped, tag = 'internal scratch']
  #allocation2 [shape = 'f32[1]{0:T(128)S(6)}', space=smem, size = 0x200, scoped, tag = 'scoped memory for encoding_block_forward.4']
  %s0 = inlined_call_operand.<no memory space> [shape: f32[1], index: 0, kind: input, shape index: {}]
  %s1 = inlined_call_operand.vmem [shape: f32[2,2,184,8], index: 1, kind: input, shape index: {}]
  %s2 = inlined_call_operand.vmem [shape: f32[9,8,128], index: 2, kind: input, shape index: {}]
  %s3 = inlined_call_operand.vmem [shape: f32[1,128], index: 3, kind: input, shape index: {}]
  %s4 = inlined_call_operand.vmem [shape: f32[2,2,144,128], index: 4, kind: output, shape index: {0}]
  %s5 = inlined_call_operand.vmem [shape: f32[2,2,8,128], index: 5, kind: output, shape index: {1}]
  %6 = xla_tuple %s4, %s5
  %s7 = sld [smem:[#allocation0]]
  $region57: #{encoding_block_forward.4} parent=0
    _
  %s9 = ssub.s32 1, %s7
  %s10 = scalar_select 0, %s9, %s7
  %11 = sst [smem:[#allocation2]] %s0
  loop: start=0, step=1, limit=6
  $region2: #{encoding_block_forward.4} parent=0 // loop_pre_header
    _
  $region3: #{encoding_block_forward.4} parent=0 // loop_header
    %s13 = sphi 0, %s17
    %p14 = scmp.ge.s32.totalorder %s13, 6
    %s20 = sphi 0, %s32
    %s21 = sphi 0, %s28
    %s22 = sphi 0, %s20
    %s23 = sphi 0, %s21
    %s24 = sphi 0, %s22
    %s25 = sphi 0, %s23
    %s33 = sphi 0, %s33
    %s35 = sphi 0, %s33
    %s36 = sphi 0, %s35
    %s50 = sphi 0, %s36
    %s58 = sphi 0, %s60
    %s61 = sphi 0, %s58
    %s62 = sphi 0, %s61
    %s78 = sphi 0, %s62
    %s82 = sphi 0, %s82
    %s84 = sphi 0, %s82
    %s85 = sphi 0, %s84
    %s99 = sphi 0, %s85
    %s103 = sphi 0, %s103
    %s105 = sphi 0, %s103
    %s106 = sphi 0, %s105
    %s120 = sphi 0, %s106
    %s128 = sphi 0, %s130
    %s131 = sphi 0, %s128
    %s132 = sphi 0, %s131
    %s148 = sphi 0, %s132
    %s156 = sphi 0, %s158
    %s159 = sphi 0, %s156
    %s160 = sphi 0, %s159
    %s176 = sphi 0, %s160
  $region4: #{encoding_block_forward.4} parent=0 // loop_header_branch
    %16 = sbr.rel (%p14) target = $region8
  $region5: #{encoding_block_forward.4} parent=0 // loop_body
    %s18 = ssub.s32 %s13, 1
    %s19 = ssub.s32 %s13, 2
    %s26 = sadd.s32 1, %s21
    %p27 = scmp.ge.s32.totalorder %s26, 2
    %s28 = scalar_select %p27, 0, %s26
    %s29 = sadd.s32 1, %s20
    %s30 = scalar_select %p27, %s29, %s20
    %p31 = scmp.ge.s32.totalorder %s30, 2
    %s32 = scalar_select %p31, 0, %s30
    %s34 = sadd.s32 %s33, 1
    %p37 = scmp.eq.s32.totalorder %s13, 3
    %p38 = scmp.ne.s32.totalorder %s33, %s35
    %p39 = scmp.eq.s32.totalorder %s13, 0
    %p40 = por %p38, %p39
    %p41 = scmp.ne.s32.totalorder %s33, %s35
    %p42 = scmp.eq.s32.totalorder %s18, 3
    %p43 = por %p41, %p42
    %p44 = scmp.ne.s32.totalorder %s35, %s36
    %p45 = scmp.eq.s32.totalorder %s18, 0
    %p46 = por %p44, %p45
    %p47 = scmp.ne.s32.totalorder %s35, %s36
    %p48 = scmp.eq.s32.totalorder %s19, 3
    %p49 = por %p47, %p48
    %p51 = scmp.ne.s32.totalorder %s36, %s50
    %p52 = scmp.eq.s32.totalorder %s19, 0
    %p53 = por %p51, %p52
    %s54 = ssub.s32 %s20, %s32
    %s55 = ssub.s32 %s21, %s28
    %s56 = sor.u32 %s54, %s55
    %p57 = scmp.eq.s32.totalorder %s56, 0
    %s59 = sadd.s32 %s58, 1
    %s60 = scalar_select %p57, %s58, %s59
    %p63 = pneg %p57
    %p64 = scmp.eq.s32.totalorder %s13, 3
    %p65 = por %p63, %p64
    %p66 = scmp.ne.s32.totalorder %s58, %s61
    %p67 = scmp.eq.s32.totalorder %s13, 0
    %p68 = por %p66, %p67
    %p69 = scmp.ne.s32.totalorder %s58, %s61
    %p70 = scmp.eq.s32.totalorder %s18, 3
    %p71 = por %p69, %p70
    %p72 = scmp.ne.s32.totalorder %s61, %s62
    %p73 = scmp.eq.s32.totalorder %s18, 0
    %p74 = por %p72, %p73
    %p75 = scmp.ne.s32.totalorder %s61, %s62
    %p76 = scmp.eq.s32.totalorder %s19, 3
    %p77 = por %p75, %p76
    %p79 = scmp.ne.s32.totalorder %s62, %s78
    %p80 = scmp.eq.s32.totalorder %s19, 0
    %p81 = por %p79, %p80
    %s83 = sadd.s32 %s82, 1
    %p86 = scmp.eq.s32.totalorder %s13, 3
    %p87 = scmp.ne.s32.totalorder %s82, %s84
    %p88 = scmp.eq.s32.totalorder %s13, 0
    %p89 = por %p87, %p88
    %p90 = scmp.ne.s32.totalorder %s82, %s84
    %p91 = scmp.eq.s32.totalorder %s18, 3
    %p92 = por %p90, %p91
    %p93 = scmp.ne.s32.totalorder %s84, %s85
    %p94 = scmp.eq.s32.totalorder %s18, 0
    %p95 = por %p93, %p94
    %p96 = scmp.ne.s32.totalorder %s84, %s85
    %p97 = scmp.eq.s32.totalorder %s19, 3
    %p98 = por %p96, %p97
    %p100 = scmp.ne.s32.totalorder %s85, %s99
    %p101 = scmp.eq.s32.totalorder %s19, 0
    %p102 = por %p100, %p101
    %s104 = sadd.s32 %s103, 1
    %p107 = scmp.eq.s32.totalorder %s13, 3
    %p108 = scmp.ne.s32.totalorder %s103, %s105
    %p109 = scmp.eq.s32.totalorder %s13, 0
    %p110 = por %p108, %p109
    %p111 = scmp.ne.s32.totalorder %s103, %s105
    %p112 = scmp.eq.s32.totalorder %s18, 3
    %p113 = por %p111, %p112
    %p114 = scmp.ne.s32.totalorder %s105, %s106
    %p115 = scmp.eq.s32.totalorder %s18, 0
    %p116 = por %p114, %p115
    %p117 = scmp.ne.s32.totalorder %s105, %s106
    %p118 = scmp.eq.s32.totalorder %s19, 3
    %p119 = por %p117, %p118
    %p121 = scmp.ne.s32.totalorder %s106, %s120
    %p122 = scmp.eq.s32.totalorder %s19, 0
    %p123 = por %p121, %p122
    %s124 = ssub.s32 %s20, %s32
    %s125 = ssub.s32 %s21, %s28
    %s126 = sor.u32 %s124, %s125
    %p127 = scmp.eq.s32.totalorder %s126, 0
    %s129 = sadd.s32 %s128, 1
    %s130 = scalar_select %p127, %s128, %s129
    %p133 = pneg %p127
    %p134 = scmp.eq.s32.totalorder %s13, 3
    %p135 = por %p133, %p134
    %p136 = scmp.ne.s32.totalorder %s128, %s131
    %p137 = scmp.eq.s32.totalorder %s13, 0
    %p138 = por %p136, %p137
    %p139 = scmp.ne.s32.totalorder %s128, %s131
    %p140 = scmp.eq.s32.totalorder %s18, 3
    %p141 = por %p139, %p140
    %p142 = scmp.ne.s32.totalorder %s131, %s132
    %p143 = scmp.eq.s32.totalorder %s18, 0
    %p144 = por %p142, %p143
    %p145 = scmp.ne.s32.totalorder %s131, %s132
    %p146 = scmp.eq.s32.totalorder %s19, 3
    %p147 = por %p145, %p146
    %p149 = scmp.ne.s32.totalorder %s132, %s148
    %p150 = scmp.eq.s32.totalorder %s19, 0
    %p151 = por %p149, %p150
    %s152 = ssub.s32 %s20, %s32
    %s153 = ssub.s32 %s21, %s28
    %s154 = sor.u32 %s152, %s153
    %p155 = scmp.eq.s32.totalorder %s154, 0
    %s157 = sadd.s32 %s156, 1
    %s158 = scalar_select %p155, %s156, %s157
    %p161 = pneg %p155
    %p162 = scmp.eq.s32.totalorder %s13, 3
    %p163 = por %p161, %p162
    %p164 = scmp.ne.s32.totalorder %s156, %s159
    %p165 = scmp.eq.s32.totalorder %s13, 0
    %p166 = por %p164, %p165
    %p167 = scmp.ne.s32.totalorder %s156, %s159
    %p168 = scmp.eq.s32.totalorder %s18, 3
    %p169 = por %p167, %p168
    %p170 = scmp.ne.s32.totalorder %s159, %s160
    %p171 = scmp.eq.s32.totalorder %s18, 0
    %p172 = por %p170, %p171
    %p173 = scmp.ne.s32.totalorder %s159, %s160
    %p174 = scmp.eq.s32.totalorder %s19, 3
    %p175 = por %p173, %p174
    %p177 = scmp.ne.s32.totalorder %s160, %s176
    %p178 = scmp.eq.s32.totalorder %s19, 0
    %p179 = por %p177, %p178
    %p180 = scmp.le.s32.totalorder 1, %s13
    %p181 = scmp.lt.s32.totalorder %s13, 5
    %p182 = pnand %p180, %p181
    %p183 = pneg %p182
    // Predicated region
    $region9: #{encoding_block_forward.4} parent=5 // pred_check
      _
    $region10: #{encoding_block_forward.4} parent=5 // pred_check_branch
      %185 = sbr.rel (%p182) target = $region12
    $region11: #{encoding_block_forward.4} parent=5 // pred_region
      %s186 = ssub.s32 %s13, 1
      // Predicated region
      $region13: #{encoding_block_forward.4} parent=11 // pred_check
        %p187 = pneg %p46
      $region14: #{encoding_block_forward.4} parent=11 // pred_check_branch
        %189 = sbr.rel (%p187) target = $region16
      $region15: #{encoding_block_forward.4} parent=11 // pred_region
        _
      $region16: #{encoding_block_forward.4} parent=11 // pred_fallthru
        _
      // Predicated region
      $region17: #{encoding_block_forward.4} parent=11 // pred_check
        %p190 = pneg %p95
      $region18: #{encoding_block_forward.4} parent=11 // pred_check_branch
        %192 = sbr.rel (%p190) target = $region20
      $region19: #{encoding_block_forward.4} parent=11 // pred_region
        _
      $region20: #{encoding_block_forward.4} parent=11 // pred_fallthru
        _
      // Predicated region
      $region21: #{encoding_block_forward.4} parent=11 // pred_check
        %p193 = pneg %p116
      $region22: #{encoding_block_forward.4} parent=11 // pred_check_branch
        %195 = sbr.rel (%p193) target = $region24
      $region23: #{encoding_block_forward.4} parent=11 // pred_region
        _
      $region24: #{encoding_block_forward.4} parent=11 // pred_fallthru
        _
    $region12: #{encoding_block_forward.4} parent=5 // pred_fallthru
      _
    %p196 = scmp.lt.s32.totalorder %s13, 4
    // Predicated region
    $region25: #{encoding_block_forward.4} parent=5 // pred_check
      %p197 = pneg %p196
    $region26: #{encoding_block_forward.4} parent=5 // pred_check_branch
      %199 = sbr.rel (%p197) target = $region28
    $region27: #{encoding_block_forward.4} parent=5 // pred_region
      // Predicated region
      $region29: #{encoding_block_forward.4} parent=27 // pred_check
        %p200 = pneg %p68
      $region30: #{encoding_block_forward.4} parent=27 // pred_check_branch
        %202 = sbr.rel (%p200) target = $region32
      $region31: #{encoding_block_forward.4} parent=27 // pred_region
        %p203 = scmp.lt.s32.totalorder %s20, 1
        %s204 = scalar_select %p203, %s20, 1
        %p205 = scmp.lt.s32.totalorder %s21, 1
        %s206 = scalar_select %p205, %s21, 1
        %s207 = smul.addr %s206, 23
        %s208 = smul.addr %s204, 46
        %s209 = sadd.s32 %s207, %s208
        %s210 = smul.addr %s209, 8
        %s211 = scalar_lea.vmem %s1, %s210
      $region32: #{encoding_block_forward.4} parent=27 // pred_fallthru
        _
    $region28: #{encoding_block_forward.4} parent=5 // pred_fallthru
      _
    %p212 = scmp.le.s32.totalorder 1, %s13
    %p213 = scmp.lt.s32.totalorder %s13, 5
    %p214 = pnand %p212, %p213
    %p215 = pneg %p214
    // Predicated region
    $region33: #{encoding_block_forward.4} parent=5 // pred_check
      _
    $region34: #{encoding_block_forward.4} parent=5 // pred_check_branch
      %217 = sbr.rel (%p214) target = $region36
    $region35: #{encoding_block_forward.4} parent=5 // pred_region
      %s218 = ssub.s32 %s13, 1
      %p219 = pneg %p46
      %p220 = pneg %p43
      %p221 = scmp.lt.s32.totalorder %s22, 1
      %s222 = scalar_select %p221, %s22, 1
      %p223 = scmp.lt.s32.totalorder %s23, 1
      %s224 = scalar_select %p223, %s23, 1
      %s225 = smul.addr %s224, 23
      %s226 = smul.addr %s222, 46
      %s227 = sadd.s32 %s225, %s226
      %s228 = smul.addr %s227, 8
      %s229 = scalar_lea.vmem %s1, %s228
      %p230 = pneg %p74
      %p231 = pneg %p71
      %p232 = pneg %p95
      %p233 = pneg %p92
      %p234 = pneg %p116
      %p235 = pneg %p113
      %p236 = pneg %p144
      %p237 = pneg %p141
      %p238 = scmp.lt.s32.totalorder %s22, 1
      %s239 = scalar_select %p238, %s22, 1
      %p240 = scmp.lt.s32.totalorder %s23, 1
      %s241 = scalar_select %p240, %s23, 1
      %s242 = smul.addr %s241, 18
      %s243 = smul.addr %s239, 36
      %s244 = sadd.s32 %s242, %s243
      %s245 = smul.addr %s244, 8
      %s246 = scalar_lea.vmem %s4, %s245
      %p247 = pneg %p172
      %p248 = pneg %p169
      %p249 = scmp.lt.s32.totalorder %s22, 1
      %s250 = scalar_select %p249, %s22, 1
      %p251 = scmp.lt.s32.totalorder %s23, 1
      %s252 = scalar_select %p251, %s23, 1
      %s253 = smul.addr %s250, 2
      %s254 = sadd.s32 %s252, %s253
      %s255 = smul.addr %s254, 8
      %s256 = scalar_lea.vmem %s5, %s255
      %p257 = scmp.lt.s32.totalorder %s22, 1
      %s258 = scalar_select %p257, %s22, 1
      %p259 = scmp.lt.s32.totalorder %s23, 1
      %s260 = scalar_select %p259, %s23, 1
      %s261 = smul.addr %s260, 23
      %s262 = smul.addr %s258, 46
      %s263 = sadd.s32 %s261, %s262
      %s264 = smul.addr %s263, 8
      %s265 = scalar_lea.vmem %s1, %s264
      %p266 = scmp.lt.s32.totalorder %s22, 1
      %s267 = scalar_select %p266, %s22, 1
      %p268 = scmp.lt.s32.totalorder %s23, 1
      %s269 = scalar_select %p268, %s23, 1
      %s270 = smul.addr %s269, 18
      %s271 = smul.addr %s267, 36
      %s272 = sadd.s32 %s270, %s271
      %s273 = smul.addr %s272, 8
      %s274 = scalar_lea.vmem %s4, %s273
      %p275 = scmp.lt.s32.totalorder %s22, 1
      %s276 = scalar_select %p275, %s22, 1
      %p277 = scmp.lt.s32.totalorder %s23, 1
      %s278 = scalar_select %p277, %s23, 1
      %s279 = smul.addr %s276, 2
      %s280 = sadd.s32 %s278, %s279
      %s281 = smul.addr %s280, 8
      %s282 = scalar_lea.vmem %s5, %s281
      %v283 = vld [vmem:[%s265] sm:$0xff]
      %v284 = vld [vmem:[%s265 + $0x8] sm:$0xff]
      %v285 = vld [vmem:[%s265 + $0x10] sm:$0xff]
      %v286 = vld [vmem:[%s265 + $0x18] sm:$0xff]
      %v287 = vld [vmem:[%s265 + $0x20] sm:$0xff]
      %v288 = vld [vmem:[%s265 + $0x28] sm:$0xff]
      %v289 = vld [vmem:[%s265 + $0x30] sm:$0xff]
      %v290 = vld [vmem:[%s265 + $0x38] sm:$0xff]
      %v291 = vld [vmem:[%s265 + $0x40] sm:$0xff]
      %v292 = vld [vmem:[%s265 + $0x48] sm:$0xff]
      %v293 = vld [vmem:[%s265 + $0x50] sm:$0xff]
      %v294 = vld [vmem:[%s265 + $0x58] sm:$0xff]
      %v295 = vld [vmem:[%s265 + $0x60] sm:$0xff]
      %v296 = vld [vmem:[%s265 + $0x68] sm:$0xff]
      %v297 = vld [vmem:[%s265 + $0x70] sm:$0xff]
      %v298 = vld [vmem:[%s265 + $0x78] sm:$0xff]
      %v299 = vld [vmem:[%s265 + $0x80] sm:$0xff]
      %v300 = vld [vmem:[%s265 + $0x88] sm:$0xff]
      %v301 = vld [vmem:[%s265 + $0x90] sm:$0xff]
      %v302 = vld [vmem:[%s265 + $0x98] sm:$0xff]
      %v303 = vld [vmem:[%s265 + $0xa0] sm:$0xff]
      %v304 = vld [vmem:[%s265 + $0xa8] sm:$0xff]
      %v305 = vld [vmem:[%s265 + $0xb0] sm:$0xff]
      %v306 = vld [vmem:[%s2] sm:$0xff]
      %s307 = scalar_lea.vmem %s2, 8
      %v308 = vld [vmem:[%s307] sm:$0xff]
      %vm328 = vcmask 1046528
      %v329 = vrot.slane %v283, 1
      %v330 = vrot.slane %v284, 1
      %v331 = vsel %vm328, %v329, %v330
      %v332 = vrot.slane %v285, 1
      %v333 = vsel %vm328, %v330, %v332
      %v334 = vrot.slane %v286, 1
      %v335 = vsel %vm328, %v332, %v334
      %v336 = vrot.slane %v287, 1
      %v337 = vsel %vm328, %v334, %v336
      %v338 = vrot.slane %v288, 1
      %v339 = vsel %vm328, %v336, %v338
      %v340 = vrot.slane %v289, 1
      %v341 = vsel %vm328, %v338, %v340
      %v342 = vrot.slane %v290, 1
      %v343 = vsel %vm328, %v340, %v342
      %v344 = vrot.slane %v291, 1
      %v345 = vsel %vm328, %v342, %v344
      %v346 = vrot.slane %v292, 1
      %v347 = vsel %vm328, %v344, %v346
      %v348 = vrot.slane %v293, 1
      %v349 = vsel %vm328, %v346, %v348
      %v350 = vrot.slane %v294, 1
      %v351 = vsel %vm328, %v348, %v350
      %v352 = vrot.slane %v295, 1
      %v353 = vsel %vm328, %v350, %v352
      %v354 = vrot.slane %v296, 1
      %v355 = vsel %vm328, %v352, %v354
      %v356 = vrot.slane %v297, 1
      %v357 = vsel %vm328, %v354, %v356
      %v358 = vrot.slane %v298, 1
      %v359 = vsel %vm328, %v356, %v358
      %v360 = vrot.slane %v299, 1
      %v361 = vsel %vm328, %v358, %v360
      %v362 = vrot.slane %v300, 1
      %v363 = vsel %vm328, %v360, %v362
      %v364 = vrot.slane %v301, 1
      %v365 = vsel %vm328, %v362, %v364
      %vm366 = vcmask 64512
      %v367 = vsel %vm366, %v331, 0
      %v369 = vsel %vm366, %v333, 0
      %v371 = vsel %vm366, %v335, 0
      %v373 = vsel %vm366, %v337, 0
      %v375 = vsel %vm366, %v339, 0
      %v377 = vsel %vm366, %v341, 0
      %v379 = vsel %vm366, %v343, 0
      %v381 = vsel %vm366, %v345, 0
      %v383 = vsel %vm366, %v347, 0
      %v385 = vsel %vm366, %v349, 0
      %v387 = vsel %vm366, %v351, 0
      %v389 = vsel %vm366, %v353, 0
      %v391 = vsel %vm366, %v355, 0
      %v393 = vsel %vm366, %v357, 0
      %v395 = vsel %vm366, %v359, 0
      %v397 = vsel %vm366, %v361, 0
      %v399 = vsel %vm366, %v363, 0
      %v401 = vsel %vm366, %v365, 0
      %403 = vmatprep.subr.mxu0 0.0
      %404 = vmatpush1.msra.mxu0 %v308
      %405 = vmatprep.subr.mxu0 0.0
      %406 = vmatpush1.msra.mxu0 0.0
      %407 = vmatprep.subr.mxu0 0.0
      %408 = vmatpush1.msra.mxu0 0.0
      %409 = vmatprep.subr.mxu0 0.0
      %410 = vmatpush1.msra.mxu0 0.0
      %411 = vmatprep.subr.mxu0 0.0
      %412 = vmatpush1.msra.mxu0 0.0
      %413 = vmatprep.subr.mxu0 0.0
      %414 = vmatpush1.msra.mxu0 0.0
      %415 = vmatprep.subr.mxu0 0.0
      %416 = vmatpush1.msra.mxu0 0.0
      %417 = vmatprep.subr.mxu0 0.0
      %418 = vmatpush1.msra.mxu0 0.0
      %419 = vmatprep.subr.mxu0 0.0
      %420 = vmatpush1.msra.mxu0 0.0
      %421 = vmatprep.subr.mxu0 0.0
      %422 = vmatpush1.msra.mxu0 0.0
      %423 = vmatprep.subr.mxu0 0.0
      %424 = vmatpush1.msra.mxu0 0.0
      %425 = vmatprep.subr.mxu0 0.0
      %426 = vmatpush1.msra.mxu0 0.0
      %427 = vmatprep.subr.mxu0 0.0
      %428 = vmatpush1.msra.mxu0 0.0
      %429 = vmatprep.subr.mxu0 0.0
      %430 = vmatpush1.msra.mxu0 0.0
      %431 = vmatprep.subr.mxu0 0.0
      %432 = vmatpush1.msra.mxu0 0.0
      %433 = vmatprep.subr.mxu0 0.0
      %434 = vmatpush1.msra.mxu0 0.0
      %435 = vmatprep.subr.mxu0 0.0
      %436 = vmatpush1.msra.mxu0 0.0
      %437 = vmatprep.subr.mxu0 0.0
      %438 = vmatpush1.msra.mxu0 0.0
      %439 = vmatprep.subr.mxu0 0.0
      %440 = vmatpush1.msra.mxu0 0.0
      %441 = vmatprep.subr.mxu0 0.0
      %442 = vmatpush1.msra.mxu0 0.0
      %443 = vmatprep.subr.mxu0 0.0
      %444 = vmatpush1.msra.mxu0 0.0
      %445 = vmatprep.subr.mxu0 0.0
      %446 = vmatpush1.msra.mxu0 0.0
      %447 = vmatprep.subr.mxu0 0.0
      %448 = vmatpush1.msra.mxu0 0.0
      %449 = vmatprep.subr.mxu0 0.0
      %450 = vmatpush1.msra.mxu0 0.0
      %451 = vmatprep.subr.mxu0 0.0
      %452 = vmatpush1.msra.mxu0 0.0
      %453 = vmatprep.subr.mxu0 0.0
      %454 = vmatpush1.msra.mxu0 0.0
      %455 = vmatprep.subr.mxu0 0.0
      %456 = vmatpush1.msra.mxu0 0.0
      %457 = vmatprep.subr.mxu0 0.0
      %458 = vmatpush1.msra.mxu0 0.0
      %459 = vmatprep.subr.mxu0 0.0
      %460 = vmatpush1.msra.mxu0 0.0
      %461 = vmatprep.subr.mxu0 0.0
      %462 = vmatpush1.msra.mxu0 0.0
      %463 = vmatprep.subr.mxu0 0.0
      %464 = vmatpush1.msra.mxu0 0.0
      %465 = vmatprep.subr.mxu0 0.0
      %466 = vmatpush1.msra.mxu0 0.0
      %467 = vmatprep.mubr.f32.mxu0 0.0
      %468 = vmatmul.mubr.f32.gmra.mrb[0].mxu0 %v367
      %v469 = vpop.f32.mrb[0].mxu0
      %v470 = vadd.f32 0.0, %v469
      %v471 = vpop.f32.mrb[0].mxu0
      %472 = vmatprep.mubr.f32.mxu0 0.0
      %473 = vmatmul.mubr.f32.gmra.mrb[0].mxu0 %v369
      %v474 = vpop.f32.mrb[0].mxu0
      %v475 = vadd.f32 0.0, %v474
      %v476 = vpop.f32.mrb[0].mxu0
      %477 = vmatprep.mubr.f32.mxu0 0.0
      %478 = vmatmul.mubr.f32.gmra.mrb[0].mxu0 %v371
      %v479 = vpop.f32.mrb[0].mxu0
      %v480 = vadd.f32 0.0, %v479
      %v481 = vpop.f32.mrb[0].mxu0
      %482 = vmatprep.mubr.f32.mxu0 0.0
      %483 = vmatmul.mubr.f32.gmra.mrb[0].mxu0 %v373
      %v484 = vpop.f32.mrb[0].mxu0
      %v485 = vadd.f32 0.0, %v484
      %v486 = vpop.f32.mrb[0].mxu0
      %487 = vmatprep.mubr.f32.mxu0 0.0
      %488 = vmatmul.mubr.f32.gmra.mrb[0].mxu0 %v375
      %v489 = vpop.f32.mrb[0].mxu0
      %v490 = vadd.f32 0.0, %v489
      %v491 = vpop.f32.mrb[0].mxu0
      %492 = vmatprep.mubr.f32.mxu0 0.0
      %493 = vmatmul.mubr.f32.gmra.mrb[0].mxu0 %v377
      %v494 = vpop.f32.mrb[0].mxu0
      %v495 = vadd.f32 0.0, %v494
      %v496 = vpop.f32.mrb[0].mxu0
      %497 = vmatprep.mubr.f32.mxu0 0.0
      %498 = vmatmul.mubr.f32.gmra.mrb[0].mxu0 %v379
      %v499 = vpop.f32.mrb[0].mxu0
      %v500 = vadd.f32 0.0, %v499
      %v501 = vpop.f32.mrb[0].mxu0
      %502 = vmatprep.mubr.f32.mxu0 0.0
      %503 = vmatmul.mubr.f32.gmra.mrb[0].mxu0 %v381
      %v504 = vpop.f32.mrb[0].mxu0
      %v505 = vadd.f32 0.0, %v504
      %v506 = vpop.f32.mrb[0].mxu0
      %507 = vmatprep.mubr.f32.mxu0 0.0
      %508 = vmatmul.mubr.f32.gmra.mrb[0].mxu0 %v383
      %v509 = vpop.f32.mrb[0].mxu0
      %v510 = vadd.f32 0.0, %v509
      %v511 = vpop.f32.mrb[0].mxu0
      %512 = vmatprep.mubr.f32.mxu0 0.0
      %513 = vmatmul.mubr.f32.gmra.mrb[0].mxu0 %v385
      %v514 = vpop.f32.mrb[0].mxu0
      %v515 = vadd.f32 0.0, %v514
      %v516 = vpop.f32.mrb[0].mxu0
      %517 = vmatprep.mubr.f32.mxu0 0.0
      %518 = vmatmul.mubr.f32.gmra.mrb[0].mxu0 %v387
      %v519 = vpop.f32.mrb[0].mxu0
      %v520 = vadd.f32 0.0, %v519
      %v521 = vpop.f32.mrb[0].mxu0
      %522 = vmatprep.mubr.f32.mxu0 0.0
      %523 = vmatmul.mubr.f32.gmra.mrb[0].mxu0 %v389
      %v524 = vpop.f32.mrb[0].mxu0
      %v525 = vadd.f32 0.0, %v524
      %v526 = vpop.f32.mrb[0].mxu0
      %527 = vmatprep.mubr.f32.mxu0 0.0
      %528 = vmatmul.mubr.f32.gmra.mrb[0].mxu0 %v391
      %v529 = vpop.f32.mrb[0].mxu0
      %v530 = vadd.f32 0.0, %v529
      %v531 = vpop.f32.mrb[0].mxu0
      %532 = vmatprep.mubr.f32.mxu0 0.0
      %533 = vmatmul.mubr.f32.gmra.mrb[0].mxu0 %v393
      %v534 = vpop.f32.mrb[0].mxu0
      %v535 = vadd.f32 0.0, %v534
      %v536 = vpop.f32.mrb[0].mxu0
      %537 = vmatprep.mubr.f32.mxu0 0.0
      %538 = vmatmul.mubr.f32.gmra.mrb[0].mxu0 %v395
      %v539 = vpop.f32.mrb[0].mxu0
      %v540 = vadd.f32 0.0, %v539
      %v541 = vpop.f32.mrb[0].mxu0
      %542 = vmatprep.mubr.f32.mxu0 0.0
      %543 = vmatmul.mubr.f32.gmra.mrb[0].mxu0 %v397
      %v544 = vpop.f32.mrb[0].mxu0
      %v545 = vadd.f32 0.0, %v544
      %v546 = vpop.f32.mrb[0].mxu0
      %547 = vmatprep.mubr.f32.mxu0 0.0
      %548 = vmatmul.mubr.f32.gmra.mrb[0].mxu0 %v399
      %v549 = vpop.f32.mrb[0].mxu0
      %v550 = vadd.f32 0.0, %v549
      %v551 = vpop.f32.mrb[0].mxu0
      %552 = vmatprep.mubr.f32.mxu0 0.0
      %553 = vmatmul.mubr.f32.gmra.mrb[0].mxu0 %v401
      %v554 = vpop.f32.mrb[0].mxu0
      %v555 = vadd.f32 0.0, %v554
      %v556 = vpop.f32.mrb[0].mxu0
      %557 = vdwg.mxu0
      %v558 = vsel %vm366, %v283, 0
      %v560 = vsel %vm366, %v284, 0
      %v562 = vsel %vm366, %v285, 0
      %v564 = vsel %vm366, %v286, 0
      %v566 = vsel %vm366, %v287, 0
      %v568 = vsel %vm366, %v288, 0
      %v570 = vsel %vm366, %v289, 0
      %v572 = vsel %vm366, %v290, 0
      %v574 = vsel %vm366, %v291, 0
      %v576 = vsel %vm366, %v292, 0
      %v578 = vsel %vm366, %v293, 0
      %v580 = vsel %vm366, %v294, 0
      %v582 = vsel %vm366, %v295, 0
      %v584 = vsel %vm366, %v296, 0
      %v586 = vsel %vm366, %v297, 0
      %v588 = vsel %vm366, %v298, 0
      %v590 = vsel %vm366, %v299, 0
      %v592 = vsel %vm366, %v300, 0
      %594 = vmatprep.subr.mxu0 0.0
      %595 = vmatpush1.msra.mxu0 %v306
      %596 = vmatprep.subr.mxu0 0.0
      %597 = vmatpush1.msra.mxu0 0.0
      %598 = vmatprep.subr.mxu0 0.0
      %599 = vmatpush1.msra.mxu0 0.0
      %600 = vmatprep.subr.mxu0 0.0
      %601 = vmatpush1.msra.mxu0 0.0
      %602 = vmatprep.subr.mxu0 0.0
      %603 = vmatpush1.msra.mxu0 0.0
      %604 = vmatprep.subr.mxu0 0.0
      %605 = vmatpush1.msra.mxu0 0.0
      %606 = vmatprep.subr.mxu0 0.0
      %607 = vmatpush1.msra.mxu0 0.0
      %608 = vmatprep.subr.mxu0 0.0
      %609 = vmatpush1.msra.mxu0 0.0
      %610 = vmatprep.subr.mxu0 0.0
      %611 = vmatpush1.msra.mxu0 0.0
      %612 = vmatprep.subr.mxu0 0.0
      %613 = vmatpush1.msra.mxu0 0.0
      %614 = vmatprep.subr.mxu0 0.0
      %615 = vmatpush1.msra.mxu0 0.0
      %616 = vmatprep.subr.mxu0 0.0
      %617 = vmatpush1.msra.mxu0 0.0
      %618 = vmatprep.subr.mxu0 0.0
      %619 = vmatpush1.msra.mxu0 0.0
      %620 = vmatprep.subr.mxu0 0.0
      %621 = vmatpush1.msra.mxu0 0.0
      %622 = vmatprep.subr.mxu0 0.0
      %623 = vmatpush1.msra.mxu0 0.0
      %624 = vmatprep.subr.mxu0 0.0
      %625 = vmatpush1.msra.mxu0 0.0
      %626 = vmatprep.subr.mxu0 0.0
      %627 = vmatpush1.msra.mxu0 0.0
      %628 = vmatprep.subr.mxu0 0.0
      %629 = vmatpush1.msra.mxu0 0.0
      %630 = vmatprep.subr.mxu0 0.0
      %631 = vmatpush1.msra.mxu0 0.0
      %632 = vmatprep.subr.mxu0 0.0
      %633 = vmatpush1.msra.mxu0 0.0
      %634 = vmatprep.subr.mxu0 0.0
      %635 = vmatpush1.msra.mxu0 0.0
      %636 = vmatprep.subr.mxu0 0.0
      %637 = vmatpush1.msra.mxu0 0.0
      %638 = vmatprep.subr.mxu0 0.0
      %639 = vmatpush1.msra.mxu0 0.0
      %640 = vmatprep.subr.mxu0 0.0
      %641 = vmatpush1.msra.mxu0 0.0
      %642 = vmatprep.subr.mxu0 0.0
      %643 = vmatpush1.msra.mxu0 0.0
      %644 = vmatprep.subr.mxu0 0.0
      %645 = vmatpush1.msra.mxu0 0.0
      %646 = vmatprep.subr.mxu0 0.0
      %647 = vmatpush1.msra.mxu0 0.0
      %648 = vmatprep.subr.mxu0 0.0
      %649 = vmatpush1.msra.mxu0 0.0
      %650 = vmatprep.subr.mxu0 0.0
      %651 = vmatpush1.msra.mxu0 0.0
      %652 = vmatprep.subr.mxu0 0.0
      %653 = vmatpush1.msra.mxu0 0.0
      %654 = vmatprep.subr.mxu0 0.0
      %655 = vmatpush1.msra.mxu0 0.0
      %656 = vmatprep.subr.mxu0 0.0
      %657 = vmatpush1.msra.mxu0 0.0
      %658 = vmatprep.mubr.f32.mxu0 0.0
      %659 = vmatmul.mubr.f32.gmra.mrb[0].mxu0 %v558
      %v660 = vpop.f32.mrb[0].mxu0
      %v661 = vadd.f32 %v470, %v660
      %v662 = vpop.f32.mrb[0].mxu0
      %663 = vmatprep.mubr.f32.mxu0 0.0
      %664 = vmatmul.mubr.f32.gmra.mrb[0].mxu0 %v560
      %v665 = vpop.f32.mrb[0].mxu0
      %v666 = vadd.f32 %v475, %v665
      %v667 = vpop.f32.mrb[0].mxu0
      %668 = vmatprep.mubr.f32.mxu0 0.0
      %669 = vmatmul.mubr.f32.gmra.mrb[0].mxu0 %v562
      %v670 = vpop.f32.mrb[0].mxu0
      %v671 = vadd.f32 %v480, %v670
      %v672 = vpop.f32.mrb[0].mxu0
      %673 = vmatprep.mubr.f32.mxu0 0.0
      %674 = vmatmul.mubr.f32.gmra.mrb[0].mxu0 %v564
      %v675 = vpop.f32.mrb[0].mxu0
      %v676 = vadd.f32 %v485, %v675
      %v677 = vpop.f32.mrb[0].mxu0
      %678 = vmatprep.mubr.f32.mxu0 0.0
      %679 = vmatmul.mubr.f32.gmra.mrb[0].mxu0 %v566
      %v680 = vpop.f32.mrb[0].mxu0
      %v681 = vadd.f32 %v490, %v680
      %v682 = vpop.f32.mrb[0].mxu0
      %683 = vmatprep.mubr.f32.mxu0 0.0
      %684 = vmatmul.mubr.f32.gmra.mrb[0].mxu0 %v568
      %v685 = vpop.f32.mrb[0].mxu0
      %v686 = vadd.f32 %v495, %v685
      %v687 = vpop.f32.mrb[0].mxu0
      %688 = vmatprep.mubr.f32.mxu0 0.0
      %689 = vmatmul.mubr.f32.gmra.mrb[0].mxu0 %v570
      %v690 = vpop.f32.mrb[0].mxu0
      %v691 = vadd.f32 %v500, %v690
      %v692 = vpop.f32.mrb[0].mxu0
      %693 = vmatprep.mubr.f32.mxu0 0.0
      %694 = vmatmul.mubr.f32.gmra.mrb[0].mxu0 %v572
      %v695 = vpop.f32.mrb[0].mxu0
      %v696 = vadd.f32 %v505, %v695
      %v697 = vpop.f32.mrb[0].mxu0
      %698 = vmatprep.mubr.f32.mxu0 0.0
      %699 = vmatmul.mubr.f32.gmra.mrb[0].mxu0 %v574
      %v700 = vpop.f32.mrb[0].mxu0
      %v701 = vadd.f32 %v510, %v700
      %v702 = vpop.f32.mrb[0].mxu0
      %703 = vmatprep.mubr.f32.mxu0 0.0
      %704 = vmatmul.mubr.f32.gmra.mrb[0].mxu0 %v576
      %v705 = vpop.f32.mrb[0].mxu0
      %v706 = vadd.f32 %v515, %v705
      %v707 = vpop.f32.mrb[0].mxu0
      %708 = vmatprep.mubr.f32.mxu0 0.0
      %709 = vmatmul.mubr.f32.gmra.mrb[0].mxu0 %v578
      %v710 = vpop.f32.mrb[0].mxu0
      %v711 = vadd.f32 %v520, %v710
      %v712 = vpop.f32.mrb[0].mxu0
      %713 = vmatprep.mubr.f32.mxu0 0.0
      %714 = vmatmul.mubr.f32.gmra.mrb[0].mxu0 %v580
      %v715 = vpop.f32.mrb[0].mxu0
      %v716 = vadd.f32 %v525, %v715
      %v717 = vpop.f32.mrb[0].mxu0
      %718 = vmatprep.mubr.f32.mxu0 0.0
      %719 = vmatmul.mubr.f32.gmra.mrb[0].mxu0 %v582
      %v720 = vpop.f32.mrb[0].mxu0
      %v721 = vadd.f32 %v530, %v720
      %v722 = vpop.f32.mrb[0].mxu0
      %723 = vmatprep.mubr.f32.mxu0 0.0
      %724 = vmatmul.mubr.f32.gmra.mrb[0].mxu0 %v584
      %v725 = vpop.f32.mrb[0].mxu0
      %v726 = vadd.f32 %v535, %v725
      %v727 = vpop.f32.mrb[0].mxu0
      %728 = vmatprep.mubr.f32.mxu0 0.0
      %729 = vmatmul.mubr.f32.gmra.mrb[0].mxu0 %v586
      %v730 = vpop.f32.mrb[0].mxu0
      %v731 = vadd.f32 %v540, %v730
      %v732 = vpop.f32.mrb[0].mxu0
      %733 = vmatprep.mubr.f32.mxu0 0.0
      %734 = vmatmul.mubr.f32.gmra.mrb[0].mxu0 %v588
      %v735 = vpop.f32.mrb[0].mxu0
      %v736 = vadd.f32 %v545, %v735
      %v737 = vpop.f32.mrb[0].mxu0
      %738 = vmatprep.mubr.f32.mxu0 0.0
      %739 = vmatmul.mubr.f32.gmra.mrb[0].mxu0 %v590
      %v740 = vpop.f32.mrb[0].mxu0
      %v741 = vadd.f32 %v550, %v740
      %v742 = vpop.f32.mrb[0].mxu0
      %743 = vmatprep.mubr.f32.mxu0 0.0
      %744 = vmatmul.mubr.f32.gmra.mrb[0].mxu0 %v592
      %v745 = vpop.f32.mrb[0].mxu0
      %v746 = vadd.f32 %v555, %v745
      %v747 = vpop.f32.mrb[0].mxu0
      %748 = vdwg.mxu0
      %s749 = scalar_lea.vmem %s2, 16
      %v750 = vld [vmem:[%s749] sm:$0xff]
      %vm751 = vcmask 1045504
      %v752 = vrot.slane %v283, 2
      %v753 = vrot.slane %v284, 2
      %v754 = vsel %vm751, %v752, %v753
      %v755 = vrot.slane %v285, 2
      %v756 = vsel %vm751, %v753, %v755
      %v757 = vrot.slane %v286, 2
      %v758 = vsel %vm751, %v755, %v757
      %v759 = vrot.slane %v287, 2
      %v760 = vsel %vm751, %v757, %v759
      %v761 = vrot.slane %v288, 2
      %v762 = vsel %vm751, %v759, %v761
      %v763 = vrot.slane %v289, 2
      %v764 = vsel %vm751, %v761, %v763
      %v765 = vrot.slane %v290, 2
      %v766 = vsel %vm751, %v763, %v765
      %v767 = vrot.slane %v291, 2
      %v768 = vsel %vm751, %v765, %v767
      %v769 = vrot.slane %v292, 2
      %v770 = vsel %vm751, %v767, %v769
      %v771 = vrot.slane %v293, 2
      %v772 = vsel %vm751, %v769, %v771
      %v773 = vrot.slane %v294, 2
      %v774 = vsel %vm751, %v771, %v773
      %v775 = vrot.slane %v295, 2
      %v776 = vsel %vm751, %v773, %v775
      %v777 = vrot.slane %v296, 2
      %v778 = vsel %vm751, %v775, %v777
      %v779 = vrot.slane %v297, 2
      %v780 = vsel %vm751, %v777, %v779
      %v781 = vrot.slane %v298, 2
      %v782 = vsel %vm751, %v779, %v781
      %v783 = vrot.slane %v299, 2
      %v784 = vsel %vm751, %v781, %v783
      %v785 = vrot.slane %v300, 2
      %v786 = vsel %vm751, %v783, %v785
      %v787 = vrot.slane %v301, 2
      %v788 = vsel %vm751, %v785, %v787
      %v789 = vsel %vm366, %v754, 0
      %v791 = vsel %vm366, %v756, 0
      %v793 = vsel %vm366, %v758, 0
      %v795 = vsel %vm366, %v760, 0
      %v797 = vsel %vm366, %v762, 0
      %v799 = vsel %vm366, %v764, 0
      %v801 = vsel %vm366, %v766, 0
      %v803 = vsel %vm366, %v768, 0
      %v805 = vsel %vm366, %v770, 0
      %v807 = vsel %vm366, %v772, 0
      %v809 = vsel %vm366, %v774, 0
      %v811 = vsel %vm366, %v776, 0
      %v813 = vsel %vm366, %v778, 0
      %v815 = vsel %vm366, %v780, 0
      %v817 = vsel %vm366, %v782, 0
      %v819 = vsel %vm366, %v784, 0
      %v821 = vsel %vm366, %v786, 0
      %v823 = vsel %vm366, %v788, 0
      %825 = vmatprep.subr.mxu0 0.0
      %826 = vmatpush1.msra.mxu0 %v750
      %827 = vmatprep.subr.mxu0 0.0
      %828 = vmatpush1.msra.mxu0 0.0
      %829 = vmatprep.subr.mxu0 0.0
      %830 = vmatpush1.msra.mxu0 0.0
      %831 = vmatprep.subr.mxu0 0.0
      %832 = vmatpush1.msra.mxu0 0.0
      %833 = vmatprep.subr.mxu0 0.0
      %834 = vmatpush1.msra.mxu0 0.0
      %835 = vmatprep.subr.mxu0 0.0
      %836 = vmatpush1.msra.mxu0 0.0
      %837 = vmatprep.subr.mxu0 0.0
      %838 = vmatpush1.msra.mxu0 0.0
      %839 = vmatprep.subr.mxu0 0.0
      %840 = vmatpush1.msra.mxu0 0.0
      %841 = vmatprep.subr.mxu0 0.0
      %842 = vmatpush1.msra.mxu0 0.0
      %843 = vmatprep.subr.mxu0 0.0
      %844 = vmatpush1.msra.mxu0 0.0
      %845 = vmatprep.subr.mxu0 0.0
      %846 = vmatpush1.msra.mxu0 0.0
      %847 = vmatprep.subr.mxu0 0.0
      %848 = vmatpush1.msra.mxu0 0.0
      %849 = vmatprep.subr.mxu0 0.0
      %850 = vmatpush1.msra.mxu0 0.0
      %851 = vmatprep.subr.mxu0 0.0
      %852 = vmatpush1.msra.mxu0 0.0
      %853 = vmatprep.subr.mxu0 0.0
      %854 = vmatpush1.msra.mxu0 0.0
      %855 = vmatprep.subr.mxu0 0.0
      %856 = vmatpush1.msra.mxu0 0.0
      %857 = vmatprep.subr.mxu0 0.0
      %858 = vmatpush1.msra.mxu0 0.0
      %859 = vmatprep.subr.mxu0 0.0
      %860 = vmatpush1.msra.mxu0 0.0
      %861 = vmatprep.subr.mxu0 0.0
      %862 = vmatpush1.msra.mxu0 0.0
      %863 = vmatprep.subr.mxu0 0.0
      %864 = vmatpush1.msra.mxu0 0.0
      %865 = vmatprep.subr.mxu0 0.0
      %866 = vmatpush1.msra.mxu0 0.0
      %867 = vmatprep.subr.mxu0 0.0
      %868 = vmatpush1.msra.mxu0 0.0
      %869 = vmatprep.subr.mxu0 0.0
      %870 = vmatpush1.msra.mxu0 0.0
      %871 = vmatprep.subr.mxu0 0.0
      %872 = vmatpush1.msra.mxu0 0.0
      %873 = vmatprep.subr.mxu0 0.0
      %874 = vmatpush1.msra.mxu0 0.0
      %875 = vmatprep.subr.mxu0 0.0
      %876 = vmatpush1.msra.mxu0 0.0
      %877 = vmatprep.subr.mxu0 0.0
      %878 = vmatpush1.msra.mxu0 0.0
      %879 = vmatprep.subr.mxu0 0.0
      %880 = vmatpush1.msra.mxu0 0.0
      %881 = vmatprep.subr.mxu0 0.0
      %882 = vmatpush1.msra.mxu0 0.0
      %883 = vmatprep.subr.mxu0 0.0
      %884 = vmatpush1.msra.mxu0 0.0
      %885 = vmatprep.subr.mxu0 0.0
      %886 = vmatpush1.msra.mxu0 0.0
      %887 = vmatprep.subr.mxu0 0.0
      %888 = vmatpush1.msra.mxu0 0.0
      %889 = vmatprep.mubr.f32.mxu0 0.0
      %890 = vmatmul.mubr.f32.gmra.mrb[0].mxu0 %v789
      %v891 = vpop.f32.mrb[0].mxu0
      %v892 = vadd.f32 0.0, %v891
      %v893 = vpop.f32.mrb[0].mxu0
      %894 = vmatprep.mubr.f32.mxu0 0.0
      %895 = vmatmul.mubr.f32.gmra.mrb[0].mxu0 %v791
      %v896 = vpop.f32.mrb[0].mxu0
      %v897 = vadd.f32 0.0, %v896
      %v898 = vpop.f32.mrb[0].mxu0
      %899 = vmatprep.mubr.f32.mxu0 0.0
      %900 = vmatmul.mubr.f32.gmra.mrb[0].mxu0 %v793
      %v901 = vpop.f32.mrb[0].mxu0
      %v902 = vadd.f32 0.0, %v901
      %v903 = vpop.f32.mrb[0].mxu0
      %904 = vmatprep.mubr.f32.mxu0 0.0
      %905 = vmatmul.mubr.f32.gmra.mrb[0].mxu0 %v795
      %v906 = vpop.f32.mrb[0].mxu0
      %v907 = vadd.f32 0.0, %v906
      %v908 = vpop.f32.mrb[0].mxu0
      %909 = vmatprep.mubr.f32.mxu0 0.0
      %910 = vmatmul.mubr.f32.gmra.mrb[0].mxu0 %v797
      %v911 = vpop.f32.mrb[0].mxu0
      %v912 = vadd.f32 0.0, %v911
      %v913 = vpop.f32.mrb[0].mxu0
      %914 = vmatprep.mubr.f32.mxu0 0.0
      %915 = vmatmul.mubr.f32.gmra.mrb[0].mxu0 %v799
      %v916 = vpop.f32.mrb[0].mxu0
      %v917 = vadd.f32 0.0, %v916
      %v918 = vpop.f32.mrb[0].mxu0
      %919 = vmatprep.mubr.f32.mxu0 0.0
      %920 = vmatmul.mubr.f32.gmra.mrb[0].mxu0 %v801
      %v921 = vpop.f32.mrb[0].mxu0
      %v922 = vadd.f32 0.0, %v921
      %v923 = vpop.f32.mrb[0].mxu0
      %924 = vmatprep.mubr.f32.mxu0 0.0
      %925 = vmatmul.mubr.f32.gmra.mrb[0].mxu0 %v803
      %v926 = vpop.f32.mrb[0].mxu0
      %v927 = vadd.f32 0.0, %v926
      %v928 = vpop.f32.mrb[0].mxu0
      %929 = vmatprep.mubr.f32.mxu0 0.0
      %930 = vmatmul.mubr.f32.gmra.mrb[0].mxu0 %v805
      %v931 = vpop.f32.mrb[0].mxu0
      %v932 = vadd.f32 0.0, %v931
      %v933 = vpop.f32.mrb[0].mxu0
      %934 = vmatprep.mubr.f32.mxu0 0.0
      %935 = vmatmul.mubr.f32.gmra.mrb[0].mxu0 %v807
      %v936 = vpop.f32.mrb[0].mxu0
      %v937 = vadd.f32 0.0, %v936
      %v938 = vpop.f32.mrb[0].mxu0
      %939 = vmatprep.mubr.f32.mxu0 0.0
      %940 = vmatmul.mubr.f32.gmra.mrb[0].mxu0 %v809
      %v941 = vpop.f32.mrb[0].mxu0
      %v942 = vadd.f32 0.0, %v941
      %v943 = vpop.f32.mrb[0].mxu0
      %944 = vmatprep.mubr.f32.mxu0 0.0
      %945 = vmatmul.mubr.f32.gmra.mrb[0].mxu0 %v811
      %v946 = vpop.f32.mrb[0].mxu0
      %v947 = vadd.f32 0.0, %v946
      %v948 = vpop.f32.mrb[0].mxu0
      %949 = vmatprep.mubr.f32.mxu0 0.0
      %950 = vmatmul.mubr.f32.gmra.mrb[0].mxu0 %v813
      %v951 = vpop.f32.mrb[0].mxu0
      %v952 = vadd.f32 0.0, %v951
      %v953 = vpop.f32.mrb[0].mxu0
      %954 = vmatprep.mubr.f32.mxu0 0.0
      %955 = vmatmul.mubr.f32.gmra.mrb[0].mxu0 %v815
      %v956 = vpop.f32.mrb[0].mxu0
      %v957 = vadd.f32 0.0, %v956
      %v958 = vpop.f32.mrb[0].mxu0
      %959 = vmatprep.mubr.f32.mxu0 0.0
      %960 = vmatmul.mubr.f32.gmra.mrb[0].mxu0 %v817
      %v961 = vpop.f32.mrb[0].mxu0
      %v962 = vadd.f32 0.0, %v961
      %v963 = vpop.f32.mrb[0].mxu0
      %964 = vmatprep.mubr.f32.mxu0 0.0
      %965 = vmatmul.mubr.f32.gmra.mrb[0].mxu0 %v819
      %v966 = vpop.f32.mrb[0].mxu0
      %v967 = vadd.f32 0.0, %v966
      %v968 = vpop.f32.mrb[0].mxu0
      %969 = vmatprep.mubr.f32.mxu0 0.0
      %970 = vmatmul.mubr.f32.gmra.mrb[0].mxu0 %v821
      %v971 = vpop.f32.mrb[0].mxu0
      %v972 = vadd.f32 0.0, %v971
      %v973 = vpop.f32.mrb[0].mxu0
      %974 = vmatprep.mubr.f32.mxu0 0.0
      %975 = vmatmul.mubr.f32.gmra.mrb[0].mxu0 %v823
      %v976 = vpop.f32.mrb[0].mxu0
      %v977 = vadd.f32 0.0, %v976
      %v978 = vpop.f32.mrb[0].mxu0
      %979 = vdwg.mxu0
      %v980 = vadd.f32 %v661, %v892
      %v981 = vadd.f32 %v666, %v897
      %v982 = vadd.f32 %v671, %v902
      %v983 = vadd.f32 %v676, %v907
      %v984 = vadd.f32 %v681, %v912
      %v985 = vadd.f32 %v686, %v917
      %v986 = vadd.f32 %v691, %v922
      %v987 = vadd.f32 %v696, %v927
      %v988 = vadd.f32 %v701, %v932
      %v989 = vadd.f32 %v706, %v937
      %v990 = vadd.f32 %v711, %v942
      %v991 = vadd.f32 %v716, %v947
      %v992 = vadd.f32 %v721, %v952
      %v993 = vadd.f32 %v726, %v957
      %v994 = vadd.f32 %v731, %v962
      %v995 = vadd.f32 %v736, %v967
      %v996 = vadd.f32 %v741, %v972
      %v997 = vadd.f32 %v746, %v977
      %s998 = scalar_lea.vmem %s2, 24
      %v999 = vld [vmem:[%s998] sm:$0xff]
      %v1002 = vrot.slane %v302, 2
      %v1003 = vsel %vm751, %v787, %v1002
      %v1004 = vrot.slane %v303, 2
      %v1005 = vsel %vm751, %v1002, %v1004
      %v1006 = vsel %vm366, %v1003, 0
      %v1008 = vsel %vm366, %v1005, 0
      %1010 = vmatprep.subr.mxu0 0.0
      %1011 = vmatpush1.msra.mxu0 %v999
      %1012 = vmatprep.subr.mxu0 0.0
      %1013 = vmatpush1.msra.mxu0 0.0
      %1014 = vmatprep.subr.mxu0 0.0
      %1015 = vmatpush1.msra.mxu0 0.0
      %1016 = vmatprep.subr.mxu0 0.0
      %1017 = vmatpush1.msra.mxu0 0.0
      %1018 = vmatprep.subr.mxu0 0.0
      %1019 = vmatpush1.msra.mxu0 0.0
      %1020 = vmatprep.subr.mxu0 0.0
      %1021 = vmatpush1.msra.mxu0 0.0
      %1022 = vmatprep.subr.mxu0 0.0
      %1023 = vmatpush1.msra.mxu0 0.0
      %1024 = vmatprep.subr.mxu0 0.0
      %1025 = vmatpush1.msra.mxu0 0.0
      %1026 = vmatprep.subr.mxu0 0.0
      %1027 = vmatpush1.msra.mxu0 0.0
      %1028 = vmatprep.subr.mxu0 0.0
      %1029 = vmatpush1.msra.mxu0 0.0
      %1030 = vmatprep.subr.mxu0 0.0
      %1031 = vmatpush1.msra.mxu0 0.0
      %1032 = vmatprep.subr.mxu0 0.0
      %1033 = vmatpush1.msra.mxu0 0.0
      %1034 = vmatprep.subr.mxu0 0.0
      %1035 = vmatpush1.msra.mxu0 0.0
      %1036 = vmatprep.subr.mxu0 0.0
      %1037 = vmatpush1.msra.mxu0 0.0
      %1038 = vmatprep.subr.mxu0 0.0
      %1039 = vmatpush1.msra.mxu0 0.0
      %1040 = vmatprep.subr.mxu0 0.0
      %1041 = vmatpush1.msra.mxu0 0.0
      %1042 = vmatprep.subr.mxu0 0.0
      %1043 = vmatpush1.msra.mxu0 0.0
      %1044 = vmatprep.subr.mxu0 0.0
      %1045 = vmatpush1.msra.mxu0 0.0
      %1046 = vmatprep.subr.mxu0 0.0
      %1047 = vmatpush1.msra.mxu0 0.0
      %1048 = vmatprep.subr.mxu0 0.0
      %1049 = vmatpush1.msra.mxu0 0.0
      %1050 = vmatprep.subr.mxu0 0.0
      %1051 = vmatpush1.msra.mxu0 0.0
      %1052 = vmatprep.subr.mxu0 0.0
      %1053 = vmatpush1.msra.mxu0 0.0
      %1054 = vmatprep.subr.mxu0 0.0
      %1055 = vmatpush1.msra.mxu0 0.0
      %1056 = vmatprep.subr.mxu0 0.0
      %1057 = vmatpush1.msra.mxu0 0.0
      %1058 = vmatprep.subr.mxu0 0.0
      %1059 = vmatpush1.msra.mxu0 0.0
      %1060 = vmatprep.subr.mxu0 0.0
      %1061 = vmatpush1.msra.mxu0 0.0
      %1062 = vmatprep.subr.mxu0 0.0
      %1063 = vmatpush1.msra.mxu0 0.0
      %1064 = vmatprep.subr.mxu0 0.0
      %1065 = vmatpush1.msra.mxu0 0.0
      %1066 = vmatprep.subr.mxu0 0.0
      %1067 = vmatpush1.msra.mxu0 0.0
      %1068 = vmatprep.subr.mxu0 0.0
      %1069 = vmatpush1.msra.mxu0 0.0
      %1070 = vmatprep.subr.mxu0 0.0
      %1071 = vmatpush1.msra.mxu0 0.0
      %1072 = vmatprep.subr.mxu0 0.0
      %1073 = vmatpush1.msra.mxu0 0.0
      %1074 = vmatprep.mubr.f32.mxu0 0.0
      %1075 = vmatmul.mubr.f32.gmra.mrb[0].mxu0 %v793
      %v1076 = vpop.f32.mrb[0].mxu0
      %v1077 = vadd.f32 0.0, %v1076
      %v1078 = vpop.f32.mrb[0].mxu0
      %1079 = vmatprep.mubr.f32.mxu0 0.0
      %1080 = vmatmul.mubr.f32.gmra.mrb[0].mxu0 %v795
      %v1081 = vpop.f32.mrb[0].mxu0
      %v1082 = vadd.f32 0.0, %v1081
      %v1083 = vpop.f32.mrb[0].mxu0
      %1084 = vmatprep.mubr.f32.mxu0 0.0
      %1085 = vmatmul.mubr.f32.gmra.mrb[0].mxu0 %v797
      %v1086 = vpop.f32.mrb[0].mxu0
      %v1087 = vadd.f32 0.0, %v1086
      %v1088 = vpop.f32.mrb[0].mxu0
      %1089 = vmatprep.mubr.f32.mxu0 0.0
      %1090 = vmatmul.mubr.f32.gmra.mrb[0].mxu0 %v799
      %v1091 = vpop.f32.mrb[0].mxu0
      %v1092 = vadd.f32 0.0, %v1091
      %v1093 = vpop.f32.mrb[0].mxu0
      %1094 = vmatprep.mubr.f32.mxu0 0.0
      %1095 = vmatmul.mubr.f32.gmra.mrb[0].mxu0 %v801
      %v1096 = vpop.f32.mrb[0].mxu0
      %v1097 = vadd.f32 0.0, %v1096
      %v1098 = vpop.f32.mrb[0].mxu0
      %1099 = vmatprep.mubr.f32.mxu0 0.0
      %1100 = vmatmul.mubr.f32.gmra.mrb[0].mxu0 %v803
      %v1101 = vpop.f32.mrb[0].mxu0
      %v1102 = vadd.f32 0.0, %v1101
      %v1103 = vpop.f32.mrb[0].mxu0
      %1104 = vmatprep.mubr.f32.mxu0 0.0
      %1105 = vmatmul.mubr.f32.gmra.mrb[0].mxu0 %v805
      %v1106 = vpop.f32.mrb[0].mxu0
      %v1107 = vadd.f32 0.0, %v1106
      %v1108 = vpop.f32.mrb[0].mxu0
      %1109 = vmatprep.mubr.f32.mxu0 0.0
      %1110 = vmatmul.mubr.f32.gmra.mrb[0].mxu0 %v807
      %v1111 = vpop.f32.mrb[0].mxu0
      %v1112 = vadd.f32 0.0, %v1111
      %v1113 = vpop.f32.mrb[0].mxu0
      %1114 = vmatprep.mubr.f32.mxu0 0.0
      %1115 = vmatmul.mubr.f32.gmra.mrb[0].mxu0 %v809
      %v1116 = vpop.f32.mrb[0].mxu0
      %v1117 = vadd.f32 0.0, %v1116
      %v1118 = vpop.f32.mrb[0].mxu0
      %1119 = vmatprep.mubr.f32.mxu0 0.0
      %1120 = vmatmul.mubr.f32.gmra.mrb[0].mxu0 %v811
      %v1121 = vpop.f32.mrb[0].mxu0
      %v1122 = vadd.f32 0.0, %v1121
      %v1123 = vpop.f32.mrb[0].mxu0
      %1124 = vmatprep.mubr.f32.mxu0 0.0
      %1125 = vmatmul.mubr.f32.gmra.mrb[0].mxu0 %v813
      %v1126 = vpop.f32.mrb[0].mxu0
      %v1127 = vadd.f32 0.0, %v1126
      %v1128 = vpop.f32.mrb[0].mxu0
      %1129 = vmatprep.mubr.f32.mxu0 0.0
      %1130 = vmatmul.mubr.f32.gmra.mrb[0].mxu0 %v815
      %v1131 = vpop.f32.mrb[0].mxu0
      %v1132 = vadd.f32 0.0, %v1131
      %v1133 = vpop.f32.mrb[0].mxu0
      %1134 = vmatprep.mubr.f32.mxu0 0.0
      %1135 = vmatmul.mubr.f32.gmra.mrb[0].mxu0 %v817
      %v1136 = vpop.f32.mrb[0].mxu0
      %v1137 = vadd.f32 0.0, %v1136
      %v1138 = vpop.f32.mrb[0].mxu0
      %1139 = vmatprep.mubr.f32.mxu0 0.0
      %1140 = vmatmul.mubr.f32.gmra.mrb[0].mxu0 %v819
      %v1141 = vpop.f32.mrb[0].mxu0
      %v1142 = vadd.f32 0.0, %v1141
      %v1143 = vpop.f32.mrb[0].mxu0
      %1144 = vmatprep.mubr.f32.mxu0 0.0
      %1145 = vmatmul.mubr.f32.gmra.mrb[0].mxu0 %v821
      %v1146 = vpop.f32.mrb[0].mxu0
      %v1147 = vadd.f32 0.0, %v1146
      %v1148 = vpop.f32.mrb[0].mxu0
      %1149 = vmatprep.mubr.f32.mxu0 0.0
      %1150 = vmatmul.mubr.f32.gmra.mrb[0].mxu0 %v823
      %v1151 = vpop.f32.mrb[0].mxu0
      %v1152 = vadd.f32 0.0, %v1151
      %v1153 = vpop.f32.mrb[0].mxu0
      %1154 = vmatprep.mubr.f32.mxu0 0.0
      %1155 = vmatmul.mubr.f32.gmra.mrb[0].mxu0 %v1006
      %v1156 = vpop.f32.mrb[0].mxu0
      %v1157 = vadd.f32 0.0, %v1156
      %v1158 = vpop.f32.mrb[0].mxu0
      %1159 = vmatprep.mubr.f32.mxu0 0.0
      %1160 = vmatmul.mubr.f32.gmra.mrb[0].mxu0 %v1008
      %v1161 = vpop.f32.mrb[0].mxu0
      %v1162 = vadd.f32 0.0, %v1161
      %v1163 = vpop.f32.mrb[0].mxu0
      %1164 = vdwg.mxu0
      %v1165 = vadd.f32 %v980, %v1077
      %v1166 = vadd.f32 %v981, %v1082
      %v1167 = vadd.f32 %v982, %v1087
      %v1168 = vadd.f32 %v983, %v1092
      %v1169 = vadd.f32 %v984, %v1097
      %v1170 = vadd.f32 %v985, %v1102
      %v1171 = vadd.f32 %v986, %v1107
      %v1172 = vadd.f32 %v987, %v1112
      %v1173 = vadd.f32 %v988, %v1117
      %v1174 = vadd.f32 %v989, %v1122
      %v1175 = vadd.f32 %v990, %v1127
      %v1176 = vadd.f32 %v991, %v1132
      %v1177 = vadd.f32 %v992, %v1137
      %v1178 = vadd.f32 %v993, %v1142
      %v1179 = vadd.f32 %v994, %v1147
      %v1180 = vadd.f32 %v995, %v1152
      %v1181 = vadd.f32 %v996, %v1157
      %v1182 = vadd.f32 %v997, %v1162
      %s1183 = scalar_lea.vmem %s2, 32
      %v1184 = vld [vmem:[%s1183] sm:$0xff]
      %vm1185 = vcmask 1044480
      %v1186 = vrot.slane %v285, 3
      %v1187 = vrot.slane %v286, 3
      %v1188 = vsel %vm1185, %v1186, %v1187
      %v1189 = vrot.slane %v287, 3
      %v1190 = vsel %vm1185, %v1187, %v1189
      %v1191 = vrot.slane %v288, 3
      %v1192 = vsel %vm1185, %v1189, %v1191
      %v1193 = vrot.slane %v289, 3
      %v1194 = vsel %vm1185, %v1191, %v1193
      %v1195 = vrot.slane %v290, 3
      %v1196 = vsel %vm1185, %v1193, %v1195
      %v1197 = vrot.slane %v291, 3
      %v1198 = vsel %vm1185, %v1195, %v1197
      %v1199 = vrot.slane %v292, 3
      %v1200 = vsel %vm1185, %v1197, %v1199
      %v1201 = vrot.slane %v293, 3
      %v1202 = vsel %vm1185, %v1199, %v1201
      %v1203 = vrot.slane %v294, 3
      %v1204 = vsel %vm1185, %v1201, %v1203
      %v1205 = vrot.slane %v295, 3
      %v1206 = vsel %vm1185, %v1203, %v1205
      %v1207 = vrot.slane %v296, 3
      %v1208 = vsel %vm1185, %v1205, %v1207
      %v1209 = vrot.slane %v297, 3
      %v1210 = vsel %vm1185, %v1207, %v1209
      %v1211 = vrot.slane %v298, 3
      %v1212 = vsel %vm1185, %v1209, %v1211
      %v1213 = vrot.slane %v299, 3
      %v1214 = vsel %vm1185, %v1211, %v1213
      %v1215 = vrot.slane %v300, 3
      %v1216 = vsel %vm1185, %v1213, %v1215
      %v1217 = vrot.slane %v301, 3
      %v1218 = vsel %vm1185, %v1215, %v1217
      %v1219 = vrot.slane %v302, 3
      %v1220 = vsel %vm1185, %v1217, %v1219
      %v1221 = vrot.slane %v303, 3
      %v1222 = vsel %vm1185, %v1219, %v1221
      %v1223 = vsel %vm366, %v1188, 0
      %v1225 = vsel %vm366, %v1190, 0
      %v1227 = vsel %vm366, %v1192, 0
      %v1229 = vsel %vm366, %v1194, 0
      %v1231 = vsel %vm366, %v1196, 0
      %v1233 = vsel %vm366, %v1198, 0
      %v1235 = vsel %vm366, %v1200, 0
      %v1237 = vsel %vm366, %v1202, 0
      %v1239 = vsel %vm366, %v1204, 0
      %v1241 = vsel %vm366, %v1206, 0
      %v1243 = vsel %vm366, %v1208, 0
      %v1245 = vsel %vm366, %v1210, 0
      %v1247 = vsel %vm366, %v1212, 0
      %v1249 = vsel %vm366, %v1214, 0
      %v1251 = vsel %vm366, %v1216, 0
      %v1253 = vsel %vm366, %v1218, 0
      %v1255 = vsel %vm366, %v1220, 0
      %v1257 = vsel %vm366, %v1222, 0
      %1259 = vmatprep.subr.mxu0 0.0
      %1260 = vmatpush1.msra.mxu0 %v1184
      %1261 = vmatprep.subr.mxu0 0.0
      %1262 = vmatpush1.msra.mxu0 0.0
      %1263 = vmatprep.subr.mxu0 0.0
      %1264 = vmatpush1.msra.mxu0 0.0
      %1265 = vmatprep.subr.mxu0 0.0
      %1266 = vmatpush1.msra.mxu0 0.0
      %1267 = vmatprep.subr.mxu0 0.0
      %1268 = vmatpush1.msra.mxu0 0.0
      %1269 = vmatprep.subr.mxu0 0.0
      %1270 = vmatpush1.msra.mxu0 0.0
      %1271 = vmatprep.subr.mxu0 0.0
      %1272 = vmatpush1.msra.mxu0 0.0
      %1273 = vmatprep.subr.mxu0 0.0
      %1274 = vmatpush1.msra.mxu0 0.0
      %1275 = vmatprep.subr.mxu0 0.0
      %1276 = vmatpush1.msra.mxu0 0.0
      %1277 = vmatprep.subr.mxu0 0.0
      %1278 = vmatpush1.msra.mxu0 0.0
      %1279 = vmatprep.subr.mxu0 0.0
      %1280 = vmatpush1.msra.mxu0 0.0
      %1281 = vmatprep.subr.mxu0 0.0
      %1282 = vmatpush1.msra.mxu0 0.0
      %1283 = vmatprep.subr.mxu0 0.0
      %1284 = vmatpush1.msra.mxu0 0.0
      %1285 = vmatprep.subr.mxu0 0.0
      %1286 = vmatpush1.msra.mxu0 0.0
      %1287 = vmatprep.subr.mxu0 0.0
      %1288 = vmatpush1.msra.mxu0 0.0
      %1289 = vmatprep.subr.mxu0 0.0
      %1290 = vmatpush1.msra.mxu0 0.0
      %1291 = vmatprep.subr.mxu0 0.0
      %1292 = vmatpush1.msra.mxu0 0.0
      %1293 = vmatprep.subr.mxu0 0.0
      %1294 = vmatpush1.msra.mxu0 0.0
      %1295 = vmatprep.subr.mxu0 0.0
      %1296 = vmatpush1.msra.mxu0 0.0
      %1297 = vmatprep.subr.mxu0 0.0
      %1298 = vmatpush1.msra.mxu0 0.0
      %1299 = vmatprep.subr.mxu0 0.0
      %1300 = vmatpush1.msra.mxu0 0.0
      %1301 = vmatprep.subr.mxu0 0.0
      %1302 = vmatpush1.msra.mxu0 0.0
      %1303 = vmatprep.subr.mxu0 0.0
      %1304 = vmatpush1.msra.mxu0 0.0
      %1305 = vmatprep.subr.mxu0 0.0
      %1306 = vmatpush1.msra.mxu0 0.0
      %1307 = vmatprep.subr.mxu0 0.0
      %1308 = vmatpush1.msra.mxu0 0.0
      %1309 = vmatprep.subr.mxu0 0.0
      %1310 = vmatpush1.msra.mxu0 0.0
      %1311 = vmatprep.subr.mxu0 0.0
      %1312 = vmatpush1.msra.mxu0 0.0
      %1313 = vmatprep.subr.mxu0 0.0
      %1314 = vmatpush1.msra.mxu0 0.0
      %1315 = vmatprep.subr.mxu0 0.0
      %1316 = vmatpush1.msra.mxu0 0.0
      %1317 = vmatprep.subr.mxu0 0.0
      %1318 = vmatpush1.msra.mxu0 0.0
      %1319 = vmatprep.subr.mxu0 0.0
      %1320 = vmatpush1.msra.mxu0 0.0
      %1321 = vmatprep.subr.mxu0 0.0
      %1322 = vmatpush1.msra.mxu0 0.0
      %1323 = vmatprep.mubr.f32.mxu0 0.0
      %1324 = vmatmul.mubr.f32.gmra.mrb[0].mxu0 %v1223
      %v1325 = vpop.f32.mrb[0].mxu0
      %v1326 = vadd.f32 0.0, %v1325
      %v1327 = vpop.f32.mrb[0].mxu0
      %1328 = vmatprep.mubr.f32.mxu0 0.0
      %1329 = vmatmul.mubr.f32.gmra.mrb[0].mxu0 %v1225
      %v1330 = vpop.f32.mrb[0].mxu0
      %v1331 = vadd.f32 0.0, %v1330
      %v1332 = vpop.f32.mrb[0].mxu0
      %1333 = vmatprep.mubr.f32.mxu0 0.0
      %1334 = vmatmul.mubr.f32.gmra.mrb[0].mxu0 %v1227
      %v1335 = vpop.f32.mrb[0].mxu0
      %v1336 = vadd.f32 0.0, %v1335
      %v1337 = vpop.f32.mrb[0].mxu0
      %1338 = vmatprep.mubr.f32.mxu0 0.0
      %1339 = vmatmul.mubr.f32.gmra.mrb[0].mxu0 %v1229
      %v1340 = vpop.f32.mrb[0].mxu0
      %v1341 = vadd.f32 0.0, %v1340
      %v1342 = vpop.f32.mrb[0].mxu0
      %1343 = vmatprep.mubr.f32.mxu0 0.0
      %1344 = vmatmul.mubr.f32.gmra.mrb[0].mxu0 %v1231
      %v1345 = vpop.f32.mrb[0].mxu0
      %v1346 = vadd.f32 0.0, %v1345
      %v1347 = vpop.f32.mrb[0].mxu0
      %1348 = vmatprep.mubr.f32.mxu0 0.0
      %1349 = vmatmul.mubr.f32.gmra.mrb[0].mxu0 %v1233
      %v1350 = vpop.f32.mrb[0].mxu0
      %v1351 = vadd.f32 0.0, %v1350
      %v1352 = vpop.f32.mrb[0].mxu0
      %1353 = vmatprep.mubr.f32.mxu0 0.0
      %1354 = vmatmul.mubr.f32.gmra.mrb[0].mxu0 %v1235
      %v1355 = vpop.f32.mrb[0].mxu0
      %v1356 = vadd.f32 0.0, %v1355
      %v1357 = vpop.f32.mrb[0].mxu0
      %1358 = vmatprep.mubr.f32.mxu0 0.0
      %1359 = vmatmul.mubr.f32.gmra.mrb[0].mxu0 %v1237
      %v1360 = vpop.f32.mrb[0].mxu0
      %v1361 = vadd.f32 0.0, %v1360
      %v1362 = vpop.f32.mrb[0].mxu0
      %1363 = vmatprep.mubr.f32.mxu0 0.0
      %1364 = vmatmul.mubr.f32.gmra.mrb[0].mxu0 %v1239
      %v1365 = vpop.f32.mrb[0].mxu0
      %v1366 = vadd.f32 0.0, %v1365
      %v1367 = vpop.f32.mrb[0].mxu0
      %1368 = vmatprep.mubr.f32.mxu0 0.0
      %1369 = vmatmul.mubr.f32.gmra.mrb[0].mxu0 %v1241
      %v1370 = vpop.f32.mrb[0].mxu0
      %v1371 = vadd.f32 0.0, %v1370
      %v1372 = vpop.f32.mrb[0].mxu0
      %1373 = vmatprep.mubr.f32.mxu0 0.0
      %1374 = vmatmul.mubr.f32.gmra.mrb[0].mxu0 %v1243
      %v1375 = vpop.f32.mrb[0].mxu0
      %v1376 = vadd.f32 0.0, %v1375
      %v1377 = vpop.f32.mrb[0].mxu0
      %1378 = vmatprep.mubr.f32.mxu0 0.0
      %1379 = vmatmul.mubr.f32.gmra.mrb[0].mxu0 %v1245
      %v1380 = vpop.f32.mrb[0].mxu0
      %v1381 = vadd.f32 0.0, %v1380
      %v1382 = vpop.f32.mrb[0].mxu0
      %1383 = vmatprep.mubr.f32.mxu0 0.0
      %1384 = vmatmul.mubr.f32.gmra.mrb[0].mxu0 %v1247
      %v1385 = vpop.f32.mrb[0].mxu0
      %v1386 = vadd.f32 0.0, %v1385
      %v1387 = vpop.f32.mrb[0].mxu0
      %1388 = vmatprep.mubr.f32.mxu0 0.0
      %1389 = vmatmul.mubr.f32.gmra.mrb[0].mxu0 %v1249
      %v1390 = vpop.f32.mrb[0].mxu0
      %v1391 = vadd.f32 0.0, %v1390
      %v1392 = vpop.f32.mrb[0].mxu0
      %1393 = vmatprep.mubr.f32.mxu0 0.0
      %1394 = vmatmul.mubr.f32.gmra.mrb[0].mxu0 %v1251
      %v1395 = vpop.f32.mrb[0].mxu0
      %v1396 = vadd.f32 0.0, %v1395
      %v1397 = vpop.f32.mrb[0].mxu0
      %1398 = vmatprep.mubr.f32.mxu0 0.0
      %1399 = vmatmul.mubr.f32.gmra.mrb[0].mxu0 %v1253
      %v1400 = vpop.f32.mrb[0].mxu0
      %v1401 = vadd.f32 0.0, %v1400
      %v1402 = vpop.f32.mrb[0].mxu0
      %1403 = vmatprep.mubr.f32.mxu0 0.0
      %1404 = vmatmul.mubr.f32.gmra.mrb[0].mxu0 %v1255
      %v1405 = vpop.f32.mrb[0].mxu0
      %v1406 = vadd.f32 0.0, %v1405
      %v1407 = vpop.f32.mrb[0].mxu0
      %1408 = vmatprep.mubr.f32.mxu0 0.0
      %1409 = vmatmul.mubr.f32.gmra.mrb[0].mxu0 %v1257
      %v1410 = vpop.f32.mrb[0].mxu0
      %v1411 = vadd.f32 0.0, %v1410
      %v1412 = vpop.f32.mrb[0].mxu0
      %1413 = vdwg.mxu0
      %v1414 = vadd.f32 %v1165, %v1326
      %v1415 = vadd.f32 %v1166, %v1331
      %v1416 = vadd.f32 %v1167, %v1336
      %v1417 = vadd.f32 %v1168, %v1341
      %v1418 = vadd.f32 %v1169, %v1346
      %v1419 = vadd.f32 %v1170, %v1351
      %v1420 = vadd.f32 %v1171, %v1356
      %v1421 = vadd.f32 %v1172, %v1361
      %v1422 = vadd.f32 %v1173, %v1366
      %v1423 = vadd.f32 %v1174, %v1371
      %v1424 = vadd.f32 %v1175, %v1376
      %v1425 = vadd.f32 %v1176, %v1381
      %v1426 = vadd.f32 %v1177, %v1386
      %v1427 = vadd.f32 %v1178, %v1391
      %v1428 = vadd.f32 %v1179, %v1396
      %v1429 = vadd.f32 %v1180, %v1401
      %v1430 = vadd.f32 %v1181, %v1406
      %v1431 = vadd.f32 %v1182, %v1411
      %s1432 = scalar_lea.vmem %s2, 40
      %v1433 = vld [vmem:[%s1432] sm:$0xff]
      %vm1434 = vcmask 1043456
      %v1435 = vrot.slane %v285, 4
      %v1436 = vrot.slane %v286, 4
      %v1437 = vsel %vm1434, %v1435, %v1436
      %v1438 = vrot.slane %v287, 4
      %v1439 = vsel %vm1434, %v1436, %v1438
      %v1440 = vrot.slane %v288, 4
      %v1441 = vsel %vm1434, %v1438, %v1440
      %v1442 = vrot.slane %v289, 4
      %v1443 = vsel %vm1434, %v1440, %v1442
      %v1444 = vrot.slane %v290, 4
      %v1445 = vsel %vm1434, %v1442, %v1444
      %v1446 = vrot.slane %v291, 4
      %v1447 = vsel %vm1434, %v1444, %v1446
      %v1448 = vrot.slane %v292, 4
      %v1449 = vsel %vm1434, %v1446, %v1448
      %v1450 = vrot.slane %v293, 4
      %v1451 = vsel %vm1434, %v1448, %v1450
      %v1452 = vrot.slane %v294, 4
      %v1453 = vsel %vm1434, %v1450, %v1452
      %v1454 = vrot.slane %v295, 4
      %v1455 = vsel %vm1434, %v1452, %v1454
      %v1456 = vrot.slane %v296, 4
      %v1457 = vsel %vm1434, %v1454, %v1456
      %v1458 = vrot.slane %v297, 4
      %v1459 = vsel %vm1434, %v1456, %v1458
      %v1460 = vrot.slane %v298, 4
      %v1461 = vsel %vm1434, %v1458, %v1460
      %v1462 = vrot.slane %v299, 4
      %v1463 = vsel %vm1434, %v1460, %v1462
      %v1464 = vrot.slane %v300, 4
      %v1465 = vsel %vm1434, %v1462, %v1464
      %v1466 = vrot.slane %v301, 4
      %v1467 = vsel %vm1434, %v1464, %v1466
      %v1468 = vrot.slane %v302, 4
      %v1469 = vsel %vm1434, %v1466, %v1468
      %v1470 = vrot.slane %v303, 4
      %v1471 = vsel %vm1434, %v1468, %v1470
      %v1472 = vsel %vm366, %v1437, 0
      %v1474 = vsel %vm366, %v1439, 0
      %v1476 = vsel %vm366, %v1441, 0
      %v1478 = vsel %vm366, %v1443, 0
      %v1480 = vsel %vm366, %v1445, 0
      %v1482 = vsel %vm366, %v1447, 0
      %v1484 = vsel %vm366, %v1449, 0
      %v1486 = vsel %vm366, %v1451, 0
      %v1488 = vsel %vm366, %v1453, 0
      %v1490 = vsel %vm366, %v1455, 0
      %v1492 = vsel %vm366, %v1457, 0
      %v1494 = vsel %vm366, %v1459, 0
      %v1496 = vsel %vm366, %v1461, 0
      %v1498 = vsel %vm366, %v1463, 0
      %v1500 = vsel %vm366, %v1465, 0
      %v1502 = vsel %vm366, %v1467, 0
      %v1504 = vsel %vm366, %v1469, 0
      %v1506 = vsel %vm366, %v1471, 0
      %1508 = vmatprep.subr.mxu0 0.0
      %1509 = vmatpush1.msra.mxu0 %v1433
      %1510 = vmatprep.subr.mxu0 0.0
      %1511 = vmatpush1.msra.mxu0 0.0
      %1512 = vmatprep.subr.mxu0 0.0
      %1513 = vmatpush1.msra.mxu0 0.0
      %1514 = vmatprep.subr.mxu0 0.0
      %1515 = vmatpush1.msra.mxu0 0.0
      %1516 = vmatprep.subr.mxu0 0.0
      %1517 = vmatpush1.msra.mxu0 0.0
      %1518 = vmatprep.subr.mxu0 0.0
      %1519 = vmatpush1.msra.mxu0 0.0
      %1520 = vmatprep.subr.mxu0 0.0
      %1521 = vmatpush1.msra.mxu0 0.0
      %1522 = vmatprep.subr.mxu0 0.0
      %1523 = vmatpush1.msra.mxu0 0.0
      %1524 = vmatprep.subr.mxu0 0.0
      %1525 = vmatpush1.msra.mxu0 0.0
      %1526 = vmatprep.subr.mxu0 0.0
      %1527 = vmatpush1.msra.mxu0 0.0
      %1528 = vmatprep.subr.mxu0 0.0
      %1529 = vmatpush1.msra.mxu0 0.0
      %1530 = vmatprep.subr.mxu0 0.0
      %1531 = vmatpush1.msra.mxu0 0.0
      %1532 = vmatprep.subr.mxu0 0.0
      %1533 = vmatpush1.msra.mxu0 0.0
      %1534 = vmatprep.subr.mxu0 0.0
      %1535 = vmatpush1.msra.mxu0 0.0
      %1536 = vmatprep.subr.mxu0 0.0
      %1537 = vmatpush1.msra.mxu0 0.0
      %1538 = vmatprep.subr.mxu0 0.0
      %1539 = vmatpush1.msra.mxu0 0.0
      %1540 = vmatprep.subr.mxu0 0.0
      %1541 = vmatpush1.msra.mxu0 0.0
      %1542 = vmatprep.subr.mxu0 0.0
      %1543 = vmatpush1.msra.mxu0 0.0
      %1544 = vmatprep.subr.mxu0 0.0
      %1545 = vmatpush1.msra.mxu0 0.0
      %1546 = vmatprep.subr.mxu0 0.0
      %1547 = vmatpush1.msra.mxu0 0.0
      %1548 = vmatprep.subr.mxu0 0.0
      %1549 = vmatpush1.msra.mxu0 0.0
      %1550 = vmatprep.subr.mxu0 0.0
      %1551 = vmatpush1.msra.mxu0 0.0
      %1552 = vmatprep.subr.mxu0 0.0
      %1553 = vmatpush1.msra.mxu0 0.0
      %1554 = vmatprep.subr.mxu0 0.0
      %1555 = vmatpush1.msra.mxu0 0.0
      %1556 = vmatprep.subr.mxu0 0.0
      %1557 = vmatpush1.msra.mxu0 0.0
      %1558 = vmatprep.subr.mxu0 0.0
      %1559 = vmatpush1.msra.mxu0 0.0
      %1560 = vmatprep.subr.mxu0 0.0
      %1561 = vmatpush1.msra.mxu0 0.0
      %1562 = vmatprep.subr.mxu0 0.0
      %1563 = vmatpush1.msra.mxu0 0.0
      %1564 = vmatprep.subr.mxu0 0.0
      %1565 = vmatpush1.msra.mxu0 0.0
      %1566 = vmatprep.subr.mxu0 0.0
      %1567 = vmatpush1.msra.mxu0 0.0
      %1568 = vmatprep.subr.mxu0 0.0
      %1569 = vmatpush1.msra.mxu0 0.0
      %1570 = vmatprep.subr.mxu0 0.0
      %1571 = vmatpush1.msra.mxu0 0.0
      %1572 = vmatprep.mubr.f32.mxu0 0.0
      %1573 = vmatmul.mubr.f32.gmra.mrb[0].mxu0 %v1472
      %v1574 = vpop.f32.mrb[0].mxu0
      %v1575 = vadd.f32 0.0, %v1574
      %v1576 = vpop.f32.mrb[0].mxu0
      %1577 = vmatprep.mubr.f32.mxu0 0.0
      %1578 = vmatmul.mubr.f32.gmra.mrb[0].mxu0 %v1474
      %v1579 = vpop.f32.mrb[0].mxu0
      %v1580 = vadd.f32 0.0, %v1579
      %v1581 = vpop.f32.mrb[0].mxu0
      %1582 = vmatprep.mubr.f32.mxu0 0.0
      %1583 = vmatmul.mubr.f32.gmra.mrb[0].mxu0 %v1476
      %v1584 = vpop.f32.mrb[0].mxu0
      %v1585 = vadd.f32 0.0, %v1584
      %v1586 = vpop.f32.mrb[0].mxu0
      %1587 = vmatprep.mubr.f32.mxu0 0.0
      %1588 = vmatmul.mubr.f32.gmra.mrb[0].mxu0 %v1478
      %v1589 = vpop.f32.mrb[0].mxu0
      %v1590 = vadd.f32 0.0, %v1589
      %v1591 = vpop.f32.mrb[0].mxu0
      %1592 = vmatprep.mubr.f32.mxu0 0.0
      %1593 = vmatmul.mubr.f32.gmra.mrb[0].mxu0 %v1480
      %v1594 = vpop.f32.mrb[0].mxu0
      %v1595 = vadd.f32 0.0, %v1594
      %v1596 = vpop.f32.mrb[0].mxu0
      %1597 = vmatprep.mubr.f32.mxu0 0.0
      %1598 = vmatmul.mubr.f32.gmra.mrb[0].mxu0 %v1482
      %v1599 = vpop.f32.mrb[0].mxu0
      %v1600 = vadd.f32 0.0, %v1599
      %v1601 = vpop.f32.mrb[0].mxu0
      %1602 = vmatprep.mubr.f32.mxu0 0.0
      %1603 = vmatmul.mubr.f32.gmra.mrb[0].mxu0 %v1484
      %v1604 = vpop.f32.mrb[0].mxu0
      %v1605 = vadd.f32 0.0, %v1604
      %v1606 = vpop.f32.mrb[0].mxu0
      %1607 = vmatprep.mubr.f32.mxu0 0.0
      %1608 = vmatmul.mubr.f32.gmra.mrb[0].mxu0 %v1486
      %v1609 = vpop.f32.mrb[0].mxu0
      %v1610 = vadd.f32 0.0, %v1609
      %v1611 = vpop.f32.mrb[0].mxu0
      %1612 = vmatprep.mubr.f32.mxu0 0.0
      %1613 = vmatmul.mubr.f32.gmra.mrb[0].mxu0 %v1488
      %v1614 = vpop.f32.mrb[0].mxu0
      %v1615 = vadd.f32 0.0, %v1614
      %v1616 = vpop.f32.mrb[0].mxu0
      %1617 = vmatprep.mubr.f32.mxu0 0.0
      %1618 = vmatmul.mubr.f32.gmra.mrb[0].mxu0 %v1490
      %v1619 = vpop.f32.mrb[0].mxu0
      %v1620 = vadd.f32 0.0, %v1619
      %v1621 = vpop.f32.mrb[0].mxu0
      %1622 = vmatprep.mubr.f32.mxu0 0.0
      %1623 = vmatmul.mubr.f32.gmra.mrb[0].mxu0 %v1492
      %v1624 = vpop.f32.mrb[0].mxu0
      %v1625 = vadd.f32 0.0, %v1624
      %v1626 = vpop.f32.mrb[0].mxu0
      %1627 = vmatprep.mubr.f32.mxu0 0.0
      %1628 = vmatmul.mubr.f32.gmra.mrb[0].mxu0 %v1494
      %v1629 = vpop.f32.mrb[0].mxu0
      %v1630 = vadd.f32 0.0, %v1629
      %v1631 = vpop.f32.mrb[0].mxu0
      %1632 = vmatprep.mubr.f32.mxu0 0.0
      %1633 = vmatmul.mubr.f32.gmra.mrb[0].mxu0 %v1496
      %v1634 = vpop.f32.mrb[0].mxu0
      %v1635 = vadd.f32 0.0, %v1634
      %v1636 = vpop.f32.mrb[0].mxu0
      %1637 = vmatprep.mubr.f32.mxu0 0.0
      %1638 = vmatmul.mubr.f32.gmra.mrb[0].mxu0 %v1498
      %v1639 = vpop.f32.mrb[0].mxu0
      %v1640 = vadd.f32 0.0, %v1639
      %v1641 = vpop.f32.mrb[0].mxu0
      %1642 = vmatprep.mubr.f32.mxu0 0.0
      %1643 = vmatmul.mubr.f32.gmra.mrb[0].mxu0 %v1500
      %v1644 = vpop.f32.mrb[0].mxu0
      %v1645 = vadd.f32 0.0, %v1644
      %v1646 = vpop.f32.mrb[0].mxu0
      %1647 = vmatprep.mubr.f32.mxu0 0.0
      %1648 = vmatmul.mubr.f32.gmra.mrb[0].mxu0 %v1502
      %v1649 = vpop.f32.mrb[0].mxu0
      %v1650 = vadd.f32 0.0, %v1649
      %v1651 = vpop.f32.mrb[0].mxu0
      %1652 = vmatprep.mubr.f32.mxu0 0.0
      %1653 = vmatmul.mubr.f32.gmra.mrb[0].mxu0 %v1504
      %v1654 = vpop.f32.mrb[0].mxu0
      %v1655 = vadd.f32 0.0, %v1654
      %v1656 = vpop.f32.mrb[0].mxu0
      %1657 = vmatprep.mubr.f32.mxu0 0.0
      %1658 = vmatmul.mubr.f32.gmra.mrb[0].mxu0 %v1506
      %v1659 = vpop.f32.mrb[0].mxu0
      %v1660 = vadd.f32 0.0, %v1659
      %v1661 = vpop.f32.mrb[0].mxu0
      %1662 = vdwg.mxu0
      %v1663 = vadd.f32 %v1414, %v1575
      %v1664 = vadd.f32 %v1415, %v1580
      %v1665 = vadd.f32 %v1416, %v1585
      %v1666 = vadd.f32 %v1417, %v1590
      %v1667 = vadd.f32 %v1418, %v1595
      %v1668 = vadd.f32 %v1419, %v1600
      %v1669 = vadd.f32 %v1420, %v1605
      %v1670 = vadd.f32 %v1421, %v1610
      %v1671 = vadd.f32 %v1422, %v1615
      %v1672 = vadd.f32 %v1423, %v1620
      %v1673 = vadd.f32 %v1424, %v1625
      %v1674 = vadd.f32 %v1425, %v1630
      %v1675 = vadd.f32 %v1426, %v1635
      %v1676 = vadd.f32 %v1427, %v1640
      %v1677 = vadd.f32 %v1428, %v1645
      %v1678 = vadd.f32 %v1429, %v1650
      %v1679 = vadd.f32 %v1430, %v1655
      %v1680 = vadd.f32 %v1431, %v1660
      %s1681 = scalar_lea.vmem %s2, 48
      %v1682 = vld [vmem:[%s1681] sm:$0xff]
      %v1685 = vrot.slane %v304, 4
      %v1686 = vsel %vm1434, %v1470, %v1685
      %v1687 = vrot.slane %v305, 4
      %v1688 = vsel %vm1434, %v1685, %v1687
      %v1689 = vsel %vm366, %v1686, 0
      %v1691 = vsel %vm366, %v1688, 0
      %1693 = vmatprep.subr.mxu0 0.0
      %1694 = vmatpush1.msra.mxu0 %v1682
      %1695 = vmatprep.subr.mxu0 0.0
      %1696 = vmatpush1.msra.mxu0 0.0
      %1697 = vmatprep.subr.mxu0 0.0
      %1698 = vmatpush1.msra.mxu0 0.0
      %1699 = vmatprep.subr.mxu0 0.0
      %1700 = vmatpush1.msra.mxu0 0.0
      %1701 = vmatprep.subr.mxu0 0.0
      %1702 = vmatpush1.msra.mxu0 0.0
      %1703 = vmatprep.subr.mxu0 0.0
      %1704 = vmatpush1.msra.mxu0 0.0
      %1705 = vmatprep.subr.mxu0 0.0
      %1706 = vmatpush1.msra.mxu0 0.0
      %1707 = vmatprep.subr.mxu0 0.0
      %1708 = vmatpush1.msra.mxu0 0.0
      %1709 = vmatprep.subr.mxu0 0.0
      %1710 = vmatpush1.msra.mxu0 0.0
      %1711 = vmatprep.subr.mxu0 0.0
      %1712 = vmatpush1.msra.mxu0 0.0
      %1713 = vmatprep.subr.mxu0 0.0
      %1714 = vmatpush1.msra.mxu0 0.0
      %1715 = vmatprep.subr.mxu0 0.0
      %1716 = vmatpush1.msra.mxu0 0.0
      %1717 = vmatprep.subr.mxu0 0.0
      %1718 = vmatpush1.msra.mxu0 0.0
      %1719 = vmatprep.subr.mxu0 0.0
      %1720 = vmatpush1.msra.mxu0 0.0
      %1721 = vmatprep.subr.mxu0 0.0
      %1722 = vmatpush1.msra.mxu0 0.0
      %1723 = vmatprep.subr.mxu0 0.0
      %1724 = vmatpush1.msra.mxu0 0.0
      %1725 = vmatprep.subr.mxu0 0.0
      %1726 = vmatpush1.msra.mxu0 0.0
      %1727 = vmatprep.subr.mxu0 0.0
      %1728 = vmatpush1.msra.mxu0 0.0
      %1729 = vmatprep.subr.mxu0 0.0
      %1730 = vmatpush1.msra.mxu0 0.0
      %1731 = vmatprep.subr.mxu0 0.0
      %1732 = vmatpush1.msra.mxu0 0.0
      %1733 = vmatprep.subr.mxu0 0.0
      %1734 = vmatpush1.msra.mxu0 0.0
      %1735 = vmatprep.subr.mxu0 0.0
      %1736 = vmatpush1.msra.mxu0 0.0
      %1737 = vmatprep.subr.mxu0 0.0
      %1738 = vmatpush1.msra.mxu0 0.0
      %1739 = vmatprep.subr.mxu0 0.0
      %1740 = vmatpush1.msra.mxu0 0.0
      %1741 = vmatprep.subr.mxu0 0.0
      %1742 = vmatpush1.msra.mxu0 0.0
      %1743 = vmatprep.subr.mxu0 0.0
      %1744 = vmatpush1.msra.mxu0 0.0
      %1745 = vmatprep.subr.mxu0 0.0
      %1746 = vmatpush1.msra.mxu0 0.0
      %1747 = vmatprep.subr.mxu0 0.0
      %1748 = vmatpush1.msra.mxu0 0.0
      %1749 = vmatprep.subr.mxu0 0.0
      %1750 = vmatpush1.msra.mxu0 0.0
      %1751 = vmatprep.subr.mxu0 0.0
      %1752 = vmatpush1.msra.mxu0 0.0
      %1753 = vmatprep.subr.mxu0 0.0
      %1754 = vmatpush1.msra.mxu0 0.0
      %1755 = vmatprep.subr.mxu0 0.0
      %1756 = vmatpush1.msra.mxu0 0.0
      %1757 = vmatprep.mubr.f32.mxu0 0.0
      %1758 = vmatmul.mubr.f32.gmra.mrb[0].mxu0 %v1476
      %v1759 = vpop.f32.mrb[0].mxu0
      %v1760 = vadd.f32 0.0, %v1759
      %v1761 = vpop.f32.mrb[0].mxu0
      %1762 = vmatprep.mubr.f32.mxu0 0.0
      %1763 = vmatmul.mubr.f32.gmra.mrb[0].mxu0 %v1478
      %v1764 = vpop.f32.mrb[0].mxu0
      %v1765 = vadd.f32 0.0, %v1764
      %v1766 = vpop.f32.mrb[0].mxu0
      %1767 = vmatprep.mubr.f32.mxu0 0.0
      %1768 = vmatmul.mubr.f32.gmra.mrb[0].mxu0 %v1480
      %v1769 = vpop.f32.mrb[0].mxu0
      %v1770 = vadd.f32 0.0, %v1769
      %v1771 = vpop.f32.mrb[0].mxu0
      %1772 = vmatprep.mubr.f32.mxu0 0.0
      %1773 = vmatmul.mubr.f32.gmra.mrb[0].mxu0 %v1482
      %v1774 = vpop.f32.mrb[0].mxu0
      %v1775 = vadd.f32 0.0, %v1774
      %v1776 = vpop.f32.mrb[0].mxu0
      %1777 = vmatprep.mubr.f32.mxu0 0.0
      %1778 = vmatmul.mubr.f32.gmra.mrb[0].mxu0 %v1484
      %v1779 = vpop.f32.mrb[0].mxu0
      %v1780 = vadd.f32 0.0, %v1779
      %v1781 = vpop.f32.mrb[0].mxu0
      %1782 = vmatprep.mubr.f32.mxu0 0.0
      %1783 = vmatmul.mubr.f32.gmra.mrb[0].mxu0 %v1486
      %v1784 = vpop.f32.mrb[0].mxu0
      %v1785 = vadd.f32 0.0, %v1784
      %v1786 = vpop.f32.mrb[0].mxu0
      %1787 = vmatprep.mubr.f32.mxu0 0.0
      %1788 = vmatmul.mubr.f32.gmra.mrb[0].mxu0 %v1488
      %v1789 = vpop.f32.mrb[0].mxu0
      %v1790 = vadd.f32 0.0, %v1789
      %v1791 = vpop.f32.mrb[0].mxu0
      %1792 = vmatprep.mubr.f32.mxu0 0.0
      %1793 = vmatmul.mubr.f32.gmra.mrb[0].mxu0 %v1490
      %v1794 = vpop.f32.mrb[0].mxu0
      %v1795 = vadd.f32 0.0, %v1794
      %v1796 = vpop.f32.mrb[0].mxu0
      %1797 = vmatprep.mubr.f32.mxu0 0.0
      %1798 = vmatmul.mubr.f32.gmra.mrb[0].mxu0 %v1492
      %v1799 = vpop.f32.mrb[0].mxu0
      %v1800 = vadd.f32 0.0, %v1799
      %v1801 = vpop.f32.mrb[0].mxu0
      %1802 = vmatprep.mubr.f32.mxu0 0.0
      %1803 = vmatmul.mubr.f32.gmra.mrb[0].mxu0 %v1494
      %v1804 = vpop.f32.mrb[0].mxu0
      %v1805 = vadd.f32 0.0, %v1804
      %v1806 = vpop.f32.mrb[0].mxu0
      %1807 = vmatprep.mubr.f32.mxu0 0.0
      %1808 = vmatmul.mubr.f32.gmra.mrb[0].mxu0 %v1496
      %v1809 = vpop.f32.mrb[0].mxu0
      %v1810 = vadd.f32 0.0, %v1809
      %v1811 = vpop.f32.mrb[0].mxu0
      %1812 = vmatprep.mubr.f32.mxu0 0.0
      %1813 = vmatmul.mubr.f32.gmra.mrb[0].mxu0 %v1498
      %v1814 = vpop.f32.mrb[0].mxu0
      %v1815 = vadd.f32 0.0, %v1814
      %v1816 = vpop.f32.mrb[0].mxu0
      %1817 = vmatprep.mubr.f32.mxu0 0.0
      %1818 = vmatmul.mubr.f32.gmra.mrb[0].mxu0 %v1500
      %v1819 = vpop.f32.mrb[0].mxu0
      %v1820 = vadd.f32 0.0, %v1819
      %v1821 = vpop.f32.mrb[0].mxu0
      %1822 = vmatprep.mubr.f32.mxu0 0.0
      %1823 = vmatmul.mubr.f32.gmra.mrb[0].mxu0 %v1502
      %v1824 = vpop.f32.mrb[0].mxu0
      %v1825 = vadd.f32 0.0, %v1824
      %v1826 = vpop.f32.mrb[0].mxu0
      %1827 = vmatprep.mubr.f32.mxu0 0.0
      %1828 = vmatmul.mubr.f32.gmra.mrb[0].mxu0 %v1504
      %v1829 = vpop.f32.mrb[0].mxu0
      %v1830 = vadd.f32 0.0, %v1829
      %v1831 = vpop.f32.mrb[0].mxu0
      %1832 = vmatprep.mubr.f32.mxu0 0.0
      %1833 = vmatmul.mubr.f32.gmra.mrb[0].mxu0 %v1506
      %v1834 = vpop.f32.mrb[0].mxu0
      %v1835 = vadd.f32 0.0, %v1834
      %v1836 = vpop.f32.mrb[0].mxu0
      %1837 = vmatprep.mubr.f32.mxu0 0.0
      %1838 = vmatmul.mubr.f32.gmra.mrb[0].mxu0 %v1689
      %v1839 = vpop.f32.mrb[0].mxu0
      %v1840 = vadd.f32 0.0, %v1839
      %v1841 = vpop.f32.mrb[0].mxu0
      %1842 = vmatprep.mubr.f32.mxu0 0.0
      %1843 = vmatmul.mubr.f32.gmra.mrb[0].mxu0 %v1691
      %v1844 = vpop.f32.mrb[0].mxu0
      %v1845 = vadd.f32 0.0, %v1844
      %v1846 = vpop.f32.mrb[0].mxu0
      %1847 = vdwg.mxu0
      %v1848 = vadd.f32 %v1663, %v1760
      %v1849 = vadd.f32 %v1664, %v1765
      %v1850 = vadd.f32 %v1665, %v1770
      %v1851 = vadd.f32 %v1666, %v1775
      %v1852 = vadd.f32 %v1667, %v1780
      %v1853 = vadd.f32 %v1668, %v1785
      %v1854 = vadd.f32 %v1669, %v1790
      %v1855 = vadd.f32 %v1670, %v1795
      %v1856 = vadd.f32 %v1671, %v1800
      %v1857 = vadd.f32 %v1672, %v1805
      %v1858 = vadd.f32 %v1673, %v1810
      %v1859 = vadd.f32 %v1674, %v1815
      %v1860 = vadd.f32 %v1675, %v1820
      %v1861 = vadd.f32 %v1676, %v1825
      %v1862 = vadd.f32 %v1677, %v1830
      %v1863 = vadd.f32 %v1678, %v1835
      %v1864 = vadd.f32 %v1679, %v1840
      %v1865 = vadd.f32 %v1680, %v1845
      %s1866 = scalar_lea.vmem %s2, 56
      %v1867 = vld [vmem:[%s1866] sm:$0xff]
      %vm1868 = vcmask 1042432
      %v1869 = vrot.slane %v287, 5
      %v1870 = vrot.slane %v288, 5
      %v1871 = vsel %vm1868, %v1869, %v1870
      %v1872 = vrot.slane %v289, 5
      %v1873 = vsel %vm1868, %v1870, %v1872
      %v1874 = vrot.slane %v290, 5
      %v1875 = vsel %vm1868, %v1872, %v1874
      %v1876 = vrot.slane %v291, 5
      %v1877 = vsel %vm1868, %v1874, %v1876
      %v1878 = vrot.slane %v292, 5
      %v1879 = vsel %vm1868, %v1876, %v1878
      %v1880 = vrot.slane %v293, 5
      %v1881 = vsel %vm1868, %v1878, %v1880
      %v1882 = vrot.slane %v294, 5
      %v1883 = vsel %vm1868, %v1880, %v1882
      %v1884 = vrot.slane %v295, 5
      %v1885 = vsel %vm1868, %v1882, %v1884
      %v1886 = vrot.slane %v296, 5
      %v1887 = vsel %vm1868, %v1884, %v1886
      %v1888 = vrot.slane %v297, 5
      %v1889 = vsel %vm1868, %v1886, %v1888
      %v1890 = vrot.slane %v298, 5
      %v1891 = vsel %vm1868, %v1888, %v1890
      %v1892 = vrot.slane %v299, 5
      %v1893 = vsel %vm1868, %v1890, %v1892
      %v1894 = vrot.slane %v300, 5
      %v1895 = vsel %vm1868, %v1892, %v1894
      %v1896 = vrot.slane %v301, 5
      %v1897 = vsel %vm1868, %v1894, %v1896
      %v1898 = vrot.slane %v302, 5
      %v1899 = vsel %vm1868, %v1896, %v1898
      %v1900 = vrot.slane %v303, 5
      %v1901 = vsel %vm1868, %v1898, %v1900
      %v1902 = vrot.slane %v304, 5
      %v1903 = vsel %vm1868, %v1900, %v1902
      %v1904 = vrot.slane %v305, 5
      %v1905 = vsel %vm1868, %v1902, %v1904
      %v1906 = vsel %vm366, %v1871, 0
      %v1908 = vsel %vm366, %v1873, 0
      %v1910 = vsel %vm366, %v1875, 0
      %v1912 = vsel %vm366, %v1877, 0
      %v1914 = vsel %vm366, %v1879, 0
      %v1916 = vsel %vm366, %v1881, 0
      %v1918 = vsel %vm366, %v1883, 0
      %v1920 = vsel %vm366, %v1885, 0
      %v1922 = vsel %vm366, %v1887, 0
      %v1924 = vsel %vm366, %v1889, 0
      %v1926 = vsel %vm366, %v1891, 0
      %v1928 = vsel %vm366, %v1893, 0
      %v1930 = vsel %vm366, %v1895, 0
      %v1932 = vsel %vm366, %v1897, 0
      %v1934 = vsel %vm366, %v1899, 0
      %v1936 = vsel %vm366, %v1901, 0
      %v1938 = vsel %vm366, %v1903, 0
      %v1940 = vsel %vm366, %v1905, 0
      %1942 = vmatprep.subr.mxu0 0.0
      %1943 = vmatpush1.msra.mxu0 %v1867
      %1944 = vmatprep.subr.mxu0 0.0
      %1945 = vmatpush1.msra.mxu0 0.0
      %1946 = vmatprep.subr.mxu0 0.0
      %1947 = vmatpush1.msra.mxu0 0.0
      %1948 = vmatprep.subr.mxu0 0.0
      %1949 = vmatpush1.msra.mxu0 0.0
      %1950 = vmatprep.subr.mxu0 0.0
      %1951 = vmatpush1.msra.mxu0 0.0
      %1952 = vmatprep.subr.mxu0 0.0
      %1953 = vmatpush1.msra.mxu0 0.0
      %1954 = vmatprep.subr.mxu0 0.0
      %1955 = vmatpush1.msra.mxu0 0.0
      %1956 = vmatprep.subr.mxu0 0.0
      %1957 = vmatpush1.msra.mxu0 0.0
      %1958 = vmatprep.subr.mxu0 0.0
      %1959 = vmatpush1.msra.mxu0 0.0
      %1960 = vmatprep.subr.mxu0 0.0
      %1961 = vmatpush1.msra.mxu0 0.0
      %1962 = vmatprep.subr.mxu0 0.0
      %1963 = vmatpush1.msra.mxu0 0.0
      %1964 = vmatprep.subr.mxu0 0.0
      %1965 = vmatpush1.msra.mxu0 0.0
      %1966 = vmatprep.subr.mxu0 0.0
      %1967 = vmatpush1.msra.mxu0 0.0
      %1968 = vmatprep.subr.mxu0 0.0
      %1969 = vmatpush1.msra.mxu0 0.0
      %1970 = vmatprep.subr.mxu0 0.0
      %1971 = vmatpush1.msra.mxu0 0.0
      %1972 = vmatprep.subr.mxu0 0.0
      %1973 = vmatpush1.msra.mxu0 0.0
      %1974 = vmatprep.subr.mxu0 0.0
      %1975 = vmatpush1.msra.mxu0 0.0
      %1976 = vmatprep.subr.mxu0 0.0
      %1977 = vmatpush1.msra.mxu0 0.0
      %1978 = vmatprep.subr.mxu0 0.0
      %1979 = vmatpush1.msra.mxu0 0.0
      %1980 = vmatprep.subr.mxu0 0.0
      %1981 = vmatpush1.msra.mxu0 0.0
      %1982 = vmatprep.subr.mxu0 0.0
      %1983 = vmatpush1.msra.mxu0 0.0
      %1984 = vmatprep.subr.mxu0 0.0
      %1985 = vmatpush1.msra.mxu0 0.0
      %1986 = vmatprep.subr.mxu0 0.0
      %1987 = vmatpush1.msra.mxu0 0.0
      %1988 = vmatprep.subr.mxu0 0.0
      %1989 = vmatpush1.msra.mxu0 0.0
      %1990 = vmatprep.subr.mxu0 0.0
      %1991 = vmatpush1.msra.mxu0 0.0
      %1992 = vmatprep.subr.mxu0 0.0
      %1993 = vmatpush1.msra.mxu0 0.0
      %1994 = vmatprep.subr.mxu0 0.0
      %1995 = vmatpush1.msra.mxu0 0.0
      %1996 = vmatprep.subr.mxu0 0.0
      %1997 = vmatpush1.msra.mxu0 0.0
      %1998 = vmatprep.subr.mxu0 0.0
      %1999 = vmatpush1.msra.mxu0 0.0
      %2000 = vmatprep.subr.mxu0 0.0
      %2001 = vmatpush1.msra.mxu0 0.0
      %2002 = vmatprep.subr.mxu0 0.0
      %2003 = vmatpush1.msra.mxu0 0.0
      %2004 = vmatprep.subr.mxu0 0.0
      %2005 = vmatpush1.msra.mxu0 0.0
      %2006 = vmatprep.mubr.f32.mxu0 0.0
      %2007 = vmatmul.mubr.f32.gmra.mrb[0].mxu0 %v1906
      %v2008 = vpop.f32.mrb[0].mxu0
      %v2009 = vadd.f32 0.0, %v2008
      %v2010 = vpop.f32.mrb[0].mxu0
      %2011 = vmatprep.mubr.f32.mxu0 0.0
      %2012 = vmatmul.mubr.f32.gmra.mrb[0].mxu0 %v1908
      %v2013 = vpop.f32.mrb[0].mxu0
      %v2014 = vadd.f32 0.0, %v2013
      %v2015 = vpop.f32.mrb[0].mxu0
      %2016 = vmatprep.mubr.f32.mxu0 0.0
      %2017 = vmatmul.mubr.f32.gmra.mrb[0].mxu0 %v1910
      %v2018 = vpop.f32.mrb[0].mxu0
      %v2019 = vadd.f32 0.0, %v2018
      %v2020 = vpop.f32.mrb[0].mxu0
      %2021 = vmatprep.mubr.f32.mxu0 0.0
      %2022 = vmatmul.mubr.f32.gmra.mrb[0].mxu0 %v1912
      %v2023 = vpop.f32.mrb[0].mxu0
      %v2024 = vadd.f32 0.0, %v2023
      %v2025 = vpop.f32.mrb[0].mxu0
      %2026 = vmatprep.mubr.f32.mxu0 0.0
      %2027 = vmatmul.mubr.f32.gmra.mrb[0].mxu0 %v1914
      %v2028 = vpop.f32.mrb[0].mxu0
      %v2029 = vadd.f32 0.0, %v2028
      %v2030 = vpop.f32.mrb[0].mxu0
      %2031 = vmatprep.mubr.f32.mxu0 0.0
      %2032 = vmatmul.mubr.f32.gmra.mrb[0].mxu0 %v1916
      %v2033 = vpop.f32.mrb[0].mxu0
      %v2034 = vadd.f32 0.0, %v2033
      %v2035 = vpop.f32.mrb[0].mxu0
      %2036 = vmatprep.mubr.f32.mxu0 0.0
      %2037 = vmatmul.mubr.f32.gmra.mrb[0].mxu0 %v1918
      %v2038 = vpop.f32.mrb[0].mxu0
      %v2039 = vadd.f32 0.0, %v2038
      %v2040 = vpop.f32.mrb[0].mxu0
      %2041 = vmatprep.mubr.f32.mxu0 0.0
      %2042 = vmatmul.mubr.f32.gmra.mrb[0].mxu0 %v1920
      %v2043 = vpop.f32.mrb[0].mxu0
      %v2044 = vadd.f32 0.0, %v2043
      %v2045 = vpop.f32.mrb[0].mxu0
      %2046 = vmatprep.mubr.f32.mxu0 0.0
      %2047 = vmatmul.mubr.f32.gmra.mrb[0].mxu0 %v1922
      %v2048 = vpop.f32.mrb[0].mxu0
      %v2049 = vadd.f32 0.0, %v2048
      %v2050 = vpop.f32.mrb[0].mxu0
      %2051 = vmatprep.mubr.f32.mxu0 0.0
      %2052 = vmatmul.mubr.f32.gmra.mrb[0].mxu0 %v1924
      %v2053 = vpop.f32.mrb[0].mxu0
      %v2054 = vadd.f32 0.0, %v2053
      %v2055 = vpop.f32.mrb[0].mxu0
      %2056 = vmatprep.mubr.f32.mxu0 0.0
      %2057 = vmatmul.mubr.f32.gmra.mrb[0].mxu0 %v1926
      %v2058 = vpop.f32.mrb[0].mxu0
      %v2059 = vadd.f32 0.0, %v2058
      %v2060 = vpop.f32.mrb[0].mxu0
      %2061 = vmatprep.mubr.f32.mxu0 0.0
      %2062 = vmatmul.mubr.f32.gmra.mrb[0].mxu0 %v1928
      %v2063 = vpop.f32.mrb[0].mxu0
      %v2064 = vadd.f32 0.0, %v2063
      %v2065 = vpop.f32.mrb[0].mxu0
      %2066 = vmatprep.mubr.f32.mxu0 0.0
      %2067 = vmatmul.mubr.f32.gmra.mrb[0].mxu0 %v1930
      %v2068 = vpop.f32.mrb[0].mxu0
      %v2069 = vadd.f32 0.0, %v2068
      %v2070 = vpop.f32.mrb[0].mxu0
      %2071 = vmatprep.mubr.f32.mxu0 0.0
      %2072 = vmatmul.mubr.f32.gmra.mrb[0].mxu0 %v1932
      %v2073 = vpop.f32.mrb[0].mxu0
      %v2074 = vadd.f32 0.0, %v2073
      %v2075 = vpop.f32.mrb[0].mxu0
      %2076 = vmatprep.mubr.f32.mxu0 0.0
      %2077 = vmatmul.mubr.f32.gmra.mrb[0].mxu0 %v1934
      %v2078 = vpop.f32.mrb[0].mxu0
      %v2079 = vadd.f32 0.0, %v2078
      %v2080 = vpop.f32.mrb[0].mxu0
      %2081 = vmatprep.mubr.f32.mxu0 0.0
      %2082 = vmatmul.mubr.f32.gmra.mrb[0].mxu0 %v1936
      %v2083 = vpop.f32.mrb[0].mxu0
      %v2084 = vadd.f32 0.0, %v2083
      %v2085 = vpop.f32.mrb[0].mxu0
      %2086 = vmatprep.mubr.f32.mxu0 0.0
      %2087 = vmatmul.mubr.f32.gmra.mrb[0].mxu0 %v1938
      %v2088 = vpop.f32.mrb[0].mxu0
      %v2089 = vadd.f32 0.0, %v2088
      %v2090 = vpop.f32.mrb[0].mxu0
      %2091 = vmatprep.mubr.f32.mxu0 0.0
      %2092 = vmatmul.mubr.f32.gmra.mrb[0].mxu0 %v1940
      %v2093 = vpop.f32.mrb[0].mxu0
      %v2094 = vadd.f32 0.0, %v2093
      %v2095 = vpop.f32.mrb[0].mxu0
      %2096 = vdwg.mxu0
      %v2097 = vadd.f32 %v1848, %v2009
      %v2098 = vadd.f32 %v1849, %v2014
      %v2099 = vadd.f32 %v1850, %v2019
      %v2100 = vadd.f32 %v1851, %v2024
      %v2101 = vadd.f32 %v1852, %v2029
      %v2102 = vadd.f32 %v1853, %v2034
      %v2103 = vadd.f32 %v1854, %v2039
      %v2104 = vadd.f32 %v1855, %v2044
      %v2105 = vadd.f32 %v1856, %v2049
      %v2106 = vadd.f32 %v1857, %v2054
      %v2107 = vadd.f32 %v1858, %v2059
      %v2108 = vadd.f32 %v1859, %v2064
      %v2109 = vadd.f32 %v1860, %v2069
      %v2110 = vadd.f32 %v1861, %v2074
      %v2111 = vadd.f32 %v1862, %v2079
      %v2112 = vadd.f32 %v1863, %v2084
      %v2113 = vadd.f32 %v1864, %v2089
      %v2114 = vadd.f32 %v1865, %v2094
      %s2115 = scalar_lea.vmem %s2, 64
      %v2116 = vld [vmem:[%s2115] sm:$0xff]
      %vm2117 = vcmask 1041408
      %v2118 = vrot.slane %v287, 6
      %v2119 = vrot.slane %v288, 6
      %v2120 = vsel %vm2117, %v2118, %v2119
      %v2121 = vrot.slane %v289, 6
      %v2122 = vsel %vm2117, %v2119, %v2121
      %v2123 = vrot.slane %v290, 6
      %v2124 = vsel %vm2117, %v2121, %v2123
      %v2125 = vrot.slane %v291, 6
      %v2126 = vsel %vm2117, %v2123, %v2125
      %v2127 = vrot.slane %v292, 6
      %v2128 = vsel %vm2117, %v2125, %v2127
      %v2129 = vrot.slane %v293, 6
      %v2130 = vsel %vm2117, %v2127, %v2129
      %v2131 = vrot.slane %v294, 6
      %v2132 = vsel %vm2117, %v2129, %v2131
      %v2133 = vrot.slane %v295, 6
      %v2134 = vsel %vm2117, %v2131, %v2133
      %v2135 = vrot.slane %v296, 6
      %v2136 = vsel %vm2117, %v2133, %v2135
      %v2137 = vrot.slane %v297, 6
      %v2138 = vsel %vm2117, %v2135, %v2137
      %v2139 = vrot.slane %v298, 6
      %v2140 = vsel %vm2117, %v2137, %v2139
      %v2141 = vrot.slane %v299, 6
      %v2142 = vsel %vm2117, %v2139, %v2141
      %v2143 = vrot.slane %v300, 6
      %v2144 = vsel %vm2117, %v2141, %v2143
      %v2145 = vrot.slane %v301, 6
      %v2146 = vsel %vm2117, %v2143, %v2145
      %v2147 = vrot.slane %v302, 6
      %v2148 = vsel %vm2117, %v2145, %v2147
      %v2149 = vrot.slane %v303, 6
      %v2150 = vsel %vm2117, %v2147, %v2149
      %v2151 = vrot.slane %v304, 6
      %v2152 = vsel %vm2117, %v2149, %v2151
      %v2153 = vrot.slane %v305, 6
      %v2154 = vsel %vm2117, %v2151, %v2153
      %v2155 = vsel %vm366, %v2120, 0
      %v2157 = vsel %vm366, %v2122, 0
      %v2159 = vsel %vm366, %v2124, 0
      %v2161 = vsel %vm366, %v2126, 0
      %v2163 = vsel %vm366, %v2128, 0
      %v2165 = vsel %vm366, %v2130, 0
      %v2167 = vsel %vm366, %v2132, 0
      %v2169 = vsel %vm366, %v2134, 0
      %v2171 = vsel %vm366, %v2136, 0
      %v2173 = vsel %vm366, %v2138, 0
      %v2175 = vsel %vm366, %v2140, 0
      %v2177 = vsel %vm366, %v2142, 0
      %v2179 = vsel %vm366, %v2144, 0
      %v2181 = vsel %vm366, %v2146, 0
      %v2183 = vsel %vm366, %v2148, 0
      %v2185 = vsel %vm366, %v2150, 0
      %v2187 = vsel %vm366, %v2152, 0
      %v2189 = vsel %vm366, %v2154, 0
      %2191 = vmatprep.subr.mxu0 0.0
      %2192 = vmatpush1.msra.mxu0 %v2116
      %2193 = vmatprep.subr.mxu0 0.0
      %2194 = vmatpush1.msra.mxu0 0.0
      %2195 = vmatprep.subr.mxu0 0.0
      %2196 = vmatpush1.msra.mxu0 0.0
      %2197 = vmatprep.subr.mxu0 0.0
      %2198 = vmatpush1.msra.mxu0 0.0
      %2199 = vmatprep.subr.mxu0 0.0
      %2200 = vmatpush1.msra.mxu0 0.0
      %2201 = vmatprep.subr.mxu0 0.0
      %2202 = vmatpush1.msra.mxu0 0.0
      %2203 = vmatprep.subr.mxu0 0.0
      %2204 = vmatpush1.msra.mxu0 0.0
      %2205 = vmatprep.subr.mxu0 0.0
      %2206 = vmatpush1.msra.mxu0 0.0
      %2207 = vmatprep.subr.mxu0 0.0
      %2208 = vmatpush1.msra.mxu0 0.0
      %2209 = vmatprep.subr.mxu0 0.0
      %2210 = vmatpush1.msra.mxu0 0.0
      %2211 = vmatprep.subr.mxu0 0.0
      %2212 = vmatpush1.msra.mxu0 0.0
      %2213 = vmatprep.subr.mxu0 0.0
      %2214 = vmatpush1.msra.mxu0 0.0
      %2215 = vmatprep.subr.mxu0 0.0
      %2216 = vmatpush1.msra.mxu0 0.0
      %2217 = vmatprep.subr.mxu0 0.0
      %2218 = vmatpush1.msra.mxu0 0.0
      %2219 = vmatprep.subr.mxu0 0.0
      %2220 = vmatpush1.msra.mxu0 0.0
      %2221 = vmatprep.subr.mxu0 0.0
      %2222 = vmatpush1.msra.mxu0 0.0
      %2223 = vmatprep.subr.mxu0 0.0
      %2224 = vmatpush1.msra.mxu0 0.0
      %2225 = vmatprep.subr.mxu0 0.0
      %2226 = vmatpush1.msra.mxu0 0.0
      %2227 = vmatprep.subr.mxu0 0.0
      %2228 = vmatpush1.msra.mxu0 0.0
      %2229 = vmatprep.subr.mxu0 0.0
      %2230 = vmatpush1.msra.mxu0 0.0
      %2231 = vmatprep.subr.mxu0 0.0
      %2232 = vmatpush1.msra.mxu0 0.0
      %2233 = vmatprep.subr.mxu0 0.0
      %2234 = vmatpush1.msra.mxu0 0.0
      %2235 = vmatprep.subr.mxu0 0.0
      %2236 = vmatpush1.msra.mxu0 0.0
      %2237 = vmatprep.subr.mxu0 0.0
      %2238 = vmatpush1.msra.mxu0 0.0
      %2239 = vmatprep.subr.mxu0 0.0
      %2240 = vmatpush1.msra.mxu0 0.0
      %2241 = vmatprep.subr.mxu0 0.0
      %2242 = vmatpush1.msra.mxu0 0.0
      %2243 = vmatprep.subr.mxu0 0.0
      %2244 = vmatpush1.msra.mxu0 0.0
      %2245 = vmatprep.subr.mxu0 0.0
      %2246 = vmatpush1.msra.mxu0 0.0
      %2247 = vmatprep.subr.mxu0 0.0
      %2248 = vmatpush1.msra.mxu0 0.0
      %2249 = vmatprep.subr.mxu0 0.0
      %2250 = vmatpush1.msra.mxu0 0.0
      %2251 = vmatprep.subr.mxu0 0.0
      %2252 = vmatpush1.msra.mxu0 0.0
      %2253 = vmatprep.subr.mxu0 0.0
      %2254 = vmatpush1.msra.mxu0 0.0
      %2255 = vmatprep.mubr.f32.mxu0 0.0
      %2256 = vmatmul.mubr.f32.gmra.mrb[0].mxu0 %v2155
      %v2257 = vpop.f32.mrb[0].mxu0
      %v2258 = vadd.f32 0.0, %v2257
      %v2259 = vpop.f32.mrb[0].mxu0
      %2260 = vmatprep.mubr.f32.mxu0 0.0
      %2261 = vmatmul.mubr.f32.gmra.mrb[0].mxu0 %v2157
      %v2262 = vpop.f32.mrb[0].mxu0
      %v2263 = vadd.f32 0.0, %v2262
      %v2264 = vpop.f32.mrb[0].mxu0
      %2265 = vmatprep.mubr.f32.mxu0 0.0
      %2266 = vmatmul.mubr.f32.gmra.mrb[0].mxu0 %v2159
      %v2267 = vpop.f32.mrb[0].mxu0
      %v2268 = vadd.f32 0.0, %v2267
      %v2269 = vpop.f32.mrb[0].mxu0
      %2270 = vmatprep.mubr.f32.mxu0 0.0
      %2271 = vmatmul.mubr.f32.gmra.mrb[0].mxu0 %v2161
      %v2272 = vpop.f32.mrb[0].mxu0
      %v2273 = vadd.f32 0.0, %v2272
      %v2274 = vpop.f32.mrb[0].mxu0
      %2275 = vmatprep.mubr.f32.mxu0 0.0
      %2276 = vmatmul.mubr.f32.gmra.mrb[0].mxu0 %v2163
      %v2277 = vpop.f32.mrb[0].mxu0
      %v2278 = vadd.f32 0.0, %v2277
      %v2279 = vpop.f32.mrb[0].mxu0
      %2280 = vmatprep.mubr.f32.mxu0 0.0
      %2281 = vmatmul.mubr.f32.gmra.mrb[0].mxu0 %v2165
      %v2282 = vpop.f32.mrb[0].mxu0
      %v2283 = vadd.f32 0.0, %v2282
      %v2284 = vpop.f32.mrb[0].mxu0
      %2285 = vmatprep.mubr.f32.mxu0 0.0
      %2286 = vmatmul.mubr.f32.gmra.mrb[0].mxu0 %v2167
      %v2287 = vpop.f32.mrb[0].mxu0
      %v2288 = vadd.f32 0.0, %v2287
      %v2289 = vpop.f32.mrb[0].mxu0
      %2290 = vmatprep.mubr.f32.mxu0 0.0
      %2291 = vmatmul.mubr.f32.gmra.mrb[0].mxu0 %v2169
      %v2292 = vpop.f32.mrb[0].mxu0
      %v2293 = vadd.f32 0.0, %v2292
      %v2294 = vpop.f32.mrb[0].mxu0
      %2295 = vmatprep.mubr.f32.mxu0 0.0
      %2296 = vmatmul.mubr.f32.gmra.mrb[0].mxu0 %v2171
      %v2297 = vpop.f32.mrb[0].mxu0
      %v2298 = vadd.f32 0.0, %v2297
      %v2299 = vpop.f32.mrb[0].mxu0
      %2300 = vmatprep.mubr.f32.mxu0 0.0
      %2301 = vmatmul.mubr.f32.gmra.mrb[0].mxu0 %v2173
      %v2302 = vpop.f32.mrb[0].mxu0
      %v2303 = vadd.f32 0.0, %v2302
      %v2304 = vpop.f32.mrb[0].mxu0
      %2305 = vmatprep.mubr.f32.mxu0 0.0
      %2306 = vmatmul.mubr.f32.gmra.mrb[0].mxu0 %v2175
      %v2307 = vpop.f32.mrb[0].mxu0
      %v2308 = vadd.f32 0.0, %v2307
      %v2309 = vpop.f32.mrb[0].mxu0
      %2310 = vmatprep.mubr.f32.mxu0 0.0
      %2311 = vmatmul.mubr.f32.gmra.mrb[0].mxu0 %v2177
      %v2312 = vpop.f32.mrb[0].mxu0
      %v2313 = vadd.f32 0.0, %v2312
      %v2314 = vpop.f32.mrb[0].mxu0
      %2315 = vmatprep.mubr.f32.mxu0 0.0
      %2316 = vmatmul.mubr.f32.gmra.mrb[0].mxu0 %v2179
      %v2317 = vpop.f32.mrb[0].mxu0
      %v2318 = vadd.f32 0.0, %v2317
      %v2319 = vpop.f32.mrb[0].mxu0
      %2320 = vmatprep.mubr.f32.mxu0 0.0
      %2321 = vmatmul.mubr.f32.gmra.mrb[0].mxu0 %v2181
      %v2322 = vpop.f32.mrb[0].mxu0
      %v2323 = vadd.f32 0.0, %v2322
      %v2324 = vpop.f32.mrb[0].mxu0
      %2325 = vmatprep.mubr.f32.mxu0 0.0
      %2326 = vmatmul.mubr.f32.gmra.mrb[0].mxu0 %v2183
      %v2327 = vpop.f32.mrb[0].mxu0
      %v2328 = vadd.f32 0.0, %v2327
      %v2329 = vpop.f32.mrb[0].mxu0
      %2330 = vmatprep.mubr.f32.mxu0 0.0
      %2331 = vmatmul.mubr.f32.gmra.mrb[0].mxu0 %v2185
      %v2332 = vpop.f32.mrb[0].mxu0
      %v2333 = vadd.f32 0.0, %v2332
      %v2334 = vpop.f32.mrb[0].mxu0
      %2335 = vmatprep.mubr.f32.mxu0 0.0
      %2336 = vmatmul.mubr.f32.gmra.mrb[0].mxu0 %v2187
      %v2337 = vpop.f32.mrb[0].mxu0
      %v2338 = vadd.f32 0.0, %v2337
      %v2339 = vpop.f32.mrb[0].mxu0
      %2340 = vmatprep.mubr.f32.mxu0 0.0
      %2341 = vmatmul.mubr.f32.gmra.mrb[0].mxu0 %v2189
      %v2342 = vpop.f32.mrb[0].mxu0
      %v2343 = vadd.f32 0.0, %v2342
      %v2344 = vpop.f32.mrb[0].mxu0
      %2345 = vdwg.mxu0
      %v2346 = vadd.f32 %v2097, %v2258
      %v2347 = vadd.f32 %v2098, %v2263
      %v2348 = vadd.f32 %v2099, %v2268
      %v2349 = vadd.f32 %v2100, %v2273
      %v2350 = vadd.f32 %v2101, %v2278
      %v2351 = vadd.f32 %v2102, %v2283
      %v2352 = vadd.f32 %v2103, %v2288
      %v2353 = vadd.f32 %v2104, %v2293
      %v2354 = vadd.f32 %v2105, %v2298
      %v2355 = vadd.f32 %v2106, %v2303
      %v2356 = vadd.f32 %v2107, %v2308
      %v2357 = vadd.f32 %v2108, %v2313
      %v2358 = vadd.f32 %v2109, %v2318
      %v2359 = vadd.f32 %v2110, %v2323
      %v2360 = vadd.f32 %v2111, %v2328
      %v2361 = vadd.f32 %v2112, %v2333
      %v2362 = vadd.f32 %v2113, %v2338
      %v2363 = vadd.f32 %v2114, %v2343
      %v2364 = vld [vmem:[%s3] sm:$0x1]
      %v2366 = vlaneseq
      %v2367 = vshrl.u32 %v2366, 7
      %v2368 = vsub.s32 0, %v2367
      %v2369 = vrot.slane %v2364, %v2368
      %v2371 = vadd.f32 %v2346, %v2369
      %v2372 = vadd.f32 %v2347, %v2369
      %v2373 = vadd.f32 %v2348, %v2369
      %v2374 = vadd.f32 %v2349, %v2369
      %v2375 = vadd.f32 %v2350, %v2369
      %v2376 = vadd.f32 %v2351, %v2369
      %v2377 = vadd.f32 %v2352, %v2369
      %v2378 = vadd.f32 %v2353, %v2369
      %v2379 = vadd.f32 %v2354, %v2369
      %v2380 = vadd.f32 %v2355, %v2369
      %v2381 = vadd.f32 %v2356, %v2369
      %v2382 = vadd.f32 %v2357, %v2369
      %v2383 = vadd.f32 %v2358, %v2369
      %v2384 = vadd.f32 %v2359, %v2369
      %v2385 = vadd.f32 %v2360, %v2369
      %v2386 = vadd.f32 %v2361, %v2369
      %v2387 = vadd.f32 %v2362, %v2369
      %v2388 = vadd.f32 %v2363, %v2369
      %s2389 = sld [smem:[#allocation2]]
      %vm2390 = vcmp.gt.f32.partialorder %v2371, 0.0
      %vm2391 = vcmp.gt.f32.partialorder %v2372, 0.0
      %vm2392 = vcmp.gt.f32.partialorder %v2373, 0.0
      %vm2393 = vcmp.gt.f32.partialorder %v2374, 0.0
      %vm2394 = vcmp.gt.f32.partialorder %v2375, 0.0
      %vm2395 = vcmp.gt.f32.partialorder %v2376, 0.0
      %vm2396 = vcmp.gt.f32.partialorder %v2377, 0.0
      %vm2397 = vcmp.gt.f32.partialorder %v2378, 0.0
      %vm2398 = vcmp.gt.f32.partialorder %v2379, 0.0
      %vm2399 = vcmp.gt.f32.partialorder %v2380, 0.0
      %vm2400 = vcmp.gt.f32.partialorder %v2381, 0.0
      %vm2401 = vcmp.gt.f32.partialorder %v2382, 0.0
      %vm2402 = vcmp.gt.f32.partialorder %v2383, 0.0
      %vm2403 = vcmp.gt.f32.partialorder %v2384, 0.0
      %vm2404 = vcmp.gt.f32.partialorder %v2385, 0.0
      %vm2405 = vcmp.gt.f32.partialorder %v2386, 0.0
      %vm2406 = vcmp.gt.f32.partialorder %v2387, 0.0
      %vm2407 = vcmp.gt.f32.partialorder %v2388, 0.0
      %v2408 = vstv %s2389
      %v2409 = vmul.f32 %v2408, %v2371
      %v2410 = vmul.f32 %v2408, %v2372
      %v2411 = vmul.f32 %v2408, %v2373
      %v2412 = vmul.f32 %v2408, %v2374
      %v2413 = vmul.f32 %v2408, %v2375
      %v2414 = vmul.f32 %v2408, %v2376
      %v2415 = vmul.f32 %v2408, %v2377
      %v2416 = vmul.f32 %v2408, %v2378
      %v2417 = vmul.f32 %v2408, %v2379
      %v2418 = vmul.f32 %v2408, %v2380
      %v2419 = vmul.f32 %v2408, %v2381
      %v2420 = vmul.f32 %v2408, %v2382
      %v2421 = vmul.f32 %v2408, %v2383
      %v2422 = vmul.f32 %v2408, %v2384
      %v2423 = vmul.f32 %v2408, %v2385
      %v2424 = vmul.f32 %v2408, %v2386
      %v2425 = vmul.f32 %v2408, %v2387
      %v2426 = vmul.f32 %v2408, %v2388
      %v2427 = vsel %vm2390, %v2371, %v2409
      %v2428 = vsel %vm2391, %v2372, %v2410
      %v2429 = vsel %vm2392, %v2373, %v2411
      %v2430 = vsel %vm2393, %v2374, %v2412
      %v2431 = vsel %vm2394, %v2375, %v2413
      %v2432 = vsel %vm2395, %v2376, %v2414
      %v2433 = vsel %vm2396, %v2377, %v2415
      %v2434 = vsel %vm2397, %v2378, %v2416
      %v2435 = vsel %vm2398, %v2379, %v2417
      %v2436 = vsel %vm2399, %v2380, %v2418
      %v2437 = vsel %vm2400, %v2381, %v2419
      %v2438 = vsel %vm2401, %v2382, %v2420
      %v2439 = vsel %vm2402, %v2383, %v2421
      %v2440 = vsel %vm2403, %v2384, %v2422
      %v2441 = vsel %vm2404, %v2385, %v2423
      %v2442 = vsel %vm2405, %v2386, %v2424
      %v2443 = vsel %vm2406, %v2387, %v2425
      %v2444 = vsel %vm2407, %v2388, %v2426
      %2445 = vst [vmem:[%s274] sm:$0xff] %v2427
      %2446 = vst [vmem:[%s274 + $0x8] sm:$0xff] %v2428
      %2447 = vst [vmem:[%s274 + $0x10] sm:$0xff] %v2429
      %2448 = vst [vmem:[%s274 + $0x18] sm:$0xff] %v2430
      %2449 = vst [vmem:[%s274 + $0x20] sm:$0xff] %v2431
      %2450 = vst [vmem:[%s274 + $0x28] sm:$0xff] %v2432
      %2451 = vst [vmem:[%s274 + $0x30] sm:$0xff] %v2433
      %2452 = vst [vmem:[%s274 + $0x38] sm:$0xff] %v2434
      %2453 = vst [vmem:[%s274 + $0x40] sm:$0xff] %v2435
      %2454 = vst [vmem:[%s274 + $0x48] sm:$0xff] %v2436
      %2455 = vst [vmem:[%s274 + $0x50] sm:$0xff] %v2437
      %2456 = vst [vmem:[%s274 + $0x58] sm:$0xff] %v2438
      %2457 = vst [vmem:[%s274 + $0x60] sm:$0xff] %v2439
      %2458 = vst [vmem:[%s274 + $0x68] sm:$0xff] %v2440
      %2459 = vst [vmem:[%s274 + $0x70] sm:$0xff] %v2441
      %2460 = vst [vmem:[%s274 + $0x78] sm:$0xff] %v2442
      %2461 = vst [vmem:[%s274 + $0x80] sm:$0xff] %v2443
      %2462 = vst [vmem:[%s274 + $0x88] sm:$0xff] %v2444
      %v2463 = vlaneseq
      %v2464 = vshrl.u32 %v2463, 7
      %v2465 = vadd.s32 %v2464, 8
      %v2466 = vadd.s32 %v2464, 16
      %v2467 = vadd.s32 %v2464, 24
      %v2468 = vadd.s32 %v2464, 32
      %v2469 = vadd.s32 %v2464, 40
      %v2470 = vadd.s32 %v2464, 48
      %v2471 = vadd.s32 %v2464, 56
      %v2472 = vadd.s32 %v2464, 64
      %v2473 = vadd.s32 %v2464, 72
      %v2474 = vadd.s32 %v2464, 80
      %v2475 = vadd.s32 %v2464, 88
      %v2476 = vadd.s32 %v2464, 96
      %v2477 = vadd.s32 %v2464, 104
      %v2478 = vadd.s32 %v2464, 112
      %v2479 = vadd.s32 %v2464, 120
      %v2480 = vadd.s32 %v2464, 128
      %v2481 = vadd.s32 %v2464, 136
      %vm2482 = vcmp.lt.s32.totalorder %v2464, 0
      %v2483 = vsub.s32 0, %v2464
      %v2484 = vsel %vm2482, %v2483, %v2464
      %v2485 = vmul.u32.u64.compose %v2484, 3817748708
      %v2486 = vextract.low.u32 %v2485
      %v2487 = vextract.high.u32 %v2485
      %v2488 = vshrl.u32 %v2487, 4
      %v2489 = vmul.u32 %v2488, 18
      %v2490 = vsub.s32 %v2484, %v2489
      %v2491 = vsub.s32 0, %v2490
      %v2492 = vsel %vm2482, %v2491, %v2490
      %vm2493 = vcmp.lt.s32.totalorder %v2465, 0
      %v2494 = vsub.s32 0, %v2465
      %v2495 = vsel %vm2493, %v2494, %v2465
      %v2496 = vmul.u32.u64.compose %v2495, 3817748708
      %v2497 = vextract.low.u32 %v2496
      %v2498 = vextract.high.u32 %v2496
      %v2499 = vshrl.u32 %v2498, 4
      %v2500 = vmul.u32 %v2499, 18
      %v2501 = vsub.s32 %v2495, %v2500
      %v2502 = vsub.s32 0, %v2501
      %v2503 = vsel %vm2493, %v2502, %v2501
      %vm2504 = vcmp.lt.s32.totalorder %v2466, 0
      %v2505 = vsub.s32 0, %v2466
      %v2506 = vsel %vm2504, %v2505, %v2466
      %v2507 = vmul.u32.u64.compose %v2506, 3817748708
      %v2508 = vextract.low.u32 %v2507
      %v2509 = vextract.high.u32 %v2507
      %v2510 = vshrl.u32 %v2509, 4
      %v2511 = vmul.u32 %v2510, 18
      %v2512 = vsub.s32 %v2506, %v2511
      %v2513 = vsub.s32 0, %v2512
      %v2514 = vsel %vm2504, %v2513, %v2512
      %vm2515 = vcmp.lt.s32.totalorder %v2467, 0
      %v2516 = vsub.s32 0, %v2467
      %v2517 = vsel %vm2515, %v2516, %v2467
      %v2518 = vmul.u32.u64.compose %v2517, 3817748708
      %v2519 = vextract.low.u32 %v2518
      %v2520 = vextract.high.u32 %v2518
      %v2521 = vshrl.u32 %v2520, 4
      %v2522 = vmul.u32 %v2521, 18
      %v2523 = vsub.s32 %v2517, %v2522
      %v2524 = vsub.s32 0, %v2523
      %v2525 = vsel %vm2515, %v2524, %v2523
      %vm2526 = vcmp.lt.s32.totalorder %v2468, 0
      %v2527 = vsub.s32 0, %v2468
      %v2528 = vsel %vm2526, %v2527, %v2468
      %v2529 = vmul.u32.u64.compose %v2528, 3817748708
      %v2530 = vextract.low.u32 %v2529
      %v2531 = vextract.high.u32 %v2529
      %v2532 = vshrl.u32 %v2531, 4
      %v2533 = vmul.u32 %v2532, 18
      %v2534 = vsub.s32 %v2528, %v2533
      %v2535 = vsub.s32 0, %v2534
      %v2536 = vsel %vm2526, %v2535, %v2534
      %vm2537 = vcmp.lt.s32.totalorder %v2469, 0
      %v2538 = vsub.s32 0, %v2469
      %v2539 = vsel %vm2537, %v2538, %v2469
      %v2540 = vmul.u32.u64.compose %v2539, 3817748708
      %v2541 = vextract.low.u32 %v2540
      %v2542 = vextract.high.u32 %v2540
      %v2543 = vshrl.u32 %v2542, 4
      %v2544 = vmul.u32 %v2543, 18
      %v2545 = vsub.s32 %v2539, %v2544
      %v2546 = vsub.s32 0, %v2545
      %v2547 = vsel %vm2537, %v2546, %v2545
      %vm2548 = vcmp.lt.s32.totalorder %v2470, 0
      %v2549 = vsub.s32 0, %v2470
      %v2550 = vsel %vm2548, %v2549, %v2470
      %v2551 = vmul.u32.u64.compose %v2550, 3817748708
      %v2552 = vextract.low.u32 %v2551
      %v2553 = vextract.high.u32 %v2551
      %v2554 = vshrl.u32 %v2553, 4
      %v2555 = vmul.u32 %v2554, 18
      %v2556 = vsub.s32 %v2550, %v2555
      %v2557 = vsub.s32 0, %v2556
      %v2558 = vsel %vm2548, %v2557, %v2556
      %vm2559 = vcmp.lt.s32.totalorder %v2471, 0
      %v2560 = vsub.s32 0, %v2471
      %v2561 = vsel %vm2559, %v2560, %v2471
      %v2562 = vmul.u32.u64.compose %v2561, 3817748708
      %v2563 = vextract.low.u32 %v2562
      %v2564 = vextract.high.u32 %v2562
      %v2565 = vshrl.u32 %v2564, 4
      %v2566 = vmul.u32 %v2565, 18
      %v2567 = vsub.s32 %v2561, %v2566
      %v2568 = vsub.s32 0, %v2567
      %v2569 = vsel %vm2559, %v2568, %v2567
      %vm2570 = vcmp.lt.s32.totalorder %v2472, 0
      %v2571 = vsub.s32 0, %v2472
      %v2572 = vsel %vm2570, %v2571, %v2472
      %v2573 = vmul.u32.u64.compose %v2572, 3817748708
      %v2574 = vextract.low.u32 %v2573
      %v2575 = vextract.high.u32 %v2573
      %v2576 = vshrl.u32 %v2575, 4
      %v2577 = vmul.u32 %v2576, 18
      %v2578 = vsub.s32 %v2572, %v2577
      %v2579 = vsub.s32 0, %v2578
      %v2580 = vsel %vm2570, %v2579, %v2578
      %vm2581 = vcmp.lt.s32.totalorder %v2473, 0
      %v2582 = vsub.s32 0, %v2473
      %v2583 = vsel %vm2581, %v2582, %v2473
      %v2584 = vmul.u32.u64.compose %v2583, 3817748708
      %v2585 = vextract.low.u32 %v2584
      %v2586 = vextract.high.u32 %v2584
      %v2587 = vshrl.u32 %v2586, 4
      %v2588 = vmul.u32 %v2587, 18
      %v2589 = vsub.s32 %v2583, %v2588
      %v2590 = vsub.s32 0, %v2589
      %v2591 = vsel %vm2581, %v2590, %v2589
      %vm2592 = vcmp.lt.s32.totalorder %v2474, 0
      %v2593 = vsub.s32 0, %v2474
      %v2594 = vsel %vm2592, %v2593, %v2474
      %v2595 = vmul.u32.u64.compose %v2594, 3817748708
      %v2596 = vextract.low.u32 %v2595
      %v2597 = vextract.high.u32 %v2595
      %v2598 = vshrl.u32 %v2597, 4
      %v2599 = vmul.u32 %v2598, 18
      %v2600 = vsub.s32 %v2594, %v2599
      %v2601 = vsub.s32 0, %v2600
      %v2602 = vsel %vm2592, %v2601, %v2600
      %vm2603 = vcmp.lt.s32.totalorder %v2475, 0
      %v2604 = vsub.s32 0, %v2475
      %v2605 = vsel %vm2603, %v2604, %v2475
      %v2606 = vmul.u32.u64.compose %v2605, 3817748708
      %v2607 = vextract.low.u32 %v2606
      %v2608 = vextract.high.u32 %v2606
      %v2609 = vshrl.u32 %v2608, 4
      %v2610 = vmul.u32 %v2609, 18
      %v2611 = vsub.s32 %v2605, %v2610
      %v2612 = vsub.s32 0, %v2611
      %v2613 = vsel %vm2603, %v2612, %v2611
      %vm2614 = vcmp.lt.s32.totalorder %v2476, 0
      %v2615 = vsub.s32 0, %v2476
      %v2616 = vsel %vm2614, %v2615, %v2476
      %v2617 = vmul.u32.u64.compose %v2616, 3817748708
      %v2618 = vextract.low.u32 %v2617
      %v2619 = vextract.high.u32 %v2617
      %v2620 = vshrl.u32 %v2619, 4
      %v2621 = vmul.u32 %v2620, 18
      %v2622 = vsub.s32 %v2616, %v2621
      %v2623 = vsub.s32 0, %v2622
      %v2624 = vsel %vm2614, %v2623, %v2622
      %vm2625 = vcmp.lt.s32.totalorder %v2477, 0
      %v2626 = vsub.s32 0, %v2477
      %v2627 = vsel %vm2625, %v2626, %v2477
      %v2628 = vmul.u32.u64.compose %v2627, 3817748708
      %v2629 = vextract.low.u32 %v2628
      %v2630 = vextract.high.u32 %v2628
      %v2631 = vshrl.u32 %v2630, 4
      %v2632 = vmul.u32 %v2631, 18
      %v2633 = vsub.s32 %v2627, %v2632
      %v2634 = vsub.s32 0, %v2633
      %v2635 = vsel %vm2625, %v2634, %v2633
      %vm2636 = vcmp.lt.s32.totalorder %v2478, 0
      %v2637 = vsub.s32 0, %v2478
      %v2638 = vsel %vm2636, %v2637, %v2478
      %v2639 = vmul.u32.u64.compose %v2638, 3817748708
      %v2640 = vextract.low.u32 %v2639
      %v2641 = vextract.high.u32 %v2639
      %v2642 = vshrl.u32 %v2641, 4
      %v2643 = vmul.u32 %v2642, 18
      %v2644 = vsub.s32 %v2638, %v2643
      %v2645 = vsub.s32 0, %v2644
      %v2646 = vsel %vm2636, %v2645, %v2644
      %vm2647 = vcmp.lt.s32.totalorder %v2479, 0
      %v2648 = vsub.s32 0, %v2479
      %v2649 = vsel %vm2647, %v2648, %v2479
      %v2650 = vmul.u32.u64.compose %v2649, 3817748708
      %v2651 = vextract.low.u32 %v2650
      %v2652 = vextract.high.u32 %v2650
      %v2653 = vshrl.u32 %v2652, 4
      %v2654 = vmul.u32 %v2653, 18
      %v2655 = vsub.s32 %v2649, %v2654
      %v2656 = vsub.s32 0, %v2655
      %v2657 = vsel %vm2647, %v2656, %v2655
      %vm2658 = vcmp.lt.s32.totalorder %v2480, 0
      %v2659 = vsub.s32 0, %v2480
      %v2660 = vsel %vm2658, %v2659, %v2480
      %v2661 = vmul.u32.u64.compose %v2660, 3817748708
      %v2662 = vextract.low.u32 %v2661
      %v2663 = vextract.high.u32 %v2661
      %v2664 = vshrl.u32 %v2663, 4
      %v2665 = vmul.u32 %v2664, 18
      %v2666 = vsub.s32 %v2660, %v2665
      %v2667 = vsub.s32 0, %v2666
      %v2668 = vsel %vm2658, %v2667, %v2666
      %vm2669 = vcmp.lt.s32.totalorder %v2481, 0
      %v2670 = vsub.s32 0, %v2481
      %v2671 = vsel %vm2669, %v2670, %v2481
      %v2672 = vmul.u32.u64.compose %v2671, 3817748708
      %v2673 = vextract.low.u32 %v2672
      %v2674 = vextract.high.u32 %v2672
      %v2675 = vshrl.u32 %v2674, 4
      %v2676 = vmul.u32 %v2675, 18
      %v2677 = vsub.s32 %v2671, %v2676
      %v2678 = vsub.s32 0, %v2677
      %v2679 = vsel %vm2669, %v2678, %v2677
      %vm2680 = vcmp.ne.s32.totalorder %v2492, 0
      %vm2681 = vcmp.ne.s32.totalorder %v2503, 0
      %vm2682 = vcmp.ne.s32.totalorder %v2514, 0
      %vm2683 = vcmp.ne.s32.totalorder %v2525, 0
      %vm2684 = vcmp.ne.s32.totalorder %v2536, 0
      %vm2685 = vcmp.ne.s32.totalorder %v2547, 0
      %vm2686 = vcmp.ne.s32.totalorder %v2558, 0
      %vm2687 = vcmp.ne.s32.totalorder %v2569, 0
      %vm2688 = vcmp.ne.s32.totalorder %v2580, 0
      %vm2689 = vcmp.ne.s32.totalorder %v2591, 0
      %vm2690 = vcmp.ne.s32.totalorder %v2602, 0
      %vm2691 = vcmp.ne.s32.totalorder %v2613, 0
      %vm2692 = vcmp.ne.s32.totalorder %v2624, 0
      %vm2693 = vcmp.ne.s32.totalorder %v2635, 0
      %vm2694 = vcmp.ne.s32.totalorder %v2646, 0
      %vm2695 = vcmp.ne.s32.totalorder %v2657, 0
      %vm2696 = vcmp.ne.s32.totalorder %v2668, 0
      %vm2697 = vcmp.ne.s32.totalorder %v2679, 0
      %vm2698 = vcmp.lt.s32.totalorder %v2492, 0
      %vm2699 = vcmp.lt.s32.totalorder %v2503, 0
      %vm2700 = vcmp.lt.s32.totalorder %v2514, 0
      %vm2701 = vcmp.lt.s32.totalorder %v2525, 0
      %vm2702 = vcmp.lt.s32.totalorder %v2536, 0
      %vm2703 = vcmp.lt.s32.totalorder %v2547, 0
      %vm2704 = vcmp.lt.s32.totalorder %v2558, 0
      %vm2705 = vcmp.lt.s32.totalorder %v2569, 0
      %vm2706 = vcmp.lt.s32.totalorder %v2580, 0
      %vm2707 = vcmp.lt.s32.totalorder %v2591, 0
      %vm2708 = vcmp.lt.s32.totalorder %v2602, 0
      %vm2709 = vcmp.lt.s32.totalorder %v2613, 0
      %vm2710 = vcmp.lt.s32.totalorder %v2624, 0
      %vm2711 = vcmp.lt.s32.totalorder %v2635, 0
      %vm2712 = vcmp.lt.s32.totalorder %v2646, 0
      %vm2713 = vcmp.lt.s32.totalorder %v2657, 0
      %vm2714 = vcmp.lt.s32.totalorder %v2668, 0
      %vm2715 = vcmp.lt.s32.totalorder %v2679, 0
      %vm2716 = vmand %vm2698, %vm2680
      %vm2717 = vmand %vm2699, %vm2681
      %vm2718 = vmand %vm2700, %vm2682
      %vm2719 = vmand %vm2701, %vm2683
      %vm2720 = vmand %vm2702, %vm2684
      %vm2721 = vmand %vm2703, %vm2685
      %vm2722 = vmand %vm2704, %vm2686
      %vm2723 = vmand %vm2705, %vm2687
      %vm2724 = vmand %vm2706, %vm2688
      %vm2725 = vmand %vm2707, %vm2689
      %vm2726 = vmand %vm2708, %vm2690
      %vm2727 = vmand %vm2709, %vm2691
      %vm2728 = vmand %vm2710, %vm2692
      %vm2729 = vmand %vm2711, %vm2693
      %vm2730 = vmand %vm2712, %vm2694
      %vm2731 = vmand %vm2713, %vm2695
      %vm2732 = vmand %vm2714, %vm2696
      %vm2733 = vmand %vm2715, %vm2697
      %v2734 = vadd.s32 %v2492, 18
      %v2735 = vadd.s32 %v2503, 18
      %v2736 = vadd.s32 %v2514, 18
      %v2737 = vadd.s32 %v2525, 18
      %v2738 = vadd.s32 %v2536, 18
      %v2739 = vadd.s32 %v2547, 18
      %v2740 = vadd.s32 %v2558, 18
      %v2741 = vadd.s32 %v2569, 18
      %v2742 = vadd.s32 %v2580, 18
      %v2743 = vadd.s32 %v2591, 18
      %v2744 = vadd.s32 %v2602, 18
      %v2745 = vadd.s32 %v2613, 18
      %v2746 = vadd.s32 %v2624, 18
      %v2747 = vadd.s32 %v2635, 18
      %v2748 = vadd.s32 %v2646, 18
      %v2749 = vadd.s32 %v2657, 18
      %v2750 = vadd.s32 %v2668, 18
      %v2751 = vadd.s32 %v2679, 18
      %v2752 = vsel %vm2716, %v2734, %v2492
      %v2753 = vsel %vm2717, %v2735, %v2503
      %v2754 = vsel %vm2718, %v2736, %v2514
      %v2755 = vsel %vm2719, %v2737, %v2525
      %v2756 = vsel %vm2720, %v2738, %v2536
      %v2757 = vsel %vm2721, %v2739, %v2547
      %v2758 = vsel %vm2722, %v2740, %v2558
      %v2759 = vsel %vm2723, %v2741, %v2569
      %v2760 = vsel %vm2724, %v2742, %v2580
      %v2761 = vsel %vm2725, %v2743, %v2591
      %v2762 = vsel %vm2726, %v2744, %v2602
      %v2763 = vsel %vm2727, %v2745, %v2613
      %v2764 = vsel %vm2728, %v2746, %v2624
      %v2765 = vsel %vm2729, %v2747, %v2635
      %v2766 = vsel %vm2730, %v2748, %v2646
      %v2767 = vsel %vm2731, %v2749, %v2657
      %v2768 = vsel %vm2732, %v2750, %v2668
      %v2769 = vsel %vm2733, %v2751, %v2679
      %vm2770 = vcmp.lt.s32.totalorder %v2752, 16
      %vm2771 = vcmp.lt.s32.totalorder %v2753, 16
      %vm2772 = vcmp.lt.s32.totalorder %v2754, 16
      %vm2773 = vcmp.lt.s32.totalorder %v2755, 16
      %vm2774 = vcmp.lt.s32.totalorder %v2756, 16
      %vm2775 = vcmp.lt.s32.totalorder %v2757, 16
      %vm2776 = vcmp.lt.s32.totalorder %v2758, 16
      %vm2777 = vcmp.lt.s32.totalorder %v2759, 16
      %vm2778 = vcmp.lt.s32.totalorder %v2760, 16
      %vm2779 = vcmp.lt.s32.totalorder %v2761, 16
      %vm2780 = vcmp.lt.s32.totalorder %v2762, 16
      %vm2781 = vcmp.lt.s32.totalorder %v2763, 16
      %vm2782 = vcmp.lt.s32.totalorder %v2764, 16
      %vm2783 = vcmp.lt.s32.totalorder %v2765, 16
      %vm2784 = vcmp.lt.s32.totalorder %v2766, 16
      %vm2785 = vcmp.lt.s32.totalorder %v2767, 16
      %vm2786 = vcmp.lt.s32.totalorder %v2768, 16
      %vm2787 = vcmp.lt.s32.totalorder %v2769, 16
      %v2788 = vsel %vm2770, 1, 0
      %v2789 = vsel %vm2771, 1, 0
      %v2790 = vsel %vm2772, 1, 0
      %v2791 = vsel %vm2773, 1, 0
      %v2792 = vsel %vm2774, 1, 0
      %v2793 = vsel %vm2775, 1, 0
      %v2794 = vsel %vm2776, 1, 0
      %v2795 = vsel %vm2777, 1, 0
      %v2796 = vsel %vm2778, 1, 0
      %v2797 = vsel %vm2779, 1, 0
      %v2798 = vsel %vm2780, 1, 0
      %v2799 = vsel %vm2781, 1, 0
      %v2800 = vsel %vm2782, 1, 0
      %v2801 = vsel %vm2783, 1, 0
      %v2802 = vsel %vm2784, 1, 0
      %v2803 = vsel %vm2785, 1, 0
      %v2804 = vsel %vm2786, 1, 0
      %v2805 = vsel %vm2787, 1, 0
      %vm2806 = vcmp.eq.s32.totalorder %v2788, 1
      %vm2807 = vcmp.eq.s32.totalorder %v2789, 1
      %vm2808 = vcmp.eq.s32.totalorder %v2790, 1
      %vm2809 = vcmp.eq.s32.totalorder %v2791, 1
      %vm2810 = vcmp.eq.s32.totalorder %v2792, 1
      %vm2811 = vcmp.eq.s32.totalorder %v2793, 1
      %vm2812 = vcmp.eq.s32.totalorder %v2794, 1
      %vm2813 = vcmp.eq.s32.totalorder %v2795, 1
      %vm2814 = vcmp.eq.s32.totalorder %v2796, 1
      %vm2815 = vcmp.eq.s32.totalorder %v2797, 1
      %vm2816 = vcmp.eq.s32.totalorder %v2798, 1
      %vm2817 = vcmp.eq.s32.totalorder %v2799, 1
      %vm2818 = vcmp.eq.s32.totalorder %v2800, 1
      %vm2819 = vcmp.eq.s32.totalorder %v2801, 1
      %vm2820 = vcmp.eq.s32.totalorder %v2802, 1
      %vm2821 = vcmp.eq.s32.totalorder %v2803, 1
      %vm2822 = vcmp.eq.s32.totalorder %v2804, 1
      %vm2823 = vcmp.eq.s32.totalorder %v2805, 1
      %v2824 = vsel %vm2806, %v2427, 0.0
      %v2825 = vsel %vm2807, %v2428, 0.0
      %v2826 = vsel %vm2808, %v2429, 0.0
      %v2827 = vsel %vm2809, %v2430, 0.0
      %v2828 = vsel %vm2810, %v2431, 0.0
      %v2829 = vsel %vm2811, %v2432, 0.0
      %v2830 = vsel %vm2812, %v2433, 0.0
      %v2831 = vsel %vm2813, %v2434, 0.0
      %v2832 = vsel %vm2814, %v2435, 0.0
      %v2833 = vsel %vm2815, %v2436, 0.0
      %v2834 = vsel %vm2816, %v2437, 0.0
      %v2835 = vsel %vm2817, %v2438, 0.0
      %v2836 = vsel %vm2818, %v2439, 0.0
      %v2837 = vsel %vm2819, %v2440, 0.0
      %v2838 = vsel %vm2820, %v2441, 0.0
      %v2839 = vsel %vm2821, %v2442, 0.0
      %v2840 = vsel %vm2822, %v2443, 0.0
      %v2841 = vsel %vm2823, %v2444, 0.0
      %v2842 = vadd.f32 %v2824, %v2825
      %v2843 = vadd.f32 %v2842, %v2826
      %v2844 = vadd.f32 %v2843, %v2827
      %v2845 = vadd.f32 %v2844, %v2828
      %v2846 = vadd.f32 %v2845, %v2829
      %v2847 = vadd.f32 %v2846, %v2830
      %v2848 = vadd.f32 %v2847, %v2831
      %v2849 = vadd.f32 %v2848, %v2832
      %v2850 = vadd.f32 %v2849, %v2833
      %v2851 = vadd.f32 %v2850, %v2834
      %v2852 = vadd.f32 %v2851, %v2835
      %v2853 = vadd.f32 %v2852, %v2836
      %v2854 = vadd.f32 %v2853, %v2837
      %v2855 = vadd.f32 %v2854, %v2838
      %v2856 = vadd.f32 %v2855, %v2839
      %v2857 = vadd.f32 %v2856, %v2840
      %v2858 = vadd.f32 %v2857, %v2841
      %v2859 = vrot.slane %v2858, 4
      %v2860 = vadd.f32 %v2858, %v2859
      %v2861 = vrot.slane %v2860, 2
      %v2862 = vadd.f32 %v2860, %v2861
      %v2863 = vrot.slane %v2862, 1
      %v2864 = vadd.f32 %v2862, %v2863
      %v2865 = vmul.f32 %v2824, %v2824
      %v2866 = vmul.f32 %v2825, %v2825
      %v2867 = vmul.f32 %v2826, %v2826
      %v2868 = vmul.f32 %v2827, %v2827
      %v2869 = vmul.f32 %v2828, %v2828
      %v2870 = vmul.f32 %v2829, %v2829
      %v2871 = vmul.f32 %v2830, %v2830
      %v2872 = vmul.f32 %v2831, %v2831
      %v2873 = vmul.f32 %v2832, %v2832
      %v2874 = vmul.f32 %v2833, %v2833
      %v2875 = vmul.f32 %v2834, %v2834
      %v2876 = vmul.f32 %v2835, %v2835
      %v2877 = vmul.f32 %v2836, %v2836
      %v2878 = vmul.f32 %v2837, %v2837
      %v2879 = vmul.f32 %v2838, %v2838
      %v2880 = vmul.f32 %v2839, %v2839
      %v2881 = vmul.f32 %v2840, %v2840
      %v2882 = vmul.f32 %v2841, %v2841
      %v2883 = vadd.f32 %v2865, %v2866
      %v2884 = vadd.f32 %v2883, %v2867
      %v2885 = vadd.f32 %v2884, %v2868
      %v2886 = vadd.f32 %v2885, %v2869
      %v2887 = vadd.f32 %v2886, %v2870
      %v2888 = vadd.f32 %v2887, %v2871
      %v2889 = vadd.f32 %v2888, %v2872
      %v2890 = vadd.f32 %v2889, %v2873
      %v2891 = vadd.f32 %v2890, %v2874
      %v2892 = vadd.f32 %v2891, %v2875
      %v2893 = vadd.f32 %v2892, %v2876
      %v2894 = vadd.f32 %v2893, %v2877
      %v2895 = vadd.f32 %v2894, %v2878
      %v2896 = vadd.f32 %v2895, %v2879
      %v2897 = vadd.f32 %v2896, %v2880
      %v2898 = vadd.f32 %v2897, %v2881
      %v2899 = vadd.f32 %v2898, %v2882
      %v2900 = vrot.slane %v2899, 4
      %v2901 = vadd.f32 %v2899, %v2900
      %v2902 = vrot.slane %v2901, 2
      %v2903 = vadd.f32 %v2901, %v2902
      %v2904 = vrot.slane %v2903, 1
      %v2905 = vadd.f32 %v2903, %v2904
      %vm2906 = vcmp.eq.s32.totalorder %v2464, 0
      %v2907 = vsel %vm2906, 1, 0
      %vm2908 = vcmp.eq.s32.totalorder %v2907, 1
      %v2909 = vsel %vm2908, %v2864, 0.0
      %vm2910 = vcmp.eq.s32.totalorder %v2464, 1
      %v2911 = vsel %vm2910, 1, 0
      %vm2912 = vcmp.eq.s32.totalorder %v2911, 1
      %v2913 = vsel %vm2912, %v2905, 0.0
      %v2914 = vadd.f32 %v2909, %v2913
      %2915 = vst [vmem:[%s282] sm:$0xff] %v2914
      %p2916 = scmp.lt.s32.totalorder %s22, 1
      %s2917 = scalar_select %p2916, %s22, 1
      %p2918 = scmp.lt.s32.totalorder %s23, 1
      %s2919 = scalar_select %p2918, %s23, 1
      %s2920 = smul.addr %s2919, 18
      %s2921 = smul.addr %s2917, 36
      %s2922 = sadd.s32 %s2920, %s2921
      %s2923 = smul.addr %s2922, 8
      %s2924 = scalar_lea.vmem %s4, %s2923
      %p2925 = scmp.lt.s32.totalorder %s22, 1
      %s2926 = scalar_select %p2925, %s22, 1
      %p2927 = scmp.lt.s32.totalorder %s23, 1
      %s2928 = scalar_select %p2927, %s23, 1
      %s2929 = smul.addr %s2926, 2
      %s2930 = sadd.s32 %s2928, %s2929
      %s2931 = smul.addr %s2930, 8
      %s2932 = scalar_lea.vmem %s5, %s2931
      // Predicated region
      $region37: #{encoding_block_forward.4} parent=35 // pred_check
        %p2933 = pneg %p141
      $region38: #{encoding_block_forward.4} parent=35 // pred_check_branch
        %2935 = sbr.rel (%p2933) target = $region40
      $region39: #{encoding_block_forward.4} parent=35 // pred_region
        _
      $region40: #{encoding_block_forward.4} parent=35 // pred_fallthru
        _
      // Predicated region
      $region41: #{encoding_block_forward.4} parent=35 // pred_check
        %p2936 = pneg %p169
      $region42: #{encoding_block_forward.4} parent=35 // pred_check_branch
        %2938 = sbr.rel (%p2936) target = $region44
      $region43: #{encoding_block_forward.4} parent=35 // pred_region
        _
      $region44: #{encoding_block_forward.4} parent=35 // pred_fallthru
        _
    $region36: #{encoding_block_forward.4} parent=5 // pred_fallthru
      _
    %p2939 = scmp.le.s32.totalorder 2, %s13
    // Predicated region
    $region45: #{encoding_block_forward.4} parent=5 // pred_check
      %p2940 = pneg %p2939
    $region46: #{encoding_block_forward.4} parent=5 // pred_check_branch
      %2942 = sbr.rel (%p2940) target = $region48
    $region47: #{encoding_block_forward.4} parent=5 // pred_region
      %s2943 = ssub.s32 %s13, 2
      // Predicated region
      $region49: #{encoding_block_forward.4} parent=47 // pred_check
        %p2944 = pneg %p147
      $region50: #{encoding_block_forward.4} parent=47 // pred_check_branch
        %2946 = sbr.rel (%p2944) target = $region52
      $region51: #{encoding_block_forward.4} parent=47 // pred_region
        %p2947 = scmp.lt.s32.totalorder %s24, 1
        %s2948 = scalar_select %p2947, %s24, 1
        %p2949 = scmp.lt.s32.totalorder %s25, 1
        %s2950 = scalar_select %p2949, %s25, 1
        %s2951 = smul.addr %s2950, 18
        %s2952 = smul.addr %s2948, 36
        %s2953 = sadd.s32 %s2951, %s2952
        %s2954 = smul.addr %s2953, 8
        %s2955 = scalar_lea.vmem %s4, %s2954
      $region52: #{encoding_block_forward.4} parent=47 // pred_fallthru
        _
      // Predicated region
      $region53: #{encoding_block_forward.4} parent=47 // pred_check
        %p2956 = pneg %p175
      $region54: #{encoding_block_forward.4} parent=47 // pred_check_branch
        %2958 = sbr.rel (%p2956) target = $region56
      $region55: #{encoding_block_forward.4} parent=47 // pred_region
        %p2959 = scmp.lt.s32.totalorder %s24, 1
        %s2960 = scalar_select %p2959, %s24, 1
        %p2961 = scmp.lt.s32.totalorder %s25, 1
        %s2962 = scalar_select %p2961, %s25, 1
        %s2963 = smul.addr %s2960, 2
        %s2964 = sadd.s32 %s2962, %s2963
        %s2965 = smul.addr %s2964, 8
        %s2966 = scalar_lea.vmem %s5, %s2965
      $region56: #{encoding_block_forward.4} parent=47 // pred_fallthru
        _
    $region48: #{encoding_block_forward.4} parent=5 // pred_fallthru
      _
  $region6: #{encoding_block_forward.4} parent=0 // loop_footer
    %s17 = sadd.s32 1, %s13
  $region7: #{encoding_block_forward.4} parent=0 // loop_footer_branch
    %12 = sbr.rel target = $region3
  $region8: #{encoding_block_forward.4} parent=0 // loop_exit
    _

</llo_original>
